<compile_context>
chip_gen: v7x
topology: tpu7x:2x2x1
jax: 0.10.0
libtpu: 0.0.40
codegen_flags: <defaults>
</compile_context>

<pallas_src>
import functools

import jax
import jax.numpy as jnp
from jax.experimental import pallas as pl
from jax.experimental.pallas import tpu as pltpu


def _round_up(x, m):
    return (x + m - 1) // m * m


def _cdiv(a, b):
    return -(-a // b)


def _attention_kernel(x_ref, wqkv_ref, wout_ref, b_ref, o_ref,
                      q_scr, k_scr, v_scr, ov_scr, *,
                      num_heads, head_dim, seq_len):
    """One grid step = one (batch element, lane-block of H*W positions) tile.

    Shapes (f32):
      x_ref   : [C*T, NBLK]        rows ordered (c, t), positions in lanes
      wqkv_ref: [3*C*T, C*T]       kron(w_qkv^T, I_T)
      wout_ref: [C*T, C*T]         kron(w_out^T, I_T)
      b_ref   : [C*T, 1]           bias repeated over t (lane-broadcast)
      o_ref   : [C*T, NBLK]
      *_scr   : [nh, hd, T, NBLK]  normalized q (x scale), normalized k, v, out
    """
    T = seq_len
    nh, hd = num_heads, head_dim
    CT = nh * hd * T
    NBLK = x_ref.shape[-1]
    scale = hd ** (-0.5)
    eps2 = 1e-24   # F.normalize eps = 1e-12, squared (compared to sum of squares)

    # ---- fused QKV projection: one MXU matmul with K = C*T ------------------
    qkv = jnp.dot(wqkv_ref[...], x_ref[...],
                  preferred_element_type=jnp.float32)            # [3*C*T, NBLK]
    # Row splits below are sublane-tile aligned when T is a multiple of 8.
    q = qkv[0:CT].reshape(nh, hd, T, NBLK)
    k = qkv[CT:2 * CT].reshape(nh, hd, T, NBLK)
    v = qkv[2 * CT:3 * CT].reshape(nh, hd, T, NBLK)

    # ---- qk L2 norm over head_dim (outer-dim reduce -> pure VPU adds) -------
    # Softmax scale folded into q's normalization (saves T^2 score multiplies).
    ssq_q = jnp.sum(q * q, axis=1, keepdims=True)
    q_scr[...] = q * (jax.lax.rsqrt(jnp.maximum(ssq_q, eps2)) * scale)
    ssq_k = jnp.sum(k * k, axis=1, keepdims=True)
    k_scr[...] = k * jax.lax.rsqrt(jnp.maximum(ssq_k, eps2))
    v_scr[...] = v

    # ---- causal attention core -----------------------------------------------
    # Per head: loop over keys j, vectorized over ALL queries i (sublane axis)
    # and all positions (lane axis).  Heads are chunked so acc/den stay inside
    # the vreg file.  q/k are unit vectors so |score| <= scale and exp cannot
    # overflow -> no running-max subtraction.
    row_id = jax.lax.broadcasted_iota(jnp.int32, (1, T, NBLK), 1)  # query index i
    for h in range(nh):
        qh = q_scr[h]                                              # [hd, T, NBLK]
        # j = 0: every query attends to key 0, no mask needed.
        p = jnp.exp(jnp.sum(qh * k_scr[h, :, 0:1, :], axis=0, keepdims=True))
        den = p                                                    # [1, T, NBLK]
        acc = p * v_scr[h, :, 0:1, :]                              # [hd, T, NBLK]
        for j in range(1, T):
            s = jnp.sum(qh * k_scr[h, :, j:j + 1, :], axis=0, keepdims=True)
            p = jnp.where(row_id >= j, jnp.exp(s), 0.0)            # causal mask
            den = den + p
            acc = acc + p * v_scr[h, :, j:j + 1, :]
        # Reciprocal hoisted out of the j loop (exact; it runs once per head).
        ov_scr[h] = acc * pl.reciprocal(den, approx=False)

    # ---- fused output projection: one MXU matmul with K = C*T ---------------
    ov = ov_scr[...].reshape(CT, NBLK)
    y = jnp.dot(wout_ref[...], ov, preferred_element_type=jnp.float32) + b_ref[...]
    o_ref[...] = y.astype(o_ref.dtype)


def attention_forward(x, w_qkv, w_out, b_out, *, head_dim, nblk_max=256):
    """Temporal self-attention.  x: [B, C, T, H, W]; w_qkv: [C, 3C]; w_out: [C, C]."""
    B, C, T, H, W = x.shape
    num_heads = C // head_dim
    assert num_heads * head_dim == C

    if T == 1:
        # Degenerate path (matches the PyTorch shortcut): qkv -> take v -> out.
        # TODO(synk): trivial matmul glue kept in plain JAX (not worth a kernel).
        xt = jnp.moveaxis(x, 1, -1)
        qkv = xt @ w_qkv
        v = qkv[..., 2 * C:3 * C]
        y = v @ w_out + b_out
        return jnp.moveaxis(y, -1, 1)

    HW = H * W
    CT = C * T

    # Native-layout view: [B, C, T, H, W] -> [B, C*T, H*W] is metadata-only
    # (no HBM transpose); the kernel reads/writes lane-dense blocks of it.
    x3 = x.reshape(B, CT, HW)

    # Lane block of positions (multiple of 128); keep >= 2 grid steps so both
    # v7x TensorCores get work.
    nblk = min(nblk_max, _round_up(HW, 128))
    if B * _cdiv(HW, nblk) < 2 and nblk > 128:
        nblk = _round_up(_cdiv(HW, 2), 128)
    hw_pad = _round_up(HW, nblk)
    if hw_pad != HW:
        x3 = jnp.pad(x3, ((0, 0), (0, 0), (0, hw_pad - HW)))

    # Fold the per-timestep projections into single wide-K matmuls:
    #   qkv[(o,t), n] = sum_c W[o,c] * x[(c,t), n]   ==   kron(W^T, I_T) @ x
    # TODO(synk): for large C*T the kron weight grows as (C*T)^2; fall back to a
    # per-timestep projection loop in that regime (here C*T = 256).
    eye_t = jnp.eye(T, dtype=x.dtype)
    wqkv_big = jnp.kron(w_qkv.T.astype(x.dtype), eye_t)          # [3*C*T, C*T]
    wout_big = jnp.kron(w_out.T.astype(x.dtype), eye_t)          # [C*T, C*T]
    bias_big = jnp.repeat(b_out.astype(x.dtype), T).reshape(CT, 1)

    kernel = functools.partial(_attention_kernel, num_heads=num_heads,
                               head_dim=head_dim, seq_len=T)

    # VMEM budget from the actual shapes (f32), capped for v7x's 64 MiB VMEM.
    blk_bytes = CT * nblk * 4
    vmem_needed = (4 * blk_bytes                                       # x + out blocks, double-buffered
                   + 2 * (wqkv_big.size + wout_big.size + CT * 128) * 4  # weights + padded bias
                   + 4 * num_heads * head_dim * T * nblk * 4           # q/k/v/ov scratch
                   + 3 * blk_bytes)                                    # in-kernel qkv/ov values
    vmem_limit = int(min(48 * 1024 * 1024, max(2 * vmem_needed, 24 * 1024 * 1024)))

    out = pl.pallas_call(
        kernel,
        out_shape=jax.ShapeDtypeStruct((B, CT, hw_pad), x.dtype),
        grid_spec=pltpu.PrefetchScalarGridSpec(
            num_scalar_prefetch=0,
            grid=(B, hw_pad // nblk),
            in_specs=[
                pl.BlockSpec((None, CT, nblk), lambda b, n: (b, 0, n)),  # x block
                pl.BlockSpec((3 * CT, CT), lambda b, n: (0, 0)),         # kron(Wqkv^T, I_T)
                pl.BlockSpec((CT, CT), lambda b, n: (0, 0)),             # kron(Wout^T, I_T)
                pl.BlockSpec((CT, 1), lambda b, n: (0, 0)),              # bias column
            ],
            out_specs=pl.BlockSpec((None, CT, nblk), lambda b, n: (b, 0, n)),
            scratch_shapes=[
                pltpu.VMEM((num_heads, head_dim, T, nblk), jnp.float32),  # q (normalized * scale)
                pltpu.VMEM((num_heads, head_dim, T, nblk), jnp.float32),  # k (normalized)
                pltpu.VMEM((num_heads, head_dim, T, nblk), jnp.float32),  # v
                pltpu.VMEM((num_heads, head_dim, T, nblk), jnp.float32),  # attention output
            ],
        ),
        compiler_params=pltpu.CompilerParams(
            dimension_semantics=("parallel", "parallel"),
            vmem_limit_bytes=vmem_limit,
        ),
    )(x3, wqkv_big, wout_big, bias_big)

    # [B, C*T, hw_pad] -> [B, C, T, H, W]  (slice + metadata reshape only).
    return out[:, :, :HW].reshape(B, C, T, H, W)


def _reference(x, w_qkv, w_out, b_out, *, head_dim):
    """Pure-JAX reference mirroring the PyTorch forward (T > 1 path)."""
    B, C, T, H, W = x.shape
    nh = C // head_dim
    xs = jnp.transpose(x, (0, 3, 4, 2, 1)).reshape(B * H * W, T, C)
    qkv = xs @ w_qkv
    qkv = qkv.reshape(B * H * W, T, 3, nh, head_dim)
    q, k, v = qkv[:, :, 0], qkv[:, :, 1], qkv[:, :, 2]       # [N, T, nh, hd]
    q, k, v = (jnp.swapaxes(a, 1, 2) for a in (q, k, v))     # [N, nh, T, hd]

    def l2norm(a):
        return a / jnp.maximum(
            jnp.sqrt(jnp.sum(a * a, axis=-1, keepdims=True)), 1e-12)

    q, k = l2norm(q), l2norm(k)
    s = jnp.einsum('nhqd,nhkd->nhqk', q, k) * head_dim ** (-0.5)
    mask = jnp.tril(jnp.ones((T, T), dtype=bool))
    s = jnp.where(mask, s, -jnp.inf)
    p = jax.nn.softmax(s, axis=-1)
    o = jnp.einsum('nhqk,nhkd->nhqd', p, v)
    o = jnp.swapaxes(o, 1, 2).reshape(B * H * W, T, C)
    y = o @ w_out + b_out
    return y.reshape(B, H, W, T, C).transpose(0, 4, 3, 1, 2)


if __name__ == "__main__":
    # Module config: dim = C = 32, head_dim = 8 -> num_heads = 4
    B, C, T, H, W = 2, 32, 8, 8, 8
    head_dim = 8

    key = jax.random.PRNGKey(0)
    kx, kq, ko, kb = jax.random.split(key, 4)

    x = jax.random.normal(kx, (B, C, T, H, W), dtype=jnp.float32)
    # Deterministic synthetic parameters (qkv_bias=False, out_bias=True).
    w_qkv = jax.random.normal(kq, (C, 3 * C), dtype=jnp.float32) * 0.05
    w_out = jax.random.normal(ko, (C, C), dtype=jnp.float32) * 0.05
    b_out = jax.random.normal(kb, (C,), dtype=jnp.float32) * 0.05

    y = attention_forward(x, w_qkv, w_out, b_out, head_dim=head_dim)
    y = jax.block_until_ready(y)

    y_ref = _reference(x, w_qkv, w_out, b_out, head_dim=head_dim)
    assert y.shape == (B, C, T, H, W)
    max_err = jnp.max(jnp.abs(y - y_ref))
    assert jnp.allclose(y, y_ref, atol=1e-4, rtol=1e-4), \
        f"mismatch vs reference (max abs err {max_err})"

    print("KERNEL_OK")
</pallas_src>

<mosaic_0001>
module attributes {stable_mosaic.version = 11 : i64} {
  func.func @_attention_kernel(%arg0: i32, %arg1: i32, %arg2: memref<1x256x128xf32, #tpu.memory_space<vmem>>, %arg3: memref<768x256xf32, #tpu.memory_space<vmem>>, %arg4: memref<256x256xf32, #tpu.memory_space<vmem>>, %arg5: memref<256x1xf32, #tpu.memory_space<vmem>>, %arg6: memref<1x256x128xf32, #tpu.memory_space<vmem>>, %arg7: memref<4x8x8x128xf32, #tpu.memory_space<vmem>>, %arg8: memref<4x8x8x128xf32, #tpu.memory_space<vmem>>, %arg9: memref<4x8x8x128xf32, #tpu.memory_space<vmem>>, %arg10: memref<4x8x8x128xf32, #tpu.memory_space<vmem>>) attributes {dimension_semantics = [#tpu.dimension_semantics<parallel>, #tpu.dimension_semantics<parallel>], iteration_bounds = array<i64: 2, 1>, scalar_prefetch = 0 : i64, scratch_operands = 4 : i64, tpu.core_type = #tpu.core_type<tc>, window_params = [{transform_indices = @transform_0, window_bounds = array<i64: 1, 256, 128>}, {pipeline_mode = #tpu.pipeline_mode<synchronous>, transform_indices = @transform_1, window_bounds = array<i64: 768, 256>}, {pipeline_mode = #tpu.pipeline_mode<synchronous>, transform_indices = @transform_2, window_bounds = array<i64: 256, 256>}, {pipeline_mode = #tpu.pipeline_mode<synchronous>, transform_indices = @transform_3, window_bounds = array<i64: 256, 1>}, {transform_indices = @transform_4, window_bounds = array<i64: 1, 256, 128>}]} {
    %c0 = arith.constant 0 : index
    %c0_0 = arith.constant 0 : index
    %0 = vector.load %arg3[%c0, %c0_0] : memref<768x256xf32, #tpu.memory_space<vmem>>, vector<768x256xf32>
    %c0_1 = arith.constant 0 : index
    %c0_2 = arith.constant 0 : index
    %c0_3 = arith.constant 0 : index
    %1 = vector.load %arg2[%c0_1, %c0_2, %c0_3] : memref<1x256x128xf32, #tpu.memory_space<vmem>>, vector<1x256x128xf32>
    %2 = vector.shape_cast %1 : vector<1x256x128xf32> to vector<256x128xf32>
    %cst = arith.constant dense<0.000000e+00> : vector<768x128xf32>
    %3 = tpu.matmul %0, %2, %cst {dimension_numbers = #tpu.dot_dimension_numbers<[1], [0], [0], [1], [0, 0, 1, 1], [], []>} : vector<768x256xf32>, vector<256x128xf32>, vector<768x128xf32> -> vector<768x128xf32>
    %4 = vector.extract_strided_slice %3 {offsets = [0, 0], sizes = [256, 128], strides = [1, 1]} : vector<768x128xf32> to vector<256x128xf32>
    %5 = vector.shape_cast %4 : vector<256x128xf32> to vector<4x8x8x128xf32>
    %6 = vector.extract_strided_slice %3 {offsets = [256, 0], sizes = [256, 128], strides = [1, 1]} : vector<768x128xf32> to vector<256x128xf32>
    %7 = vector.shape_cast %6 : vector<256x128xf32> to vector<4x8x8x128xf32>
    %8 = vector.extract_strided_slice %3 {offsets = [512, 0], sizes = [256, 128], strides = [1, 1]} : vector<768x128xf32> to vector<256x128xf32>
    %9 = vector.shape_cast %8 : vector<256x128xf32> to vector<4x8x8x128xf32>
    %10 = arith.mulf %5, %5 : vector<4x8x8x128xf32>
    %cst_4 = arith.constant dense<0.000000e+00> : vector<4x8x128xf32>
    %11 = vector.multi_reduction <add>, %10, %cst_4 [1] : vector<4x8x8x128xf32> to vector<4x8x128xf32>
    %12 = vector.shape_cast %11 : vector<4x8x128xf32> to vector<4x1x8x128xf32>
    %cst_5 = arith.constant 1.000000e-24 : f32
    %13 = vector.broadcast %cst_5 : f32 to vector<4x1x8x128xf32>
    %14 = arith.maximumf %12, %13 : vector<4x1x8x128xf32>
    %15 = math.rsqrt %14 : vector<4x1x8x128xf32>
    %cst_6 = arith.constant 0.353553385 : f32
    %16 = vector.broadcast %cst_6 : f32 to vector<4x1x8x128xf32>
    %17 = arith.mulf %15, %16 : vector<4x1x8x128xf32>
    %18 = vector.broadcast %17 : vector<4x1x8x128xf32> to vector<4x8x8x128xf32>
    %19 = arith.mulf %5, %18 : vector<4x8x8x128xf32>
    %c0_7 = arith.constant 0 : index
    %c0_8 = arith.constant 0 : index
    %c0_9 = arith.constant 0 : index
    %c0_10 = arith.constant 0 : index
    %20 = vector.load %arg7[%c0_7, %c0_8, %c0_9, %c0_10] : memref<4x8x8x128xf32, #tpu.memory_space<vmem>>, vector<4x8x8x128xf32>
    tpu.vector_store %arg7[%c0_7, %c0_8, %c0_9, %c0_10], %19 {strides = array<i32>} : memref<4x8x8x128xf32, #tpu.memory_space<vmem>>, vector<4x8x8x128xf32>,
    %21 = arith.mulf %7, %7 : vector<4x8x8x128xf32>
    %cst_11 = arith.constant dense<0.000000e+00> : vector<4x8x128xf32>
    %22 = vector.multi_reduction <add>, %21, %cst_11 [1] : vector<4x8x8x128xf32> to vector<4x8x128xf32>
    %23 = vector.shape_cast %22 : vector<4x8x128xf32> to vector<4x1x8x128xf32>
    %cst_12 = arith.constant 1.000000e-24 : f32
    %24 = vector.broadcast %cst_12 : f32 to vector<4x1x8x128xf32>
    %25 = arith.maximumf %23, %24 : vector<4x1x8x128xf32>
    %26 = math.rsqrt %25 : vector<4x1x8x128xf32>
    %27 = vector.broadcast %26 : vector<4x1x8x128xf32> to vector<4x8x8x128xf32>
    %28 = arith.mulf %7, %27 : vector<4x8x8x128xf32>
    %c0_13 = arith.constant 0 : index
    %c0_14 = arith.constant 0 : index
    %c0_15 = arith.constant 0 : index
    %c0_16 = arith.constant 0 : index
    %29 = vector.load %arg8[%c0_13, %c0_14, %c0_15, %c0_16] : memref<4x8x8x128xf32, #tpu.memory_space<vmem>>, vector<4x8x8x128xf32>
    tpu.vector_store %arg8[%c0_13, %c0_14, %c0_15, %c0_16], %28 {strides = array<i32>} : memref<4x8x8x128xf32, #tpu.memory_space<vmem>>, vector<4x8x8x128xf32>,
    %c0_17 = arith.constant 0 : index
    %c0_18 = arith.constant 0 : index
    %c0_19 = arith.constant 0 : index
    %c0_20 = arith.constant 0 : index
    %30 = vector.load %arg9[%c0_17, %c0_18, %c0_19, %c0_20] : memref<4x8x8x128xf32, #tpu.memory_space<vmem>>, vector<4x8x8x128xf32>
    tpu.vector_store %arg9[%c0_17, %c0_18, %c0_19, %c0_20], %9 {strides = array<i32>} : memref<4x8x8x128xf32, #tpu.memory_space<vmem>>, vector<4x8x8x128xf32>,
    %31 = tpu.iota {dimensions = array<i32: 1>} : vector<1x8x128xi32>
    %c0_21 = arith.constant 0 : index
    %c0_22 = arith.constant 0 : index
    %c0_23 = arith.constant 0 : index
    %c0_24 = arith.constant 0 : index
    %32 = vector.load %arg7[%c0_21, %c0_22, %c0_23, %c0_24] : memref<4x8x8x128xf32, #tpu.memory_space<vmem>>, vector<1x8x8x128xf32>
    %33 = vector.shape_cast %32 : vector<1x8x8x128xf32> to vector<8x8x128xf32>
    %c0_25 = arith.constant 0 : index
    %c0_26 = arith.constant 0 : index
    %c0_27 = arith.constant 0 : index
    %c0_28 = arith.constant 0 : index
    %34 = vector.load %arg8[%c0_25, %c0_26, %c0_27, %c0_28] : memref<4x8x8x128xf32, #tpu.memory_space<vmem>>, vector<1x8x1x128xf32>
    %35 = vector.shape_cast %34 : vector<1x8x1x128xf32> to vector<8x1x128xf32>
    %36 = vector.broadcast %35 : vector<8x1x128xf32> to vector<8x8x128xf32>
    %37 = arith.mulf %33, %36 : vector<8x8x128xf32>
    %cst_29 = arith.constant dense<0.000000e+00> : vector<8x128xf32>
    %38 = vector.multi_reduction <add>, %37, %cst_29 [0] : vector<8x8x128xf32> to vector<8x128xf32>
    %39 = vector.shape_cast %38 : vector<8x128xf32> to vector<1x8x128xf32>
    %40 = math.exp %39 : vector<1x8x128xf32>
    %c0_30 = arith.constant 0 : index
    %c0_31 = arith.constant 0 : index
    %c0_32 = arith.constant 0 : index
    %c0_33 = arith.constant 0 : index
    %41 = vector.load %arg9[%c0_30, %c0_31, %c0_32, %c0_33] : memref<4x8x8x128xf32, #tpu.memory_space<vmem>>, vector<1x8x1x128xf32>
    %42 = vector.shape_cast %41 : vector<1x8x1x128xf32> to vector<8x1x128xf32>
    %43 = vector.broadcast %40 : vector<1x8x128xf32> to vector<8x8x128xf32>
    %44 = vector.broadcast %42 : vector<8x1x128xf32> to vector<8x8x128xf32>
    %45 = arith.mulf %43, %44 : vector<8x8x128xf32>
    %c0_34 = arith.constant 0 : index
    %c0_35 = arith.constant 0 : index
    %c1 = arith.constant 1 : index
    %c0_36 = arith.constant 0 : index
    %46 = vector.load %arg8[%c0_34, %c0_35, %c1, %c0_36] : memref<4x8x8x128xf32, #tpu.memory_space<vmem>>, vector<1x8x1x128xf32>
    %47 = vector.shape_cast %46 : vector<1x8x1x128xf32> to vector<8x1x128xf32>
    %48 = vector.broadcast %47 : vector<8x1x128xf32> to vector<8x8x128xf32>
    %49 = arith.mulf %33, %48 : vector<8x8x128xf32>
    %cst_37 = arith.constant dense<0.000000e+00> : vector<8x128xf32>
    %50 = vector.multi_reduction <add>, %49, %cst_37 [0] : vector<8x8x128xf32> to vector<8x128xf32>
    %51 = vector.shape_cast %50 : vector<8x128xf32> to vector<1x8x128xf32>
    %c1_i32 = arith.constant 1 : i32
    %52 = vector.broadcast %c1_i32 : i32 to vector<1x8x128xi32>
    %53 = arith.cmpi sge, %31, %52 : vector<1x8x128xi32>
    %54 = math.exp %51 : vector<1x8x128xf32>
    %cst_38 = arith.constant 0.000000e+00 : f32
    %55 = vector.broadcast %cst_38 : f32 to vector<1x8x128xf32>
    %56 = arith.select %53, %54, %55 : vector<1x8x128xi1>, vector<1x8x128xf32>
    %57 = arith.addf %40, %56 : vector<1x8x128xf32>
    %c0_39 = arith.constant 0 : index
    %c0_40 = arith.constant 0 : index
    %c1_41 = arith.constant 1 : index
    %c0_42 = arith.constant 0 : index
    %58 = vector.load %arg9[%c0_39, %c0_40, %c1_41, %c0_42] : memref<4x8x8x128xf32, #tpu.memory_space<vmem>>, vector<1x8x1x128xf32>
    %59 = vector.shape_cast %58 : vector<1x8x1x128xf32> to vector<8x1x128xf32>
    %60 = vector.broadcast %56 : vector<1x8x128xf32> to vector<8x8x128xf32>
    %61 = vector.broadcast %59 : vector<8x1x128xf32> to vector<8x8x128xf32>
    %62 = arith.mulf %60, %61 : vector<8x8x128xf32>
    %63 = arith.addf %45, %62 : vector<8x8x128xf32>
    %c0_43 = arith.constant 0 : index
    %c0_44 = arith.constant 0 : index
    %c2 = arith.constant 2 : index
    %c0_45 = arith.constant 0 : index
    %64 = vector.load %arg8[%c0_43, %c0_44, %c2, %c0_45] : memref<4x8x8x128xf32, #tpu.memory_space<vmem>>, vector<1x8x1x128xf32>
    %65 = vector.shape_cast %64 : vector<1x8x1x128xf32> to vector<8x1x128xf32>
    %66 = vector.broadcast %65 : vector<8x1x128xf32> to vector<8x8x128xf32>
    %67 = arith.mulf %33, %66 : vector<8x8x128xf32>
    %cst_46 = arith.constant dense<0.000000e+00> : vector<8x128xf32>
    %68 = vector.multi_reduction <add>, %67, %cst_46 [0] : vector<8x8x128xf32> to vector<8x128xf32>
    %69 = vector.shape_cast %68 : vector<8x128xf32> to vector<1x8x128xf32>
    %c2_i32 = arith.constant 2 : i32
    %70 = vector.broadcast %c2_i32 : i32 to vector<1x8x128xi32>
    %71 = arith.cmpi sge, %31, %70 : vector<1x8x128xi32>
    %72 = math.exp %69 : vector<1x8x128xf32>
    %cst_47 = arith.constant 0.000000e+00 : f32
    %73 = vector.broadcast %cst_47 : f32 to vector<1x8x128xf32>
    %74 = arith.select %71, %72, %73 : vector<1x8x128xi1>, vector<1x8x128xf32>
    %75 = arith.addf %57, %74 : vector<1x8x128xf32>
    %c0_48 = arith.constant 0 : index
    %c0_49 = arith.constant 0 : index
    %c2_50 = arith.constant 2 : index
    %c0_51 = arith.constant 0 : index
    %76 = vector.load %arg9[%c0_48, %c0_49, %c2_50, %c0_51] : memref<4x8x8x128xf32, #tpu.memory_space<vmem>>, vector<1x8x1x128xf32>
    %77 = vector.shape_cast %76 : vector<1x8x1x128xf32> to vector<8x1x128xf32>
    %78 = vector.broadcast %74 : vector<1x8x128xf32> to vector<8x8x128xf32>
    %79 = vector.broadcast %77 : vector<8x1x128xf32> to vector<8x8x128xf32>
    %80 = arith.mulf %78, %79 : vector<8x8x128xf32>
    %81 = arith.addf %63, %80 : vector<8x8x128xf32>
    %c0_52 = arith.constant 0 : index
    %c0_53 = arith.constant 0 : index
    %c3 = arith.constant 3 : index
    %c0_54 = arith.constant 0 : index
    %82 = vector.load %arg8[%c0_52, %c0_53, %c3, %c0_54] : memref<4x8x8x128xf32, #tpu.memory_space<vmem>>, vector<1x8x1x128xf32>
    %83 = vector.shape_cast %82 : vector<1x8x1x128xf32> to vector<8x1x128xf32>
    %84 = vector.broadcast %83 : vector<8x1x128xf32> to vector<8x8x128xf32>
    %85 = arith.mulf %33, %84 : vector<8x8x128xf32>
    %cst_55 = arith.constant dense<0.000000e+00> : vector<8x128xf32>
    %86 = vector.multi_reduction <add>, %85, %cst_55 [0] : vector<8x8x128xf32> to vector<8x128xf32>
    %87 = vector.shape_cast %86 : vector<8x128xf32> to vector<1x8x128xf32>
    %c3_i32 = arith.constant 3 : i32
    %88 = vector.broadcast %c3_i32 : i32 to vector<1x8x128xi32>
    %89 = arith.cmpi sge, %31, %88 : vector<1x8x128xi32>
    %90 = math.exp %87 : vector<1x8x128xf32>
    %cst_56 = arith.constant 0.000000e+00 : f32
    %91 = vector.broadcast %cst_56 : f32 to vector<1x8x128xf32>
    %92 = arith.select %89, %90, %91 : vector<1x8x128xi1>, vector<1x8x128xf32>
    %93 = arith.addf %75, %92 : vector<1x8x128xf32>
    %c0_57 = arith.constant 0 : index
    %c0_58 = arith.constant 0 : index
    %c3_59 = arith.constant 3 : index
    %c0_60 = arith.constant 0 : index
    %94 = vector.load %arg9[%c0_57, %c0_58, %c3_59, %c0_60] : memref<4x8x8x128xf32, #tpu.memory_space<vmem>>, vector<1x8x1x128xf32>
    %95 = vector.shape_cast %94 : vector<1x8x1x128xf32> to vector<8x1x128xf32>
    %96 = vector.broadcast %92 : vector<1x8x128xf32> to vector<8x8x128xf32>
    %97 = vector.broadcast %95 : vector<8x1x128xf32> to vector<8x8x128xf32>
    %98 = arith.mulf %96, %97 : vector<8x8x128xf32>
    %99 = arith.addf %81, %98 : vector<8x8x128xf32>
    %c0_61 = arith.constant 0 : index
    %c0_62 = arith.constant 0 : index
    %c4 = arith.constant 4 : index
    %c0_63 = arith.constant 0 : index
    %100 = vector.load %arg8[%c0_61, %c0_62, %c4, %c0_63] : memref<4x8x8x128xf32, #tpu.memory_space<vmem>>, vector<1x8x1x128xf32>
    %101 = vector.shape_cast %100 : vector<1x8x1x128xf32> to vector<8x1x128xf32>
    %102 = vector.broadcast %101 : vector<8x1x128xf32> to vector<8x8x128xf32>
    %103 = arith.mulf %33, %102 : vector<8x8x128xf32>
    %cst_64 = arith.constant dense<0.000000e+00> : vector<8x128xf32>
    %104 = vector.multi_reduction <add>, %103, %cst_64 [0] : vector<8x8x128xf32> to vector<8x128xf32>
    %105 = vector.shape_cast %104 : vector<8x128xf32> to vector<1x8x128xf32>
    %c4_i32 = arith.constant 4 : i32
    %106 = vector.broadcast %c4_i32 : i32 to vector<1x8x128xi32>
    %107 = arith.cmpi sge, %31, %106 : vector<1x8x128xi32>
    %108 = math.exp %105 : vector<1x8x128xf32>
    %cst_65 = arith.constant 0.000000e+00 : f32
    %109 = vector.broadcast %cst_65 : f32 to vector<1x8x128xf32>
    %110 = arith.select %107, %108, %109 : vector<1x8x128xi1>, vector<1x8x128xf32>
    %111 = arith.addf %93, %110 : vector<1x8x128xf32>
    %c0_66 = arith.constant 0 : index
    %c0_67 = arith.constant 0 : index
    %c4_68 = arith.constant 4 : index
    %c0_69 = arith.constant 0 : index
    %112 = vector.load %arg9[%c0_66, %c0_67, %c4_68, %c0_69] : memref<4x8x8x128xf32, #tpu.memory_space<vmem>>, vector<1x8x1x128xf32>
    %113 = vector.shape_cast %112 : vector<1x8x1x128xf32> to vector<8x1x128xf32>
    %114 = vector.broadcast %110 : vector<1x8x128xf32> to vector<8x8x128xf32>
    %115 = vector.broadcast %113 : vector<8x1x128xf32> to vector<8x8x128xf32>
    %116 = arith.mulf %114, %115 : vector<8x8x128xf32>
    %117 = arith.addf %99, %116 : vector<8x8x128xf32>
    %c0_70 = arith.constant 0 : index
    %c0_71 = arith.constant 0 : index
    %c5 = arith.constant 5 : index
    %c0_72 = arith.constant 0 : index
    %118 = vector.load %arg8[%c0_70, %c0_71, %c5, %c0_72] : memref<4x8x8x128xf32, #tpu.memory_space<vmem>>, vector<1x8x1x128xf32>
    %119 = vector.shape_cast %118 : vector<1x8x1x128xf32> to vector<8x1x128xf32>
    %120 = vector.broadcast %119 : vector<8x1x128xf32> to vector<8x8x128xf32>
    %121 = arith.mulf %33, %120 : vector<8x8x128xf32>
    %cst_73 = arith.constant dense<0.000000e+00> : vector<8x128xf32>
    %122 = vector.multi_reduction <add>, %121, %cst_73 [0] : vector<8x8x128xf32> to vector<8x128xf32>
    %123 = vector.shape_cast %122 : vector<8x128xf32> to vector<1x8x128xf32>
    %c5_i32 = arith.constant 5 : i32
    %124 = vector.broadcast %c5_i32 : i32 to vector<1x8x128xi32>
    %125 = arith.cmpi sge, %31, %124 : vector<1x8x128xi32>
    %126 = math.exp %123 : vector<1x8x128xf32>
    %cst_74 = arith.constant 0.000000e+00 : f32
    %127 = vector.broadcast %cst_74 : f32 to vector<1x8x128xf32>
    %128 = arith.select %125, %126, %127 : vector<1x8x128xi1>, vector<1x8x128xf32>
    %129 = arith.addf %111, %128 : vector<1x8x128xf32>
    %c0_75 = arith.constant 0 : index
    %c0_76 = arith.constant 0 : index
    %c5_77 = arith.constant 5 : index
    %c0_78 = arith.constant 0 : index
    %130 = vector.load %arg9[%c0_75, %c0_76, %c5_77, %c0_78] : memref<4x8x8x128xf32, #tpu.memory_space<vmem>>, vector<1x8x1x128xf32>
    %131 = vector.shape_cast %130 : vector<1x8x1x128xf32> to vector<8x1x128xf32>
    %132 = vector.broadcast %128 : vector<1x8x128xf32> to vector<8x8x128xf32>
    %133 = vector.broadcast %131 : vector<8x1x128xf32> to vector<8x8x128xf32>
    %134 = arith.mulf %132, %133 : vector<8x8x128xf32>
    %135 = arith.addf %117, %134 : vector<8x8x128xf32>
    %c0_79 = arith.constant 0 : index
    %c0_80 = arith.constant 0 : index
    %c6 = arith.constant 6 : index
    %c0_81 = arith.constant 0 : index
    %136 = vector.load %arg8[%c0_79, %c0_80, %c6, %c0_81] : memref<4x8x8x128xf32, #tpu.memory_space<vmem>>, vector<1x8x1x128xf32>
    %137 = vector.shape_cast %136 : vector<1x8x1x128xf32> to vector<8x1x128xf32>
    %138 = vector.broadcast %137 : vector<8x1x128xf32> to vector<8x8x128xf32>
    %139 = arith.mulf %33, %138 : vector<8x8x128xf32>
    %cst_82 = arith.constant dense<0.000000e+00> : vector<8x128xf32>
    %140 = vector.multi_reduction <add>, %139, %cst_82 [0] : vector<8x8x128xf32> to vector<8x128xf32>
    %141 = vector.shape_cast %140 : vector<8x128xf32> to vector<1x8x128xf32>
    %c6_i32 = arith.constant 6 : i32
    %142 = vector.broadcast %c6_i32 : i32 to vector<1x8x128xi32>
    %143 = arith.cmpi sge, %31, %142 : vector<1x8x128xi32>
    %144 = math.exp %141 : vector<1x8x128xf32>
    %cst_83 = arith.constant 0.000000e+00 : f32
    %145 = vector.broadcast %cst_83 : f32 to vector<1x8x128xf32>
    %146 = arith.select %143, %144, %145 : vector<1x8x128xi1>, vector<1x8x128xf32>
    %147 = arith.addf %129, %146 : vector<1x8x128xf32>
    %c0_84 = arith.constant 0 : index
    %c0_85 = arith.constant 0 : index
    %c6_86 = arith.constant 6 : index
    %c0_87 = arith.constant 0 : index
    %148 = vector.load %arg9[%c0_84, %c0_85, %c6_86, %c0_87] : memref<4x8x8x128xf32, #tpu.memory_space<vmem>>, vector<1x8x1x128xf32>
    %149 = vector.shape_cast %148 : vector<1x8x1x128xf32> to vector<8x1x128xf32>
    %150 = vector.broadcast %146 : vector<1x8x128xf32> to vector<8x8x128xf32>
    %151 = vector.broadcast %149 : vector<8x1x128xf32> to vector<8x8x128xf32>
    %152 = arith.mulf %150, %151 : vector<8x8x128xf32>
    %153 = arith.addf %135, %152 : vector<8x8x128xf32>
    %c0_88 = arith.constant 0 : index
    %c0_89 = arith.constant 0 : index
    %c7 = arith.constant 7 : index
    %c0_90 = arith.constant 0 : index
    %154 = vector.load %arg8[%c0_88, %c0_89, %c7, %c0_90] : memref<4x8x8x128xf32, #tpu.memory_space<vmem>>, vector<1x8x1x128xf32>
    %155 = vector.shape_cast %154 : vector<1x8x1x128xf32> to vector<8x1x128xf32>
    %156 = vector.broadcast %155 : vector<8x1x128xf32> to vector<8x8x128xf32>
    %157 = arith.mulf %33, %156 : vector<8x8x128xf32>
    %cst_91 = arith.constant dense<0.000000e+00> : vector<8x128xf32>
    %158 = vector.multi_reduction <add>, %157, %cst_91 [0] : vector<8x8x128xf32> to vector<8x128xf32>
    %159 = vector.shape_cast %158 : vector<8x128xf32> to vector<1x8x128xf32>
    %c7_i32 = arith.constant 7 : i32
    %160 = vector.broadcast %c7_i32 : i32 to vector<1x8x128xi32>
    %161 = arith.cmpi sge, %31, %160 : vector<1x8x128xi32>
    %162 = math.exp %159 : vector<1x8x128xf32>
    %cst_92 = arith.constant 0.000000e+00 : f32
    %163 = vector.broadcast %cst_92 : f32 to vector<1x8x128xf32>
    %164 = arith.select %161, %162, %163 : vector<1x8x128xi1>, vector<1x8x128xf32>
    %165 = arith.addf %147, %164 : vector<1x8x128xf32>
    %c0_93 = arith.constant 0 : index
    %c0_94 = arith.constant 0 : index
    %c7_95 = arith.constant 7 : index
    %c0_96 = arith.constant 0 : index
    %166 = vector.load %arg9[%c0_93, %c0_94, %c7_95, %c0_96] : memref<4x8x8x128xf32, #tpu.memory_space<vmem>>, vector<1x8x1x128xf32>
    %167 = vector.shape_cast %166 : vector<1x8x1x128xf32> to vector<8x1x128xf32>
    %168 = vector.broadcast %164 : vector<1x8x128xf32> to vector<8x8x128xf32>
    %169 = vector.broadcast %167 : vector<8x1x128xf32> to vector<8x8x128xf32>
    %170 = arith.mulf %168, %169 : vector<8x8x128xf32>
    %171 = arith.addf %153, %170 : vector<8x8x128xf32>
    %172 = tpu.reciprocal %165 : vector<1x8x128xf32> -> vector<1x8x128xf32>
    %173 = vector.broadcast %172 : vector<1x8x128xf32> to vector<8x8x128xf32>
    %174 = arith.mulf %171, %173 : vector<8x8x128xf32>
    %c0_97 = arith.constant 0 : index
    %c0_98 = arith.constant 0 : index
    %c0_99 = arith.constant 0 : index
    %c0_100 = arith.constant 0 : index
    %175 = vector.load %arg10[%c0_97, %c0_98, %c0_99, %c0_100] : memref<4x8x8x128xf32, #tpu.memory_space<vmem>>, vector<1x8x8x128xf32>
    %176 = vector.shape_cast %175 : vector<1x8x8x128xf32> to vector<8x8x128xf32>
    %177 = vector.shape_cast %174 : vector<8x8x128xf32> to vector<1x8x8x128xf32>
    tpu.vector_store %arg10[%c0_97, %c0_98, %c0_99, %c0_100], %177 {strides = array<i32>} : memref<4x8x8x128xf32, #tpu.memory_space<vmem>>, vector<1x8x8x128xf32>,
    %c1_101 = arith.constant 1 : index
    %c0_102 = arith.constant 0 : index
    %c0_103 = arith.constant 0 : index
    %c0_104 = arith.constant 0 : index
    %178 = vector.load %arg7[%c1_101, %c0_102, %c0_103, %c0_104] : memref<4x8x8x128xf32, #tpu.memory_space<vmem>>, vector<1x8x8x128xf32>
    %179 = vector.shape_cast %178 : vector<1x8x8x128xf32> to vector<8x8x128xf32>
    %c1_105 = arith.constant 1 : index
    %c0_106 = arith.constant 0 : index
    %c0_107 = arith.constant 0 : index
    %c0_108 = arith.constant 0 : index
    %180 = vector.load %arg8[%c1_105, %c0_106, %c0_107, %c0_108] : memref<4x8x8x128xf32, #tpu.memory_space<vmem>>, vector<1x8x1x128xf32>
    %181 = vector.shape_cast %180 : vector<1x8x1x128xf32> to vector<8x1x128xf32>
    %182 = vector.broadcast %181 : vector<8x1x128xf32> to vector<8x8x128xf32>
    %183 = arith.mulf %179, %182 : vector<8x8x128xf32>
    %cst_109 = arith.constant dense<0.000000e+00> : vector<8x128xf32>
    %184 = vector.multi_reduction <add>, %183, %cst_109 [0] : vector<8x8x128xf32> to vector<8x128xf32>
    %185 = vector.shape_cast %184 : vector<8x128xf32> to vector<1x8x128xf32>
    %186 = math.exp %185 : vector<1x8x128xf32>
    %c1_110 = arith.constant 1 : index
    %c0_111 = arith.constant 0 : index
    %c0_112 = arith.constant 0 : index
    %c0_113 = arith.constant 0 : index
    %187 = vector.load %arg9[%c1_110, %c0_111, %c0_112, %c0_113] : memref<4x8x8x128xf32, #tpu.memory_space<vmem>>, vector<1x8x1x128xf32>
    %188 = vector.shape_cast %187 : vector<1x8x1x128xf32> to vector<8x1x128xf32>
    %189 = vector.broadcast %186 : vector<1x8x128xf32> to vector<8x8x128xf32>
    %190 = vector.broadcast %188 : vector<8x1x128xf32> to vector<8x8x128xf32>
    %191 = arith.mulf %189, %190 : vector<8x8x128xf32>
    %c1_114 = arith.constant 1 : index
    %c0_115 = arith.constant 0 : index
    %c1_116 = arith.constant 1 : index
    %c0_117 = arith.constant 0 : index
    %192 = vector.load %arg8[%c1_114, %c0_115, %c1_116, %c0_117] : memref<4x8x8x128xf32, #tpu.memory_space<vmem>>, vector<1x8x1x128xf32>
    %193 = vector.shape_cast %192 : vector<1x8x1x128xf32> to vector<8x1x128xf32>
    %194 = vector.broadcast %193 : vector<8x1x128xf32> to vector<8x8x128xf32>
    %195 = arith.mulf %179, %194 : vector<8x8x128xf32>
    %cst_118 = arith.constant dense<0.000000e+00> : vector<8x128xf32>
    %196 = vector.multi_reduction <add>, %195, %cst_118 [0] : vector<8x8x128xf32> to vector<8x128xf32>
    %197 = vector.shape_cast %196 : vector<8x128xf32> to vector<1x8x128xf32>
    %c1_i32_119 = arith.constant 1 : i32
    %198 = vector.broadcast %c1_i32_119 : i32 to vector<1x8x128xi32>
    %199 = arith.cmpi sge, %31, %198 : vector<1x8x128xi32>
    %200 = math.exp %197 : vector<1x8x128xf32>
    %cst_120 = arith.constant 0.000000e+00 : f32
    %201 = vector.broadcast %cst_120 : f32 to vector<1x8x128xf32>
    %202 = arith.select %199, %200, %201 : vector<1x8x128xi1>, vector<1x8x128xf32>
    %203 = arith.addf %186, %202 : vector<1x8x128xf32>
    %c1_121 = arith.constant 1 : index
    %c0_122 = arith.constant 0 : index
    %c1_123 = arith.constant 1 : index
    %c0_124 = arith.constant 0 : index
    %204 = vector.load %arg9[%c1_121, %c0_122, %c1_123, %c0_124] : memref<4x8x8x128xf32, #tpu.memory_space<vmem>>, vector<1x8x1x128xf32>
    %205 = vector.shape_cast %204 : vector<1x8x1x128xf32> to vector<8x1x128xf32>
    %206 = vector.broadcast %202 : vector<1x8x128xf32> to vector<8x8x128xf32>
    %207 = vector.broadcast %205 : vector<8x1x128xf32> to vector<8x8x128xf32>
    %208 = arith.mulf %206, %207 : vector<8x8x128xf32>
    %209 = arith.addf %191, %208 : vector<8x8x128xf32>
    %c1_125 = arith.constant 1 : index
    %c0_126 = arith.constant 0 : index
    %c2_127 = arith.constant 2 : index
    %c0_128 = arith.constant 0 : index
    %210 = vector.load %arg8[%c1_125, %c0_126, %c2_127, %c0_128] : memref<4x8x8x128xf32, #tpu.memory_space<vmem>>, vector<1x8x1x128xf32>
    %211 = vector.shape_cast %210 : vector<1x8x1x128xf32> to vector<8x1x128xf32>
    %212 = vector.broadcast %211 : vector<8x1x128xf32> to vector<8x8x128xf32>
    %213 = arith.mulf %179, %212 : vector<8x8x128xf32>
    %cst_129 = arith.constant dense<0.000000e+00> : vector<8x128xf32>
    %214 = vector.multi_reduction <add>, %213, %cst_129 [0] : vector<8x8x128xf32> to vector<8x128xf32>
    %215 = vector.shape_cast %214 : vector<8x128xf32> to vector<1x8x128xf32>
    %c2_i32_130 = arith.constant 2 : i32
    %216 = vector.broadcast %c2_i32_130 : i32 to vector<1x8x128xi32>
    %217 = arith.cmpi sge, %31, %216 : vector<1x8x128xi32>
    %218 = math.exp %215 : vector<1x8x128xf32>
    %cst_131 = arith.constant 0.000000e+00 : f32
    %219 = vector.broadcast %cst_131 : f32 to vector<1x8x128xf32>
    %220 = arith.select %217, %218, %219 : vector<1x8x128xi1>, vector<1x8x128xf32>
    %221 = arith.addf %203, %220 : vector<1x8x128xf32>
    %c1_132 = arith.constant 1 : index
    %c0_133 = arith.constant 0 : index
    %c2_134 = arith.constant 2 : index
    %c0_135 = arith.constant 0 : index
    %222 = vector.load %arg9[%c1_132, %c0_133, %c2_134, %c0_135] : memref<4x8x8x128xf32, #tpu.memory_space<vmem>>, vector<1x8x1x128xf32>
    %223 = vector.shape_cast %222 : vector<1x8x1x128xf32> to vector<8x1x128xf32>
    %224 = vector.broadcast %220 : vector<1x8x128xf32> to vector<8x8x128xf32>
    %225 = vector.broadcast %223 : vector<8x1x128xf32> to vector<8x8x128xf32>
    %226 = arith.mulf %224, %225 : vector<8x8x128xf32>
    %227 = arith.addf %209, %226 : vector<8x8x128xf32>
    %c1_136 = arith.constant 1 : index
    %c0_137 = arith.constant 0 : index
    %c3_138 = arith.constant 3 : index
    %c0_139 = arith.constant 0 : index
    %228 = vector.load %arg8[%c1_136, %c0_137, %c3_138, %c0_139] : memref<4x8x8x128xf32, #tpu.memory_space<vmem>>, vector<1x8x1x128xf32>
    %229 = vector.shape_cast %228 : vector<1x8x1x128xf32> to vector<8x1x128xf32>
    %230 = vector.broadcast %229 : vector<8x1x128xf32> to vector<8x8x128xf32>
    %231 = arith.mulf %179, %230 : vector<8x8x128xf32>
    %cst_140 = arith.constant dense<0.000000e+00> : vector<8x128xf32>
    %232 = vector.multi_reduction <add>, %231, %cst_140 [0] : vector<8x8x128xf32> to vector<8x128xf32>
    %233 = vector.shape_cast %232 : vector<8x128xf32> to vector<1x8x128xf32>
    %c3_i32_141 = arith.constant 3 : i32
    %234 = vector.broadcast %c3_i32_141 : i32 to vector<1x8x128xi32>
    %235 = arith.cmpi sge, %31, %234 : vector<1x8x128xi32>
    %236 = math.exp %233 : vector<1x8x128xf32>
    %cst_142 = arith.constant 0.000000e+00 : f32
    %237 = vector.broadcast %cst_142 : f32 to vector<1x8x128xf32>
    %238 = arith.select %235, %236, %237 : vector<1x8x128xi1>, vector<1x8x128xf32>
    %239 = arith.addf %221, %238 : vector<1x8x128xf32>
    %c1_143 = arith.constant 1 : index
    %c0_144 = arith.constant 0 : index
    %c3_145 = arith.constant 3 : index
    %c0_146 = arith.constant 0 : index
    %240 = vector.load %arg9[%c1_143, %c0_144, %c3_145, %c0_146] : memref<4x8x8x128xf32, #tpu.memory_space<vmem>>, vector<1x8x1x128xf32>
    %241 = vector.shape_cast %240 : vector<1x8x1x128xf32> to vector<8x1x128xf32>
    %242 = vector.broadcast %238 : vector<1x8x128xf32> to vector<8x8x128xf32>
    %243 = vector.broadcast %241 : vector<8x1x128xf32> to vector<8x8x128xf32>
    %244 = arith.mulf %242, %243 : vector<8x8x128xf32>
    %245 = arith.addf %227, %244 : vector<8x8x128xf32>
    %c1_147 = arith.constant 1 : index
    %c0_148 = arith.constant 0 : index
    %c4_149 = arith.constant 4 : index
    %c0_150 = arith.constant 0 : index
    %246 = vector.load %arg8[%c1_147, %c0_148, %c4_149, %c0_150] : memref<4x8x8x128xf32, #tpu.memory_space<vmem>>, vector<1x8x1x128xf32>
    %247 = vector.shape_cast %246 : vector<1x8x1x128xf32> to vector<8x1x128xf32>
    %248 = vector.broadcast %247 : vector<8x1x128xf32> to vector<8x8x128xf32>
    %249 = arith.mulf %179, %248 : vector<8x8x128xf32>
    %cst_151 = arith.constant dense<0.000000e+00> : vector<8x128xf32>
    %250 = vector.multi_reduction <add>, %249, %cst_151 [0] : vector<8x8x128xf32> to vector<8x128xf32>
    %251 = vector.shape_cast %250 : vector<8x128xf32> to vector<1x8x128xf32>
    %c4_i32_152 = arith.constant 4 : i32
    %252 = vector.broadcast %c4_i32_152 : i32 to vector<1x8x128xi32>
    %253 = arith.cmpi sge, %31, %252 : vector<1x8x128xi32>
    %254 = math.exp %251 : vector<1x8x128xf32>
    %cst_153 = arith.constant 0.000000e+00 : f32
    %255 = vector.broadcast %cst_153 : f32 to vector<1x8x128xf32>
    %256 = arith.select %253, %254, %255 : vector<1x8x128xi1>, vector<1x8x128xf32>
    %257 = arith.addf %239, %256 : vector<1x8x128xf32>
    %c1_154 = arith.constant 1 : index
    %c0_155 = arith.constant 0 : index
    %c4_156 = arith.constant 4 : index
    %c0_157 = arith.constant 0 : index
    %258 = vector.load %arg9[%c1_154, %c0_155, %c4_156, %c0_157] : memref<4x8x8x128xf32, #tpu.memory_space<vmem>>, vector<1x8x1x128xf32>
    %259 = vector.shape_cast %258 : vector<1x8x1x128xf32> to vector<8x1x128xf32>
    %260 = vector.broadcast %256 : vector<1x8x128xf32> to vector<8x8x128xf32>
    %261 = vector.broadcast %259 : vector<8x1x128xf32> to vector<8x8x128xf32>
    %262 = arith.mulf %260, %261 : vector<8x8x128xf32>
    %263 = arith.addf %245, %262 : vector<8x8x128xf32>
    %c1_158 = arith.constant 1 : index
    %c0_159 = arith.constant 0 : index
    %c5_160 = arith.constant 5 : index
    %c0_161 = arith.constant 0 : index
    %264 = vector.load %arg8[%c1_158, %c0_159, %c5_160, %c0_161] : memref<4x8x8x128xf32, #tpu.memory_space<vmem>>, vector<1x8x1x128xf32>
    %265 = vector.shape_cast %264 : vector<1x8x1x128xf32> to vector<8x1x128xf32>
    %266 = vector.broadcast %265 : vector<8x1x128xf32> to vector<8x8x128xf32>
    %267 = arith.mulf %179, %266 : vector<8x8x128xf32>
    %cst_162 = arith.constant dense<0.000000e+00> : vector<8x128xf32>
    %268 = vector.multi_reduction <add>, %267, %cst_162 [0] : vector<8x8x128xf32> to vector<8x128xf32>
    %269 = vector.shape_cast %268 : vector<8x128xf32> to vector<1x8x128xf32>
    %c5_i32_163 = arith.constant 5 : i32
    %270 = vector.broadcast %c5_i32_163 : i32 to vector<1x8x128xi32>
    %271 = arith.cmpi sge, %31, %270 : vector<1x8x128xi32>
    %272 = math.exp %269 : vector<1x8x128xf32>
    %cst_164 = arith.constant 0.000000e+00 : f32
    %273 = vector.broadcast %cst_164 : f32 to vector<1x8x128xf32>
    %274 = arith.select %271, %272, %273 : vector<1x8x128xi1>, vector<1x8x128xf32>
    %275 = arith.addf %257, %274 : vector<1x8x128xf32>
    %c1_165 = arith.constant 1 : index
    %c0_166 = arith.constant 0 : index
    %c5_167 = arith.constant 5 : index
    %c0_168 = arith.constant 0 : index
    %276 = vector.load %arg9[%c1_165, %c0_166, %c5_167, %c0_168] : memref<4x8x8x128xf32, #tpu.memory_space<vmem>>, vector<1x8x1x128xf32>
    %277 = vector.shape_cast %276 : vector<1x8x1x128xf32> to vector<8x1x128xf32>
    %278 = vector.broadcast %274 : vector<1x8x128xf32> to vector<8x8x128xf32>
    %279 = vector.broadcast %277 : vector<8x1x128xf32> to vector<8x8x128xf32>
    %280 = arith.mulf %278, %279 : vector<8x8x128xf32>
    %281 = arith.addf %263, %280 : vector<8x8x128xf32>
    %c1_169 = arith.constant 1 : index
    %c0_170 = arith.constant 0 : index
    %c6_171 = arith.constant 6 : index
    %c0_172 = arith.constant 0 : index
    %282 = vector.load %arg8[%c1_169, %c0_170, %c6_171, %c0_172] : memref<4x8x8x128xf32, #tpu.memory_space<vmem>>, vector<1x8x1x128xf32>
    %283 = vector.shape_cast %282 : vector<1x8x1x128xf32> to vector<8x1x128xf32>
    %284 = vector.broadcast %283 : vector<8x1x128xf32> to vector<8x8x128xf32>
    %285 = arith.mulf %179, %284 : vector<8x8x128xf32>
    %cst_173 = arith.constant dense<0.000000e+00> : vector<8x128xf32>
    %286 = vector.multi_reduction <add>, %285, %cst_173 [0] : vector<8x8x128xf32> to vector<8x128xf32>
    %287 = vector.shape_cast %286 : vector<8x128xf32> to vector<1x8x128xf32>
    %c6_i32_174 = arith.constant 6 : i32
    %288 = vector.broadcast %c6_i32_174 : i32 to vector<1x8x128xi32>
    %289 = arith.cmpi sge, %31, %288 : vector<1x8x128xi32>
    %290 = math.exp %287 : vector<1x8x128xf32>
    %cst_175 = arith.constant 0.000000e+00 : f32
    %291 = vector.broadcast %cst_175 : f32 to vector<1x8x128xf32>
    %292 = arith.select %289, %290, %291 : vector<1x8x128xi1>, vector<1x8x128xf32>
    %293 = arith.addf %275, %292 : vector<1x8x128xf32>
    %c1_176 = arith.constant 1 : index
    %c0_177 = arith.constant 0 : index
    %c6_178 = arith.constant 6 : index
    %c0_179 = arith.constant 0 : index
    %294 = vector.load %arg9[%c1_176, %c0_177, %c6_178, %c0_179] : memref<4x8x8x128xf32, #tpu.memory_space<vmem>>, vector<1x8x1x128xf32>
    %295 = vector.shape_cast %294 : vector<1x8x1x128xf32> to vector<8x1x128xf32>
    %296 = vector.broadcast %292 : vector<1x8x128xf32> to vector<8x8x128xf32>
    %297 = vector.broadcast %295 : vector<8x1x128xf32> to vector<8x8x128xf32>
    %298 = arith.mulf %296, %297 : vector<8x8x128xf32>
    %299 = arith.addf %281, %298 : vector<8x8x128xf32>
    %c1_180 = arith.constant 1 : index
    %c0_181 = arith.constant 0 : index
    %c7_182 = arith.constant 7 : index
    %c0_183 = arith.constant 0 : index
    %300 = vector.load %arg8[%c1_180, %c0_181, %c7_182, %c0_183] : memref<4x8x8x128xf32, #tpu.memory_space<vmem>>, vector<1x8x1x128xf32>
    %301 = vector.shape_cast %300 : vector<1x8x1x128xf32> to vector<8x1x128xf32>
    %302 = vector.broadcast %301 : vector<8x1x128xf32> to vector<8x8x128xf32>
    %303 = arith.mulf %179, %302 : vector<8x8x128xf32>
    %cst_184 = arith.constant dense<0.000000e+00> : vector<8x128xf32>
    %304 = vector.multi_reduction <add>, %303, %cst_184 [0] : vector<8x8x128xf32> to vector<8x128xf32>
    %305 = vector.shape_cast %304 : vector<8x128xf32> to vector<1x8x128xf32>
    %c7_i32_185 = arith.constant 7 : i32
    %306 = vector.broadcast %c7_i32_185 : i32 to vector<1x8x128xi32>
    %307 = arith.cmpi sge, %31, %306 : vector<1x8x128xi32>
    %308 = math.exp %305 : vector<1x8x128xf32>
    %cst_186 = arith.constant 0.000000e+00 : f32
    %309 = vector.broadcast %cst_186 : f32 to vector<1x8x128xf32>
    %310 = arith.select %307, %308, %309 : vector<1x8x128xi1>, vector<1x8x128xf32>
    %311 = arith.addf %293, %310 : vector<1x8x128xf32>
    %c1_187 = arith.constant 1 : index
    %c0_188 = arith.constant 0 : index
    %c7_189 = arith.constant 7 : index
    %c0_190 = arith.constant 0 : index
    %312 = vector.load %arg9[%c1_187, %c0_188, %c7_189, %c0_190] : memref<4x8x8x128xf32, #tpu.memory_space<vmem>>, vector<1x8x1x128xf32>
    %313 = vector.shape_cast %312 : vector<1x8x1x128xf32> to vector<8x1x128xf32>
    %314 = vector.broadcast %310 : vector<1x8x128xf32> to vector<8x8x128xf32>
    %315 = vector.broadcast %313 : vector<8x1x128xf32> to vector<8x8x128xf32>
    %316 = arith.mulf %314, %315 : vector<8x8x128xf32>
    %317 = arith.addf %299, %316 : vector<8x8x128xf32>
    %318 = tpu.reciprocal %311 : vector<1x8x128xf32> -> vector<1x8x128xf32>
    %319 = vector.broadcast %318 : vector<1x8x128xf32> to vector<8x8x128xf32>
    %320 = arith.mulf %317, %319 : vector<8x8x128xf32>
    %c1_191 = arith.constant 1 : index
    %c0_192 = arith.constant 0 : index
    %c0_193 = arith.constant 0 : index
    %c0_194 = arith.constant 0 : index
    %321 = vector.load %arg10[%c1_191, %c0_192, %c0_193, %c0_194] : memref<4x8x8x128xf32, #tpu.memory_space<vmem>>, vector<1x8x8x128xf32>
    %322 = vector.shape_cast %321 : vector<1x8x8x128xf32> to vector<8x8x128xf32>
    %323 = vector.shape_cast %320 : vector<8x8x128xf32> to vector<1x8x8x128xf32>
    tpu.vector_store %arg10[%c1_191, %c0_192, %c0_193, %c0_194], %323 {strides = array<i32>} : memref<4x8x8x128xf32, #tpu.memory_space<vmem>>, vector<1x8x8x128xf32>,
    %c2_195 = arith.constant 2 : index
    %c0_196 = arith.constant 0 : index
    %c0_197 = arith.constant 0 : index
    %c0_198 = arith.constant 0 : index
    %324 = vector.load %arg7[%c2_195, %c0_196, %c0_197, %c0_198] : memref<4x8x8x128xf32, #tpu.memory_space<vmem>>, vector<1x8x8x128xf32>
    %325 = vector.shape_cast %324 : vector<1x8x8x128xf32> to vector<8x8x128xf32>
    %c2_199 = arith.constant 2 : index
    %c0_200 = arith.constant 0 : index
    %c0_201 = arith.constant 0 : index
    %c0_202 = arith.constant 0 : index
    %326 = vector.load %arg8[%c2_199, %c0_200, %c0_201, %c0_202] : memref<4x8x8x128xf32, #tpu.memory_space<vmem>>, vector<1x8x1x128xf32>
    %327 = vector.shape_cast %326 : vector<1x8x1x128xf32> to vector<8x1x128xf32>
    %328 = vector.broadcast %327 : vector<8x1x128xf32> to vector<8x8x128xf32>
    %329 = arith.mulf %325, %328 : vector<8x8x128xf32>
    %cst_203 = arith.constant dense<0.000000e+00> : vector<8x128xf32>
    %330 = vector.multi_reduction <add>, %329, %cst_203 [0] : vector<8x8x128xf32> to vector<8x128xf32>
    %331 = vector.shape_cast %330 : vector<8x128xf32> to vector<1x8x128xf32>
    %332 = math.exp %331 : vector<1x8x128xf32>
    %c2_204 = arith.constant 2 : index
    %c0_205 = arith.constant 0 : index
    %c0_206 = arith.constant 0 : index
    %c0_207 = arith.constant 0 : index
    %333 = vector.load %arg9[%c2_204, %c0_205, %c0_206, %c0_207] : memref<4x8x8x128xf32, #tpu.memory_space<vmem>>, vector<1x8x1x128xf32>
    %334 = vector.shape_cast %333 : vector<1x8x1x128xf32> to vector<8x1x128xf32>
    %335 = vector.broadcast %332 : vector<1x8x128xf32> to vector<8x8x128xf32>
    %336 = vector.broadcast %334 : vector<8x1x128xf32> to vector<8x8x128xf32>
    %337 = arith.mulf %335, %336 : vector<8x8x128xf32>
    %c2_208 = arith.constant 2 : index
    %c0_209 = arith.constant 0 : index
    %c1_210 = arith.constant 1 : index
    %c0_211 = arith.constant 0 : index
    %338 = vector.load %arg8[%c2_208, %c0_209, %c1_210, %c0_211] : memref<4x8x8x128xf32, #tpu.memory_space<vmem>>, vector<1x8x1x128xf32>
    %339 = vector.shape_cast %338 : vector<1x8x1x128xf32> to vector<8x1x128xf32>
    %340 = vector.broadcast %339 : vector<8x1x128xf32> to vector<8x8x128xf32>
    %341 = arith.mulf %325, %340 : vector<8x8x128xf32>
    %cst_212 = arith.constant dense<0.000000e+00> : vector<8x128xf32>
    %342 = vector.multi_reduction <add>, %341, %cst_212 [0] : vector<8x8x128xf32> to vector<8x128xf32>
    %343 = vector.shape_cast %342 : vector<8x128xf32> to vector<1x8x128xf32>
    %c1_i32_213 = arith.constant 1 : i32
    %344 = vector.broadcast %c1_i32_213 : i32 to vector<1x8x128xi32>
    %345 = arith.cmpi sge, %31, %344 : vector<1x8x128xi32>
    %346 = math.exp %343 : vector<1x8x128xf32>
    %cst_214 = arith.constant 0.000000e+00 : f32
    %347 = vector.broadcast %cst_214 : f32 to vector<1x8x128xf32>
    %348 = arith.select %345, %346, %347 : vector<1x8x128xi1>, vector<1x8x128xf32>
    %349 = arith.addf %332, %348 : vector<1x8x128xf32>
    %c2_215 = arith.constant 2 : index
    %c0_216 = arith.constant 0 : index
    %c1_217 = arith.constant 1 : index
    %c0_218 = arith.constant 0 : index
    %350 = vector.load %arg9[%c2_215, %c0_216, %c1_217, %c0_218] : memref<4x8x8x128xf32, #tpu.memory_space<vmem>>, vector<1x8x1x128xf32>
    %351 = vector.shape_cast %350 : vector<1x8x1x128xf32> to vector<8x1x128xf32>
    %352 = vector.broadcast %348 : vector<1x8x128xf32> to vector<8x8x128xf32>
    %353 = vector.broadcast %351 : vector<8x1x128xf32> to vector<8x8x128xf32>
    %354 = arith.mulf %352, %353 : vector<8x8x128xf32>
    %355 = arith.addf %337, %354 : vector<8x8x128xf32>
    %c2_219 = arith.constant 2 : index
    %c0_220 = arith.constant 0 : index
    %c2_221 = arith.constant 2 : index
    %c0_222 = arith.constant 0 : index
    %356 = vector.load %arg8[%c2_219, %c0_220, %c2_221, %c0_222] : memref<4x8x8x128xf32, #tpu.memory_space<vmem>>, vector<1x8x1x128xf32>
    %357 = vector.shape_cast %356 : vector<1x8x1x128xf32> to vector<8x1x128xf32>
    %358 = vector.broadcast %357 : vector<8x1x128xf32> to vector<8x8x128xf32>
    %359 = arith.mulf %325, %358 : vector<8x8x128xf32>
    %cst_223 = arith.constant dense<0.000000e+00> : vector<8x128xf32>
    %360 = vector.multi_reduction <add>, %359, %cst_223 [0] : vector<8x8x128xf32> to vector<8x128xf32>
    %361 = vector.shape_cast %360 : vector<8x128xf32> to vector<1x8x128xf32>
    %c2_i32_224 = arith.constant 2 : i32
    %362 = vector.broadcast %c2_i32_224 : i32 to vector<1x8x128xi32>
    %363 = arith.cmpi sge, %31, %362 : vector<1x8x128xi32>
    %364 = math.exp %361 : vector<1x8x128xf32>
    %cst_225 = arith.constant 0.000000e+00 : f32
    %365 = vector.broadcast %cst_225 : f32 to vector<1x8x128xf32>
    %366 = arith.select %363, %364, %365 : vector<1x8x128xi1>, vector<1x8x128xf32>
    %367 = arith.addf %349, %366 : vector<1x8x128xf32>
    %c2_226 = arith.constant 2 : index
    %c0_227 = arith.constant 0 : index
    %c2_228 = arith.constant 2 : index
    %c0_229 = arith.constant 0 : index
    %368 = vector.load %arg9[%c2_226, %c0_227, %c2_228, %c0_229] : memref<4x8x8x128xf32, #tpu.memory_space<vmem>>, vector<1x8x1x128xf32>
    %369 = vector.shape_cast %368 : vector<1x8x1x128xf32> to vector<8x1x128xf32>
    %370 = vector.broadcast %366 : vector<1x8x128xf32> to vector<8x8x128xf32>
    %371 = vector.broadcast %369 : vector<8x1x128xf32> to vector<8x8x128xf32>
    %372 = arith.mulf %370, %371 : vector<8x8x128xf32>
    %373 = arith.addf %355, %372 : vector<8x8x128xf32>
    %c2_230 = arith.constant 2 : index
    %c0_231 = arith.constant 0 : index
    %c3_232 = arith.constant 3 : index
    %c0_233 = arith.constant 0 : index
    %374 = vector.load %arg8[%c2_230, %c0_231, %c3_232, %c0_233] : memref<4x8x8x128xf32, #tpu.memory_space<vmem>>, vector<1x8x1x128xf32>
    %375 = vector.shape_cast %374 : vector<1x8x1x128xf32> to vector<8x1x128xf32>
    %376 = vector.broadcast %375 : vector<8x1x128xf32> to vector<8x8x128xf32>
    %377 = arith.mulf %325, %376 : vector<8x8x128xf32>
    %cst_234 = arith.constant dense<0.000000e+00> : vector<8x128xf32>
    %378 = vector.multi_reduction <add>, %377, %cst_234 [0] : vector<8x8x128xf32> to vector<8x128xf32>
    %379 = vector.shape_cast %378 : vector<8x128xf32> to vector<1x8x128xf32>
    %c3_i32_235 = arith.constant 3 : i32
    %380 = vector.broadcast %c3_i32_235 : i32 to vector<1x8x128xi32>
    %381 = arith.cmpi sge, %31, %380 : vector<1x8x128xi32>
    %382 = math.exp %379 : vector<1x8x128xf32>
    %cst_236 = arith.constant 0.000000e+00 : f32
    %383 = vector.broadcast %cst_236 : f32 to vector<1x8x128xf32>
    %384 = arith.select %381, %382, %383 : vector<1x8x128xi1>, vector<1x8x128xf32>
    %385 = arith.addf %367, %384 : vector<1x8x128xf32>
    %c2_237 = arith.constant 2 : index
    %c0_238 = arith.constant 0 : index
    %c3_239 = arith.constant 3 : index
    %c0_240 = arith.constant 0 : index
    %386 = vector.load %arg9[%c2_237, %c0_238, %c3_239, %c0_240] : memref<4x8x8x128xf32, #tpu.memory_space<vmem>>, vector<1x8x1x128xf32>
    %387 = vector.shape_cast %386 : vector<1x8x1x128xf32> to vector<8x1x128xf32>
    %388 = vector.broadcast %384 : vector<1x8x128xf32> to vector<8x8x128xf32>
    %389 = vector.broadcast %387 : vector<8x1x128xf32> to vector<8x8x128xf32>
    %390 = arith.mulf %388, %389 : vector<8x8x128xf32>
    %391 = arith.addf %373, %390 : vector<8x8x128xf32>
    %c2_241 = arith.constant 2 : index
    %c0_242 = arith.constant 0 : index
    %c4_243 = arith.constant 4 : index
    %c0_244 = arith.constant 0 : index
    %392 = vector.load %arg8[%c2_241, %c0_242, %c4_243, %c0_244] : memref<4x8x8x128xf32, #tpu.memory_space<vmem>>, vector<1x8x1x128xf32>
    %393 = vector.shape_cast %392 : vector<1x8x1x128xf32> to vector<8x1x128xf32>
    %394 = vector.broadcast %393 : vector<8x1x128xf32> to vector<8x8x128xf32>
    %395 = arith.mulf %325, %394 : vector<8x8x128xf32>
    %cst_245 = arith.constant dense<0.000000e+00> : vector<8x128xf32>
    %396 = vector.multi_reduction <add>, %395, %cst_245 [0] : vector<8x8x128xf32> to vector<8x128xf32>
    %397 = vector.shape_cast %396 : vector<8x128xf32> to vector<1x8x128xf32>
    %c4_i32_246 = arith.constant 4 : i32
    %398 = vector.broadcast %c4_i32_246 : i32 to vector<1x8x128xi32>
    %399 = arith.cmpi sge, %31, %398 : vector<1x8x128xi32>
    %400 = math.exp %397 : vector<1x8x128xf32>
    %cst_247 = arith.constant 0.000000e+00 : f32
    %401 = vector.broadcast %cst_247 : f32 to vector<1x8x128xf32>
    %402 = arith.select %399, %400, %401 : vector<1x8x128xi1>, vector<1x8x128xf32>
    %403 = arith.addf %385, %402 : vector<1x8x128xf32>
    %c2_248 = arith.constant 2 : index
    %c0_249 = arith.constant 0 : index
    %c4_250 = arith.constant 4 : index
    %c0_251 = arith.constant 0 : index
    %404 = vector.load %arg9[%c2_248, %c0_249, %c4_250, %c0_251] : memref<4x8x8x128xf32, #tpu.memory_space<vmem>>, vector<1x8x1x128xf32>
    %405 = vector.shape_cast %404 : vector<1x8x1x128xf32> to vector<8x1x128xf32>
    %406 = vector.broadcast %402 : vector<1x8x128xf32> to vector<8x8x128xf32>
    %407 = vector.broadcast %405 : vector<8x1x128xf32> to vector<8x8x128xf32>
    %408 = arith.mulf %406, %407 : vector<8x8x128xf32>
    %409 = arith.addf %391, %408 : vector<8x8x128xf32>
    %c2_252 = arith.constant 2 : index
    %c0_253 = arith.constant 0 : index
    %c5_254 = arith.constant 5 : index
    %c0_255 = arith.constant 0 : index
    %410 = vector.load %arg8[%c2_252, %c0_253, %c5_254, %c0_255] : memref<4x8x8x128xf32, #tpu.memory_space<vmem>>, vector<1x8x1x128xf32>
    %411 = vector.shape_cast %410 : vector<1x8x1x128xf32> to vector<8x1x128xf32>
    %412 = vector.broadcast %411 : vector<8x1x128xf32> to vector<8x8x128xf32>
    %413 = arith.mulf %325, %412 : vector<8x8x128xf32>
    %cst_256 = arith.constant dense<0.000000e+00> : vector<8x128xf32>
    %414 = vector.multi_reduction <add>, %413, %cst_256 [0] : vector<8x8x128xf32> to vector<8x128xf32>
    %415 = vector.shape_cast %414 : vector<8x128xf32> to vector<1x8x128xf32>
    %c5_i32_257 = arith.constant 5 : i32
    %416 = vector.broadcast %c5_i32_257 : i32 to vector<1x8x128xi32>
    %417 = arith.cmpi sge, %31, %416 : vector<1x8x128xi32>
    %418 = math.exp %415 : vector<1x8x128xf32>
    %cst_258 = arith.constant 0.000000e+00 : f32
    %419 = vector.broadcast %cst_258 : f32 to vector<1x8x128xf32>
    %420 = arith.select %417, %418, %419 : vector<1x8x128xi1>, vector<1x8x128xf32>
    %421 = arith.addf %403, %420 : vector<1x8x128xf32>
    %c2_259 = arith.constant 2 : index
    %c0_260 = arith.constant 0 : index
    %c5_261 = arith.constant 5 : index
    %c0_262 = arith.constant 0 : index
    %422 = vector.load %arg9[%c2_259, %c0_260, %c5_261, %c0_262] : memref<4x8x8x128xf32, #tpu.memory_space<vmem>>, vector<1x8x1x128xf32>
    %423 = vector.shape_cast %422 : vector<1x8x1x128xf32> to vector<8x1x128xf32>
    %424 = vector.broadcast %420 : vector<1x8x128xf32> to vector<8x8x128xf32>
    %425 = vector.broadcast %423 : vector<8x1x128xf32> to vector<8x8x128xf32>
    %426 = arith.mulf %424, %425 : vector<8x8x128xf32>
    %427 = arith.addf %409, %426 : vector<8x8x128xf32>
    %c2_263 = arith.constant 2 : index
    %c0_264 = arith.constant 0 : index
    %c6_265 = arith.constant 6 : index
    %c0_266 = arith.constant 0 : index
    %428 = vector.load %arg8[%c2_263, %c0_264, %c6_265, %c0_266] : memref<4x8x8x128xf32, #tpu.memory_space<vmem>>, vector<1x8x1x128xf32>
    %429 = vector.shape_cast %428 : vector<1x8x1x128xf32> to vector<8x1x128xf32>
    %430 = vector.broadcast %429 : vector<8x1x128xf32> to vector<8x8x128xf32>
    %431 = arith.mulf %325, %430 : vector<8x8x128xf32>
    %cst_267 = arith.constant dense<0.000000e+00> : vector<8x128xf32>
    %432 = vector.multi_reduction <add>, %431, %cst_267 [0] : vector<8x8x128xf32> to vector<8x128xf32>
    %433 = vector.shape_cast %432 : vector<8x128xf32> to vector<1x8x128xf32>
    %c6_i32_268 = arith.constant 6 : i32
    %434 = vector.broadcast %c6_i32_268 : i32 to vector<1x8x128xi32>
    %435 = arith.cmpi sge, %31, %434 : vector<1x8x128xi32>
    %436 = math.exp %433 : vector<1x8x128xf32>
    %cst_269 = arith.constant 0.000000e+00 : f32
    %437 = vector.broadcast %cst_269 : f32 to vector<1x8x128xf32>
    %438 = arith.select %435, %436, %437 : vector<1x8x128xi1>, vector<1x8x128xf32>
    %439 = arith.addf %421, %438 : vector<1x8x128xf32>
    %c2_270 = arith.constant 2 : index
    %c0_271 = arith.constant 0 : index
    %c6_272 = arith.constant 6 : index
    %c0_273 = arith.constant 0 : index
    %440 = vector.load %arg9[%c2_270, %c0_271, %c6_272, %c0_273] : memref<4x8x8x128xf32, #tpu.memory_space<vmem>>, vector<1x8x1x128xf32>
    %441 = vector.shape_cast %440 : vector<1x8x1x128xf32> to vector<8x1x128xf32>
    %442 = vector.broadcast %438 : vector<1x8x128xf32> to vector<8x8x128xf32>
    %443 = vector.broadcast %441 : vector<8x1x128xf32> to vector<8x8x128xf32>
    %444 = arith.mulf %442, %443 : vector<8x8x128xf32>
    %445 = arith.addf %427, %444 : vector<8x8x128xf32>
    %c2_274 = arith.constant 2 : index
    %c0_275 = arith.constant 0 : index
    %c7_276 = arith.constant 7 : index
    %c0_277 = arith.constant 0 : index
    %446 = vector.load %arg8[%c2_274, %c0_275, %c7_276, %c0_277] : memref<4x8x8x128xf32, #tpu.memory_space<vmem>>, vector<1x8x1x128xf32>
    %447 = vector.shape_cast %446 : vector<1x8x1x128xf32> to vector<8x1x128xf32>
    %448 = vector.broadcast %447 : vector<8x1x128xf32> to vector<8x8x128xf32>
    %449 = arith.mulf %325, %448 : vector<8x8x128xf32>
    %cst_278 = arith.constant dense<0.000000e+00> : vector<8x128xf32>
    %450 = vector.multi_reduction <add>, %449, %cst_278 [0] : vector<8x8x128xf32> to vector<8x128xf32>
    %451 = vector.shape_cast %450 : vector<8x128xf32> to vector<1x8x128xf32>
    %c7_i32_279 = arith.constant 7 : i32
    %452 = vector.broadcast %c7_i32_279 : i32 to vector<1x8x128xi32>
    %453 = arith.cmpi sge, %31, %452 : vector<1x8x128xi32>
    %454 = math.exp %451 : vector<1x8x128xf32>
    %cst_280 = arith.constant 0.000000e+00 : f32
    %455 = vector.broadcast %cst_280 : f32 to vector<1x8x128xf32>
    %456 = arith.select %453, %454, %455 : vector<1x8x128xi1>, vector<1x8x128xf32>
    %457 = arith.addf %439, %456 : vector<1x8x128xf32>
    %c2_281 = arith.constant 2 : index
    %c0_282 = arith.constant 0 : index
    %c7_283 = arith.constant 7 : index
    %c0_284 = arith.constant 0 : index
    %458 = vector.load %arg9[%c2_281, %c0_282, %c7_283, %c0_284] : memref<4x8x8x128xf32, #tpu.memory_space<vmem>>, vector<1x8x1x128xf32>
    %459 = vector.shape_cast %458 : vector<1x8x1x128xf32> to vector<8x1x128xf32>
    %460 = vector.broadcast %456 : vector<1x8x128xf32> to vector<8x8x128xf32>
    %461 = vector.broadcast %459 : vector<8x1x128xf32> to vector<8x8x128xf32>
    %462 = arith.mulf %460, %461 : vector<8x8x128xf32>
    %463 = arith.addf %445, %462 : vector<8x8x128xf32>
    %464 = tpu.reciprocal %457 : vector<1x8x128xf32> -> vector<1x8x128xf32>
    %465 = vector.broadcast %464 : vector<1x8x128xf32> to vector<8x8x128xf32>
    %466 = arith.mulf %463, %465 : vector<8x8x128xf32>
    %c2_285 = arith.constant 2 : index
    %c0_286 = arith.constant 0 : index
    %c0_287 = arith.constant 0 : index
    %c0_288 = arith.constant 0 : index
    %467 = vector.load %arg10[%c2_285, %c0_286, %c0_287, %c0_288] : memref<4x8x8x128xf32, #tpu.memory_space<vmem>>, vector<1x8x8x128xf32>
    %468 = vector.shape_cast %467 : vector<1x8x8x128xf32> to vector<8x8x128xf32>
    %469 = vector.shape_cast %466 : vector<8x8x128xf32> to vector<1x8x8x128xf32>
    tpu.vector_store %arg10[%c2_285, %c0_286, %c0_287, %c0_288], %469 {strides = array<i32>} : memref<4x8x8x128xf32, #tpu.memory_space<vmem>>, vector<1x8x8x128xf32>,
    %c3_289 = arith.constant 3 : index
    %c0_290 = arith.constant 0 : index
    %c0_291 = arith.constant 0 : index
    %c0_292 = arith.constant 0 : index
    %470 = vector.load %arg7[%c3_289, %c0_290, %c0_291, %c0_292] : memref<4x8x8x128xf32, #tpu.memory_space<vmem>>, vector<1x8x8x128xf32>
    %471 = vector.shape_cast %470 : vector<1x8x8x128xf32> to vector<8x8x128xf32>
    %c3_293 = arith.constant 3 : index
    %c0_294 = arith.constant 0 : index
    %c0_295 = arith.constant 0 : index
    %c0_296 = arith.constant 0 : index
    %472 = vector.load %arg8[%c3_293, %c0_294, %c0_295, %c0_296] : memref<4x8x8x128xf32, #tpu.memory_space<vmem>>, vector<1x8x1x128xf32>
    %473 = vector.shape_cast %472 : vector<1x8x1x128xf32> to vector<8x1x128xf32>
    %474 = vector.broadcast %473 : vector<8x1x128xf32> to vector<8x8x128xf32>
    %475 = arith.mulf %471, %474 : vector<8x8x128xf32>
    %cst_297 = arith.constant dense<0.000000e+00> : vector<8x128xf32>
    %476 = vector.multi_reduction <add>, %475, %cst_297 [0] : vector<8x8x128xf32> to vector<8x128xf32>
    %477 = vector.shape_cast %476 : vector<8x128xf32> to vector<1x8x128xf32>
    %478 = math.exp %477 : vector<1x8x128xf32>
    %c3_298 = arith.constant 3 : index
    %c0_299 = arith.constant 0 : index
    %c0_300 = arith.constant 0 : index
    %c0_301 = arith.constant 0 : index
    %479 = vector.load %arg9[%c3_298, %c0_299, %c0_300, %c0_301] : memref<4x8x8x128xf32, #tpu.memory_space<vmem>>, vector<1x8x1x128xf32>
    %480 = vector.shape_cast %479 : vector<1x8x1x128xf32> to vector<8x1x128xf32>
    %481 = vector.broadcast %478 : vector<1x8x128xf32> to vector<8x8x128xf32>
    %482 = vector.broadcast %480 : vector<8x1x128xf32> to vector<8x8x128xf32>
    %483 = arith.mulf %481, %482 : vector<8x8x128xf32>
    %c3_302 = arith.constant 3 : index
    %c0_303 = arith.constant 0 : index
    %c1_304 = arith.constant 1 : index
    %c0_305 = arith.constant 0 : index
    %484 = vector.load %arg8[%c3_302, %c0_303, %c1_304, %c0_305] : memref<4x8x8x128xf32, #tpu.memory_space<vmem>>, vector<1x8x1x128xf32>
    %485 = vector.shape_cast %484 : vector<1x8x1x128xf32> to vector<8x1x128xf32>
    %486 = vector.broadcast %485 : vector<8x1x128xf32> to vector<8x8x128xf32>
    %487 = arith.mulf %471, %486 : vector<8x8x128xf32>
    %cst_306 = arith.constant dense<0.000000e+00> : vector<8x128xf32>
    %488 = vector.multi_reduction <add>, %487, %cst_306 [0] : vector<8x8x128xf32> to vector<8x128xf32>
    %489 = vector.shape_cast %488 : vector<8x128xf32> to vector<1x8x128xf32>
    %c1_i32_307 = arith.constant 1 : i32
    %490 = vector.broadcast %c1_i32_307 : i32 to vector<1x8x128xi32>
    %491 = arith.cmpi sge, %31, %490 : vector<1x8x128xi32>
    %492 = math.exp %489 : vector<1x8x128xf32>
    %cst_308 = arith.constant 0.000000e+00 : f32
    %493 = vector.broadcast %cst_308 : f32 to vector<1x8x128xf32>
    %494 = arith.select %491, %492, %493 : vector<1x8x128xi1>, vector<1x8x128xf32>
    %495 = arith.addf %478, %494 : vector<1x8x128xf32>
    %c3_309 = arith.constant 3 : index
    %c0_310 = arith.constant 0 : index
    %c1_311 = arith.constant 1 : index
    %c0_312 = arith.constant 0 : index
    %496 = vector.load %arg9[%c3_309, %c0_310, %c1_311, %c0_312] : memref<4x8x8x128xf32, #tpu.memory_space<vmem>>, vector<1x8x1x128xf32>
    %497 = vector.shape_cast %496 : vector<1x8x1x128xf32> to vector<8x1x128xf32>
    %498 = vector.broadcast %494 : vector<1x8x128xf32> to vector<8x8x128xf32>
    %499 = vector.broadcast %497 : vector<8x1x128xf32> to vector<8x8x128xf32>
    %500 = arith.mulf %498, %499 : vector<8x8x128xf32>
    %501 = arith.addf %483, %500 : vector<8x8x128xf32>
    %c3_313 = arith.constant 3 : index
    %c0_314 = arith.constant 0 : index
    %c2_315 = arith.constant 2 : index
    %c0_316 = arith.constant 0 : index
    %502 = vector.load %arg8[%c3_313, %c0_314, %c2_315, %c0_316] : memref<4x8x8x128xf32, #tpu.memory_space<vmem>>, vector<1x8x1x128xf32>
    %503 = vector.shape_cast %502 : vector<1x8x1x128xf32> to vector<8x1x128xf32>
    %504 = vector.broadcast %503 : vector<8x1x128xf32> to vector<8x8x128xf32>
    %505 = arith.mulf %471, %504 : vector<8x8x128xf32>
    %cst_317 = arith.constant dense<0.000000e+00> : vector<8x128xf32>
    %506 = vector.multi_reduction <add>, %505, %cst_317 [0] : vector<8x8x128xf32> to vector<8x128xf32>
    %507 = vector.shape_cast %506 : vector<8x128xf32> to vector<1x8x128xf32>
    %c2_i32_318 = arith.constant 2 : i32
    %508 = vector.broadcast %c2_i32_318 : i32 to vector<1x8x128xi32>
    %509 = arith.cmpi sge, %31, %508 : vector<1x8x128xi32>
    %510 = math.exp %507 : vector<1x8x128xf32>
    %cst_319 = arith.constant 0.000000e+00 : f32
    %511 = vector.broadcast %cst_319 : f32 to vector<1x8x128xf32>
    %512 = arith.select %509, %510, %511 : vector<1x8x128xi1>, vector<1x8x128xf32>
    %513 = arith.addf %495, %512 : vector<1x8x128xf32>
    %c3_320 = arith.constant 3 : index
    %c0_321 = arith.constant 0 : index
    %c2_322 = arith.constant 2 : index
    %c0_323 = arith.constant 0 : index
    %514 = vector.load %arg9[%c3_320, %c0_321, %c2_322, %c0_323] : memref<4x8x8x128xf32, #tpu.memory_space<vmem>>, vector<1x8x1x128xf32>
    %515 = vector.shape_cast %514 : vector<1x8x1x128xf32> to vector<8x1x128xf32>
    %516 = vector.broadcast %512 : vector<1x8x128xf32> to vector<8x8x128xf32>
    %517 = vector.broadcast %515 : vector<8x1x128xf32> to vector<8x8x128xf32>
    %518 = arith.mulf %516, %517 : vector<8x8x128xf32>
    %519 = arith.addf %501, %518 : vector<8x8x128xf32>
    %c3_324 = arith.constant 3 : index
    %c0_325 = arith.constant 0 : index
    %c3_326 = arith.constant 3 : index
    %c0_327 = arith.constant 0 : index
    %520 = vector.load %arg8[%c3_324, %c0_325, %c3_326, %c0_327] : memref<4x8x8x128xf32, #tpu.memory_space<vmem>>, vector<1x8x1x128xf32>
    %521 = vector.shape_cast %520 : vector<1x8x1x128xf32> to vector<8x1x128xf32>
    %522 = vector.broadcast %521 : vector<8x1x128xf32> to vector<8x8x128xf32>
    %523 = arith.mulf %471, %522 : vector<8x8x128xf32>
    %cst_328 = arith.constant dense<0.000000e+00> : vector<8x128xf32>
    %524 = vector.multi_reduction <add>, %523, %cst_328 [0] : vector<8x8x128xf32> to vector<8x128xf32>
    %525 = vector.shape_cast %524 : vector<8x128xf32> to vector<1x8x128xf32>
    %c3_i32_329 = arith.constant 3 : i32
    %526 = vector.broadcast %c3_i32_329 : i32 to vector<1x8x128xi32>
    %527 = arith.cmpi sge, %31, %526 : vector<1x8x128xi32>
    %528 = math.exp %525 : vector<1x8x128xf32>
    %cst_330 = arith.constant 0.000000e+00 : f32
    %529 = vector.broadcast %cst_330 : f32 to vector<1x8x128xf32>
    %530 = arith.select %527, %528, %529 : vector<1x8x128xi1>, vector<1x8x128xf32>
    %531 = arith.addf %513, %530 : vector<1x8x128xf32>
    %c3_331 = arith.constant 3 : index
    %c0_332 = arith.constant 0 : index
    %c3_333 = arith.constant 3 : index
    %c0_334 = arith.constant 0 : index
    %532 = vector.load %arg9[%c3_331, %c0_332, %c3_333, %c0_334] : memref<4x8x8x128xf32, #tpu.memory_space<vmem>>, vector<1x8x1x128xf32>
    %533 = vector.shape_cast %532 : vector<1x8x1x128xf32> to vector<8x1x128xf32>
    %534 = vector.broadcast %530 : vector<1x8x128xf32> to vector<8x8x128xf32>
    %535 = vector.broadcast %533 : vector<8x1x128xf32> to vector<8x8x128xf32>
    %536 = arith.mulf %534, %535 : vector<8x8x128xf32>
    %537 = arith.addf %519, %536 : vector<8x8x128xf32>
    %c3_335 = arith.constant 3 : index
    %c0_336 = arith.constant 0 : index
    %c4_337 = arith.constant 4 : index
    %c0_338 = arith.constant 0 : index
    %538 = vector.load %arg8[%c3_335, %c0_336, %c4_337, %c0_338] : memref<4x8x8x128xf32, #tpu.memory_space<vmem>>, vector<1x8x1x128xf32>
    %539 = vector.shape_cast %538 : vector<1x8x1x128xf32> to vector<8x1x128xf32>
    %540 = vector.broadcast %539 : vector<8x1x128xf32> to vector<8x8x128xf32>
    %541 = arith.mulf %471, %540 : vector<8x8x128xf32>
    %cst_339 = arith.constant dense<0.000000e+00> : vector<8x128xf32>
    %542 = vector.multi_reduction <add>, %541, %cst_339 [0] : vector<8x8x128xf32> to vector<8x128xf32>
    %543 = vector.shape_cast %542 : vector<8x128xf32> to vector<1x8x128xf32>
    %c4_i32_340 = arith.constant 4 : i32
    %544 = vector.broadcast %c4_i32_340 : i32 to vector<1x8x128xi32>
    %545 = arith.cmpi sge, %31, %544 : vector<1x8x128xi32>
    %546 = math.exp %543 : vector<1x8x128xf32>
    %cst_341 = arith.constant 0.000000e+00 : f32
    %547 = vector.broadcast %cst_341 : f32 to vector<1x8x128xf32>
    %548 = arith.select %545, %546, %547 : vector<1x8x128xi1>, vector<1x8x128xf32>
    %549 = arith.addf %531, %548 : vector<1x8x128xf32>
    %c3_342 = arith.constant 3 : index
    %c0_343 = arith.constant 0 : index
    %c4_344 = arith.constant 4 : index
    %c0_345 = arith.constant 0 : index
    %550 = vector.load %arg9[%c3_342, %c0_343, %c4_344, %c0_345] : memref<4x8x8x128xf32, #tpu.memory_space<vmem>>, vector<1x8x1x128xf32>
    %551 = vector.shape_cast %550 : vector<1x8x1x128xf32> to vector<8x1x128xf32>
    %552 = vector.broadcast %548 : vector<1x8x128xf32> to vector<8x8x128xf32>
    %553 = vector.broadcast %551 : vector<8x1x128xf32> to vector<8x8x128xf32>
    %554 = arith.mulf %552, %553 : vector<8x8x128xf32>
    %555 = arith.addf %537, %554 : vector<8x8x128xf32>
    %c3_346 = arith.constant 3 : index
    %c0_347 = arith.constant 0 : index
    %c5_348 = arith.constant 5 : index
    %c0_349 = arith.constant 0 : index
    %556 = vector.load %arg8[%c3_346, %c0_347, %c5_348, %c0_349] : memref<4x8x8x128xf32, #tpu.memory_space<vmem>>, vector<1x8x1x128xf32>
    %557 = vector.shape_cast %556 : vector<1x8x1x128xf32> to vector<8x1x128xf32>
    %558 = vector.broadcast %557 : vector<8x1x128xf32> to vector<8x8x128xf32>
    %559 = arith.mulf %471, %558 : vector<8x8x128xf32>
    %cst_350 = arith.constant dense<0.000000e+00> : vector<8x128xf32>
    %560 = vector.multi_reduction <add>, %559, %cst_350 [0] : vector<8x8x128xf32> to vector<8x128xf32>
    %561 = vector.shape_cast %560 : vector<8x128xf32> to vector<1x8x128xf32>
    %c5_i32_351 = arith.constant 5 : i32
    %562 = vector.broadcast %c5_i32_351 : i32 to vector<1x8x128xi32>
    %563 = arith.cmpi sge, %31, %562 : vector<1x8x128xi32>
    %564 = math.exp %561 : vector<1x8x128xf32>
    %cst_352 = arith.constant 0.000000e+00 : f32
    %565 = vector.broadcast %cst_352 : f32 to vector<1x8x128xf32>
    %566 = arith.select %563, %564, %565 : vector<1x8x128xi1>, vector<1x8x128xf32>
    %567 = arith.addf %549, %566 : vector<1x8x128xf32>
    %c3_353 = arith.constant 3 : index
    %c0_354 = arith.constant 0 : index
    %c5_355 = arith.constant 5 : index
    %c0_356 = arith.constant 0 : index
    %568 = vector.load %arg9[%c3_353, %c0_354, %c5_355, %c0_356] : memref<4x8x8x128xf32, #tpu.memory_space<vmem>>, vector<1x8x1x128xf32>
    %569 = vector.shape_cast %568 : vector<1x8x1x128xf32> to vector<8x1x128xf32>
    %570 = vector.broadcast %566 : vector<1x8x128xf32> to vector<8x8x128xf32>
    %571 = vector.broadcast %569 : vector<8x1x128xf32> to vector<8x8x128xf32>
    %572 = arith.mulf %570, %571 : vector<8x8x128xf32>
    %573 = arith.addf %555, %572 : vector<8x8x128xf32>
    %c3_357 = arith.constant 3 : index
    %c0_358 = arith.constant 0 : index
    %c6_359 = arith.constant 6 : index
    %c0_360 = arith.constant 0 : index
    %574 = vector.load %arg8[%c3_357, %c0_358, %c6_359, %c0_360] : memref<4x8x8x128xf32, #tpu.memory_space<vmem>>, vector<1x8x1x128xf32>
    %575 = vector.shape_cast %574 : vector<1x8x1x128xf32> to vector<8x1x128xf32>
    %576 = vector.broadcast %575 : vector<8x1x128xf32> to vector<8x8x128xf32>
    %577 = arith.mulf %471, %576 : vector<8x8x128xf32>
    %cst_361 = arith.constant dense<0.000000e+00> : vector<8x128xf32>
    %578 = vector.multi_reduction <add>, %577, %cst_361 [0] : vector<8x8x128xf32> to vector<8x128xf32>
    %579 = vector.shape_cast %578 : vector<8x128xf32> to vector<1x8x128xf32>
    %c6_i32_362 = arith.constant 6 : i32
    %580 = vector.broadcast %c6_i32_362 : i32 to vector<1x8x128xi32>
    %581 = arith.cmpi sge, %31, %580 : vector<1x8x128xi32>
    %582 = math.exp %579 : vector<1x8x128xf32>
    %cst_363 = arith.constant 0.000000e+00 : f32
    %583 = vector.broadcast %cst_363 : f32 to vector<1x8x128xf32>
    %584 = arith.select %581, %582, %583 : vector<1x8x128xi1>, vector<1x8x128xf32>
    %585 = arith.addf %567, %584 : vector<1x8x128xf32>
    %c3_364 = arith.constant 3 : index
    %c0_365 = arith.constant 0 : index
    %c6_366 = arith.constant 6 : index
    %c0_367 = arith.constant 0 : index
    %586 = vector.load %arg9[%c3_364, %c0_365, %c6_366, %c0_367] : memref<4x8x8x128xf32, #tpu.memory_space<vmem>>, vector<1x8x1x128xf32>
    %587 = vector.shape_cast %586 : vector<1x8x1x128xf32> to vector<8x1x128xf32>
    %588 = vector.broadcast %584 : vector<1x8x128xf32> to vector<8x8x128xf32>
    %589 = vector.broadcast %587 : vector<8x1x128xf32> to vector<8x8x128xf32>
    %590 = arith.mulf %588, %589 : vector<8x8x128xf32>
    %591 = arith.addf %573, %590 : vector<8x8x128xf32>
    %c3_368 = arith.constant 3 : index
    %c0_369 = arith.constant 0 : index
    %c7_370 = arith.constant 7 : index
    %c0_371 = arith.constant 0 : index
    %592 = vector.load %arg8[%c3_368, %c0_369, %c7_370, %c0_371] : memref<4x8x8x128xf32, #tpu.memory_space<vmem>>, vector<1x8x1x128xf32>
    %593 = vector.shape_cast %592 : vector<1x8x1x128xf32> to vector<8x1x128xf32>
    %594 = vector.broadcast %593 : vector<8x1x128xf32> to vector<8x8x128xf32>
    %595 = arith.mulf %471, %594 : vector<8x8x128xf32>
    %cst_372 = arith.constant dense<0.000000e+00> : vector<8x128xf32>
    %596 = vector.multi_reduction <add>, %595, %cst_372 [0] : vector<8x8x128xf32> to vector<8x128xf32>
    %597 = vector.shape_cast %596 : vector<8x128xf32> to vector<1x8x128xf32>
    %c7_i32_373 = arith.constant 7 : i32
    %598 = vector.broadcast %c7_i32_373 : i32 to vector<1x8x128xi32>
    %599 = arith.cmpi sge, %31, %598 : vector<1x8x128xi32>
    %600 = math.exp %597 : vector<1x8x128xf32>
    %cst_374 = arith.constant 0.000000e+00 : f32
    %601 = vector.broadcast %cst_374 : f32 to vector<1x8x128xf32>
    %602 = arith.select %599, %600, %601 : vector<1x8x128xi1>, vector<1x8x128xf32>
    %603 = arith.addf %585, %602 : vector<1x8x128xf32>
    %c3_375 = arith.constant 3 : index
    %c0_376 = arith.constant 0 : index
    %c7_377 = arith.constant 7 : index
    %c0_378 = arith.constant 0 : index
    %604 = vector.load %arg9[%c3_375, %c0_376, %c7_377, %c0_378] : memref<4x8x8x128xf32, #tpu.memory_space<vmem>>, vector<1x8x1x128xf32>
    %605 = vector.shape_cast %604 : vector<1x8x1x128xf32> to vector<8x1x128xf32>
    %606 = vector.broadcast %602 : vector<1x8x128xf32> to vector<8x8x128xf32>
    %607 = vector.broadcast %605 : vector<8x1x128xf32> to vector<8x8x128xf32>
    %608 = arith.mulf %606, %607 : vector<8x8x128xf32>
    %609 = arith.addf %591, %608 : vector<8x8x128xf32>
    %610 = tpu.reciprocal %603 : vector<1x8x128xf32> -> vector<1x8x128xf32>
    %611 = vector.broadcast %610 : vector<1x8x128xf32> to vector<8x8x128xf32>
    %612 = arith.mulf %609, %611 : vector<8x8x128xf32>
    %c3_379 = arith.constant 3 : index
    %c0_380 = arith.constant 0 : index
    %c0_381 = arith.constant 0 : index
    %c0_382 = arith.constant 0 : index
    %613 = vector.load %arg10[%c3_379, %c0_380, %c0_381, %c0_382] : memref<4x8x8x128xf32, #tpu.memory_space<vmem>>, vector<1x8x8x128xf32>
    %614 = vector.shape_cast %613 : vector<1x8x8x128xf32> to vector<8x8x128xf32>
    %615 = vector.shape_cast %612 : vector<8x8x128xf32> to vector<1x8x8x128xf32>
    tpu.vector_store %arg10[%c3_379, %c0_380, %c0_381, %c0_382], %615 {strides = array<i32>} : memref<4x8x8x128xf32, #tpu.memory_space<vmem>>, vector<1x8x8x128xf32>,
    %c0_383 = arith.constant 0 : index
    %c0_384 = arith.constant 0 : index
    %c0_385 = arith.constant 0 : index
    %c0_386 = arith.constant 0 : index
    %616 = vector.load %arg10[%c0_383, %c0_384, %c0_385, %c0_386] : memref<4x8x8x128xf32, #tpu.memory_space<vmem>>, vector<4x8x8x128xf32>
    %617 = vector.shape_cast %616 : vector<4x8x8x128xf32> to vector<256x128xf32>
    %c0_387 = arith.constant 0 : index
    %c0_388 = arith.constant 0 : index
    %618 = vector.load %arg4[%c0_387, %c0_388] : memref<256x256xf32, #tpu.memory_space<vmem>>, vector<256x256xf32>
    %cst_389 = arith.constant dense<0.000000e+00> : vector<256x128xf32>
    %619 = tpu.matmul %618, %617, %cst_389 {dimension_numbers = #tpu.dot_dimension_numbers<[1], [0], [0], [1], [0, 0, 1, 1], [], []>} : vector<256x256xf32>, vector<256x128xf32>, vector<256x128xf32> -> vector<256x128xf32>
    %c0_390 = arith.constant 0 : index
    %c0_391 = arith.constant 0 : index
    %620 = vector.load %arg5[%c0_390, %c0_391] : memref<256x1xf32, #tpu.memory_space<vmem>>, vector<256x1xf32>
    %621 = vector.broadcast %620 : vector<256x1xf32> to vector<256x128xf32>
    %622 = arith.addf %619, %621 : vector<256x128xf32>
    %c0_392 = arith.constant 0 : index
    %c0_393 = arith.constant 0 : index
    %c0_394 = arith.constant 0 : index
    %623 = vector.load %arg6[%c0_392, %c0_393, %c0_394] : memref<1x256x128xf32, #tpu.memory_space<vmem>>, vector<1x256x128xf32>
    %624 = vector.shape_cast %623 : vector<1x256x128xf32> to vector<256x128xf32>
    %625 = vector.shape_cast %622 : vector<256x128xf32> to vector<1x256x128xf32>
    tpu.vector_store %arg6[%c0_392, %c0_393, %c0_394], %625 {strides = array<i32>} : memref<1x256x128xf32, #tpu.memory_space<vmem>>, vector<1x256x128xf32>,
    return
  }
  func.func @transform_0(%arg0: i32, %arg1: i32) -> (i32, i32, i32) {
    %c0_i32 = arith.constant 0 : i32
    %c0_i32_0 = arith.constant 0 : i32
    return %arg0, %c0_i32, %arg1 : i32, i32, i32
  }
  func.func @transform_1(%arg0: i32, %arg1: i32) -> (i32, i32) {
    %c0_i32 = arith.constant 0 : i32
    %c0_i32_0 = arith.constant 0 : i32
    %c0_i32_1 = arith.constant 0 : i32
    return %c0_i32, %c0_i32_0 : i32, i32
  }
  func.func @transform_2(%arg0: i32, %arg1: i32) -> (i32, i32) {
    %c0_i32 = arith.constant 0 : i32
    %c0_i32_0 = arith.constant 0 : i32
    %c0_i32_1 = arith.constant 0 : i32
    return %c0_i32, %c0_i32_0 : i32, i32
  }
  func.func @transform_3(%arg0: i32, %arg1: i32) -> (i32, i32) {
    %c0_i32 = arith.constant 0 : i32
    %c0_i32_0 = arith.constant 0 : i32
    %c0_i32_1 = arith.constant 0 : i32
    return %c0_i32, %c0_i32_0 : i32, i32
  }
  func.func @transform_4(%arg0: i32, %arg1: i32) -> (i32, i32, i32) {
    %c0_i32 = arith.constant 0 : i32
    %c0_i32_0 = arith.constant 0 : i32
    return %arg0, %c0_i32, %arg1 : i32, i32, i32
  }
}

</mosaic_0001>

<llo_original>
// kernel: tpu_custom_call.1
$region0: #{tpu_custom_call.1}
  #allocation0 [shape = 'u32[]', space=smem, size = 0x4, offset = 0x4, fixed_abs, tag = 'smem constant byte address 0x4 - core index']
  #allocation1 [shape = 'u32[144,128]{1,0:T(1,128)}', space=vmem, size = 0x12000, scoped, tag = 'internal scratch']
  #allocation2 [shape = 'f32[4,8,8,128]{3,2,1,0:T(8,128)}', space=vmem, size = 0x20000, scoped, tag = 'scratch operand']
  #allocation3 [shape = 'f32[4,8,8,128]{3,2,1,0:T(8,128)}', space=vmem, size = 0x20000, scoped, tag = 'scratch operand']
  #allocation4 [shape = 'f32[4,8,8,128]{3,2,1,0:T(8,128)}', space=vmem, size = 0x20000, scoped, tag = 'scratch operand']
  #allocation5 [shape = 'f32[4,8,8,128]{3,2,1,0:T(8,128)}', space=vmem, size = 0x20000, scoped, tag = 'scratch operand']
  %s0 = inlined_call_operand.hbm [shape: f32[2,256,128], index: 0, kind: input, shape index: {}]
  %s1 = inlined_call_operand.hbm [shape: f32[768,256], index: 1, kind: input, shape index: {}]
  %s2 = inlined_call_operand.hbm [shape: f32[256,256], index: 2, kind: input, shape index: {}]
  %s3 = inlined_call_operand.vmem [shape: f32[256,1], index: 3, kind: input, shape index: {}]
  %s4 = inlined_call_operand.hbm [shape: f32[2,256,128], index: 4, kind: output, shape index: {}]
  %s5 = sld [smem:[#allocation0]]
  $region61: #{tpu_custom_call.1} parent=0
    _
  %s7 = ssub.s32 1, %s5
  %s8 = scalar_select 0, %s7, %s5
  $region1: #{tpu_custom_call.1} parent=0
    #allocation6 [shape = 'u8[262144]{0}', space=vmem, size = 0x40000, scoped, tag = 'input window, operand 0']
    #allocation7 [shape = 's32[2]{0}', space=sflag, size = 0x8, scoped, tag = 'scoped memory for tpu_custom_call.1']
    #allocation8 [shape = 's32[2]{0}', space=sflag, size = 0x8, scoped, tag = 'scoped memory for tpu_custom_call.1']
    #allocation9 [shape = 'u8[786432]{0}', space=vmem, size = 0xc0000, scoped, tag = 'input window, operand 1, single buffered']
    #allocation10 [shape = 's32[1]{0}', space=sflag, size = 0x4, scoped, tag = 'scoped memory for tpu_custom_call.1']
    #allocation11 [shape = 'u8[262144]{0}', space=vmem, size = 0x40000, scoped, tag = 'input window, operand 2, single buffered']
    #allocation12 [shape = 'u8[262144]{0}', space=vmem, size = 0x40000, scoped, tag = 'output window, operand 0']
    %9 = vsyncpa [#allocation7], 0
    %s10 = scalar_lea.sflag [#allocation7], 1
    %11 = vsyncpa %s10, 0
    %12 = vsyncpa [#allocation10], 0
    %13 = vsyncpa [#allocation8], 0
    %s14 = scalar_lea.sflag [#allocation8], 1
    %15 = vsyncpa %s14, 0
    loop: start=0, step=1, limit=4
    $region2: #{tpu_custom_call.1} parent=1 // loop_pre_header
      _
    $region3: #{tpu_custom_call.1} parent=1 // loop_header
      %s17 = sphi 0, %s21
      %p18 = scmp.ge.s32.totalorder %s17, 4
      %s24 = sphi 0, %s36
      %s25 = sphi 0, %s32
      %s26 = sphi 0, %s24
      %s27 = sphi 0, %s25
      %s28 = sphi 0, %s26
      %s29 = sphi 0, %s27
      %s41 = sphi 0, %s43
      %s44 = sphi 0, %s41
      %s45 = sphi 0, %s44
      %s61 = sphi 0, %s45
      %s65 = sphi 0, %s65
      %s67 = sphi 0, %s65
      %s68 = sphi 0, %s67
      %s82 = sphi 0, %s68
      %s86 = sphi 0, %s86
      %s88 = sphi 0, %s86
      %s89 = sphi 0, %s88
      %s103 = sphi 0, %s89
      %s107 = sphi 0, %s107
      %s109 = sphi 0, %s107
      %s110 = sphi 0, %s109
      %s124 = sphi 0, %s110
      %s132 = sphi 0, %s134
      %s135 = sphi 0, %s132
      %s136 = sphi 0, %s135
      %s152 = sphi 0, %s136
    $region4: #{tpu_custom_call.1} parent=1 // loop_header_branch
      %20 = sbr.rel (%p18) target = $region8
    $region5: #{tpu_custom_call.1} parent=1 // loop_body
      %s22 = ssub.s32 %s17, 1
      %s23 = ssub.s32 %s17, 2
      %s30 = sadd.s32 1, %s25
      %p31 = scmp.ge.s32.totalorder %s30, 1
      %s32 = scalar_select %p31, 0, %s30
      %s33 = sadd.s32 1, %s24
      %s34 = scalar_select %p31, %s33, %s24
      %p35 = scmp.ge.s32.totalorder %s34, 2
      %s36 = scalar_select %p35, 0, %s34
      %s37 = ssub.s32 %s24, %s36
      %s38 = ssub.s32 %s25, %s32
      %s39 = sor.u32 %s37, %s38
      %p40 = scmp.eq.s32.totalorder %s39, 0
      %s42 = sadd.s32 %s41, 1
      %s43 = scalar_select %p40, %s41, %s42
      %p46 = pneg %p40
      %p47 = scmp.eq.s32.totalorder %s17, 1
      %p48 = por %p46, %p47
      %p49 = scmp.ne.s32.totalorder %s41, %s44
      %p50 = scmp.eq.s32.totalorder %s17, 0
      %p51 = por %p49, %p50
      %p52 = scmp.ne.s32.totalorder %s41, %s44
      %p53 = scmp.eq.s32.totalorder %s22, 1
      %p54 = por %p52, %p53
      %p55 = scmp.ne.s32.totalorder %s44, %s45
      %p56 = scmp.eq.s32.totalorder %s22, 0
      %p57 = por %p55, %p56
      %p58 = scmp.ne.s32.totalorder %s44, %s45
      %p59 = scmp.eq.s32.totalorder %s23, 1
      %p60 = por %p58, %p59
      %p62 = scmp.ne.s32.totalorder %s45, %s61
      %p63 = scmp.eq.s32.totalorder %s23, 0
      %p64 = por %p62, %p63
      %s66 = sadd.s32 %s65, 1
      %p69 = scmp.eq.s32.totalorder %s17, 1
      %p70 = scmp.ne.s32.totalorder %s65, %s67
      %p71 = scmp.eq.s32.totalorder %s17, 0
      %p72 = por %p70, %p71
      %p73 = scmp.ne.s32.totalorder %s65, %s67
      %p74 = scmp.eq.s32.totalorder %s22, 1
      %p75 = por %p73, %p74
      %p76 = scmp.ne.s32.totalorder %s67, %s68
      %p77 = scmp.eq.s32.totalorder %s22, 0
      %p78 = por %p76, %p77
      %p79 = scmp.ne.s32.totalorder %s67, %s68
      %p80 = scmp.eq.s32.totalorder %s23, 1
      %p81 = por %p79, %p80
      %p83 = scmp.ne.s32.totalorder %s68, %s82
      %p84 = scmp.eq.s32.totalorder %s23, 0
      %p85 = por %p83, %p84
      %s87 = sadd.s32 %s86, 1
      %p90 = scmp.eq.s32.totalorder %s17, 1
      %p91 = scmp.ne.s32.totalorder %s86, %s88
      %p92 = scmp.eq.s32.totalorder %s17, 0
      %p93 = por %p91, %p92
      %p94 = scmp.ne.s32.totalorder %s86, %s88
      %p95 = scmp.eq.s32.totalorder %s22, 1
      %p96 = por %p94, %p95
      %p97 = scmp.ne.s32.totalorder %s88, %s89
      %p98 = scmp.eq.s32.totalorder %s22, 0
      %p99 = por %p97, %p98
      %p100 = scmp.ne.s32.totalorder %s88, %s89
      %p101 = scmp.eq.s32.totalorder %s23, 1
      %p102 = por %p100, %p101
      %p104 = scmp.ne.s32.totalorder %s89, %s103
      %p105 = scmp.eq.s32.totalorder %s23, 0
      %p106 = por %p104, %p105
      %s108 = sadd.s32 %s107, 1
      %p111 = scmp.eq.s32.totalorder %s17, 1
      %p112 = scmp.ne.s32.totalorder %s107, %s109
      %p113 = scmp.eq.s32.totalorder %s17, 0
      %p114 = por %p112, %p113
      %p115 = scmp.ne.s32.totalorder %s107, %s109
      %p116 = scmp.eq.s32.totalorder %s22, 1
      %p117 = por %p115, %p116
      %p118 = scmp.ne.s32.totalorder %s109, %s110
      %p119 = scmp.eq.s32.totalorder %s22, 0
      %p120 = por %p118, %p119
      %p121 = scmp.ne.s32.totalorder %s109, %s110
      %p122 = scmp.eq.s32.totalorder %s23, 1
      %p123 = por %p121, %p122
      %p125 = scmp.ne.s32.totalorder %s110, %s124
      %p126 = scmp.eq.s32.totalorder %s23, 0
      %p127 = por %p125, %p126
      %s128 = ssub.s32 %s24, %s36
      %s129 = ssub.s32 %s25, %s32
      %s130 = sor.u32 %s128, %s129
      %p131 = scmp.eq.s32.totalorder %s130, 0
      %s133 = sadd.s32 %s132, 1
      %s134 = scalar_select %p131, %s132, %s133
      %p137 = pneg %p131
      %p138 = scmp.eq.s32.totalorder %s17, 1
      %p139 = por %p137, %p138
      %p140 = scmp.ne.s32.totalorder %s132, %s135
      %p141 = scmp.eq.s32.totalorder %s17, 0
      %p142 = por %p140, %p141
      %p143 = scmp.ne.s32.totalorder %s132, %s135
      %p144 = scmp.eq.s32.totalorder %s22, 1
      %p145 = por %p143, %p144
      %p146 = scmp.ne.s32.totalorder %s135, %s136
      %p147 = scmp.eq.s32.totalorder %s22, 0
      %p148 = por %p146, %p147
      %p149 = scmp.ne.s32.totalorder %s135, %s136
      %p150 = scmp.eq.s32.totalorder %s23, 1
      %p151 = por %p149, %p150
      %p153 = scmp.ne.s32.totalorder %s136, %s152
      %p154 = scmp.eq.s32.totalorder %s23, 0
      %p155 = por %p153, %p154
      %p156 = scmp.le.s32.totalorder 1, %s17
      %p157 = scmp.lt.s32.totalorder %s17, 3
      %p158 = pnand %p156, %p157
      %p159 = pneg %p158
      // Predicated region
      $region9: #{tpu_custom_call.1} parent=5 // pred_check
        _
      $region10: #{tpu_custom_call.1} parent=5 // pred_check_branch
        %161 = sbr.rel (%p158) target = $region12
      $region11: #{tpu_custom_call.1} parent=5 // pred_region
        %s162 = ssub.s32 %s17, 1
        // Predicated region
        $region13: #{tpu_custom_call.1} parent=11 // pred_check
          %p163 = pneg %p78
        $region14: #{tpu_custom_call.1} parent=11 // pred_check_branch
          %165 = sbr.rel (%p163) target = $region16
        $region15: #{tpu_custom_call.1} parent=11 // pred_region
          %s167 = ssub.s32 24576, 24576
          %168 = vsyncadd [#allocation10], %s167
          %s169 = sshll.u32 [#allocation9], 4
          %s170 = int_to_ptr.vmem [resolvable:$true] %s169
          %175 = dma.hbm_to_vmem [thread:$0]  %s1, 24576, %s170, [#allocation10], 256, 256, 16
        $region16: #{tpu_custom_call.1} parent=11 // pred_fallthru
          _
        // Predicated region
        $region17: #{tpu_custom_call.1} parent=11 // pred_check
          %p176 = pneg %p99
        $region18: #{tpu_custom_call.1} parent=11 // pred_check_branch
          %178 = sbr.rel (%p176) target = $region20
        $region19: #{tpu_custom_call.1} parent=11 // pred_region
          %s180 = ssub.s32 8192, 8192
          %181 = vsyncadd [#allocation10], %s180
          %s182 = sshll.u32 [#allocation11], 4
          %s183 = int_to_ptr.vmem [resolvable:$true] %s182
          %188 = dma.hbm_to_vmem [thread:$0]  %s2, 8192, %s183, [#allocation10], 256, 256, 16
        $region20: #{tpu_custom_call.1} parent=11 // pred_fallthru
          _
        // Predicated region
        $region21: #{tpu_custom_call.1} parent=11 // pred_check
          %p189 = pneg %p120
        $region22: #{tpu_custom_call.1} parent=11 // pred_check_branch
          %191 = sbr.rel (%p189) target = $region24
        $region23: #{tpu_custom_call.1} parent=11 // pred_region
          _
        $region24: #{tpu_custom_call.1} parent=11 // pred_fallthru
          _
      $region12: #{tpu_custom_call.1} parent=5 // pred_fallthru
        _
      %p192 = scmp.lt.s32.totalorder %s17, 2
      // Predicated region
      $region25: #{tpu_custom_call.1} parent=5 // pred_check
        %p193 = pneg %p192
      $region26: #{tpu_custom_call.1} parent=5 // pred_check_branch
        %195 = sbr.rel (%p193) target = $region28
      $region27: #{tpu_custom_call.1} parent=5 // pred_region
        // Predicated region
        $region29: #{tpu_custom_call.1} parent=27 // pred_check
          %p196 = pneg %p51
        $region30: #{tpu_custom_call.1} parent=27 // pred_check_branch
          %198 = sbr.rel (%p196) target = $region32
        $region31: #{tpu_custom_call.1} parent=27 // pred_region
          %s199 = sand.u32 %s41, 1
          %s200 = scalar_lea.sflag [#allocation7], %s199
          %s201 = sand.u32 %s41, 1
          %s202 = smul.addr %s201, 256
          %s203 = scalar_lea.vmem [#allocation6], %s202
          %s205 = ssub.s32 4096, 4096
          %206 = vsyncadd %s200, %s205
          %s207 = smul.addr %s24, 32
          %s208 = sadd.s32 %s25, %s207
          %s209 = smul.addr %s208, 128
          %s210 = scalar_lea.hbm %s0, %s209
          %s211 = sshll.u32 %s203, 4
          %s212 = int_to_ptr.vmem [resolvable:$true] %s211
          %217 = dma.hbm_to_vmem [thread:$0]  %s210, 4096, %s212, %s200, 128, 128, 8
        $region32: #{tpu_custom_call.1} parent=27 // pred_fallthru
          _
      $region28: #{tpu_custom_call.1} parent=5 // pred_fallthru
        _
      %p218 = scmp.le.s32.totalorder 1, %s17
      %p219 = scmp.lt.s32.totalorder %s17, 3
      %p220 = pnand %p218, %p219
      %p221 = pneg %p220
      // Predicated region
      $region33: #{tpu_custom_call.1} parent=5 // pred_check
        _
      $region34: #{tpu_custom_call.1} parent=5 // pred_check_branch
        %223 = sbr.rel (%p220) target = $region36
      $region35: #{tpu_custom_call.1} parent=5 // pred_region
        %s224 = ssub.s32 %s17, 1
        %s225 = sand.u32 %s44, 1
        %s226 = scalar_lea.sflag [#allocation7], %s225
        %s227 = sand.u32 %s44, 1
        %s228 = smul.addr %s227, 256
        %s229 = scalar_lea.vmem [#allocation6], %s228
        // Predicated region
        $region37: #{tpu_custom_call.1} parent=35 // pred_check
          %p230 = pneg %p57
        $region38: #{tpu_custom_call.1} parent=35 // pred_check_branch
          %232 = sbr.rel (%p230) target = $region40
        $region39: #{tpu_custom_call.1} parent=35 // pred_region
          %233 = dma.done %s226, 4096
        $region40: #{tpu_custom_call.1} parent=35 // pred_fallthru
          _
        // Predicated region
        $region41: #{tpu_custom_call.1} parent=35 // pred_check
          %p234 = pneg %p78
        $region42: #{tpu_custom_call.1} parent=35 // pred_check_branch
          %236 = sbr.rel (%p234) target = $region44
        $region43: #{tpu_custom_call.1} parent=35 // pred_region
          %237 = dma.done [#allocation10], 24576
        $region44: #{tpu_custom_call.1} parent=35 // pred_fallthru
          _
        // Predicated region
        $region45: #{tpu_custom_call.1} parent=35 // pred_check
          %p238 = pneg %p99
        $region46: #{tpu_custom_call.1} parent=35 // pred_check_branch
          %240 = sbr.rel (%p238) target = $region48
        $region47: #{tpu_custom_call.1} parent=35 // pred_region
          %241 = dma.done [#allocation10], 8192
        $region48: #{tpu_custom_call.1} parent=35 // pred_fallthru
          _
        %s242 = sand.u32 %s44, 1
        %s243 = scalar_lea.sflag [#allocation7], %s242
        %s244 = sand.u32 %s44, 1
        %s245 = smul.addr %s244, 256
        %s246 = scalar_lea.vmem [#allocation6], %s245
        %p247 = pneg %p57
        %p248 = pneg %p54
        %p249 = pneg %p78
        %p250 = pneg %p75
        %p251 = pneg %p99
        %p252 = pneg %p96
        %p253 = pneg %p120
        %p254 = pneg %p117
        %p255 = pneg %p148
        %p256 = pneg %p145
        %s257 = sand.u32 %s135, 1
        %s258 = scalar_lea.sflag [#allocation8], %s257
        %s259 = sand.u32 %s135, 1
        %s260 = smul.addr %s259, 256
        %s261 = scalar_lea.vmem [#allocation12], %s260
        %v262 = vld [vmem:[#allocation9] sm:$0xff]
        %v263 = vld [vmem:[#allocation9 + $0x8] sm:$0xff]
        %v264 = vld [vmem:[#allocation9 + $0x10] sm:$0xff]
        %v265 = vld [vmem:[#allocation9 + $0x18] sm:$0xff]
        %v266 = vld [vmem:[#allocation9 + $0x20] sm:$0xff]
        %v267 = vld [vmem:[#allocation9 + $0x28] sm:$0xff]
        %v268 = vld [vmem:[#allocation9 + $0x30] sm:$0xff]
        %v269 = vld [vmem:[#allocation9 + $0x38] sm:$0xff]
        %v270 = vld [vmem:[#allocation9 + $0x40] sm:$0xff]
        %v271 = vld [vmem:[#allocation9 + $0x48] sm:$0xff]
        %v272 = vld [vmem:[#allocation9 + $0x50] sm:$0xff]
        %v273 = vld [vmem:[#allocation9 + $0x58] sm:$0xff]
        %v274 = vld [vmem:[#allocation9 + $0x60] sm:$0xff]
        %v275 = vld [vmem:[#allocation9 + $0x68] sm:$0xff]
        %v276 = vld [vmem:[#allocation9 + $0x70] sm:$0xff]
        %v277 = vld [vmem:[#allocation9 + $0x78] sm:$0xff]
        %v278 = vld [vmem:[#allocation9 + $0x80] sm:$0xff]
        %v279 = vld [vmem:[#allocation9 + $0x88] sm:$0xff]
        %v280 = vld [vmem:[#allocation9 + $0x90] sm:$0xff]
        %v281 = vld [vmem:[#allocation9 + $0x98] sm:$0xff]
        %v282 = vld [vmem:[#allocation9 + $0xa0] sm:$0xff]
        %v283 = vld [vmem:[#allocation9 + $0xa8] sm:$0xff]
        %v284 = vld [vmem:[#allocation9 + $0xb0] sm:$0xff]
        %v285 = vld [vmem:[#allocation9 + $0xb8] sm:$0xff]
        %v286 = vld [vmem:[#allocation9 + $0xc0] sm:$0xff]
        %v287 = vld [vmem:[#allocation9 + $0xc8] sm:$0xff]
        %v288 = vld [vmem:[#allocation9 + $0xd0] sm:$0xff]
        %v289 = vld [vmem:[#allocation9 + $0xd8] sm:$0xff]
        %v290 = vld [vmem:[#allocation9 + $0xe0] sm:$0xff]
        %v291 = vld [vmem:[#allocation9 + $0xe8] sm:$0xff]
        %v292 = vld [vmem:[#allocation9 + $0xf0] sm:$0xff]
        %v293 = vld [vmem:[#allocation9 + $0xf8] sm:$0xff]
        %v294 = vld [vmem:[#allocation9 + $0x100] sm:$0xff]
        %v295 = vld [vmem:[#allocation9 + $0x108] sm:$0xff]
        %v296 = vld [vmem:[#allocation9 + $0x110] sm:$0xff]
        %v297 = vld [vmem:[#allocation9 + $0x118] sm:$0xff]
        %v298 = vld [vmem:[#allocation9 + $0x120] sm:$0xff]
        %v299 = vld [vmem:[#allocation9 + $0x128] sm:$0xff]
        %v300 = vld [vmem:[#allocation9 + $0x130] sm:$0xff]
        %v301 = vld [vmem:[#allocation9 + $0x138] sm:$0xff]
        %v302 = vld [vmem:[#allocation9 + $0x140] sm:$0xff]
        %v303 = vld [vmem:[#allocation9 + $0x148] sm:$0xff]
        %v304 = vld [vmem:[#allocation9 + $0x150] sm:$0xff]
        %v305 = vld [vmem:[#allocation9 + $0x158] sm:$0xff]
        %v306 = vld [vmem:[#allocation9 + $0x160] sm:$0xff]
        %v307 = vld [vmem:[#allocation9 + $0x168] sm:$0xff]
        %v308 = vld [vmem:[#allocation9 + $0x170] sm:$0xff]
        %v309 = vld [vmem:[#allocation9 + $0x178] sm:$0xff]
        %v310 = vld [vmem:[#allocation9 + $0x180] sm:$0xff]
        %v311 = vld [vmem:[#allocation9 + $0x188] sm:$0xff]
        %v312 = vld [vmem:[#allocation9 + $0x190] sm:$0xff]
        %v313 = vld [vmem:[#allocation9 + $0x198] sm:$0xff]
        %v314 = vld [vmem:[#allocation9 + $0x1a0] sm:$0xff]
        %v315 = vld [vmem:[#allocation9 + $0x1a8] sm:$0xff]
        %v316 = vld [vmem:[#allocation9 + $0x1b0] sm:$0xff]
        %v317 = vld [vmem:[#allocation9 + $0x1b8] sm:$0xff]
        %v318 = vld [vmem:[#allocation9 + $0x1c0] sm:$0xff]
        %v319 = vld [vmem:[#allocation9 + $0x1c8] sm:$0xff]
        %v320 = vld [vmem:[#allocation9 + $0x1d0] sm:$0xff]
        %v321 = vld [vmem:[#allocation9 + $0x1d8] sm:$0xff]
        %v322 = vld [vmem:[#allocation9 + $0x1e0] sm:$0xff]
        %v323 = vld [vmem:[#allocation9 + $0x1e8] sm:$0xff]
        %v324 = vld [vmem:[#allocation9 + $0x1f0] sm:$0xff]
        %v325 = vld [vmem:[#allocation9 + $0x1f8] sm:$0xff]
        %v326 = vld [vmem:[#allocation9 + $0x200] sm:$0xff]
        %v327 = vld [vmem:[#allocation9 + $0x208] sm:$0xff]
        %v328 = vld [vmem:[#allocation9 + $0x210] sm:$0xff]
        %v329 = vld [vmem:[#allocation9 + $0x218] sm:$0xff]
        %v330 = vld [vmem:[#allocation9 + $0x220] sm:$0xff]
        %v331 = vld [vmem:[#allocation9 + $0x228] sm:$0xff]
        %v332 = vld [vmem:[#allocation9 + $0x230] sm:$0xff]
        %v333 = vld [vmem:[#allocation9 + $0x238] sm:$0xff]
        %v334 = vld [vmem:[#allocation9 + $0x240] sm:$0xff]
        %v335 = vld [vmem:[#allocation9 + $0x248] sm:$0xff]
        %v336 = vld [vmem:[#allocation9 + $0x250] sm:$0xff]
        %v337 = vld [vmem:[#allocation9 + $0x258] sm:$0xff]
        %v338 = vld [vmem:[#allocation9 + $0x260] sm:$0xff]
        %v339 = vld [vmem:[#allocation9 + $0x268] sm:$0xff]
        %v340 = vld [vmem:[#allocation9 + $0x270] sm:$0xff]
        %v341 = vld [vmem:[#allocation9 + $0x278] sm:$0xff]
        %v342 = vld [vmem:[#allocation9 + $0x280] sm:$0xff]
        %v343 = vld [vmem:[#allocation9 + $0x288] sm:$0xff]
        %v344 = vld [vmem:[#allocation9 + $0x290] sm:$0xff]
        %v345 = vld [vmem:[#allocation9 + $0x298] sm:$0xff]
        %v346 = vld [vmem:[#allocation9 + $0x2a0] sm:$0xff]
        %v347 = vld [vmem:[#allocation9 + $0x2a8] sm:$0xff]
        %v348 = vld [vmem:[#allocation9 + $0x2b0] sm:$0xff]
        %v349 = vld [vmem:[#allocation9 + $0x2b8] sm:$0xff]
        %v350 = vld [vmem:[#allocation9 + $0x2c0] sm:$0xff]
        %v351 = vld [vmem:[#allocation9 + $0x2c8] sm:$0xff]
        %v352 = vld [vmem:[#allocation9 + $0x2d0] sm:$0xff]
        %v353 = vld [vmem:[#allocation9 + $0x2d8] sm:$0xff]
        %v354 = vld [vmem:[#allocation9 + $0x2e0] sm:$0xff]
        %v355 = vld [vmem:[#allocation9 + $0x2e8] sm:$0xff]
        %v356 = vld [vmem:[#allocation9 + $0x2f0] sm:$0xff]
        %v357 = vld [vmem:[#allocation9 + $0x2f8] sm:$0xff]
        %v358 = vld [vmem:[#allocation9 + $0x300] sm:$0xff]
        %v359 = vld [vmem:[#allocation9 + $0x308] sm:$0xff]
        %v360 = vld [vmem:[#allocation9 + $0x310] sm:$0xff]
        %v361 = vld [vmem:[#allocation9 + $0x318] sm:$0xff]
        %v362 = vld [vmem:[#allocation9 + $0x320] sm:$0xff]
        %v363 = vld [vmem:[#allocation9 + $0x328] sm:$0xff]
        %v364 = vld [vmem:[#allocation9 + $0x330] sm:$0xff]
        %v365 = vld [vmem:[#allocation9 + $0x338] sm:$0xff]
        %v366 = vld [vmem:[#allocation9 + $0x340] sm:$0xff]
        %v367 = vld [vmem:[#allocation9 + $0x348] sm:$0xff]
        %v368 = vld [vmem:[#allocation9 + $0x350] sm:$0xff]
        %v369 = vld [vmem:[#allocation9 + $0x358] sm:$0xff]
        %v370 = vld [vmem:[#allocation9 + $0x360] sm:$0xff]
        %v371 = vld [vmem:[#allocation9 + $0x368] sm:$0xff]
        %v372 = vld [vmem:[#allocation9 + $0x370] sm:$0xff]
        %v373 = vld [vmem:[#allocation9 + $0x378] sm:$0xff]
        %v374 = vld [vmem:[#allocation9 + $0x380] sm:$0xff]
        %v375 = vld [vmem:[#allocation9 + $0x388] sm:$0xff]
        %v376 = vld [vmem:[#allocation9 + $0x390] sm:$0xff]
        %v377 = vld [vmem:[#allocation9 + $0x398] sm:$0xff]
        %v378 = vld [vmem:[#allocation9 + $0x3a0] sm:$0xff]
        %v379 = vld [vmem:[#allocation9 + $0x3a8] sm:$0xff]
        %v380 = vld [vmem:[#allocation9 + $0x3b0] sm:$0xff]
        %v381 = vld [vmem:[#allocation9 + $0x3b8] sm:$0xff]
        %v382 = vld [vmem:[#allocation9 + $0x3c0] sm:$0xff]
        %v383 = vld [vmem:[#allocation9 + $0x3c8] sm:$0xff]
        %v384 = vld [vmem:[#allocation9 + $0x3d0] sm:$0xff]
        %v385 = vld [vmem:[#allocation9 + $0x3d8] sm:$0xff]
        %v386 = vld [vmem:[#allocation9 + $0x3e0] sm:$0xff]
        %v387 = vld [vmem:[#allocation9 + $0x3e8] sm:$0xff]
        %v388 = vld [vmem:[#allocation9 + $0x3f0] sm:$0xff]
        %v389 = vld [vmem:[#allocation9 + $0x3f8] sm:$0xff]
        %v390 = vld [vmem:[#allocation9 + $0x400] sm:$0xff]
        %v391 = vld [vmem:[#allocation9 + $0x408] sm:$0xff]
        %v392 = vld [vmem:[#allocation9 + $0x410] sm:$0xff]
        %v393 = vld [vmem:[#allocation9 + $0x418] sm:$0xff]
        %v394 = vld [vmem:[#allocation9 + $0x420] sm:$0xff]
        %v395 = vld [vmem:[#allocation9 + $0x428] sm:$0xff]
        %v396 = vld [vmem:[#allocation9 + $0x430] sm:$0xff]
        %v397 = vld [vmem:[#allocation9 + $0x438] sm:$0xff]
        %v398 = vld [vmem:[#allocation9 + $0x440] sm:$0xff]
        %v399 = vld [vmem:[#allocation9 + $0x448] sm:$0xff]
        %v400 = vld [vmem:[#allocation9 + $0x450] sm:$0xff]
        %v401 = vld [vmem:[#allocation9 + $0x458] sm:$0xff]
        %v402 = vld [vmem:[#allocation9 + $0x460] sm:$0xff]
        %v403 = vld [vmem:[#allocation9 + $0x468] sm:$0xff]
        %v404 = vld [vmem:[#allocation9 + $0x470] sm:$0xff]
        %v405 = vld [vmem:[#allocation9 + $0x478] sm:$0xff]
        %v406 = vld [vmem:[#allocation9 + $0x480] sm:$0xff]
        %v407 = vld [vmem:[#allocation9 + $0x488] sm:$0xff]
        %v408 = vld [vmem:[#allocation9 + $0x490] sm:$0xff]
        %v409 = vld [vmem:[#allocation9 + $0x498] sm:$0xff]
        %v410 = vld [vmem:[#allocation9 + $0x4a0] sm:$0xff]
        %v411 = vld [vmem:[#allocation9 + $0x4a8] sm:$0xff]
        %v412 = vld [vmem:[#allocation9 + $0x4b0] sm:$0xff]
        %v413 = vld [vmem:[#allocation9 + $0x4b8] sm:$0xff]
        %v414 = vld [vmem:[#allocation9 + $0x4c0] sm:$0xff]
        %v415 = vld [vmem:[#allocation9 + $0x4c8] sm:$0xff]
        %v416 = vld [vmem:[#allocation9 + $0x4d0] sm:$0xff]
        %v417 = vld [vmem:[#allocation9 + $0x4d8] sm:$0xff]
        %v418 = vld [vmem:[#allocation9 + $0x4e0] sm:$0xff]
        %v419 = vld [vmem:[#allocation9 + $0x4e8] sm:$0xff]
        %v420 = vld [vmem:[#allocation9 + $0x4f0] sm:$0xff]
        %v421 = vld [vmem:[#allocation9 + $0x4f8] sm:$0xff]
        %v422 = vld [vmem:[#allocation9 + $0x500] sm:$0xff]
        %v423 = vld [vmem:[#allocation9 + $0x508] sm:$0xff]
        %v424 = vld [vmem:[#allocation9 + $0x510] sm:$0xff]
        %v425 = vld [vmem:[#allocation9 + $0x518] sm:$0xff]
        %v426 = vld [vmem:[#allocation9 + $0x520] sm:$0xff]
        %v427 = vld [vmem:[#allocation9 + $0x528] sm:$0xff]
        %v428 = vld [vmem:[#allocation9 + $0x530] sm:$0xff]
        %v429 = vld [vmem:[#allocation9 + $0x538] sm:$0xff]
        %v430 = vld [vmem:[#allocation9 + $0x540] sm:$0xff]
        %v431 = vld [vmem:[#allocation9 + $0x548] sm:$0xff]
        %v432 = vld [vmem:[#allocation9 + $0x550] sm:$0xff]
        %v433 = vld [vmem:[#allocation9 + $0x558] sm:$0xff]
        %v434 = vld [vmem:[#allocation9 + $0x560] sm:$0xff]
        %v435 = vld [vmem:[#allocation9 + $0x568] sm:$0xff]
        %v436 = vld [vmem:[#allocation9 + $0x570] sm:$0xff]
        %v437 = vld [vmem:[#allocation9 + $0x578] sm:$0xff]
        %v438 = vld [vmem:[#allocation9 + $0x580] sm:$0xff]
        %v439 = vld [vmem:[#allocation9 + $0x588] sm:$0xff]
        %v440 = vld [vmem:[#allocation9 + $0x590] sm:$0xff]
        %v441 = vld [vmem:[#allocation9 + $0x598] sm:$0xff]
        %v442 = vld [vmem:[#allocation9 + $0x5a0] sm:$0xff]
        %v443 = vld [vmem:[#allocation9 + $0x5a8] sm:$0xff]
        %v444 = vld [vmem:[#allocation9 + $0x5b0] sm:$0xff]
        %v445 = vld [vmem:[#allocation9 + $0x5b8] sm:$0xff]
        %v446 = vld [vmem:[#allocation9 + $0x5c0] sm:$0xff]
        %v447 = vld [vmem:[#allocation9 + $0x5c8] sm:$0xff]
        %v448 = vld [vmem:[#allocation9 + $0x5d0] sm:$0xff]
        %v449 = vld [vmem:[#allocation9 + $0x5d8] sm:$0xff]
        %v450 = vld [vmem:[#allocation9 + $0x5e0] sm:$0xff]
        %v451 = vld [vmem:[#allocation9 + $0x5e8] sm:$0xff]
        %v452 = vld [vmem:[#allocation9 + $0x5f0] sm:$0xff]
        %v453 = vld [vmem:[#allocation9 + $0x5f8] sm:$0xff]
        %v454 = vld [vmem:[%s229] sm:$0xff]
        %v455 = vld [vmem:[%s229 + $0x8] sm:$0xff]
        %v456 = vld [vmem:[%s229 + $0x10] sm:$0xff]
        %v457 = vld [vmem:[%s229 + $0x18] sm:$0xff]
        %v458 = vld [vmem:[%s229 + $0x20] sm:$0xff]
        %v459 = vld [vmem:[%s229 + $0x28] sm:$0xff]
        %v460 = vld [vmem:[%s229 + $0x30] sm:$0xff]
        %v461 = vld [vmem:[%s229 + $0x38] sm:$0xff]
        %v462 = vld [vmem:[%s229 + $0x40] sm:$0xff]
        %v463 = vld [vmem:[%s229 + $0x48] sm:$0xff]
        %v464 = vld [vmem:[%s229 + $0x50] sm:$0xff]
        %v465 = vld [vmem:[%s229 + $0x58] sm:$0xff]
        %v466 = vld [vmem:[%s229 + $0x60] sm:$0xff]
        %v467 = vld [vmem:[%s229 + $0x68] sm:$0xff]
        %v468 = vld [vmem:[%s229 + $0x70] sm:$0xff]
        %v469 = vld [vmem:[%s229 + $0x78] sm:$0xff]
        %v470 = vld [vmem:[%s229 + $0x80] sm:$0xff]
        %v471 = vld [vmem:[%s229 + $0x88] sm:$0xff]
        %v472 = vld [vmem:[%s229 + $0x90] sm:$0xff]
        %v473 = vld [vmem:[%s229 + $0x98] sm:$0xff]
        %v474 = vld [vmem:[%s229 + $0xa0] sm:$0xff]
        %v475 = vld [vmem:[%s229 + $0xa8] sm:$0xff]
        %v476 = vld [vmem:[%s229 + $0xb0] sm:$0xff]
        %v477 = vld [vmem:[%s229 + $0xb8] sm:$0xff]
        %v478 = vld [vmem:[%s229 + $0xc0] sm:$0xff]
        %v479 = vld [vmem:[%s229 + $0xc8] sm:$0xff]
        %v480 = vld [vmem:[%s229 + $0xd0] sm:$0xff]
        %v481 = vld [vmem:[%s229 + $0xd8] sm:$0xff]
        %v482 = vld [vmem:[%s229 + $0xe0] sm:$0xff]
        %v483 = vld [vmem:[%s229 + $0xe8] sm:$0xff]
        %v484 = vld [vmem:[%s229 + $0xf0] sm:$0xff]
        %v485 = vld [vmem:[%s229 + $0xf8] sm:$0xff]
        %486 = vmatprep.subr.mxu0 0.0
        %487 = vmatpush1.msra.mxu0 %v454
        %488 = vmatprep.subr.mxu0 0.0
        %489 = vmatpush1.msra.mxu0 %v455
        %490 = vmatprep.subr.mxu0 0.0
        %491 = vmatpush1.msra.mxu0 %v456
        %492 = vmatprep.subr.mxu0 0.0
        %493 = vmatpush1.msra.mxu0 %v457
        %494 = vmatprep.subr.mxu0 0.0
        %495 = vmatpush1.msra.mxu0 %v458
        %496 = vmatprep.subr.mxu0 0.0
        %497 = vmatpush1.msra.mxu0 %v459
        %498 = vmatprep.subr.mxu0 0.0
        %499 = vmatpush1.msra.mxu0 %v460
        %500 = vmatprep.subr.mxu0 0.0
        %501 = vmatpush1.msra.mxu0 %v461
        %502 = vmatprep.subr.mxu0 0.0
        %503 = vmatpush1.msra.mxu0 %v462
        %504 = vmatprep.subr.mxu0 0.0
        %505 = vmatpush1.msra.mxu0 %v463
        %506 = vmatprep.subr.mxu0 0.0
        %507 = vmatpush1.msra.mxu0 %v464
        %508 = vmatprep.subr.mxu0 0.0
        %509 = vmatpush1.msra.mxu0 %v465
        %510 = vmatprep.subr.mxu0 0.0
        %511 = vmatpush1.msra.mxu0 %v466
        %512 = vmatprep.subr.mxu0 0.0
        %513 = vmatpush1.msra.mxu0 %v467
        %514 = vmatprep.subr.mxu0 0.0
        %515 = vmatpush1.msra.mxu0 %v468
        %516 = vmatprep.subr.mxu0 0.0
        %517 = vmatpush1.msra.mxu0 %v469
        %518 = vmatprep.subr.mxu0 0.0
        %519 = vmatpush1.msra.mxu0 %v470
        %520 = vmatprep.subr.mxu0 0.0
        %521 = vmatpush1.msra.mxu0 %v471
        %522 = vmatprep.subr.mxu0 0.0
        %523 = vmatpush1.msra.mxu0 %v472
        %524 = vmatprep.subr.mxu0 0.0
        %525 = vmatpush1.msra.mxu0 %v473
        %526 = vmatprep.subr.mxu0 0.0
        %527 = vmatpush1.msra.mxu0 %v474
        %528 = vmatprep.subr.mxu0 0.0
        %529 = vmatpush1.msra.mxu0 %v475
        %530 = vmatprep.subr.mxu0 0.0
        %531 = vmatpush1.msra.mxu0 %v476
        %532 = vmatprep.subr.mxu0 0.0
        %533 = vmatpush1.msra.mxu0 %v477
        %534 = vmatprep.subr.mxu0 0.0
        %535 = vmatpush1.msra.mxu0 %v478
        %536 = vmatprep.subr.mxu0 0.0
        %537 = vmatpush1.msra.mxu0 %v479
        %538 = vmatprep.subr.mxu0 0.0
        %539 = vmatpush1.msra.mxu0 %v480
        %540 = vmatprep.subr.mxu0 0.0
        %541 = vmatpush1.msra.mxu0 %v481
        %542 = vmatprep.subr.mxu0 0.0
        %543 = vmatpush1.msra.mxu0 %v482
        %544 = vmatprep.subr.mxu0 0.0
        %545 = vmatpush1.msra.mxu0 %v483
        %546 = vmatprep.subr.mxu0 0.0
        %547 = vmatpush1.msra.mxu0 %v484
        %548 = vmatprep.subr.mxu0 0.0
        %549 = vmatpush1.msra.mxu0 %v485
        %550 = vmatprep.mubr.f32.mxu0 %v263
        %551 = vmatmul.mubr.f32.gmra.mrb[0].mxu0 %v262
        %v552 = vpop.f32.mrb[0].mxu0
        %v553 = vadd.f32 0.0, %v552
        %v554 = vpop.f32.mrb[0].mxu0
        %555 = vmatprep.mubr.f32.mxu0 %v265
        %556 = vmatmul.mubr.f32.gmra.mrb[0].mxu0 %v264
        %v557 = vpop.f32.mrb[0].mxu0
        %v558 = vadd.f32 0.0, %v557
        %v559 = vpop.f32.mrb[0].mxu0
        %560 = vmatprep.mubr.f32.mxu0 %v267
        %561 = vmatmul.mubr.f32.gmra.mrb[0].mxu0 %v266
        %v562 = vpop.f32.mrb[0].mxu0
        %v563 = vadd.f32 0.0, %v562
        %v564 = vpop.f32.mrb[0].mxu0
        %565 = vmatprep.mubr.f32.mxu0 %v269
        %566 = vmatmul.mubr.f32.gmra.mrb[0].mxu0 %v268
        %v567 = vpop.f32.mrb[0].mxu0
        %v568 = vadd.f32 0.0, %v567
        %v569 = vpop.f32.mrb[0].mxu0
        %570 = vmatprep.mubr.f32.mxu0 %v271
        %571 = vmatmul.mubr.f32.gmra.mrb[0].mxu0 %v270
        %v572 = vpop.f32.mrb[0].mxu0
        %v573 = vadd.f32 0.0, %v572
        %v574 = vpop.f32.mrb[0].mxu0
        %575 = vmatprep.mubr.f32.mxu0 %v273
        %576 = vmatmul.mubr.f32.gmra.mrb[0].mxu0 %v272
        %v577 = vpop.f32.mrb[0].mxu0
        %v578 = vadd.f32 0.0, %v577
        %v579 = vpop.f32.mrb[0].mxu0
        %580 = vmatprep.mubr.f32.mxu0 %v275
        %581 = vmatmul.mubr.f32.gmra.mrb[0].mxu0 %v274
        %v582 = vpop.f32.mrb[0].mxu0
        %v583 = vadd.f32 0.0, %v582
        %v584 = vpop.f32.mrb[0].mxu0
        %585 = vmatprep.mubr.f32.mxu0 %v277
        %586 = vmatmul.mubr.f32.gmra.mrb[0].mxu0 %v276
        %v587 = vpop.f32.mrb[0].mxu0
        %v588 = vadd.f32 0.0, %v587
        %v589 = vpop.f32.mrb[0].mxu0
        %590 = vmatprep.mubr.f32.mxu0 %v279
        %591 = vmatmul.mubr.f32.gmra.mrb[0].mxu0 %v278
        %v592 = vpop.f32.mrb[0].mxu0
        %v593 = vadd.f32 0.0, %v592
        %v594 = vpop.f32.mrb[0].mxu0
        %595 = vmatprep.mubr.f32.mxu0 %v281
        %596 = vmatmul.mubr.f32.gmra.mrb[0].mxu0 %v280
        %v597 = vpop.f32.mrb[0].mxu0
        %v598 = vadd.f32 0.0, %v597
        %v599 = vpop.f32.mrb[0].mxu0
        %600 = vmatprep.mubr.f32.mxu0 %v283
        %601 = vmatmul.mubr.f32.gmra.mrb[0].mxu0 %v282
        %v602 = vpop.f32.mrb[0].mxu0
        %v603 = vadd.f32 0.0, %v602
        %v604 = vpop.f32.mrb[0].mxu0
        %605 = vmatprep.mubr.f32.mxu0 %v285
        %606 = vmatmul.mubr.f32.gmra.mrb[0].mxu0 %v284
        %v607 = vpop.f32.mrb[0].mxu0
        %v608 = vadd.f32 0.0, %v607
        %v609 = vpop.f32.mrb[0].mxu0
        %610 = vmatprep.mubr.f32.mxu0 %v287
        %611 = vmatmul.mubr.f32.gmra.mrb[0].mxu0 %v286
        %v612 = vpop.f32.mrb[0].mxu0
        %v613 = vadd.f32 0.0, %v612
        %v614 = vpop.f32.mrb[0].mxu0
        %615 = vmatprep.mubr.f32.mxu0 %v289
        %616 = vmatmul.mubr.f32.gmra.mrb[0].mxu0 %v288
        %v617 = vpop.f32.mrb[0].mxu0
        %v618 = vadd.f32 0.0, %v617
        %v619 = vpop.f32.mrb[0].mxu0
        %620 = vmatprep.mubr.f32.mxu0 %v291
        %621 = vmatmul.mubr.f32.gmra.mrb[0].mxu0 %v290
        %v622 = vpop.f32.mrb[0].mxu0
        %v623 = vadd.f32 0.0, %v622
        %v624 = vpop.f32.mrb[0].mxu0
        %625 = vmatprep.mubr.f32.mxu0 %v293
        %626 = vmatmul.mubr.f32.gmra.mrb[0].mxu0 %v292
        %v627 = vpop.f32.mrb[0].mxu0
        %v628 = vadd.f32 0.0, %v627
        %v629 = vpop.f32.mrb[0].mxu0
        %630 = vmatprep.mubr.f32.mxu0 %v295
        %631 = vmatmul.mubr.f32.gmra.mrb[0].mxu0 %v294
        %v632 = vpop.f32.mrb[0].mxu0
        %v633 = vadd.f32 0.0, %v632
        %v634 = vpop.f32.mrb[0].mxu0
        %635 = vmatprep.mubr.f32.mxu0 %v297
        %636 = vmatmul.mubr.f32.gmra.mrb[0].mxu0 %v296
        %v637 = vpop.f32.mrb[0].mxu0
        %v638 = vadd.f32 0.0, %v637
        %v639 = vpop.f32.mrb[0].mxu0
        %640 = vmatprep.mubr.f32.mxu0 %v299
        %641 = vmatmul.mubr.f32.gmra.mrb[0].mxu0 %v298
        %v642 = vpop.f32.mrb[0].mxu0
        %v643 = vadd.f32 0.0, %v642
        %v644 = vpop.f32.mrb[0].mxu0
        %645 = vmatprep.mubr.f32.mxu0 %v301
        %646 = vmatmul.mubr.f32.gmra.mrb[0].mxu0 %v300
        %v647 = vpop.f32.mrb[0].mxu0
        %v648 = vadd.f32 0.0, %v647
        %v649 = vpop.f32.mrb[0].mxu0
        %650 = vmatprep.mubr.f32.mxu0 %v303
        %651 = vmatmul.mubr.f32.gmra.mrb[0].mxu0 %v302
        %v652 = vpop.f32.mrb[0].mxu0
        %v653 = vadd.f32 0.0, %v652
        %v654 = vpop.f32.mrb[0].mxu0
        %655 = vmatprep.mubr.f32.mxu0 %v305
        %656 = vmatmul.mubr.f32.gmra.mrb[0].mxu0 %v304
        %v657 = vpop.f32.mrb[0].mxu0
        %v658 = vadd.f32 0.0, %v657
        %v659 = vpop.f32.mrb[0].mxu0
        %660 = vmatprep.mubr.f32.mxu0 %v307
        %661 = vmatmul.mubr.f32.gmra.mrb[0].mxu0 %v306
        %v662 = vpop.f32.mrb[0].mxu0
        %v663 = vadd.f32 0.0, %v662
        %v664 = vpop.f32.mrb[0].mxu0
        %665 = vmatprep.mubr.f32.mxu0 %v309
        %666 = vmatmul.mubr.f32.gmra.mrb[0].mxu0 %v308
        %v667 = vpop.f32.mrb[0].mxu0
        %v668 = vadd.f32 0.0, %v667
        %v669 = vpop.f32.mrb[0].mxu0
        %670 = vmatprep.mubr.f32.mxu0 %v311
        %671 = vmatmul.mubr.f32.gmra.mrb[0].mxu0 %v310
        %v672 = vpop.f32.mrb[0].mxu0
        %v673 = vadd.f32 0.0, %v672
        %v674 = vpop.f32.mrb[0].mxu0
        %675 = vmatprep.mubr.f32.mxu0 %v313
        %676 = vmatmul.mubr.f32.gmra.mrb[0].mxu0 %v312
        %v677 = vpop.f32.mrb[0].mxu0
        %v678 = vadd.f32 0.0, %v677
        %v679 = vpop.f32.mrb[0].mxu0
        %680 = vmatprep.mubr.f32.mxu0 %v315
        %681 = vmatmul.mubr.f32.gmra.mrb[0].mxu0 %v314
        %v682 = vpop.f32.mrb[0].mxu0
        %v683 = vadd.f32 0.0, %v682
        %v684 = vpop.f32.mrb[0].mxu0
        %685 = vmatprep.mubr.f32.mxu0 %v317
        %686 = vmatmul.mubr.f32.gmra.mrb[0].mxu0 %v316
        %v687 = vpop.f32.mrb[0].mxu0
        %v688 = vadd.f32 0.0, %v687
        %v689 = vpop.f32.mrb[0].mxu0
        %690 = vmatprep.mubr.f32.mxu0 %v319
        %691 = vmatmul.mubr.f32.gmra.mrb[0].mxu0 %v318
        %v692 = vpop.f32.mrb[0].mxu0
        %v693 = vadd.f32 0.0, %v692
        %v694 = vpop.f32.mrb[0].mxu0
        %695 = vmatprep.mubr.f32.mxu0 %v321
        %696 = vmatmul.mubr.f32.gmra.mrb[0].mxu0 %v320
        %v697 = vpop.f32.mrb[0].mxu0
        %v698 = vadd.f32 0.0, %v697
        %v699 = vpop.f32.mrb[0].mxu0
        %700 = vmatprep.mubr.f32.mxu0 %v323
        %701 = vmatmul.mubr.f32.gmra.mrb[0].mxu0 %v322
        %v702 = vpop.f32.mrb[0].mxu0
        %v703 = vadd.f32 0.0, %v702
        %v704 = vpop.f32.mrb[0].mxu0
        %705 = vmatprep.mubr.f32.mxu0 %v325
        %706 = vmatmul.mubr.f32.gmra.mrb[0].mxu0 %v324
        %v707 = vpop.f32.mrb[0].mxu0
        %v708 = vadd.f32 0.0, %v707
        %v709 = vpop.f32.mrb[0].mxu0
        %710 = vmatprep.mubr.f32.mxu0 %v327
        %711 = vmatmul.mubr.f32.gmra.mrb[0].mxu0 %v326
        %v712 = vpop.f32.mrb[0].mxu0
        %v713 = vadd.f32 0.0, %v712
        %v714 = vpop.f32.mrb[0].mxu0
        %715 = vmatprep.mubr.f32.mxu0 %v329
        %716 = vmatmul.mubr.f32.gmra.mrb[0].mxu0 %v328
        %v717 = vpop.f32.mrb[0].mxu0
        %v718 = vadd.f32 0.0, %v717
        %v719 = vpop.f32.mrb[0].mxu0
        %720 = vmatprep.mubr.f32.mxu0 %v331
        %721 = vmatmul.mubr.f32.gmra.mrb[0].mxu0 %v330
        %v722 = vpop.f32.mrb[0].mxu0
        %v723 = vadd.f32 0.0, %v722
        %v724 = vpop.f32.mrb[0].mxu0
        %725 = vmatprep.mubr.f32.mxu0 %v333
        %726 = vmatmul.mubr.f32.gmra.mrb[0].mxu0 %v332
        %v727 = vpop.f32.mrb[0].mxu0
        %v728 = vadd.f32 0.0, %v727
        %v729 = vpop.f32.mrb[0].mxu0
        %730 = vmatprep.mubr.f32.mxu0 %v335
        %731 = vmatmul.mubr.f32.gmra.mrb[0].mxu0 %v334
        %v732 = vpop.f32.mrb[0].mxu0
        %v733 = vadd.f32 0.0, %v732
        %v734 = vpop.f32.mrb[0].mxu0
        %735 = vmatprep.mubr.f32.mxu0 %v337
        %736 = vmatmul.mubr.f32.gmra.mrb[0].mxu0 %v336
        %v737 = vpop.f32.mrb[0].mxu0
        %v738 = vadd.f32 0.0, %v737
        %v739 = vpop.f32.mrb[0].mxu0
        %740 = vmatprep.mubr.f32.mxu0 %v339
        %741 = vmatmul.mubr.f32.gmra.mrb[0].mxu0 %v338
        %v742 = vpop.f32.mrb[0].mxu0
        %v743 = vadd.f32 0.0, %v742
        %v744 = vpop.f32.mrb[0].mxu0
        %745 = vmatprep.mubr.f32.mxu0 %v341
        %746 = vmatmul.mubr.f32.gmra.mrb[0].mxu0 %v340
        %v747 = vpop.f32.mrb[0].mxu0
        %v748 = vadd.f32 0.0, %v747
        %v749 = vpop.f32.mrb[0].mxu0
        %750 = vmatprep.mubr.f32.mxu0 %v343
        %751 = vmatmul.mubr.f32.gmra.mrb[0].mxu0 %v342
        %v752 = vpop.f32.mrb[0].mxu0
        %v753 = vadd.f32 0.0, %v752
        %v754 = vpop.f32.mrb[0].mxu0
        %755 = vmatprep.mubr.f32.mxu0 %v345
        %756 = vmatmul.mubr.f32.gmra.mrb[0].mxu0 %v344
        %v757 = vpop.f32.mrb[0].mxu0
        %v758 = vadd.f32 0.0, %v757
        %v759 = vpop.f32.mrb[0].mxu0
        %760 = vmatprep.mubr.f32.mxu0 %v347
        %761 = vmatmul.mubr.f32.gmra.mrb[0].mxu0 %v346
        %v762 = vpop.f32.mrb[0].mxu0
        %v763 = vadd.f32 0.0, %v762
        %v764 = vpop.f32.mrb[0].mxu0
        %765 = vmatprep.mubr.f32.mxu0 %v349
        %766 = vmatmul.mubr.f32.gmra.mrb[0].mxu0 %v348
        %v767 = vpop.f32.mrb[0].mxu0
        %v768 = vadd.f32 0.0, %v767
        %v769 = vpop.f32.mrb[0].mxu0
        %770 = vmatprep.mubr.f32.mxu0 %v351
        %771 = vmatmul.mubr.f32.gmra.mrb[0].mxu0 %v350
        %v772 = vpop.f32.mrb[0].mxu0
        %v773 = vadd.f32 0.0, %v772
        %v774 = vpop.f32.mrb[0].mxu0
        %775 = vmatprep.mubr.f32.mxu0 %v353
        %776 = vmatmul.mubr.f32.gmra.mrb[0].mxu0 %v352
        %v777 = vpop.f32.mrb[0].mxu0
        %v778 = vadd.f32 0.0, %v777
        %v779 = vpop.f32.mrb[0].mxu0
        %780 = vmatprep.mubr.f32.mxu0 %v355
        %781 = vmatmul.mubr.f32.gmra.mrb[0].mxu0 %v354
        %v782 = vpop.f32.mrb[0].mxu0
        %v783 = vadd.f32 0.0, %v782
        %v784 = vpop.f32.mrb[0].mxu0
        %785 = vmatprep.mubr.f32.mxu0 %v357
        %786 = vmatmul.mubr.f32.gmra.mrb[0].mxu0 %v356
        %v787 = vpop.f32.mrb[0].mxu0
        %v788 = vadd.f32 0.0, %v787
        %v789 = vpop.f32.mrb[0].mxu0
        %790 = vmatprep.mubr.f32.mxu0 %v359
        %791 = vmatmul.mubr.f32.gmra.mrb[0].mxu0 %v358
        %v792 = vpop.f32.mrb[0].mxu0
        %v793 = vadd.f32 0.0, %v792
        %v794 = vpop.f32.mrb[0].mxu0
        %795 = vmatprep.mubr.f32.mxu0 %v361
        %796 = vmatmul.mubr.f32.gmra.mrb[0].mxu0 %v360
        %v797 = vpop.f32.mrb[0].mxu0
        %v798 = vadd.f32 0.0, %v797
        %v799 = vpop.f32.mrb[0].mxu0
        %800 = vmatprep.mubr.f32.mxu0 %v363
        %801 = vmatmul.mubr.f32.gmra.mrb[0].mxu0 %v362
        %v802 = vpop.f32.mrb[0].mxu0
        %v803 = vadd.f32 0.0, %v802
        %v804 = vpop.f32.mrb[0].mxu0
        %805 = vmatprep.mubr.f32.mxu0 %v365
        %806 = vmatmul.mubr.f32.gmra.mrb[0].mxu0 %v364
        %v807 = vpop.f32.mrb[0].mxu0
        %v808 = vadd.f32 0.0, %v807
        %v809 = vpop.f32.mrb[0].mxu0
        %810 = vmatprep.mubr.f32.mxu0 %v367
        %811 = vmatmul.mubr.f32.gmra.mrb[0].mxu0 %v366
        %v812 = vpop.f32.mrb[0].mxu0
        %v813 = vadd.f32 0.0, %v812
        %v814 = vpop.f32.mrb[0].mxu0
        %815 = vmatprep.mubr.f32.mxu0 %v369
        %816 = vmatmul.mubr.f32.gmra.mrb[0].mxu0 %v368
        %v817 = vpop.f32.mrb[0].mxu0
        %v818 = vadd.f32 0.0, %v817
        %v819 = vpop.f32.mrb[0].mxu0
        %820 = vmatprep.mubr.f32.mxu0 %v371
        %821 = vmatmul.mubr.f32.gmra.mrb[0].mxu0 %v370
        %v822 = vpop.f32.mrb[0].mxu0
        %v823 = vadd.f32 0.0, %v822
        %v824 = vpop.f32.mrb[0].mxu0
        %825 = vmatprep.mubr.f32.mxu0 %v373
        %826 = vmatmul.mubr.f32.gmra.mrb[0].mxu0 %v372
        %v827 = vpop.f32.mrb[0].mxu0
        %v828 = vadd.f32 0.0, %v827
        %v829 = vpop.f32.mrb[0].mxu0
        %830 = vmatprep.mubr.f32.mxu0 %v375
        %831 = vmatmul.mubr.f32.gmra.mrb[0].mxu0 %v374
        %v832 = vpop.f32.mrb[0].mxu0
        %v833 = vadd.f32 0.0, %v832
        %v834 = vpop.f32.mrb[0].mxu0
        %835 = vmatprep.mubr.f32.mxu0 %v377
        %836 = vmatmul.mubr.f32.gmra.mrb[0].mxu0 %v376
        %v837 = vpop.f32.mrb[0].mxu0
        %v838 = vadd.f32 0.0, %v837
        %v839 = vpop.f32.mrb[0].mxu0
        %840 = vmatprep.mubr.f32.mxu0 %v379
        %841 = vmatmul.mubr.f32.gmra.mrb[0].mxu0 %v378
        %v842 = vpop.f32.mrb[0].mxu0
        %v843 = vadd.f32 0.0, %v842
        %v844 = vpop.f32.mrb[0].mxu0
        %845 = vmatprep.mubr.f32.mxu0 %v381
        %846 = vmatmul.mubr.f32.gmra.mrb[0].mxu0 %v380
        %v847 = vpop.f32.mrb[0].mxu0
        %v848 = vadd.f32 0.0, %v847
        %v849 = vpop.f32.mrb[0].mxu0
        %850 = vmatprep.mubr.f32.mxu0 %v383
        %851 = vmatmul.mubr.f32.gmra.mrb[0].mxu0 %v382
        %v852 = vpop.f32.mrb[0].mxu0
        %v853 = vadd.f32 0.0, %v852
        %v854 = vpop.f32.mrb[0].mxu0
        %855 = vmatprep.mubr.f32.mxu0 %v385
        %856 = vmatmul.mubr.f32.gmra.mrb[0].mxu0 %v384
        %v857 = vpop.f32.mrb[0].mxu0
        %v858 = vadd.f32 0.0, %v857
        %v859 = vpop.f32.mrb[0].mxu0
        %860 = vmatprep.mubr.f32.mxu0 %v387
        %861 = vmatmul.mubr.f32.gmra.mrb[0].mxu0 %v386
        %v862 = vpop.f32.mrb[0].mxu0
        %v863 = vadd.f32 0.0, %v862
        %v864 = vpop.f32.mrb[0].mxu0
        %865 = vmatprep.mubr.f32.mxu0 %v389
        %866 = vmatmul.mubr.f32.gmra.mrb[0].mxu0 %v388
        %v867 = vpop.f32.mrb[0].mxu0
        %v868 = vadd.f32 0.0, %v867
        %v869 = vpop.f32.mrb[0].mxu0
        %870 = vmatprep.mubr.f32.mxu0 %v391
        %871 = vmatmul.mubr.f32.gmra.mrb[0].mxu0 %v390
        %v872 = vpop.f32.mrb[0].mxu0
        %v873 = vadd.f32 0.0, %v872
        %v874 = vpop.f32.mrb[0].mxu0
        %875 = vmatprep.mubr.f32.mxu0 %v393
        %876 = vmatmul.mubr.f32.gmra.mrb[0].mxu0 %v392
        %v877 = vpop.f32.mrb[0].mxu0
        %v878 = vadd.f32 0.0, %v877
        %v879 = vpop.f32.mrb[0].mxu0
        %880 = vmatprep.mubr.f32.mxu0 %v395
        %881 = vmatmul.mubr.f32.gmra.mrb[0].mxu0 %v394
        %v882 = vpop.f32.mrb[0].mxu0
        %v883 = vadd.f32 0.0, %v882
        %v884 = vpop.f32.mrb[0].mxu0
        %885 = vmatprep.mubr.f32.mxu0 %v397
        %886 = vmatmul.mubr.f32.gmra.mrb[0].mxu0 %v396
        %v887 = vpop.f32.mrb[0].mxu0
        %v888 = vadd.f32 0.0, %v887
        %v889 = vpop.f32.mrb[0].mxu0
        %890 = vmatprep.mubr.f32.mxu0 %v399
        %891 = vmatmul.mubr.f32.gmra.mrb[0].mxu0 %v398
        %v892 = vpop.f32.mrb[0].mxu0
        %v893 = vadd.f32 0.0, %v892
        %v894 = vpop.f32.mrb[0].mxu0
        %895 = vmatprep.mubr.f32.mxu0 %v401
        %896 = vmatmul.mubr.f32.gmra.mrb[0].mxu0 %v400
        %v897 = vpop.f32.mrb[0].mxu0
        %v898 = vadd.f32 0.0, %v897
        %v899 = vpop.f32.mrb[0].mxu0
        %900 = vmatprep.mubr.f32.mxu0 %v403
        %901 = vmatmul.mubr.f32.gmra.mrb[0].mxu0 %v402
        %v902 = vpop.f32.mrb[0].mxu0
        %v903 = vadd.f32 0.0, %v902
        %v904 = vpop.f32.mrb[0].mxu0
        %905 = vmatprep.mubr.f32.mxu0 %v405
        %906 = vmatmul.mubr.f32.gmra.mrb[0].mxu0 %v404
        %v907 = vpop.f32.mrb[0].mxu0
        %v908 = vadd.f32 0.0, %v907
        %v909 = vpop.f32.mrb[0].mxu0
        %910 = vmatprep.mubr.f32.mxu0 %v407
        %911 = vmatmul.mubr.f32.gmra.mrb[0].mxu0 %v406
        %v912 = vpop.f32.mrb[0].mxu0
        %v913 = vadd.f32 0.0, %v912
        %v914 = vpop.f32.mrb[0].mxu0
        %915 = vmatprep.mubr.f32.mxu0 %v409
        %916 = vmatmul.mubr.f32.gmra.mrb[0].mxu0 %v408
        %v917 = vpop.f32.mrb[0].mxu0
        %v918 = vadd.f32 0.0, %v917
        %v919 = vpop.f32.mrb[0].mxu0
        %920 = vmatprep.mubr.f32.mxu0 %v411
        %921 = vmatmul.mubr.f32.gmra.mrb[0].mxu0 %v410
        %v922 = vpop.f32.mrb[0].mxu0
        %v923 = vadd.f32 0.0, %v922
        %v924 = vpop.f32.mrb[0].mxu0
        %925 = vmatprep.mubr.f32.mxu0 %v413
        %926 = vmatmul.mubr.f32.gmra.mrb[0].mxu0 %v412
        %v927 = vpop.f32.mrb[0].mxu0
        %v928 = vadd.f32 0.0, %v927
        %v929 = vpop.f32.mrb[0].mxu0
        %930 = vmatprep.mubr.f32.mxu0 %v415
        %931 = vmatmul.mubr.f32.gmra.mrb[0].mxu0 %v414
        %v932 = vpop.f32.mrb[0].mxu0
        %v933 = vadd.f32 0.0, %v932
        %v934 = vpop.f32.mrb[0].mxu0
        %935 = vmatprep.mubr.f32.mxu0 %v417
        %936 = vmatmul.mubr.f32.gmra.mrb[0].mxu0 %v416
        %v937 = vpop.f32.mrb[0].mxu0
        %v938 = vadd.f32 0.0, %v937
        %v939 = vpop.f32.mrb[0].mxu0
        %940 = vmatprep.mubr.f32.mxu0 %v419
        %941 = vmatmul.mubr.f32.gmra.mrb[0].mxu0 %v418
        %v942 = vpop.f32.mrb[0].mxu0
        %v943 = vadd.f32 0.0, %v942
        %v944 = vpop.f32.mrb[0].mxu0
        %945 = vmatprep.mubr.f32.mxu0 %v421
        %946 = vmatmul.mubr.f32.gmra.mrb[0].mxu0 %v420
        %v947 = vpop.f32.mrb[0].mxu0
        %v948 = vadd.f32 0.0, %v947
        %v949 = vpop.f32.mrb[0].mxu0
        %950 = vmatprep.mubr.f32.mxu0 %v423
        %951 = vmatmul.mubr.f32.gmra.mrb[0].mxu0 %v422
        %v952 = vpop.f32.mrb[0].mxu0
        %v953 = vadd.f32 0.0, %v952
        %v954 = vpop.f32.mrb[0].mxu0
        %955 = vmatprep.mubr.f32.mxu0 %v425
        %956 = vmatmul.mubr.f32.gmra.mrb[0].mxu0 %v424
        %v957 = vpop.f32.mrb[0].mxu0
        %v958 = vadd.f32 0.0, %v957
        %v959 = vpop.f32.mrb[0].mxu0
        %960 = vmatprep.mubr.f32.mxu0 %v427
        %961 = vmatmul.mubr.f32.gmra.mrb[0].mxu0 %v426
        %v962 = vpop.f32.mrb[0].mxu0
        %v963 = vadd.f32 0.0, %v962
        %v964 = vpop.f32.mrb[0].mxu0
        %965 = vmatprep.mubr.f32.mxu0 %v429
        %966 = vmatmul.mubr.f32.gmra.mrb[0].mxu0 %v428
        %v967 = vpop.f32.mrb[0].mxu0
        %v968 = vadd.f32 0.0, %v967
        %v969 = vpop.f32.mrb[0].mxu0
        %970 = vmatprep.mubr.f32.mxu0 %v431
        %971 = vmatmul.mubr.f32.gmra.mrb[0].mxu0 %v430
        %v972 = vpop.f32.mrb[0].mxu0
        %v973 = vadd.f32 0.0, %v972
        %v974 = vpop.f32.mrb[0].mxu0
        %975 = vmatprep.mubr.f32.mxu0 %v433
        %976 = vmatmul.mubr.f32.gmra.mrb[0].mxu0 %v432
        %v977 = vpop.f32.mrb[0].mxu0
        %v978 = vadd.f32 0.0, %v977
        %v979 = vpop.f32.mrb[0].mxu0
        %980 = vmatprep.mubr.f32.mxu0 %v435
        %981 = vmatmul.mubr.f32.gmra.mrb[0].mxu0 %v434
        %v982 = vpop.f32.mrb[0].mxu0
        %v983 = vadd.f32 0.0, %v982
        %v984 = vpop.f32.mrb[0].mxu0
        %985 = vmatprep.mubr.f32.mxu0 %v437
        %986 = vmatmul.mubr.f32.gmra.mrb[0].mxu0 %v436
        %v987 = vpop.f32.mrb[0].mxu0
        %v988 = vadd.f32 0.0, %v987
        %v989 = vpop.f32.mrb[0].mxu0
        %990 = vmatprep.mubr.f32.mxu0 %v439
        %991 = vmatmul.mubr.f32.gmra.mrb[0].mxu0 %v438
        %v992 = vpop.f32.mrb[0].mxu0
        %v993 = vadd.f32 0.0, %v992
        %v994 = vpop.f32.mrb[0].mxu0
        %995 = vmatprep.mubr.f32.mxu0 %v441
        %996 = vmatmul.mubr.f32.gmra.mrb[0].mxu0 %v440
        %v997 = vpop.f32.mrb[0].mxu0
        %v998 = vadd.f32 0.0, %v997
        %v999 = vpop.f32.mrb[0].mxu0
        %1000 = vmatprep.mubr.f32.mxu0 %v443
        %1001 = vmatmul.mubr.f32.gmra.mrb[0].mxu0 %v442
        %v1002 = vpop.f32.mrb[0].mxu0
        %v1003 = vadd.f32 0.0, %v1002
        %v1004 = vpop.f32.mrb[0].mxu0
        %1005 = vmatprep.mubr.f32.mxu0 %v445
        %1006 = vmatmul.mubr.f32.gmra.mrb[0].mxu0 %v444
        %v1007 = vpop.f32.mrb[0].mxu0
        %v1008 = vadd.f32 0.0, %v1007
        %v1009 = vpop.f32.mrb[0].mxu0
        %1010 = vmatprep.mubr.f32.mxu0 %v447
        %1011 = vmatmul.mubr.f32.gmra.mrb[0].mxu0 %v446
        %v1012 = vpop.f32.mrb[0].mxu0
        %v1013 = vadd.f32 0.0, %v1012
        %v1014 = vpop.f32.mrb[0].mxu0
        %1015 = vmatprep.mubr.f32.mxu0 %v449
        %1016 = vmatmul.mubr.f32.gmra.mrb[0].mxu0 %v448
        %v1017 = vpop.f32.mrb[0].mxu0
        %v1018 = vadd.f32 0.0, %v1017
        %v1019 = vpop.f32.mrb[0].mxu0
        %1020 = vmatprep.mubr.f32.mxu0 %v451
        %1021 = vmatmul.mubr.f32.gmra.mrb[0].mxu0 %v450
        %v1022 = vpop.f32.mrb[0].mxu0
        %v1023 = vadd.f32 0.0, %v1022
        %v1024 = vpop.f32.mrb[0].mxu0
        %1025 = vmatprep.mubr.f32.mxu0 %v453
        %1026 = vmatmul.mubr.f32.gmra.mrb[0].mxu0 %v452
        %v1027 = vpop.f32.mrb[0].mxu0
        %v1028 = vadd.f32 0.0, %v1027
        %v1029 = vpop.f32.mrb[0].mxu0
        %1030 = vdwg.mxu0
        %v1031 = vmul.f32 %v553, %v553
        %v1032 = vmul.f32 %v558, %v558
        %v1033 = vmul.f32 %v563, %v563
        %v1034 = vmul.f32 %v568, %v568
        %v1035 = vmul.f32 %v573, %v573
        %v1036 = vmul.f32 %v578, %v578
        %v1037 = vmul.f32 %v583, %v583
        %v1038 = vmul.f32 %v588, %v588
        %v1039 = vmul.f32 %v593, %v593
        %v1040 = vmul.f32 %v598, %v598
        %v1041 = vmul.f32 %v603, %v603
        %v1042 = vmul.f32 %v608, %v608
        %v1043 = vmul.f32 %v613, %v613
        %v1044 = vmul.f32 %v618, %v618
        %v1045 = vmul.f32 %v623, %v623
        %v1046 = vmul.f32 %v628, %v628
        %v1047 = vmul.f32 %v633, %v633
        %v1048 = vmul.f32 %v638, %v638
        %v1049 = vmul.f32 %v643, %v643
        %v1050 = vmul.f32 %v648, %v648
        %v1051 = vmul.f32 %v653, %v653
        %v1052 = vmul.f32 %v658, %v658
        %v1053 = vmul.f32 %v663, %v663
        %v1054 = vmul.f32 %v668, %v668
        %v1055 = vmul.f32 %v673, %v673
        %v1056 = vmul.f32 %v678, %v678
        %v1057 = vmul.f32 %v683, %v683
        %v1058 = vmul.f32 %v688, %v688
        %v1059 = vmul.f32 %v693, %v693
        %v1060 = vmul.f32 %v698, %v698
        %v1061 = vmul.f32 %v703, %v703
        %v1062 = vmul.f32 %v708, %v708
        %v1063 = vadd.f32 %v1031, %v1032
        %v1064 = vadd.f32 %v1063, %v1033
        %v1065 = vadd.f32 %v1064, %v1034
        %v1066 = vadd.f32 %v1065, %v1035
        %v1067 = vadd.f32 %v1066, %v1036
        %v1068 = vadd.f32 %v1067, %v1037
        %v1069 = vadd.f32 %v1068, %v1038
        %v1070 = vadd.f32 %v1039, %v1040
        %v1071 = vadd.f32 %v1070, %v1041
        %v1072 = vadd.f32 %v1071, %v1042
        %v1073 = vadd.f32 %v1072, %v1043
        %v1074 = vadd.f32 %v1073, %v1044
        %v1075 = vadd.f32 %v1074, %v1045
        %v1076 = vadd.f32 %v1075, %v1046
        %v1077 = vadd.f32 %v1047, %v1048
        %v1078 = vadd.f32 %v1077, %v1049
        %v1079 = vadd.f32 %v1078, %v1050
        %v1080 = vadd.f32 %v1079, %v1051
        %v1081 = vadd.f32 %v1080, %v1052
        %v1082 = vadd.f32 %v1081, %v1053
        %v1083 = vadd.f32 %v1082, %v1054
        %v1084 = vadd.f32 %v1055, %v1056
        %v1085 = vadd.f32 %v1084, %v1057
        %v1086 = vadd.f32 %v1085, %v1058
        %v1087 = vadd.f32 %v1086, %v1059
        %v1088 = vadd.f32 %v1087, %v1060
        %v1089 = vadd.f32 %v1088, %v1061
        %v1090 = vadd.f32 %v1089, %v1062
        %v1091 = vmax.f32 %v1069, 1e-24
        %v1092 = vmax.f32 %v1076, 1e-24
        %v1093 = vmax.f32 %v1083, 1e-24
        %v1094 = vmax.f32 %v1090, 1e-24
        %v1095 = vrsqrt.pop %v1091
        %v1096 = vrsqrt.pop %v1092
        %v1097 = vrsqrt.pop %v1093
        %v1098 = vrsqrt.pop %v1094
        %v1099 = vmul.f32 %v1095, 0.35355338
        %v1100 = vmul.f32 %v1096, 0.35355338
        %v1101 = vmul.f32 %v1097, 0.35355338
        %v1102 = vmul.f32 %v1098, 0.35355338
        %v1103 = vmul.f32 %v553, %v1099
        %v1104 = vmul.f32 %v558, %v1099
        %v1105 = vmul.f32 %v563, %v1099
        %v1106 = vmul.f32 %v568, %v1099
        %v1107 = vmul.f32 %v573, %v1099
        %v1108 = vmul.f32 %v578, %v1099
        %v1109 = vmul.f32 %v583, %v1099
        %v1110 = vmul.f32 %v588, %v1099
        %v1111 = vmul.f32 %v593, %v1100
        %v1112 = vmul.f32 %v598, %v1100
        %v1113 = vmul.f32 %v603, %v1100
        %v1114 = vmul.f32 %v608, %v1100
        %v1115 = vmul.f32 %v613, %v1100
        %v1116 = vmul.f32 %v618, %v1100
        %v1117 = vmul.f32 %v623, %v1100
        %v1118 = vmul.f32 %v628, %v1100
        %v1119 = vmul.f32 %v633, %v1101
        %v1120 = vmul.f32 %v638, %v1101
        %v1121 = vmul.f32 %v643, %v1101
        %v1122 = vmul.f32 %v648, %v1101
        %v1123 = vmul.f32 %v653, %v1101
        %v1124 = vmul.f32 %v658, %v1101
        %v1125 = vmul.f32 %v663, %v1101
        %v1126 = vmul.f32 %v668, %v1101
        %v1127 = vmul.f32 %v673, %v1102
        %v1128 = vmul.f32 %v678, %v1102
        %v1129 = vmul.f32 %v683, %v1102
        %v1130 = vmul.f32 %v688, %v1102
        %v1131 = vmul.f32 %v693, %v1102
        %v1132 = vmul.f32 %v698, %v1102
        %v1133 = vmul.f32 %v703, %v1102
        %v1134 = vmul.f32 %v708, %v1102
        %1135 = vst [vmem:[#allocation2] sm:$0xff] %v1103
        %1136 = vst [vmem:[#allocation2 + $0x8] sm:$0xff] %v1104
        %1137 = vst [vmem:[#allocation2 + $0x10] sm:$0xff] %v1105
        %1138 = vst [vmem:[#allocation2 + $0x18] sm:$0xff] %v1106
        %1139 = vst [vmem:[#allocation2 + $0x20] sm:$0xff] %v1107
        %1140 = vst [vmem:[#allocation2 + $0x28] sm:$0xff] %v1108
        %1141 = vst [vmem:[#allocation2 + $0x30] sm:$0xff] %v1109
        %1142 = vst [vmem:[#allocation2 + $0x38] sm:$0xff] %v1110
        %1143 = vst [vmem:[#allocation2 + $0x40] sm:$0xff] %v1111
        %1144 = vst [vmem:[#allocation2 + $0x48] sm:$0xff] %v1112
        %1145 = vst [vmem:[#allocation2 + $0x50] sm:$0xff] %v1113
        %1146 = vst [vmem:[#allocation2 + $0x58] sm:$0xff] %v1114
        %1147 = vst [vmem:[#allocation2 + $0x60] sm:$0xff] %v1115
        %1148 = vst [vmem:[#allocation2 + $0x68] sm:$0xff] %v1116
        %1149 = vst [vmem:[#allocation2 + $0x70] sm:$0xff] %v1117
        %1150 = vst [vmem:[#allocation2 + $0x78] sm:$0xff] %v1118
        %1151 = vst [vmem:[#allocation2 + $0x80] sm:$0xff] %v1119
        %1152 = vst [vmem:[#allocation2 + $0x88] sm:$0xff] %v1120
        %1153 = vst [vmem:[#allocation2 + $0x90] sm:$0xff] %v1121
        %1154 = vst [vmem:[#allocation2 + $0x98] sm:$0xff] %v1122
        %1155 = vst [vmem:[#allocation2 + $0xa0] sm:$0xff] %v1123
        %1156 = vst [vmem:[#allocation2 + $0xa8] sm:$0xff] %v1124
        %1157 = vst [vmem:[#allocation2 + $0xb0] sm:$0xff] %v1125
        %1158 = vst [vmem:[#allocation2 + $0xb8] sm:$0xff] %v1126
        %1159 = vst [vmem:[#allocation2 + $0xc0] sm:$0xff] %v1127
        %1160 = vst [vmem:[#allocation2 + $0xc8] sm:$0xff] %v1128
        %1161 = vst [vmem:[#allocation2 + $0xd0] sm:$0xff] %v1129
        %1162 = vst [vmem:[#allocation2 + $0xd8] sm:$0xff] %v1130
        %1163 = vst [vmem:[#allocation2 + $0xe0] sm:$0xff] %v1131
        %1164 = vst [vmem:[#allocation2 + $0xe8] sm:$0xff] %v1132
        %1165 = vst [vmem:[#allocation2 + $0xf0] sm:$0xff] %v1133
        %1166 = vst [vmem:[#allocation2 + $0xf8] sm:$0xff] %v1134
        %v1167 = vmul.f32 %v713, %v713
        %v1168 = vmul.f32 %v718, %v718
        %v1169 = vmul.f32 %v723, %v723
        %v1170 = vmul.f32 %v728, %v728
        %v1171 = vmul.f32 %v733, %v733
        %v1172 = vmul.f32 %v738, %v738
        %v1173 = vmul.f32 %v743, %v743
        %v1174 = vmul.f32 %v748, %v748
        %v1175 = vmul.f32 %v753, %v753
        %v1176 = vmul.f32 %v758, %v758
        %v1177 = vmul.f32 %v763, %v763
        %v1178 = vmul.f32 %v768, %v768
        %v1179 = vmul.f32 %v773, %v773
        %v1180 = vmul.f32 %v778, %v778
        %v1181 = vmul.f32 %v783, %v783
        %v1182 = vmul.f32 %v788, %v788
        %v1183 = vmul.f32 %v793, %v793
        %v1184 = vmul.f32 %v798, %v798
        %v1185 = vmul.f32 %v803, %v803
        %v1186 = vmul.f32 %v808, %v808
        %v1187 = vmul.f32 %v813, %v813
        %v1188 = vmul.f32 %v818, %v818
        %v1189 = vmul.f32 %v823, %v823
        %v1190 = vmul.f32 %v828, %v828
        %v1191 = vmul.f32 %v833, %v833
        %v1192 = vmul.f32 %v838, %v838
        %v1193 = vmul.f32 %v843, %v843
        %v1194 = vmul.f32 %v848, %v848
        %v1195 = vmul.f32 %v853, %v853
        %v1196 = vmul.f32 %v858, %v858
        %v1197 = vmul.f32 %v863, %v863
        %v1198 = vmul.f32 %v868, %v868
        %v1199 = vadd.f32 %v1167, %v1168
        %v1200 = vadd.f32 %v1199, %v1169
        %v1201 = vadd.f32 %v1200, %v1170
        %v1202 = vadd.f32 %v1201, %v1171
        %v1203 = vadd.f32 %v1202, %v1172
        %v1204 = vadd.f32 %v1203, %v1173
        %v1205 = vadd.f32 %v1204, %v1174
        %v1206 = vadd.f32 %v1175, %v1176
        %v1207 = vadd.f32 %v1206, %v1177
        %v1208 = vadd.f32 %v1207, %v1178
        %v1209 = vadd.f32 %v1208, %v1179
        %v1210 = vadd.f32 %v1209, %v1180
        %v1211 = vadd.f32 %v1210, %v1181
        %v1212 = vadd.f32 %v1211, %v1182
        %v1213 = vadd.f32 %v1183, %v1184
        %v1214 = vadd.f32 %v1213, %v1185
        %v1215 = vadd.f32 %v1214, %v1186
        %v1216 = vadd.f32 %v1215, %v1187
        %v1217 = vadd.f32 %v1216, %v1188
        %v1218 = vadd.f32 %v1217, %v1189
        %v1219 = vadd.f32 %v1218, %v1190
        %v1220 = vadd.f32 %v1191, %v1192
        %v1221 = vadd.f32 %v1220, %v1193
        %v1222 = vadd.f32 %v1221, %v1194
        %v1223 = vadd.f32 %v1222, %v1195
        %v1224 = vadd.f32 %v1223, %v1196
        %v1225 = vadd.f32 %v1224, %v1197
        %v1226 = vadd.f32 %v1225, %v1198
        %v1227 = vmax.f32 %v1205, 1e-24
        %v1228 = vmax.f32 %v1212, 1e-24
        %v1229 = vmax.f32 %v1219, 1e-24
        %v1230 = vmax.f32 %v1226, 1e-24
        %v1231 = vrsqrt.pop %v1227
        %v1232 = vrsqrt.pop %v1228
        %v1233 = vrsqrt.pop %v1229
        %v1234 = vrsqrt.pop %v1230
        %v1235 = vmul.f32 %v713, %v1231
        %v1236 = vmul.f32 %v718, %v1231
        %v1237 = vmul.f32 %v723, %v1231
        %v1238 = vmul.f32 %v728, %v1231
        %v1239 = vmul.f32 %v733, %v1231
        %v1240 = vmul.f32 %v738, %v1231
        %v1241 = vmul.f32 %v743, %v1231
        %v1242 = vmul.f32 %v748, %v1231
        %v1243 = vmul.f32 %v753, %v1232
        %v1244 = vmul.f32 %v758, %v1232
        %v1245 = vmul.f32 %v763, %v1232
        %v1246 = vmul.f32 %v768, %v1232
        %v1247 = vmul.f32 %v773, %v1232
        %v1248 = vmul.f32 %v778, %v1232
        %v1249 = vmul.f32 %v783, %v1232
        %v1250 = vmul.f32 %v788, %v1232
        %v1251 = vmul.f32 %v793, %v1233
        %v1252 = vmul.f32 %v798, %v1233
        %v1253 = vmul.f32 %v803, %v1233
        %v1254 = vmul.f32 %v808, %v1233
        %v1255 = vmul.f32 %v813, %v1233
        %v1256 = vmul.f32 %v818, %v1233
        %v1257 = vmul.f32 %v823, %v1233
        %v1258 = vmul.f32 %v828, %v1233
        %v1259 = vmul.f32 %v833, %v1234
        %v1260 = vmul.f32 %v838, %v1234
        %v1261 = vmul.f32 %v843, %v1234
        %v1262 = vmul.f32 %v848, %v1234
        %v1263 = vmul.f32 %v853, %v1234
        %v1264 = vmul.f32 %v858, %v1234
        %v1265 = vmul.f32 %v863, %v1234
        %v1266 = vmul.f32 %v868, %v1234
        %1267 = vst [vmem:[#allocation3] sm:$0xff] %v1235
        %1268 = vst [vmem:[#allocation3 + $0x8] sm:$0xff] %v1236
        %1269 = vst [vmem:[#allocation3 + $0x10] sm:$0xff] %v1237
        %1270 = vst [vmem:[#allocation3 + $0x18] sm:$0xff] %v1238
        %1271 = vst [vmem:[#allocation3 + $0x20] sm:$0xff] %v1239
        %1272 = vst [vmem:[#allocation3 + $0x28] sm:$0xff] %v1240
        %1273 = vst [vmem:[#allocation3 + $0x30] sm:$0xff] %v1241
        %1274 = vst [vmem:[#allocation3 + $0x38] sm:$0xff] %v1242
        %1275 = vst [vmem:[#allocation3 + $0x40] sm:$0xff] %v1243
        %1276 = vst [vmem:[#allocation3 + $0x48] sm:$0xff] %v1244
        %1277 = vst [vmem:[#allocation3 + $0x50] sm:$0xff] %v1245
        %1278 = vst [vmem:[#allocation3 + $0x58] sm:$0xff] %v1246
        %1279 = vst [vmem:[#allocation3 + $0x60] sm:$0xff] %v1247
        %1280 = vst [vmem:[#allocation3 + $0x68] sm:$0xff] %v1248
        %1281 = vst [vmem:[#allocation3 + $0x70] sm:$0xff] %v1249
        %1282 = vst [vmem:[#allocation3 + $0x78] sm:$0xff] %v1250
        %1283 = vst [vmem:[#allocation3 + $0x80] sm:$0xff] %v1251
        %1284 = vst [vmem:[#allocation3 + $0x88] sm:$0xff] %v1252
        %1285 = vst [vmem:[#allocation3 + $0x90] sm:$0xff] %v1253
        %1286 = vst [vmem:[#allocation3 + $0x98] sm:$0xff] %v1254
        %1287 = vst [vmem:[#allocation3 + $0xa0] sm:$0xff] %v1255
        %1288 = vst [vmem:[#allocation3 + $0xa8] sm:$0xff] %v1256
        %1289 = vst [vmem:[#allocation3 + $0xb0] sm:$0xff] %v1257
        %1290 = vst [vmem:[#allocation3 + $0xb8] sm:$0xff] %v1258
        %1291 = vst [vmem:[#allocation3 + $0xc0] sm:$0xff] %v1259
        %1292 = vst [vmem:[#allocation3 + $0xc8] sm:$0xff] %v1260
        %1293 = vst [vmem:[#allocation3 + $0xd0] sm:$0xff] %v1261
        %1294 = vst [vmem:[#allocation3 + $0xd8] sm:$0xff] %v1262
        %1295 = vst [vmem:[#allocation3 + $0xe0] sm:$0xff] %v1263
        %1296 = vst [vmem:[#allocation3 + $0xe8] sm:$0xff] %v1264
        %1297 = vst [vmem:[#allocation3 + $0xf0] sm:$0xff] %v1265
        %1298 = vst [vmem:[#allocation3 + $0xf8] sm:$0xff] %v1266
        %1299 = vst [vmem:[#allocation4] sm:$0xff] %v873
        %1300 = vst [vmem:[#allocation4 + $0x8] sm:$0xff] %v878
        %1301 = vst [vmem:[#allocation4 + $0x10] sm:$0xff] %v883
        %1302 = vst [vmem:[#allocation4 + $0x18] sm:$0xff] %v888
        %1303 = vst [vmem:[#allocation4 + $0x20] sm:$0xff] %v893
        %1304 = vst [vmem:[#allocation4 + $0x28] sm:$0xff] %v898
        %1305 = vst [vmem:[#allocation4 + $0x30] sm:$0xff] %v903
        %1306 = vst [vmem:[#allocation4 + $0x38] sm:$0xff] %v908
        %1307 = vst [vmem:[#allocation4 + $0x40] sm:$0xff] %v913
        %1308 = vst [vmem:[#allocation4 + $0x48] sm:$0xff] %v918
        %1309 = vst [vmem:[#allocation4 + $0x50] sm:$0xff] %v923
        %1310 = vst [vmem:[#allocation4 + $0x58] sm:$0xff] %v928
        %1311 = vst [vmem:[#allocation4 + $0x60] sm:$0xff] %v933
        %1312 = vst [vmem:[#allocation4 + $0x68] sm:$0xff] %v938
        %1313 = vst [vmem:[#allocation4 + $0x70] sm:$0xff] %v943
        %1314 = vst [vmem:[#allocation4 + $0x78] sm:$0xff] %v948
        %1315 = vst [vmem:[#allocation4 + $0x80] sm:$0xff] %v953
        %1316 = vst [vmem:[#allocation4 + $0x88] sm:$0xff] %v958
        %1317 = vst [vmem:[#allocation4 + $0x90] sm:$0xff] %v963
        %1318 = vst [vmem:[#allocation4 + $0x98] sm:$0xff] %v968
        %1319 = vst [vmem:[#allocation4 + $0xa0] sm:$0xff] %v973
        %1320 = vst [vmem:[#allocation4 + $0xa8] sm:$0xff] %v978
        %1321 = vst [vmem:[#allocation4 + $0xb0] sm:$0xff] %v983
        %1322 = vst [vmem:[#allocation4 + $0xb8] sm:$0xff] %v988
        %1323 = vst [vmem:[#allocation4 + $0xc0] sm:$0xff] %v993
        %1324 = vst [vmem:[#allocation4 + $0xc8] sm:$0xff] %v998
        %1325 = vst [vmem:[#allocation4 + $0xd0] sm:$0xff] %v1003
        %1326 = vst [vmem:[#allocation4 + $0xd8] sm:$0xff] %v1008
        %1327 = vst [vmem:[#allocation4 + $0xe0] sm:$0xff] %v1013
        %1328 = vst [vmem:[#allocation4 + $0xe8] sm:$0xff] %v1018
        %1329 = vst [vmem:[#allocation4 + $0xf0] sm:$0xff] %v1023
        %1330 = vst [vmem:[#allocation4 + $0xf8] sm:$0xff] %v1028
        %v1331 = vlaneseq
        %v1332 = vshrl.u32 %v1331, 7
        %v1333 = vld [vmem:[#allocation2] sm:$0xff]
        %v1334 = vld [vmem:[#allocation2 + $0x8] sm:$0xff]
        %v1335 = vld [vmem:[#allocation2 + $0x10] sm:$0xff]
        %v1336 = vld [vmem:[#allocation2 + $0x18] sm:$0xff]
        %v1337 = vld [vmem:[#allocation2 + $0x20] sm:$0xff]
        %v1338 = vld [vmem:[#allocation2 + $0x28] sm:$0xff]
        %v1339 = vld [vmem:[#allocation2 + $0x30] sm:$0xff]
        %v1340 = vld [vmem:[#allocation2 + $0x38] sm:$0xff]
        %v1341 = vld [vmem:[#allocation3] sm:$0x1]
        %v1342 = vld [vmem:[#allocation3 + $0x8] sm:$0x1]
        %v1343 = vld [vmem:[#allocation3 + $0x10] sm:$0x1]
        %v1344 = vld [vmem:[#allocation3 + $0x18] sm:$0x1]
        %v1345 = vld [vmem:[#allocation3 + $0x20] sm:$0x1]
        %v1346 = vld [vmem:[#allocation3 + $0x28] sm:$0x1]
        %v1347 = vld [vmem:[#allocation3 + $0x30] sm:$0x1]
        %v1348 = vld [vmem:[#allocation3 + $0x38] sm:$0x1]
        %v1349 = vlaneseq
        %v1350 = vshrl.u32 %v1349, 7
        %v1351 = vsub.s32 0, %v1350
        %v1352 = vrot.slane %v1341, %v1351
        %v1353 = vlaneseq
        %v1354 = vshrl.u32 %v1353, 7
        %v1355 = vsub.s32 0, %v1354
        %v1356 = vrot.slane %v1342, %v1355
        %v1357 = vlaneseq
        %v1358 = vshrl.u32 %v1357, 7
        %v1359 = vsub.s32 0, %v1358
        %v1360 = vrot.slane %v1343, %v1359
        %v1361 = vlaneseq
        %v1362 = vshrl.u32 %v1361, 7
        %v1363 = vsub.s32 0, %v1362
        %v1364 = vrot.slane %v1344, %v1363
        %v1365 = vlaneseq
        %v1366 = vshrl.u32 %v1365, 7
        %v1367 = vsub.s32 0, %v1366
        %v1368 = vrot.slane %v1345, %v1367
        %v1369 = vlaneseq
        %v1370 = vshrl.u32 %v1369, 7
        %v1371 = vsub.s32 0, %v1370
        %v1372 = vrot.slane %v1346, %v1371
        %v1373 = vlaneseq
        %v1374 = vshrl.u32 %v1373, 7
        %v1375 = vsub.s32 0, %v1374
        %v1376 = vrot.slane %v1347, %v1375
        %v1377 = vlaneseq
        %v1378 = vshrl.u32 %v1377, 7
        %v1379 = vsub.s32 0, %v1378
        %v1380 = vrot.slane %v1348, %v1379
        %v1381 = vmul.f32 %v1333, %v1352
        %v1382 = vmul.f32 %v1334, %v1356
        %v1383 = vmul.f32 %v1335, %v1360
        %v1384 = vmul.f32 %v1336, %v1364
        %v1385 = vmul.f32 %v1337, %v1368
        %v1386 = vmul.f32 %v1338, %v1372
        %v1387 = vmul.f32 %v1339, %v1376
        %v1388 = vmul.f32 %v1340, %v1380
        %v1389 = vadd.f32 %v1381, %v1382
        %v1390 = vadd.f32 %v1389, %v1383
        %v1391 = vadd.f32 %v1390, %v1384
        %v1392 = vadd.f32 %v1391, %v1385
        %v1393 = vadd.f32 %v1392, %v1386
        %v1394 = vadd.f32 %v1393, %v1387
        %v1395 = vadd.f32 %v1394, %v1388
        %v1396 = vmul.f32 %v1395, 1.442695
        %v1397 = vpow.pop %v1396
        %v1398 = vld [vmem:[#allocation4] sm:$0x1]
        %v1399 = vld [vmem:[#allocation4 + $0x8] sm:$0x1]
        %v1400 = vld [vmem:[#allocation4 + $0x10] sm:$0x1]
        %v1401 = vld [vmem:[#allocation4 + $0x18] sm:$0x1]
        %v1402 = vld [vmem:[#allocation4 + $0x20] sm:$0x1]
        %v1403 = vld [vmem:[#allocation4 + $0x28] sm:$0x1]
        %v1404 = vld [vmem:[#allocation4 + $0x30] sm:$0x1]
        %v1405 = vld [vmem:[#allocation4 + $0x38] sm:$0x1]
        %v1406 = vlaneseq
        %v1407 = vshrl.u32 %v1406, 7
        %v1408 = vsub.s32 0, %v1407
        %v1409 = vrot.slane %v1398, %v1408
        %v1410 = vlaneseq
        %v1411 = vshrl.u32 %v1410, 7
        %v1412 = vsub.s32 0, %v1411
        %v1413 = vrot.slane %v1399, %v1412
        %v1414 = vlaneseq
        %v1415 = vshrl.u32 %v1414, 7
        %v1416 = vsub.s32 0, %v1415
        %v1417 = vrot.slane %v1400, %v1416
        %v1418 = vlaneseq
        %v1419 = vshrl.u32 %v1418, 7
        %v1420 = vsub.s32 0, %v1419
        %v1421 = vrot.slane %v1401, %v1420
        %v1422 = vlaneseq
        %v1423 = vshrl.u32 %v1422, 7
        %v1424 = vsub.s32 0, %v1423
        %v1425 = vrot.slane %v1402, %v1424
        %v1426 = vlaneseq
        %v1427 = vshrl.u32 %v1426, 7
        %v1428 = vsub.s32 0, %v1427
        %v1429 = vrot.slane %v1403, %v1428
        %v1430 = vlaneseq
        %v1431 = vshrl.u32 %v1430, 7
        %v1432 = vsub.s32 0, %v1431
        %v1433 = vrot.slane %v1404, %v1432
        %v1434 = vlaneseq
        %v1435 = vshrl.u32 %v1434, 7
        %v1436 = vsub.s32 0, %v1435
        %v1437 = vrot.slane %v1405, %v1436
        %v1438 = vmul.f32 %v1397, %v1409
        %v1439 = vmul.f32 %v1397, %v1413
        %v1440 = vmul.f32 %v1397, %v1417
        %v1441 = vmul.f32 %v1397, %v1421
        %v1442 = vmul.f32 %v1397, %v1425
        %v1443 = vmul.f32 %v1397, %v1429
        %v1444 = vmul.f32 %v1397, %v1433
        %v1445 = vmul.f32 %v1397, %v1437
        %v1446 = vld [vmem:[#allocation3 + $0x1] sm:$0x1]
        %v1447 = vld [vmem:[#allocation3 + $0x9] sm:$0x1]
        %v1448 = vld [vmem:[#allocation3 + $0x11] sm:$0x1]
        %v1449 = vld [vmem:[#allocation3 + $0x19] sm:$0x1]
        %v1450 = vld [vmem:[#allocation3 + $0x21] sm:$0x1]
        %v1451 = vld [vmem:[#allocation3 + $0x29] sm:$0x1]
        %v1452 = vld [vmem:[#allocation3 + $0x31] sm:$0x1]
        %v1453 = vld [vmem:[#allocation3 + $0x39] sm:$0x1]
        %v1454 = vlaneseq
        %v1455 = vshrl.u32 %v1454, 7
        %v1456 = vsub.s32 0, %v1455
        %v1457 = vrot.slane %v1446, %v1456
        %v1458 = vlaneseq
        %v1459 = vshrl.u32 %v1458, 7
        %v1460 = vsub.s32 0, %v1459
        %v1461 = vrot.slane %v1447, %v1460
        %v1462 = vlaneseq
        %v1463 = vshrl.u32 %v1462, 7
        %v1464 = vsub.s32 0, %v1463
        %v1465 = vrot.slane %v1448, %v1464
        %v1466 = vlaneseq
        %v1467 = vshrl.u32 %v1466, 7
        %v1468 = vsub.s32 0, %v1467
        %v1469 = vrot.slane %v1449, %v1468
        %v1470 = vlaneseq
        %v1471 = vshrl.u32 %v1470, 7
        %v1472 = vsub.s32 0, %v1471
        %v1473 = vrot.slane %v1450, %v1472
        %v1474 = vlaneseq
        %v1475 = vshrl.u32 %v1474, 7
        %v1476 = vsub.s32 0, %v1475
        %v1477 = vrot.slane %v1451, %v1476
        %v1478 = vlaneseq
        %v1479 = vshrl.u32 %v1478, 7
        %v1480 = vsub.s32 0, %v1479
        %v1481 = vrot.slane %v1452, %v1480
        %v1482 = vlaneseq
        %v1483 = vshrl.u32 %v1482, 7
        %v1484 = vsub.s32 0, %v1483
        %v1485 = vrot.slane %v1453, %v1484
        %v1486 = vmul.f32 %v1333, %v1457
        %v1487 = vmul.f32 %v1334, %v1461
        %v1488 = vmul.f32 %v1335, %v1465
        %v1489 = vmul.f32 %v1336, %v1469
        %v1490 = vmul.f32 %v1337, %v1473
        %v1491 = vmul.f32 %v1338, %v1477
        %v1492 = vmul.f32 %v1339, %v1481
        %v1493 = vmul.f32 %v1340, %v1485
        %v1494 = vadd.f32 %v1486, %v1487
        %v1495 = vadd.f32 %v1494, %v1488
        %v1496 = vadd.f32 %v1495, %v1489
        %v1497 = vadd.f32 %v1496, %v1490
        %v1498 = vadd.f32 %v1497, %v1491
        %v1499 = vadd.f32 %v1498, %v1492
        %v1500 = vadd.f32 %v1499, %v1493
        %vm1501 = vcmp.ge.s32.totalorder %v1332, 1
        %v1502 = vmul.f32 %v1500, 1.442695
        %v1503 = vpow.pop %v1502
        %v1504 = vsel %vm1501, %v1503, 0.0
        %v1505 = vadd.f32 %v1397, %v1504
        %v1506 = vld [vmem:[#allocation4 + $0x1] sm:$0x1]
        %v1507 = vld [vmem:[#allocation4 + $0x9] sm:$0x1]
        %v1508 = vld [vmem:[#allocation4 + $0x11] sm:$0x1]
        %v1509 = vld [vmem:[#allocation4 + $0x19] sm:$0x1]
        %v1510 = vld [vmem:[#allocation4 + $0x21] sm:$0x1]
        %v1511 = vld [vmem:[#allocation4 + $0x29] sm:$0x1]
        %v1512 = vld [vmem:[#allocation4 + $0x31] sm:$0x1]
        %v1513 = vld [vmem:[#allocation4 + $0x39] sm:$0x1]
        %v1514 = vlaneseq
        %v1515 = vshrl.u32 %v1514, 7
        %v1516 = vsub.s32 0, %v1515
        %v1517 = vrot.slane %v1506, %v1516
        %v1518 = vlaneseq
        %v1519 = vshrl.u32 %v1518, 7
        %v1520 = vsub.s32 0, %v1519
        %v1521 = vrot.slane %v1507, %v1520
        %v1522 = vlaneseq
        %v1523 = vshrl.u32 %v1522, 7
        %v1524 = vsub.s32 0, %v1523
        %v1525 = vrot.slane %v1508, %v1524
        %v1526 = vlaneseq
        %v1527 = vshrl.u32 %v1526, 7
        %v1528 = vsub.s32 0, %v1527
        %v1529 = vrot.slane %v1509, %v1528
        %v1530 = vlaneseq
        %v1531 = vshrl.u32 %v1530, 7
        %v1532 = vsub.s32 0, %v1531
        %v1533 = vrot.slane %v1510, %v1532
        %v1534 = vlaneseq
        %v1535 = vshrl.u32 %v1534, 7
        %v1536 = vsub.s32 0, %v1535
        %v1537 = vrot.slane %v1511, %v1536
        %v1538 = vlaneseq
        %v1539 = vshrl.u32 %v1538, 7
        %v1540 = vsub.s32 0, %v1539
        %v1541 = vrot.slane %v1512, %v1540
        %v1542 = vlaneseq
        %v1543 = vshrl.u32 %v1542, 7
        %v1544 = vsub.s32 0, %v1543
        %v1545 = vrot.slane %v1513, %v1544
        %v1546 = vmul.f32 %v1504, %v1517
        %v1547 = vmul.f32 %v1504, %v1521
        %v1548 = vmul.f32 %v1504, %v1525
        %v1549 = vmul.f32 %v1504, %v1529
        %v1550 = vmul.f32 %v1504, %v1533
        %v1551 = vmul.f32 %v1504, %v1537
        %v1552 = vmul.f32 %v1504, %v1541
        %v1553 = vmul.f32 %v1504, %v1545
        %v1554 = vadd.f32 %v1438, %v1546
        %v1555 = vadd.f32 %v1439, %v1547
        %v1556 = vadd.f32 %v1440, %v1548
        %v1557 = vadd.f32 %v1441, %v1549
        %v1558 = vadd.f32 %v1442, %v1550
        %v1559 = vadd.f32 %v1443, %v1551
        %v1560 = vadd.f32 %v1444, %v1552
        %v1561 = vadd.f32 %v1445, %v1553
        %v1562 = vld [vmem:[#allocation3 + $0x2] sm:$0x1]
        %v1563 = vld [vmem:[#allocation3 + $0xa] sm:$0x1]
        %v1564 = vld [vmem:[#allocation3 + $0x12] sm:$0x1]
        %v1565 = vld [vmem:[#allocation3 + $0x1a] sm:$0x1]
        %v1566 = vld [vmem:[#allocation3 + $0x22] sm:$0x1]
        %v1567 = vld [vmem:[#allocation3 + $0x2a] sm:$0x1]
        %v1568 = vld [vmem:[#allocation3 + $0x32] sm:$0x1]
        %v1569 = vld [vmem:[#allocation3 + $0x3a] sm:$0x1]
        %v1570 = vlaneseq
        %v1571 = vshrl.u32 %v1570, 7
        %v1572 = vsub.s32 0, %v1571
        %v1573 = vrot.slane %v1562, %v1572
        %v1574 = vlaneseq
        %v1575 = vshrl.u32 %v1574, 7
        %v1576 = vsub.s32 0, %v1575
        %v1577 = vrot.slane %v1563, %v1576
        %v1578 = vlaneseq
        %v1579 = vshrl.u32 %v1578, 7
        %v1580 = vsub.s32 0, %v1579
        %v1581 = vrot.slane %v1564, %v1580
        %v1582 = vlaneseq
        %v1583 = vshrl.u32 %v1582, 7
        %v1584 = vsub.s32 0, %v1583
        %v1585 = vrot.slane %v1565, %v1584
        %v1586 = vlaneseq
        %v1587 = vshrl.u32 %v1586, 7
        %v1588 = vsub.s32 0, %v1587
        %v1589 = vrot.slane %v1566, %v1588
        %v1590 = vlaneseq
        %v1591 = vshrl.u32 %v1590, 7
        %v1592 = vsub.s32 0, %v1591
        %v1593 = vrot.slane %v1567, %v1592
        %v1594 = vlaneseq
        %v1595 = vshrl.u32 %v1594, 7
        %v1596 = vsub.s32 0, %v1595
        %v1597 = vrot.slane %v1568, %v1596
        %v1598 = vlaneseq
        %v1599 = vshrl.u32 %v1598, 7
        %v1600 = vsub.s32 0, %v1599
        %v1601 = vrot.slane %v1569, %v1600
        %v1602 = vmul.f32 %v1333, %v1573
        %v1603 = vmul.f32 %v1334, %v1577
        %v1604 = vmul.f32 %v1335, %v1581
        %v1605 = vmul.f32 %v1336, %v1585
        %v1606 = vmul.f32 %v1337, %v1589
        %v1607 = vmul.f32 %v1338, %v1593
        %v1608 = vmul.f32 %v1339, %v1597
        %v1609 = vmul.f32 %v1340, %v1601
        %v1610 = vadd.f32 %v1602, %v1603
        %v1611 = vadd.f32 %v1610, %v1604
        %v1612 = vadd.f32 %v1611, %v1605
        %v1613 = vadd.f32 %v1612, %v1606
        %v1614 = vadd.f32 %v1613, %v1607
        %v1615 = vadd.f32 %v1614, %v1608
        %v1616 = vadd.f32 %v1615, %v1609
        %vm1617 = vcmp.ge.s32.totalorder %v1332, 2
        %v1618 = vmul.f32 %v1616, 1.442695
        %v1619 = vpow.pop %v1618
        %v1620 = vsel %vm1617, %v1619, 0.0
        %v1621 = vadd.f32 %v1505, %v1620
        %v1622 = vld [vmem:[#allocation4 + $0x2] sm:$0x1]
        %v1623 = vld [vmem:[#allocation4 + $0xa] sm:$0x1]
        %v1624 = vld [vmem:[#allocation4 + $0x12] sm:$0x1]
        %v1625 = vld [vmem:[#allocation4 + $0x1a] sm:$0x1]
        %v1626 = vld [vmem:[#allocation4 + $0x22] sm:$0x1]
        %v1627 = vld [vmem:[#allocation4 + $0x2a] sm:$0x1]
        %v1628 = vld [vmem:[#allocation4 + $0x32] sm:$0x1]
        %v1629 = vld [vmem:[#allocation4 + $0x3a] sm:$0x1]
        %v1630 = vlaneseq
        %v1631 = vshrl.u32 %v1630, 7
        %v1632 = vsub.s32 0, %v1631
        %v1633 = vrot.slane %v1622, %v1632
        %v1634 = vlaneseq
        %v1635 = vshrl.u32 %v1634, 7
        %v1636 = vsub.s32 0, %v1635
        %v1637 = vrot.slane %v1623, %v1636
        %v1638 = vlaneseq
        %v1639 = vshrl.u32 %v1638, 7
        %v1640 = vsub.s32 0, %v1639
        %v1641 = vrot.slane %v1624, %v1640
        %v1642 = vlaneseq
        %v1643 = vshrl.u32 %v1642, 7
        %v1644 = vsub.s32 0, %v1643
        %v1645 = vrot.slane %v1625, %v1644
        %v1646 = vlaneseq
        %v1647 = vshrl.u32 %v1646, 7
        %v1648 = vsub.s32 0, %v1647
        %v1649 = vrot.slane %v1626, %v1648
        %v1650 = vlaneseq
        %v1651 = vshrl.u32 %v1650, 7
        %v1652 = vsub.s32 0, %v1651
        %v1653 = vrot.slane %v1627, %v1652
        %v1654 = vlaneseq
        %v1655 = vshrl.u32 %v1654, 7
        %v1656 = vsub.s32 0, %v1655
        %v1657 = vrot.slane %v1628, %v1656
        %v1658 = vlaneseq
        %v1659 = vshrl.u32 %v1658, 7
        %v1660 = vsub.s32 0, %v1659
        %v1661 = vrot.slane %v1629, %v1660
        %v1662 = vmul.f32 %v1620, %v1633
        %v1663 = vmul.f32 %v1620, %v1637
        %v1664 = vmul.f32 %v1620, %v1641
        %v1665 = vmul.f32 %v1620, %v1645
        %v1666 = vmul.f32 %v1620, %v1649
        %v1667 = vmul.f32 %v1620, %v1653
        %v1668 = vmul.f32 %v1620, %v1657
        %v1669 = vmul.f32 %v1620, %v1661
        %v1670 = vadd.f32 %v1554, %v1662
        %v1671 = vadd.f32 %v1555, %v1663
        %v1672 = vadd.f32 %v1556, %v1664
        %v1673 = vadd.f32 %v1557, %v1665
        %v1674 = vadd.f32 %v1558, %v1666
        %v1675 = vadd.f32 %v1559, %v1667
        %v1676 = vadd.f32 %v1560, %v1668
        %v1677 = vadd.f32 %v1561, %v1669
        %v1678 = vld [vmem:[#allocation3 + $0x3] sm:$0x1]
        %v1679 = vld [vmem:[#allocation3 + $0xb] sm:$0x1]
        %v1680 = vld [vmem:[#allocation3 + $0x13] sm:$0x1]
        %v1681 = vld [vmem:[#allocation3 + $0x1b] sm:$0x1]
        %v1682 = vld [vmem:[#allocation3 + $0x23] sm:$0x1]
        %v1683 = vld [vmem:[#allocation3 + $0x2b] sm:$0x1]
        %v1684 = vld [vmem:[#allocation3 + $0x33] sm:$0x1]
        %v1685 = vld [vmem:[#allocation3 + $0x3b] sm:$0x1]
        %v1686 = vlaneseq
        %v1687 = vshrl.u32 %v1686, 7
        %v1688 = vsub.s32 0, %v1687
        %v1689 = vrot.slane %v1678, %v1688
        %v1690 = vlaneseq
        %v1691 = vshrl.u32 %v1690, 7
        %v1692 = vsub.s32 0, %v1691
        %v1693 = vrot.slane %v1679, %v1692
        %v1694 = vlaneseq
        %v1695 = vshrl.u32 %v1694, 7
        %v1696 = vsub.s32 0, %v1695
        %v1697 = vrot.slane %v1680, %v1696
        %v1698 = vlaneseq
        %v1699 = vshrl.u32 %v1698, 7
        %v1700 = vsub.s32 0, %v1699
        %v1701 = vrot.slane %v1681, %v1700
        %v1702 = vlaneseq
        %v1703 = vshrl.u32 %v1702, 7
        %v1704 = vsub.s32 0, %v1703
        %v1705 = vrot.slane %v1682, %v1704
        %v1706 = vlaneseq
        %v1707 = vshrl.u32 %v1706, 7
        %v1708 = vsub.s32 0, %v1707
        %v1709 = vrot.slane %v1683, %v1708
        %v1710 = vlaneseq
        %v1711 = vshrl.u32 %v1710, 7
        %v1712 = vsub.s32 0, %v1711
        %v1713 = vrot.slane %v1684, %v1712
        %v1714 = vlaneseq
        %v1715 = vshrl.u32 %v1714, 7
        %v1716 = vsub.s32 0, %v1715
        %v1717 = vrot.slane %v1685, %v1716
        %v1718 = vmul.f32 %v1333, %v1689
        %v1719 = vmul.f32 %v1334, %v1693
        %v1720 = vmul.f32 %v1335, %v1697
        %v1721 = vmul.f32 %v1336, %v1701
        %v1722 = vmul.f32 %v1337, %v1705
        %v1723 = vmul.f32 %v1338, %v1709
        %v1724 = vmul.f32 %v1339, %v1713
        %v1725 = vmul.f32 %v1340, %v1717
        %v1726 = vadd.f32 %v1718, %v1719
        %v1727 = vadd.f32 %v1726, %v1720
        %v1728 = vadd.f32 %v1727, %v1721
        %v1729 = vadd.f32 %v1728, %v1722
        %v1730 = vadd.f32 %v1729, %v1723
        %v1731 = vadd.f32 %v1730, %v1724
        %v1732 = vadd.f32 %v1731, %v1725
        %vm1733 = vcmp.ge.s32.totalorder %v1332, 3
        %v1734 = vmul.f32 %v1732, 1.442695
        %v1735 = vpow.pop %v1734
        %v1736 = vsel %vm1733, %v1735, 0.0
        %v1737 = vadd.f32 %v1621, %v1736
        %v1738 = vld [vmem:[#allocation4 + $0x3] sm:$0x1]
        %v1739 = vld [vmem:[#allocation4 + $0xb] sm:$0x1]
        %v1740 = vld [vmem:[#allocation4 + $0x13] sm:$0x1]
        %v1741 = vld [vmem:[#allocation4 + $0x1b] sm:$0x1]
        %v1742 = vld [vmem:[#allocation4 + $0x23] sm:$0x1]
        %v1743 = vld [vmem:[#allocation4 + $0x2b] sm:$0x1]
        %v1744 = vld [vmem:[#allocation4 + $0x33] sm:$0x1]
        %v1745 = vld [vmem:[#allocation4 + $0x3b] sm:$0x1]
        %v1746 = vlaneseq
        %v1747 = vshrl.u32 %v1746, 7
        %v1748 = vsub.s32 0, %v1747
        %v1749 = vrot.slane %v1738, %v1748
        %v1750 = vlaneseq
        %v1751 = vshrl.u32 %v1750, 7
        %v1752 = vsub.s32 0, %v1751
        %v1753 = vrot.slane %v1739, %v1752
        %v1754 = vlaneseq
        %v1755 = vshrl.u32 %v1754, 7
        %v1756 = vsub.s32 0, %v1755
        %v1757 = vrot.slane %v1740, %v1756
        %v1758 = vlaneseq
        %v1759 = vshrl.u32 %v1758, 7
        %v1760 = vsub.s32 0, %v1759
        %v1761 = vrot.slane %v1741, %v1760
        %v1762 = vlaneseq
        %v1763 = vshrl.u32 %v1762, 7
        %v1764 = vsub.s32 0, %v1763
        %v1765 = vrot.slane %v1742, %v1764
        %v1766 = vlaneseq
        %v1767 = vshrl.u32 %v1766, 7
        %v1768 = vsub.s32 0, %v1767
        %v1769 = vrot.slane %v1743, %v1768
        %v1770 = vlaneseq
        %v1771 = vshrl.u32 %v1770, 7
        %v1772 = vsub.s32 0, %v1771
        %v1773 = vrot.slane %v1744, %v1772
        %v1774 = vlaneseq
        %v1775 = vshrl.u32 %v1774, 7
        %v1776 = vsub.s32 0, %v1775
        %v1777 = vrot.slane %v1745, %v1776
        %v1778 = vmul.f32 %v1736, %v1749
        %v1779 = vmul.f32 %v1736, %v1753
        %v1780 = vmul.f32 %v1736, %v1757
        %v1781 = vmul.f32 %v1736, %v1761
        %v1782 = vmul.f32 %v1736, %v1765
        %v1783 = vmul.f32 %v1736, %v1769
        %v1784 = vmul.f32 %v1736, %v1773
        %v1785 = vmul.f32 %v1736, %v1777
        %v1786 = vadd.f32 %v1670, %v1778
        %v1787 = vadd.f32 %v1671, %v1779
        %v1788 = vadd.f32 %v1672, %v1780
        %v1789 = vadd.f32 %v1673, %v1781
        %v1790 = vadd.f32 %v1674, %v1782
        %v1791 = vadd.f32 %v1675, %v1783
        %v1792 = vadd.f32 %v1676, %v1784
        %v1793 = vadd.f32 %v1677, %v1785
        %v1794 = vld [vmem:[#allocation3 + $0x4] sm:$0x1]
        %v1795 = vld [vmem:[#allocation3 + $0xc] sm:$0x1]
        %v1796 = vld [vmem:[#allocation3 + $0x14] sm:$0x1]
        %v1797 = vld [vmem:[#allocation3 + $0x1c] sm:$0x1]
        %v1798 = vld [vmem:[#allocation3 + $0x24] sm:$0x1]
        %v1799 = vld [vmem:[#allocation3 + $0x2c] sm:$0x1]
        %v1800 = vld [vmem:[#allocation3 + $0x34] sm:$0x1]
        %v1801 = vld [vmem:[#allocation3 + $0x3c] sm:$0x1]
        %v1802 = vlaneseq
        %v1803 = vshrl.u32 %v1802, 7
        %v1804 = vsub.s32 0, %v1803
        %v1805 = vrot.slane %v1794, %v1804
        %v1806 = vlaneseq
        %v1807 = vshrl.u32 %v1806, 7
        %v1808 = vsub.s32 0, %v1807
        %v1809 = vrot.slane %v1795, %v1808
        %v1810 = vlaneseq
        %v1811 = vshrl.u32 %v1810, 7
        %v1812 = vsub.s32 0, %v1811
        %v1813 = vrot.slane %v1796, %v1812
        %v1814 = vlaneseq
        %v1815 = vshrl.u32 %v1814, 7
        %v1816 = vsub.s32 0, %v1815
        %v1817 = vrot.slane %v1797, %v1816
        %v1818 = vlaneseq
        %v1819 = vshrl.u32 %v1818, 7
        %v1820 = vsub.s32 0, %v1819
        %v1821 = vrot.slane %v1798, %v1820
        %v1822 = vlaneseq
        %v1823 = vshrl.u32 %v1822, 7
        %v1824 = vsub.s32 0, %v1823
        %v1825 = vrot.slane %v1799, %v1824
        %v1826 = vlaneseq
        %v1827 = vshrl.u32 %v1826, 7
        %v1828 = vsub.s32 0, %v1827
        %v1829 = vrot.slane %v1800, %v1828
        %v1830 = vlaneseq
        %v1831 = vshrl.u32 %v1830, 7
        %v1832 = vsub.s32 0, %v1831
        %v1833 = vrot.slane %v1801, %v1832
        %v1834 = vmul.f32 %v1333, %v1805
        %v1835 = vmul.f32 %v1334, %v1809
        %v1836 = vmul.f32 %v1335, %v1813
        %v1837 = vmul.f32 %v1336, %v1817
        %v1838 = vmul.f32 %v1337, %v1821
        %v1839 = vmul.f32 %v1338, %v1825
        %v1840 = vmul.f32 %v1339, %v1829
        %v1841 = vmul.f32 %v1340, %v1833
        %v1842 = vadd.f32 %v1834, %v1835
        %v1843 = vadd.f32 %v1842, %v1836
        %v1844 = vadd.f32 %v1843, %v1837
        %v1845 = vadd.f32 %v1844, %v1838
        %v1846 = vadd.f32 %v1845, %v1839
        %v1847 = vadd.f32 %v1846, %v1840
        %v1848 = vadd.f32 %v1847, %v1841
        %vm1849 = vcmp.ge.s32.totalorder %v1332, 4
        %v1850 = vmul.f32 %v1848, 1.442695
        %v1851 = vpow.pop %v1850
        %v1852 = vsel %vm1849, %v1851, 0.0
        %v1853 = vadd.f32 %v1737, %v1852
        %v1854 = vld [vmem:[#allocation4 + $0x4] sm:$0x1]
        %v1855 = vld [vmem:[#allocation4 + $0xc] sm:$0x1]
        %v1856 = vld [vmem:[#allocation4 + $0x14] sm:$0x1]
        %v1857 = vld [vmem:[#allocation4 + $0x1c] sm:$0x1]
        %v1858 = vld [vmem:[#allocation4 + $0x24] sm:$0x1]
        %v1859 = vld [vmem:[#allocation4 + $0x2c] sm:$0x1]
        %v1860 = vld [vmem:[#allocation4 + $0x34] sm:$0x1]
        %v1861 = vld [vmem:[#allocation4 + $0x3c] sm:$0x1]
        %v1862 = vlaneseq
        %v1863 = vshrl.u32 %v1862, 7
        %v1864 = vsub.s32 0, %v1863
        %v1865 = vrot.slane %v1854, %v1864
        %v1866 = vlaneseq
        %v1867 = vshrl.u32 %v1866, 7
        %v1868 = vsub.s32 0, %v1867
        %v1869 = vrot.slane %v1855, %v1868
        %v1870 = vlaneseq
        %v1871 = vshrl.u32 %v1870, 7
        %v1872 = vsub.s32 0, %v1871
        %v1873 = vrot.slane %v1856, %v1872
        %v1874 = vlaneseq
        %v1875 = vshrl.u32 %v1874, 7
        %v1876 = vsub.s32 0, %v1875
        %v1877 = vrot.slane %v1857, %v1876
        %v1878 = vlaneseq
        %v1879 = vshrl.u32 %v1878, 7
        %v1880 = vsub.s32 0, %v1879
        %v1881 = vrot.slane %v1858, %v1880
        %v1882 = vlaneseq
        %v1883 = vshrl.u32 %v1882, 7
        %v1884 = vsub.s32 0, %v1883
        %v1885 = vrot.slane %v1859, %v1884
        %v1886 = vlaneseq
        %v1887 = vshrl.u32 %v1886, 7
        %v1888 = vsub.s32 0, %v1887
        %v1889 = vrot.slane %v1860, %v1888
        %v1890 = vlaneseq
        %v1891 = vshrl.u32 %v1890, 7
        %v1892 = vsub.s32 0, %v1891
        %v1893 = vrot.slane %v1861, %v1892
        %v1894 = vmul.f32 %v1852, %v1865
        %v1895 = vmul.f32 %v1852, %v1869
        %v1896 = vmul.f32 %v1852, %v1873
        %v1897 = vmul.f32 %v1852, %v1877
        %v1898 = vmul.f32 %v1852, %v1881
        %v1899 = vmul.f32 %v1852, %v1885
        %v1900 = vmul.f32 %v1852, %v1889
        %v1901 = vmul.f32 %v1852, %v1893
        %v1902 = vadd.f32 %v1786, %v1894
        %v1903 = vadd.f32 %v1787, %v1895
        %v1904 = vadd.f32 %v1788, %v1896
        %v1905 = vadd.f32 %v1789, %v1897
        %v1906 = vadd.f32 %v1790, %v1898
        %v1907 = vadd.f32 %v1791, %v1899
        %v1908 = vadd.f32 %v1792, %v1900
        %v1909 = vadd.f32 %v1793, %v1901
        %v1910 = vld [vmem:[#allocation3 + $0x5] sm:$0x1]
        %v1911 = vld [vmem:[#allocation3 + $0xd] sm:$0x1]
        %v1912 = vld [vmem:[#allocation3 + $0x15] sm:$0x1]
        %v1913 = vld [vmem:[#allocation3 + $0x1d] sm:$0x1]
        %v1914 = vld [vmem:[#allocation3 + $0x25] sm:$0x1]
        %v1915 = vld [vmem:[#allocation3 + $0x2d] sm:$0x1]
        %v1916 = vld [vmem:[#allocation3 + $0x35] sm:$0x1]
        %v1917 = vld [vmem:[#allocation3 + $0x3d] sm:$0x1]
        %v1918 = vlaneseq
        %v1919 = vshrl.u32 %v1918, 7
        %v1920 = vsub.s32 0, %v1919
        %v1921 = vrot.slane %v1910, %v1920
        %v1922 = vlaneseq
        %v1923 = vshrl.u32 %v1922, 7
        %v1924 = vsub.s32 0, %v1923
        %v1925 = vrot.slane %v1911, %v1924
        %v1926 = vlaneseq
        %v1927 = vshrl.u32 %v1926, 7
        %v1928 = vsub.s32 0, %v1927
        %v1929 = vrot.slane %v1912, %v1928
        %v1930 = vlaneseq
        %v1931 = vshrl.u32 %v1930, 7
        %v1932 = vsub.s32 0, %v1931
        %v1933 = vrot.slane %v1913, %v1932
        %v1934 = vlaneseq
        %v1935 = vshrl.u32 %v1934, 7
        %v1936 = vsub.s32 0, %v1935
        %v1937 = vrot.slane %v1914, %v1936
        %v1938 = vlaneseq
        %v1939 = vshrl.u32 %v1938, 7
        %v1940 = vsub.s32 0, %v1939
        %v1941 = vrot.slane %v1915, %v1940
        %v1942 = vlaneseq
        %v1943 = vshrl.u32 %v1942, 7
        %v1944 = vsub.s32 0, %v1943
        %v1945 = vrot.slane %v1916, %v1944
        %v1946 = vlaneseq
        %v1947 = vshrl.u32 %v1946, 7
        %v1948 = vsub.s32 0, %v1947
        %v1949 = vrot.slane %v1917, %v1948
        %v1950 = vmul.f32 %v1333, %v1921
        %v1951 = vmul.f32 %v1334, %v1925
        %v1952 = vmul.f32 %v1335, %v1929
        %v1953 = vmul.f32 %v1336, %v1933
        %v1954 = vmul.f32 %v1337, %v1937
        %v1955 = vmul.f32 %v1338, %v1941
        %v1956 = vmul.f32 %v1339, %v1945
        %v1957 = vmul.f32 %v1340, %v1949
        %v1958 = vadd.f32 %v1950, %v1951
        %v1959 = vadd.f32 %v1958, %v1952
        %v1960 = vadd.f32 %v1959, %v1953
        %v1961 = vadd.f32 %v1960, %v1954
        %v1962 = vadd.f32 %v1961, %v1955
        %v1963 = vadd.f32 %v1962, %v1956
        %v1964 = vadd.f32 %v1963, %v1957
        %vm1965 = vcmp.ge.s32.totalorder %v1332, 5
        %v1966 = vmul.f32 %v1964, 1.442695
        %v1967 = vpow.pop %v1966
        %v1968 = vsel %vm1965, %v1967, 0.0
        %v1969 = vadd.f32 %v1853, %v1968
        %v1970 = vld [vmem:[#allocation4 + $0x5] sm:$0x1]
        %v1971 = vld [vmem:[#allocation4 + $0xd] sm:$0x1]
        %v1972 = vld [vmem:[#allocation4 + $0x15] sm:$0x1]
        %v1973 = vld [vmem:[#allocation4 + $0x1d] sm:$0x1]
        %v1974 = vld [vmem:[#allocation4 + $0x25] sm:$0x1]
        %v1975 = vld [vmem:[#allocation4 + $0x2d] sm:$0x1]
        %v1976 = vld [vmem:[#allocation4 + $0x35] sm:$0x1]
        %v1977 = vld [vmem:[#allocation4 + $0x3d] sm:$0x1]
        %v1978 = vlaneseq
        %v1979 = vshrl.u32 %v1978, 7
        %v1980 = vsub.s32 0, %v1979
        %v1981 = vrot.slane %v1970, %v1980
        %v1982 = vlaneseq
        %v1983 = vshrl.u32 %v1982, 7
        %v1984 = vsub.s32 0, %v1983
        %v1985 = vrot.slane %v1971, %v1984
        %v1986 = vlaneseq
        %v1987 = vshrl.u32 %v1986, 7
        %v1988 = vsub.s32 0, %v1987
        %v1989 = vrot.slane %v1972, %v1988
        %v1990 = vlaneseq
        %v1991 = vshrl.u32 %v1990, 7
        %v1992 = vsub.s32 0, %v1991
        %v1993 = vrot.slane %v1973, %v1992
        %v1994 = vlaneseq
        %v1995 = vshrl.u32 %v1994, 7
        %v1996 = vsub.s32 0, %v1995
        %v1997 = vrot.slane %v1974, %v1996
        %v1998 = vlaneseq
        %v1999 = vshrl.u32 %v1998, 7
        %v2000 = vsub.s32 0, %v1999
        %v2001 = vrot.slane %v1975, %v2000
        %v2002 = vlaneseq
        %v2003 = vshrl.u32 %v2002, 7
        %v2004 = vsub.s32 0, %v2003
        %v2005 = vrot.slane %v1976, %v2004
        %v2006 = vlaneseq
        %v2007 = vshrl.u32 %v2006, 7
        %v2008 = vsub.s32 0, %v2007
        %v2009 = vrot.slane %v1977, %v2008
        %v2010 = vmul.f32 %v1968, %v1981
        %v2011 = vmul.f32 %v1968, %v1985
        %v2012 = vmul.f32 %v1968, %v1989
        %v2013 = vmul.f32 %v1968, %v1993
        %v2014 = vmul.f32 %v1968, %v1997
        %v2015 = vmul.f32 %v1968, %v2001
        %v2016 = vmul.f32 %v1968, %v2005
        %v2017 = vmul.f32 %v1968, %v2009
        %v2018 = vadd.f32 %v1902, %v2010
        %v2019 = vadd.f32 %v1903, %v2011
        %v2020 = vadd.f32 %v1904, %v2012
        %v2021 = vadd.f32 %v1905, %v2013
        %v2022 = vadd.f32 %v1906, %v2014
        %v2023 = vadd.f32 %v1907, %v2015
        %v2024 = vadd.f32 %v1908, %v2016
        %v2025 = vadd.f32 %v1909, %v2017
        %v2026 = vld [vmem:[#allocation3 + $0x6] sm:$0x1]
        %v2027 = vld [vmem:[#allocation3 + $0xe] sm:$0x1]
        %v2028 = vld [vmem:[#allocation3 + $0x16] sm:$0x1]
        %v2029 = vld [vmem:[#allocation3 + $0x1e] sm:$0x1]
        %v2030 = vld [vmem:[#allocation3 + $0x26] sm:$0x1]
        %v2031 = vld [vmem:[#allocation3 + $0x2e] sm:$0x1]
        %v2032 = vld [vmem:[#allocation3 + $0x36] sm:$0x1]
        %v2033 = vld [vmem:[#allocation3 + $0x3e] sm:$0x1]
        %v2034 = vlaneseq
        %v2035 = vshrl.u32 %v2034, 7
        %v2036 = vsub.s32 0, %v2035
        %v2037 = vrot.slane %v2026, %v2036
        %v2038 = vlaneseq
        %v2039 = vshrl.u32 %v2038, 7
        %v2040 = vsub.s32 0, %v2039
        %v2041 = vrot.slane %v2027, %v2040
        %v2042 = vlaneseq
        %v2043 = vshrl.u32 %v2042, 7
        %v2044 = vsub.s32 0, %v2043
        %v2045 = vrot.slane %v2028, %v2044
        %v2046 = vlaneseq
        %v2047 = vshrl.u32 %v2046, 7
        %v2048 = vsub.s32 0, %v2047
        %v2049 = vrot.slane %v2029, %v2048
        %v2050 = vlaneseq
        %v2051 = vshrl.u32 %v2050, 7
        %v2052 = vsub.s32 0, %v2051
        %v2053 = vrot.slane %v2030, %v2052
        %v2054 = vlaneseq
        %v2055 = vshrl.u32 %v2054, 7
        %v2056 = vsub.s32 0, %v2055
        %v2057 = vrot.slane %v2031, %v2056
        %v2058 = vlaneseq
        %v2059 = vshrl.u32 %v2058, 7
        %v2060 = vsub.s32 0, %v2059
        %v2061 = vrot.slane %v2032, %v2060
        %v2062 = vlaneseq
        %v2063 = vshrl.u32 %v2062, 7
        %v2064 = vsub.s32 0, %v2063
        %v2065 = vrot.slane %v2033, %v2064
        %v2066 = vmul.f32 %v1333, %v2037
        %v2067 = vmul.f32 %v1334, %v2041
        %v2068 = vmul.f32 %v1335, %v2045
        %v2069 = vmul.f32 %v1336, %v2049
        %v2070 = vmul.f32 %v1337, %v2053
        %v2071 = vmul.f32 %v1338, %v2057
        %v2072 = vmul.f32 %v1339, %v2061
        %v2073 = vmul.f32 %v1340, %v2065
        %v2074 = vadd.f32 %v2066, %v2067
        %v2075 = vadd.f32 %v2074, %v2068
        %v2076 = vadd.f32 %v2075, %v2069
        %v2077 = vadd.f32 %v2076, %v2070
        %v2078 = vadd.f32 %v2077, %v2071
        %v2079 = vadd.f32 %v2078, %v2072
        %v2080 = vadd.f32 %v2079, %v2073
        %vm2081 = vcmp.ge.s32.totalorder %v1332, 6
        %v2082 = vmul.f32 %v2080, 1.442695
        %v2083 = vpow.pop %v2082
        %v2084 = vsel %vm2081, %v2083, 0.0
        %v2085 = vadd.f32 %v1969, %v2084
        %v2086 = vld [vmem:[#allocation4 + $0x6] sm:$0x1]
        %v2087 = vld [vmem:[#allocation4 + $0xe] sm:$0x1]
        %v2088 = vld [vmem:[#allocation4 + $0x16] sm:$0x1]
        %v2089 = vld [vmem:[#allocation4 + $0x1e] sm:$0x1]
        %v2090 = vld [vmem:[#allocation4 + $0x26] sm:$0x1]
        %v2091 = vld [vmem:[#allocation4 + $0x2e] sm:$0x1]
        %v2092 = vld [vmem:[#allocation4 + $0x36] sm:$0x1]
        %v2093 = vld [vmem:[#allocation4 + $0x3e] sm:$0x1]
        %v2094 = vlaneseq
        %v2095 = vshrl.u32 %v2094, 7
        %v2096 = vsub.s32 0, %v2095
        %v2097 = vrot.slane %v2086, %v2096
        %v2098 = vlaneseq
        %v2099 = vshrl.u32 %v2098, 7
        %v2100 = vsub.s32 0, %v2099
        %v2101 = vrot.slane %v2087, %v2100
        %v2102 = vlaneseq
        %v2103 = vshrl.u32 %v2102, 7
        %v2104 = vsub.s32 0, %v2103
        %v2105 = vrot.slane %v2088, %v2104
        %v2106 = vlaneseq
        %v2107 = vshrl.u32 %v2106, 7
        %v2108 = vsub.s32 0, %v2107
        %v2109 = vrot.slane %v2089, %v2108
        %v2110 = vlaneseq
        %v2111 = vshrl.u32 %v2110, 7
        %v2112 = vsub.s32 0, %v2111
        %v2113 = vrot.slane %v2090, %v2112
        %v2114 = vlaneseq
        %v2115 = vshrl.u32 %v2114, 7
        %v2116 = vsub.s32 0, %v2115
        %v2117 = vrot.slane %v2091, %v2116
        %v2118 = vlaneseq
        %v2119 = vshrl.u32 %v2118, 7
        %v2120 = vsub.s32 0, %v2119
        %v2121 = vrot.slane %v2092, %v2120
        %v2122 = vlaneseq
        %v2123 = vshrl.u32 %v2122, 7
        %v2124 = vsub.s32 0, %v2123
        %v2125 = vrot.slane %v2093, %v2124
        %v2126 = vmul.f32 %v2084, %v2097
        %v2127 = vmul.f32 %v2084, %v2101
        %v2128 = vmul.f32 %v2084, %v2105
        %v2129 = vmul.f32 %v2084, %v2109
        %v2130 = vmul.f32 %v2084, %v2113
        %v2131 = vmul.f32 %v2084, %v2117
        %v2132 = vmul.f32 %v2084, %v2121
        %v2133 = vmul.f32 %v2084, %v2125
        %v2134 = vadd.f32 %v2018, %v2126
        %v2135 = vadd.f32 %v2019, %v2127
        %v2136 = vadd.f32 %v2020, %v2128
        %v2137 = vadd.f32 %v2021, %v2129
        %v2138 = vadd.f32 %v2022, %v2130
        %v2139 = vadd.f32 %v2023, %v2131
        %v2140 = vadd.f32 %v2024, %v2132
        %v2141 = vadd.f32 %v2025, %v2133
        %v2142 = vld [vmem:[#allocation3 + $0x7] sm:$0x1]
        %v2143 = vld [vmem:[#allocation3 + $0xf] sm:$0x1]
        %v2144 = vld [vmem:[#allocation3 + $0x17] sm:$0x1]
        %v2145 = vld [vmem:[#allocation3 + $0x1f] sm:$0x1]
        %v2146 = vld [vmem:[#allocation3 + $0x27] sm:$0x1]
        %v2147 = vld [vmem:[#allocation3 + $0x2f] sm:$0x1]
        %v2148 = vld [vmem:[#allocation3 + $0x37] sm:$0x1]
        %v2149 = vld [vmem:[#allocation3 + $0x3f] sm:$0x1]
        %v2150 = vlaneseq
        %v2151 = vshrl.u32 %v2150, 7
        %v2152 = vsub.s32 0, %v2151
        %v2153 = vrot.slane %v2142, %v2152
        %v2154 = vlaneseq
        %v2155 = vshrl.u32 %v2154, 7
        %v2156 = vsub.s32 0, %v2155
        %v2157 = vrot.slane %v2143, %v2156
        %v2158 = vlaneseq
        %v2159 = vshrl.u32 %v2158, 7
        %v2160 = vsub.s32 0, %v2159
        %v2161 = vrot.slane %v2144, %v2160
        %v2162 = vlaneseq
        %v2163 = vshrl.u32 %v2162, 7
        %v2164 = vsub.s32 0, %v2163
        %v2165 = vrot.slane %v2145, %v2164
        %v2166 = vlaneseq
        %v2167 = vshrl.u32 %v2166, 7
        %v2168 = vsub.s32 0, %v2167
        %v2169 = vrot.slane %v2146, %v2168
        %v2170 = vlaneseq
        %v2171 = vshrl.u32 %v2170, 7
        %v2172 = vsub.s32 0, %v2171
        %v2173 = vrot.slane %v2147, %v2172
        %v2174 = vlaneseq
        %v2175 = vshrl.u32 %v2174, 7
        %v2176 = vsub.s32 0, %v2175
        %v2177 = vrot.slane %v2148, %v2176
        %v2178 = vlaneseq
        %v2179 = vshrl.u32 %v2178, 7
        %v2180 = vsub.s32 0, %v2179
        %v2181 = vrot.slane %v2149, %v2180
        %v2182 = vmul.f32 %v1333, %v2153
        %v2183 = vmul.f32 %v1334, %v2157
        %v2184 = vmul.f32 %v1335, %v2161
        %v2185 = vmul.f32 %v1336, %v2165
        %v2186 = vmul.f32 %v1337, %v2169
        %v2187 = vmul.f32 %v1338, %v2173
        %v2188 = vmul.f32 %v1339, %v2177
        %v2189 = vmul.f32 %v1340, %v2181
        %v2190 = vadd.f32 %v2182, %v2183
        %v2191 = vadd.f32 %v2190, %v2184
        %v2192 = vadd.f32 %v2191, %v2185
        %v2193 = vadd.f32 %v2192, %v2186
        %v2194 = vadd.f32 %v2193, %v2187
        %v2195 = vadd.f32 %v2194, %v2188
        %v2196 = vadd.f32 %v2195, %v2189
        %vm2197 = vcmp.ge.s32.totalorder %v1332, 7
        %v2198 = vmul.f32 %v2196, 1.442695
        %v2199 = vpow.pop %v2198
        %v2200 = vsel %vm2197, %v2199, 0.0
        %v2201 = vadd.f32 %v2085, %v2200
        %v2202 = vld [vmem:[#allocation4 + $0x7] sm:$0x1]
        %v2203 = vld [vmem:[#allocation4 + $0xf] sm:$0x1]
        %v2204 = vld [vmem:[#allocation4 + $0x17] sm:$0x1]
        %v2205 = vld [vmem:[#allocation4 + $0x1f] sm:$0x1]
        %v2206 = vld [vmem:[#allocation4 + $0x27] sm:$0x1]
        %v2207 = vld [vmem:[#allocation4 + $0x2f] sm:$0x1]
        %v2208 = vld [vmem:[#allocation4 + $0x37] sm:$0x1]
        %v2209 = vld [vmem:[#allocation4 + $0x3f] sm:$0x1]
        %v2210 = vlaneseq
        %v2211 = vshrl.u32 %v2210, 7
        %v2212 = vsub.s32 0, %v2211
        %v2213 = vrot.slane %v2202, %v2212
        %v2214 = vlaneseq
        %v2215 = vshrl.u32 %v2214, 7
        %v2216 = vsub.s32 0, %v2215
        %v2217 = vrot.slane %v2203, %v2216
        %v2218 = vlaneseq
        %v2219 = vshrl.u32 %v2218, 7
        %v2220 = vsub.s32 0, %v2219
        %v2221 = vrot.slane %v2204, %v2220
        %v2222 = vlaneseq
        %v2223 = vshrl.u32 %v2222, 7
        %v2224 = vsub.s32 0, %v2223
        %v2225 = vrot.slane %v2205, %v2224
        %v2226 = vlaneseq
        %v2227 = vshrl.u32 %v2226, 7
        %v2228 = vsub.s32 0, %v2227
        %v2229 = vrot.slane %v2206, %v2228
        %v2230 = vlaneseq
        %v2231 = vshrl.u32 %v2230, 7
        %v2232 = vsub.s32 0, %v2231
        %v2233 = vrot.slane %v2207, %v2232
        %v2234 = vlaneseq
        %v2235 = vshrl.u32 %v2234, 7
        %v2236 = vsub.s32 0, %v2235
        %v2237 = vrot.slane %v2208, %v2236
        %v2238 = vlaneseq
        %v2239 = vshrl.u32 %v2238, 7
        %v2240 = vsub.s32 0, %v2239
        %v2241 = vrot.slane %v2209, %v2240
        %v2242 = vmul.f32 %v2200, %v2213
        %v2243 = vmul.f32 %v2200, %v2217
        %v2244 = vmul.f32 %v2200, %v2221
        %v2245 = vmul.f32 %v2200, %v2225
        %v2246 = vmul.f32 %v2200, %v2229
        %v2247 = vmul.f32 %v2200, %v2233
        %v2248 = vmul.f32 %v2200, %v2237
        %v2249 = vmul.f32 %v2200, %v2241
        %v2250 = vadd.f32 %v2134, %v2242
        %v2251 = vadd.f32 %v2135, %v2243
        %v2252 = vadd.f32 %v2136, %v2244
        %v2253 = vadd.f32 %v2137, %v2245
        %v2254 = vadd.f32 %v2138, %v2246
        %v2255 = vadd.f32 %v2139, %v2247
        %v2256 = vadd.f32 %v2140, %v2248
        %v2257 = vadd.f32 %v2141, %v2249
        %v2258 = vrcp.pop %v2201
        %v2259 = vmul.f32 %v2250, %v2258
        %v2260 = vmul.f32 %v2251, %v2258
        %v2261 = vmul.f32 %v2252, %v2258
        %v2262 = vmul.f32 %v2253, %v2258
        %v2263 = vmul.f32 %v2254, %v2258
        %v2264 = vmul.f32 %v2255, %v2258
        %v2265 = vmul.f32 %v2256, %v2258
        %v2266 = vmul.f32 %v2257, %v2258
        %2267 = vst [vmem:[#allocation5] sm:$0xff] %v2259
        %2268 = vst [vmem:[#allocation5 + $0x8] sm:$0xff] %v2260
        %2269 = vst [vmem:[#allocation5 + $0x10] sm:$0xff] %v2261
        %2270 = vst [vmem:[#allocation5 + $0x18] sm:$0xff] %v2262
        %2271 = vst [vmem:[#allocation5 + $0x20] sm:$0xff] %v2263
        %2272 = vst [vmem:[#allocation5 + $0x28] sm:$0xff] %v2264
        %2273 = vst [vmem:[#allocation5 + $0x30] sm:$0xff] %v2265
        %2274 = vst [vmem:[#allocation5 + $0x38] sm:$0xff] %v2266
        %s2275 = scalar_lea.vmem [#allocation2], 64
        %v2276 = vld [vmem:[%s2275] sm:$0xff]
        %v2277 = vld [vmem:[%s2275 + $0x8] sm:$0xff]
        %v2278 = vld [vmem:[%s2275 + $0x10] sm:$0xff]
        %v2279 = vld [vmem:[%s2275 + $0x18] sm:$0xff]
        %v2280 = vld [vmem:[%s2275 + $0x20] sm:$0xff]
        %v2281 = vld [vmem:[%s2275 + $0x28] sm:$0xff]
        %v2282 = vld [vmem:[%s2275 + $0x30] sm:$0xff]
        %v2283 = vld [vmem:[%s2275 + $0x38] sm:$0xff]
        %s2284 = scalar_lea.vmem [#allocation3], 64
        %v2285 = vld [vmem:[%s2284] sm:$0x1]
        %v2286 = vld [vmem:[%s2284 + $0x8] sm:$0x1]
        %v2287 = vld [vmem:[%s2284 + $0x10] sm:$0x1]
        %v2288 = vld [vmem:[%s2284 + $0x18] sm:$0x1]
        %v2289 = vld [vmem:[%s2284 + $0x20] sm:$0x1]
        %v2290 = vld [vmem:[%s2284 + $0x28] sm:$0x1]
        %v2291 = vld [vmem:[%s2284 + $0x30] sm:$0x1]
        %v2292 = vld [vmem:[%s2284 + $0x38] sm:$0x1]
        %v2293 = vlaneseq
        %v2294 = vshrl.u32 %v2293, 7
        %v2295 = vsub.s32 0, %v2294
        %v2296 = vrot.slane %v2285, %v2295
        %v2297 = vlaneseq
        %v2298 = vshrl.u32 %v2297, 7
        %v2299 = vsub.s32 0, %v2298
        %v2300 = vrot.slane %v2286, %v2299
        %v2301 = vlaneseq
        %v2302 = vshrl.u32 %v2301, 7
        %v2303 = vsub.s32 0, %v2302
        %v2304 = vrot.slane %v2287, %v2303
        %v2305 = vlaneseq
        %v2306 = vshrl.u32 %v2305, 7
        %v2307 = vsub.s32 0, %v2306
        %v2308 = vrot.slane %v2288, %v2307
        %v2309 = vlaneseq
        %v2310 = vshrl.u32 %v2309, 7
        %v2311 = vsub.s32 0, %v2310
        %v2312 = vrot.slane %v2289, %v2311
        %v2313 = vlaneseq
        %v2314 = vshrl.u32 %v2313, 7
        %v2315 = vsub.s32 0, %v2314
        %v2316 = vrot.slane %v2290, %v2315
        %v2317 = vlaneseq
        %v2318 = vshrl.u32 %v2317, 7
        %v2319 = vsub.s32 0, %v2318
        %v2320 = vrot.slane %v2291, %v2319
        %v2321 = vlaneseq
        %v2322 = vshrl.u32 %v2321, 7
        %v2323 = vsub.s32 0, %v2322
        %v2324 = vrot.slane %v2292, %v2323
        %v2325 = vmul.f32 %v2276, %v2296
        %v2326 = vmul.f32 %v2277, %v2300
        %v2327 = vmul.f32 %v2278, %v2304
        %v2328 = vmul.f32 %v2279, %v2308
        %v2329 = vmul.f32 %v2280, %v2312
        %v2330 = vmul.f32 %v2281, %v2316
        %v2331 = vmul.f32 %v2282, %v2320
        %v2332 = vmul.f32 %v2283, %v2324
        %v2333 = vadd.f32 %v2325, %v2326
        %v2334 = vadd.f32 %v2333, %v2327
        %v2335 = vadd.f32 %v2334, %v2328
        %v2336 = vadd.f32 %v2335, %v2329
        %v2337 = vadd.f32 %v2336, %v2330
        %v2338 = vadd.f32 %v2337, %v2331
        %v2339 = vadd.f32 %v2338, %v2332
        %v2340 = vmul.f32 %v2339, 1.442695
        %v2341 = vpow.pop %v2340
        %s2342 = scalar_lea.vmem [#allocation4], 64
        %v2343 = vld [vmem:[%s2342] sm:$0x1]
        %v2344 = vld [vmem:[%s2342 + $0x8] sm:$0x1]
        %v2345 = vld [vmem:[%s2342 + $0x10] sm:$0x1]
        %v2346 = vld [vmem:[%s2342 + $0x18] sm:$0x1]
        %v2347 = vld [vmem:[%s2342 + $0x20] sm:$0x1]
        %v2348 = vld [vmem:[%s2342 + $0x28] sm:$0x1]
        %v2349 = vld [vmem:[%s2342 + $0x30] sm:$0x1]
        %v2350 = vld [vmem:[%s2342 + $0x38] sm:$0x1]
        %v2351 = vlaneseq
        %v2352 = vshrl.u32 %v2351, 7
        %v2353 = vsub.s32 0, %v2352
        %v2354 = vrot.slane %v2343, %v2353
        %v2355 = vlaneseq
        %v2356 = vshrl.u32 %v2355, 7
        %v2357 = vsub.s32 0, %v2356
        %v2358 = vrot.slane %v2344, %v2357
        %v2359 = vlaneseq
        %v2360 = vshrl.u32 %v2359, 7
        %v2361 = vsub.s32 0, %v2360
        %v2362 = vrot.slane %v2345, %v2361
        %v2363 = vlaneseq
        %v2364 = vshrl.u32 %v2363, 7
        %v2365 = vsub.s32 0, %v2364
        %v2366 = vrot.slane %v2346, %v2365
        %v2367 = vlaneseq
        %v2368 = vshrl.u32 %v2367, 7
        %v2369 = vsub.s32 0, %v2368
        %v2370 = vrot.slane %v2347, %v2369
        %v2371 = vlaneseq
        %v2372 = vshrl.u32 %v2371, 7
        %v2373 = vsub.s32 0, %v2372
        %v2374 = vrot.slane %v2348, %v2373
        %v2375 = vlaneseq
        %v2376 = vshrl.u32 %v2375, 7
        %v2377 = vsub.s32 0, %v2376
        %v2378 = vrot.slane %v2349, %v2377
        %v2379 = vlaneseq
        %v2380 = vshrl.u32 %v2379, 7
        %v2381 = vsub.s32 0, %v2380
        %v2382 = vrot.slane %v2350, %v2381
        %v2383 = vmul.f32 %v2341, %v2354
        %v2384 = vmul.f32 %v2341, %v2358
        %v2385 = vmul.f32 %v2341, %v2362
        %v2386 = vmul.f32 %v2341, %v2366
        %v2387 = vmul.f32 %v2341, %v2370
        %v2388 = vmul.f32 %v2341, %v2374
        %v2389 = vmul.f32 %v2341, %v2378
        %v2390 = vmul.f32 %v2341, %v2382
        %v2391 = vld [vmem:[%s2284 + $0x1] sm:$0x1]
        %v2392 = vld [vmem:[%s2284 + $0x9] sm:$0x1]
        %v2393 = vld [vmem:[%s2284 + $0x11] sm:$0x1]
        %v2394 = vld [vmem:[%s2284 + $0x19] sm:$0x1]
        %v2395 = vld [vmem:[%s2284 + $0x21] sm:$0x1]
        %v2396 = vld [vmem:[%s2284 + $0x29] sm:$0x1]
        %v2397 = vld [vmem:[%s2284 + $0x31] sm:$0x1]
        %v2398 = vld [vmem:[%s2284 + $0x39] sm:$0x1]
        %v2399 = vlaneseq
        %v2400 = vshrl.u32 %v2399, 7
        %v2401 = vsub.s32 0, %v2400
        %v2402 = vrot.slane %v2391, %v2401
        %v2403 = vlaneseq
        %v2404 = vshrl.u32 %v2403, 7
        %v2405 = vsub.s32 0, %v2404
        %v2406 = vrot.slane %v2392, %v2405
        %v2407 = vlaneseq
        %v2408 = vshrl.u32 %v2407, 7
        %v2409 = vsub.s32 0, %v2408
        %v2410 = vrot.slane %v2393, %v2409
        %v2411 = vlaneseq
        %v2412 = vshrl.u32 %v2411, 7
        %v2413 = vsub.s32 0, %v2412
        %v2414 = vrot.slane %v2394, %v2413
        %v2415 = vlaneseq
        %v2416 = vshrl.u32 %v2415, 7
        %v2417 = vsub.s32 0, %v2416
        %v2418 = vrot.slane %v2395, %v2417
        %v2419 = vlaneseq
        %v2420 = vshrl.u32 %v2419, 7
        %v2421 = vsub.s32 0, %v2420
        %v2422 = vrot.slane %v2396, %v2421
        %v2423 = vlaneseq
        %v2424 = vshrl.u32 %v2423, 7
        %v2425 = vsub.s32 0, %v2424
        %v2426 = vrot.slane %v2397, %v2425
        %v2427 = vlaneseq
        %v2428 = vshrl.u32 %v2427, 7
        %v2429 = vsub.s32 0, %v2428
        %v2430 = vrot.slane %v2398, %v2429
        %v2431 = vmul.f32 %v2276, %v2402
        %v2432 = vmul.f32 %v2277, %v2406
        %v2433 = vmul.f32 %v2278, %v2410
        %v2434 = vmul.f32 %v2279, %v2414
        %v2435 = vmul.f32 %v2280, %v2418
        %v2436 = vmul.f32 %v2281, %v2422
        %v2437 = vmul.f32 %v2282, %v2426
        %v2438 = vmul.f32 %v2283, %v2430
        %v2439 = vadd.f32 %v2431, %v2432
        %v2440 = vadd.f32 %v2439, %v2433
        %v2441 = vadd.f32 %v2440, %v2434
        %v2442 = vadd.f32 %v2441, %v2435
        %v2443 = vadd.f32 %v2442, %v2436
        %v2444 = vadd.f32 %v2443, %v2437
        %v2445 = vadd.f32 %v2444, %v2438
        %v2446 = vmul.f32 %v2445, 1.442695
        %v2447 = vpow.pop %v2446
        %v2448 = vsel %vm1501, %v2447, 0.0
        %v2449 = vadd.f32 %v2341, %v2448
        %v2450 = vld [vmem:[%s2342 + $0x1] sm:$0x1]
        %v2451 = vld [vmem:[%s2342 + $0x9] sm:$0x1]
        %v2452 = vld [vmem:[%s2342 + $0x11] sm:$0x1]
        %v2453 = vld [vmem:[%s2342 + $0x19] sm:$0x1]
        %v2454 = vld [vmem:[%s2342 + $0x21] sm:$0x1]
        %v2455 = vld [vmem:[%s2342 + $0x29] sm:$0x1]
        %v2456 = vld [vmem:[%s2342 + $0x31] sm:$0x1]
        %v2457 = vld [vmem:[%s2342 + $0x39] sm:$0x1]
        %v2458 = vlaneseq
        %v2459 = vshrl.u32 %v2458, 7
        %v2460 = vsub.s32 0, %v2459
        %v2461 = vrot.slane %v2450, %v2460
        %v2462 = vlaneseq
        %v2463 = vshrl.u32 %v2462, 7
        %v2464 = vsub.s32 0, %v2463
        %v2465 = vrot.slane %v2451, %v2464
        %v2466 = vlaneseq
        %v2467 = vshrl.u32 %v2466, 7
        %v2468 = vsub.s32 0, %v2467
        %v2469 = vrot.slane %v2452, %v2468
        %v2470 = vlaneseq
        %v2471 = vshrl.u32 %v2470, 7
        %v2472 = vsub.s32 0, %v2471
        %v2473 = vrot.slane %v2453, %v2472
        %v2474 = vlaneseq
        %v2475 = vshrl.u32 %v2474, 7
        %v2476 = vsub.s32 0, %v2475
        %v2477 = vrot.slane %v2454, %v2476
        %v2478 = vlaneseq
        %v2479 = vshrl.u32 %v2478, 7
        %v2480 = vsub.s32 0, %v2479
        %v2481 = vrot.slane %v2455, %v2480
        %v2482 = vlaneseq
        %v2483 = vshrl.u32 %v2482, 7
        %v2484 = vsub.s32 0, %v2483
        %v2485 = vrot.slane %v2456, %v2484
        %v2486 = vlaneseq
        %v2487 = vshrl.u32 %v2486, 7
        %v2488 = vsub.s32 0, %v2487
        %v2489 = vrot.slane %v2457, %v2488
        %v2490 = vmul.f32 %v2448, %v2461
        %v2491 = vmul.f32 %v2448, %v2465
        %v2492 = vmul.f32 %v2448, %v2469
        %v2493 = vmul.f32 %v2448, %v2473
        %v2494 = vmul.f32 %v2448, %v2477
        %v2495 = vmul.f32 %v2448, %v2481
        %v2496 = vmul.f32 %v2448, %v2485
        %v2497 = vmul.f32 %v2448, %v2489
        %v2498 = vadd.f32 %v2383, %v2490
        %v2499 = vadd.f32 %v2384, %v2491
        %v2500 = vadd.f32 %v2385, %v2492
        %v2501 = vadd.f32 %v2386, %v2493
        %v2502 = vadd.f32 %v2387, %v2494
        %v2503 = vadd.f32 %v2388, %v2495
        %v2504 = vadd.f32 %v2389, %v2496
        %v2505 = vadd.f32 %v2390, %v2497
        %v2506 = vld [vmem:[%s2284 + $0x2] sm:$0x1]
        %v2507 = vld [vmem:[%s2284 + $0xa] sm:$0x1]
        %v2508 = vld [vmem:[%s2284 + $0x12] sm:$0x1]
        %v2509 = vld [vmem:[%s2284 + $0x1a] sm:$0x1]
        %v2510 = vld [vmem:[%s2284 + $0x22] sm:$0x1]
        %v2511 = vld [vmem:[%s2284 + $0x2a] sm:$0x1]
        %v2512 = vld [vmem:[%s2284 + $0x32] sm:$0x1]
        %v2513 = vld [vmem:[%s2284 + $0x3a] sm:$0x1]
        %v2514 = vlaneseq
        %v2515 = vshrl.u32 %v2514, 7
        %v2516 = vsub.s32 0, %v2515
        %v2517 = vrot.slane %v2506, %v2516
        %v2518 = vlaneseq
        %v2519 = vshrl.u32 %v2518, 7
        %v2520 = vsub.s32 0, %v2519
        %v2521 = vrot.slane %v2507, %v2520
        %v2522 = vlaneseq
        %v2523 = vshrl.u32 %v2522, 7
        %v2524 = vsub.s32 0, %v2523
        %v2525 = vrot.slane %v2508, %v2524
        %v2526 = vlaneseq
        %v2527 = vshrl.u32 %v2526, 7
        %v2528 = vsub.s32 0, %v2527
        %v2529 = vrot.slane %v2509, %v2528
        %v2530 = vlaneseq
        %v2531 = vshrl.u32 %v2530, 7
        %v2532 = vsub.s32 0, %v2531
        %v2533 = vrot.slane %v2510, %v2532
        %v2534 = vlaneseq
        %v2535 = vshrl.u32 %v2534, 7
        %v2536 = vsub.s32 0, %v2535
        %v2537 = vrot.slane %v2511, %v2536
        %v2538 = vlaneseq
        %v2539 = vshrl.u32 %v2538, 7
        %v2540 = vsub.s32 0, %v2539
        %v2541 = vrot.slane %v2512, %v2540
        %v2542 = vlaneseq
        %v2543 = vshrl.u32 %v2542, 7
        %v2544 = vsub.s32 0, %v2543
        %v2545 = vrot.slane %v2513, %v2544
        %v2546 = vmul.f32 %v2276, %v2517
        %v2547 = vmul.f32 %v2277, %v2521
        %v2548 = vmul.f32 %v2278, %v2525
        %v2549 = vmul.f32 %v2279, %v2529
        %v2550 = vmul.f32 %v2280, %v2533
        %v2551 = vmul.f32 %v2281, %v2537
        %v2552 = vmul.f32 %v2282, %v2541
        %v2553 = vmul.f32 %v2283, %v2545
        %v2554 = vadd.f32 %v2546, %v2547
        %v2555 = vadd.f32 %v2554, %v2548
        %v2556 = vadd.f32 %v2555, %v2549
        %v2557 = vadd.f32 %v2556, %v2550
        %v2558 = vadd.f32 %v2557, %v2551
        %v2559 = vadd.f32 %v2558, %v2552
        %v2560 = vadd.f32 %v2559, %v2553
        %v2561 = vmul.f32 %v2560, 1.442695
        %v2562 = vpow.pop %v2561
        %v2563 = vsel %vm1617, %v2562, 0.0
        %v2564 = vadd.f32 %v2449, %v2563
        %v2565 = vld [vmem:[%s2342 + $0x2] sm:$0x1]
        %v2566 = vld [vmem:[%s2342 + $0xa] sm:$0x1]
        %v2567 = vld [vmem:[%s2342 + $0x12] sm:$0x1]
        %v2568 = vld [vmem:[%s2342 + $0x1a] sm:$0x1]
        %v2569 = vld [vmem:[%s2342 + $0x22] sm:$0x1]
        %v2570 = vld [vmem:[%s2342 + $0x2a] sm:$0x1]
        %v2571 = vld [vmem:[%s2342 + $0x32] sm:$0x1]
        %v2572 = vld [vmem:[%s2342 + $0x3a] sm:$0x1]
        %v2573 = vlaneseq
        %v2574 = vshrl.u32 %v2573, 7
        %v2575 = vsub.s32 0, %v2574
        %v2576 = vrot.slane %v2565, %v2575
        %v2577 = vlaneseq
        %v2578 = vshrl.u32 %v2577, 7
        %v2579 = vsub.s32 0, %v2578
        %v2580 = vrot.slane %v2566, %v2579
        %v2581 = vlaneseq
        %v2582 = vshrl.u32 %v2581, 7
        %v2583 = vsub.s32 0, %v2582
        %v2584 = vrot.slane %v2567, %v2583
        %v2585 = vlaneseq
        %v2586 = vshrl.u32 %v2585, 7
        %v2587 = vsub.s32 0, %v2586
        %v2588 = vrot.slane %v2568, %v2587
        %v2589 = vlaneseq
        %v2590 = vshrl.u32 %v2589, 7
        %v2591 = vsub.s32 0, %v2590
        %v2592 = vrot.slane %v2569, %v2591
        %v2593 = vlaneseq
        %v2594 = vshrl.u32 %v2593, 7
        %v2595 = vsub.s32 0, %v2594
        %v2596 = vrot.slane %v2570, %v2595
        %v2597 = vlaneseq
        %v2598 = vshrl.u32 %v2597, 7
        %v2599 = vsub.s32 0, %v2598
        %v2600 = vrot.slane %v2571, %v2599
        %v2601 = vlaneseq
        %v2602 = vshrl.u32 %v2601, 7
        %v2603 = vsub.s32 0, %v2602
        %v2604 = vrot.slane %v2572, %v2603
        %v2605 = vmul.f32 %v2563, %v2576
        %v2606 = vmul.f32 %v2563, %v2580
        %v2607 = vmul.f32 %v2563, %v2584
        %v2608 = vmul.f32 %v2563, %v2588
        %v2609 = vmul.f32 %v2563, %v2592
        %v2610 = vmul.f32 %v2563, %v2596
        %v2611 = vmul.f32 %v2563, %v2600
        %v2612 = vmul.f32 %v2563, %v2604
        %v2613 = vadd.f32 %v2498, %v2605
        %v2614 = vadd.f32 %v2499, %v2606
        %v2615 = vadd.f32 %v2500, %v2607
        %v2616 = vadd.f32 %v2501, %v2608
        %v2617 = vadd.f32 %v2502, %v2609
        %v2618 = vadd.f32 %v2503, %v2610
        %v2619 = vadd.f32 %v2504, %v2611
        %v2620 = vadd.f32 %v2505, %v2612
        %v2621 = vld [vmem:[%s2284 + $0x3] sm:$0x1]
        %v2622 = vld [vmem:[%s2284 + $0xb] sm:$0x1]
        %v2623 = vld [vmem:[%s2284 + $0x13] sm:$0x1]
        %v2624 = vld [vmem:[%s2284 + $0x1b] sm:$0x1]
        %v2625 = vld [vmem:[%s2284 + $0x23] sm:$0x1]
        %v2626 = vld [vmem:[%s2284 + $0x2b] sm:$0x1]
        %v2627 = vld [vmem:[%s2284 + $0x33] sm:$0x1]
        %v2628 = vld [vmem:[%s2284 + $0x3b] sm:$0x1]
        %v2629 = vlaneseq
        %v2630 = vshrl.u32 %v2629, 7
        %v2631 = vsub.s32 0, %v2630
        %v2632 = vrot.slane %v2621, %v2631
        %v2633 = vlaneseq
        %v2634 = vshrl.u32 %v2633, 7
        %v2635 = vsub.s32 0, %v2634
        %v2636 = vrot.slane %v2622, %v2635
        %v2637 = vlaneseq
        %v2638 = vshrl.u32 %v2637, 7
        %v2639 = vsub.s32 0, %v2638
        %v2640 = vrot.slane %v2623, %v2639
        %v2641 = vlaneseq
        %v2642 = vshrl.u32 %v2641, 7
        %v2643 = vsub.s32 0, %v2642
        %v2644 = vrot.slane %v2624, %v2643
        %v2645 = vlaneseq
        %v2646 = vshrl.u32 %v2645, 7
        %v2647 = vsub.s32 0, %v2646
        %v2648 = vrot.slane %v2625, %v2647
        %v2649 = vlaneseq
        %v2650 = vshrl.u32 %v2649, 7
        %v2651 = vsub.s32 0, %v2650
        %v2652 = vrot.slane %v2626, %v2651
        %v2653 = vlaneseq
        %v2654 = vshrl.u32 %v2653, 7
        %v2655 = vsub.s32 0, %v2654
        %v2656 = vrot.slane %v2627, %v2655
        %v2657 = vlaneseq
        %v2658 = vshrl.u32 %v2657, 7
        %v2659 = vsub.s32 0, %v2658
        %v2660 = vrot.slane %v2628, %v2659
        %v2661 = vmul.f32 %v2276, %v2632
        %v2662 = vmul.f32 %v2277, %v2636
        %v2663 = vmul.f32 %v2278, %v2640
        %v2664 = vmul.f32 %v2279, %v2644
        %v2665 = vmul.f32 %v2280, %v2648
        %v2666 = vmul.f32 %v2281, %v2652
        %v2667 = vmul.f32 %v2282, %v2656
        %v2668 = vmul.f32 %v2283, %v2660
        %v2669 = vadd.f32 %v2661, %v2662
        %v2670 = vadd.f32 %v2669, %v2663
        %v2671 = vadd.f32 %v2670, %v2664
        %v2672 = vadd.f32 %v2671, %v2665
        %v2673 = vadd.f32 %v2672, %v2666
        %v2674 = vadd.f32 %v2673, %v2667
        %v2675 = vadd.f32 %v2674, %v2668
        %v2676 = vmul.f32 %v2675, 1.442695
        %v2677 = vpow.pop %v2676
        %v2678 = vsel %vm1733, %v2677, 0.0
        %v2679 = vadd.f32 %v2564, %v2678
        %v2680 = vld [vmem:[%s2342 + $0x3] sm:$0x1]
        %v2681 = vld [vmem:[%s2342 + $0xb] sm:$0x1]
        %v2682 = vld [vmem:[%s2342 + $0x13] sm:$0x1]
        %v2683 = vld [vmem:[%s2342 + $0x1b] sm:$0x1]
        %v2684 = vld [vmem:[%s2342 + $0x23] sm:$0x1]
        %v2685 = vld [vmem:[%s2342 + $0x2b] sm:$0x1]
        %v2686 = vld [vmem:[%s2342 + $0x33] sm:$0x1]
        %v2687 = vld [vmem:[%s2342 + $0x3b] sm:$0x1]
        %v2688 = vlaneseq
        %v2689 = vshrl.u32 %v2688, 7
        %v2690 = vsub.s32 0, %v2689
        %v2691 = vrot.slane %v2680, %v2690
        %v2692 = vlaneseq
        %v2693 = vshrl.u32 %v2692, 7
        %v2694 = vsub.s32 0, %v2693
        %v2695 = vrot.slane %v2681, %v2694
        %v2696 = vlaneseq
        %v2697 = vshrl.u32 %v2696, 7
        %v2698 = vsub.s32 0, %v2697
        %v2699 = vrot.slane %v2682, %v2698
        %v2700 = vlaneseq
        %v2701 = vshrl.u32 %v2700, 7
        %v2702 = vsub.s32 0, %v2701
        %v2703 = vrot.slane %v2683, %v2702
        %v2704 = vlaneseq
        %v2705 = vshrl.u32 %v2704, 7
        %v2706 = vsub.s32 0, %v2705
        %v2707 = vrot.slane %v2684, %v2706
        %v2708 = vlaneseq
        %v2709 = vshrl.u32 %v2708, 7
        %v2710 = vsub.s32 0, %v2709
        %v2711 = vrot.slane %v2685, %v2710
        %v2712 = vlaneseq
        %v2713 = vshrl.u32 %v2712, 7
        %v2714 = vsub.s32 0, %v2713
        %v2715 = vrot.slane %v2686, %v2714
        %v2716 = vlaneseq
        %v2717 = vshrl.u32 %v2716, 7
        %v2718 = vsub.s32 0, %v2717
        %v2719 = vrot.slane %v2687, %v2718
        %v2720 = vmul.f32 %v2678, %v2691
        %v2721 = vmul.f32 %v2678, %v2695
        %v2722 = vmul.f32 %v2678, %v2699
        %v2723 = vmul.f32 %v2678, %v2703
        %v2724 = vmul.f32 %v2678, %v2707
        %v2725 = vmul.f32 %v2678, %v2711
        %v2726 = vmul.f32 %v2678, %v2715
        %v2727 = vmul.f32 %v2678, %v2719
        %v2728 = vadd.f32 %v2613, %v2720
        %v2729 = vadd.f32 %v2614, %v2721
        %v2730 = vadd.f32 %v2615, %v2722
        %v2731 = vadd.f32 %v2616, %v2723
        %v2732 = vadd.f32 %v2617, %v2724
        %v2733 = vadd.f32 %v2618, %v2725
        %v2734 = vadd.f32 %v2619, %v2726
        %v2735 = vadd.f32 %v2620, %v2727
        %v2736 = vld [vmem:[%s2284 + $0x4] sm:$0x1]
        %v2737 = vld [vmem:[%s2284 + $0xc] sm:$0x1]
        %v2738 = vld [vmem:[%s2284 + $0x14] sm:$0x1]
        %v2739 = vld [vmem:[%s2284 + $0x1c] sm:$0x1]
        %v2740 = vld [vmem:[%s2284 + $0x24] sm:$0x1]
        %v2741 = vld [vmem:[%s2284 + $0x2c] sm:$0x1]
        %v2742 = vld [vmem:[%s2284 + $0x34] sm:$0x1]
        %v2743 = vld [vmem:[%s2284 + $0x3c] sm:$0x1]
        %v2744 = vlaneseq
        %v2745 = vshrl.u32 %v2744, 7
        %v2746 = vsub.s32 0, %v2745
        %v2747 = vrot.slane %v2736, %v2746
        %v2748 = vlaneseq
        %v2749 = vshrl.u32 %v2748, 7
        %v2750 = vsub.s32 0, %v2749
        %v2751 = vrot.slane %v2737, %v2750
        %v2752 = vlaneseq
        %v2753 = vshrl.u32 %v2752, 7
        %v2754 = vsub.s32 0, %v2753
        %v2755 = vrot.slane %v2738, %v2754
        %v2756 = vlaneseq
        %v2757 = vshrl.u32 %v2756, 7
        %v2758 = vsub.s32 0, %v2757
        %v2759 = vrot.slane %v2739, %v2758
        %v2760 = vlaneseq
        %v2761 = vshrl.u32 %v2760, 7
        %v2762 = vsub.s32 0, %v2761
        %v2763 = vrot.slane %v2740, %v2762
        %v2764 = vlaneseq
        %v2765 = vshrl.u32 %v2764, 7
        %v2766 = vsub.s32 0, %v2765
        %v2767 = vrot.slane %v2741, %v2766
        %v2768 = vlaneseq
        %v2769 = vshrl.u32 %v2768, 7
        %v2770 = vsub.s32 0, %v2769
        %v2771 = vrot.slane %v2742, %v2770
        %v2772 = vlaneseq
        %v2773 = vshrl.u32 %v2772, 7
        %v2774 = vsub.s32 0, %v2773
        %v2775 = vrot.slane %v2743, %v2774
        %v2776 = vmul.f32 %v2276, %v2747
        %v2777 = vmul.f32 %v2277, %v2751
        %v2778 = vmul.f32 %v2278, %v2755
        %v2779 = vmul.f32 %v2279, %v2759
        %v2780 = vmul.f32 %v2280, %v2763
        %v2781 = vmul.f32 %v2281, %v2767
        %v2782 = vmul.f32 %v2282, %v2771
        %v2783 = vmul.f32 %v2283, %v2775
        %v2784 = vadd.f32 %v2776, %v2777
        %v2785 = vadd.f32 %v2784, %v2778
        %v2786 = vadd.f32 %v2785, %v2779
        %v2787 = vadd.f32 %v2786, %v2780
        %v2788 = vadd.f32 %v2787, %v2781
        %v2789 = vadd.f32 %v2788, %v2782
        %v2790 = vadd.f32 %v2789, %v2783
        %v2791 = vmul.f32 %v2790, 1.442695
        %v2792 = vpow.pop %v2791
        %v2793 = vsel %vm1849, %v2792, 0.0
        %v2794 = vadd.f32 %v2679, %v2793
        %v2795 = vld [vmem:[%s2342 + $0x4] sm:$0x1]
        %v2796 = vld [vmem:[%s2342 + $0xc] sm:$0x1]
        %v2797 = vld [vmem:[%s2342 + $0x14] sm:$0x1]
        %v2798 = vld [vmem:[%s2342 + $0x1c] sm:$0x1]
        %v2799 = vld [vmem:[%s2342 + $0x24] sm:$0x1]
        %v2800 = vld [vmem:[%s2342 + $0x2c] sm:$0x1]
        %v2801 = vld [vmem:[%s2342 + $0x34] sm:$0x1]
        %v2802 = vld [vmem:[%s2342 + $0x3c] sm:$0x1]
        %v2803 = vlaneseq
        %v2804 = vshrl.u32 %v2803, 7
        %v2805 = vsub.s32 0, %v2804
        %v2806 = vrot.slane %v2795, %v2805
        %v2807 = vlaneseq
        %v2808 = vshrl.u32 %v2807, 7
        %v2809 = vsub.s32 0, %v2808
        %v2810 = vrot.slane %v2796, %v2809
        %v2811 = vlaneseq
        %v2812 = vshrl.u32 %v2811, 7
        %v2813 = vsub.s32 0, %v2812
        %v2814 = vrot.slane %v2797, %v2813
        %v2815 = vlaneseq
        %v2816 = vshrl.u32 %v2815, 7
        %v2817 = vsub.s32 0, %v2816
        %v2818 = vrot.slane %v2798, %v2817
        %v2819 = vlaneseq
        %v2820 = vshrl.u32 %v2819, 7
        %v2821 = vsub.s32 0, %v2820
        %v2822 = vrot.slane %v2799, %v2821
        %v2823 = vlaneseq
        %v2824 = vshrl.u32 %v2823, 7
        %v2825 = vsub.s32 0, %v2824
        %v2826 = vrot.slane %v2800, %v2825
        %v2827 = vlaneseq
        %v2828 = vshrl.u32 %v2827, 7
        %v2829 = vsub.s32 0, %v2828
        %v2830 = vrot.slane %v2801, %v2829
        %v2831 = vlaneseq
        %v2832 = vshrl.u32 %v2831, 7
        %v2833 = vsub.s32 0, %v2832
        %v2834 = vrot.slane %v2802, %v2833
        %v2835 = vmul.f32 %v2793, %v2806
        %v2836 = vmul.f32 %v2793, %v2810
        %v2837 = vmul.f32 %v2793, %v2814
        %v2838 = vmul.f32 %v2793, %v2818
        %v2839 = vmul.f32 %v2793, %v2822
        %v2840 = vmul.f32 %v2793, %v2826
        %v2841 = vmul.f32 %v2793, %v2830
        %v2842 = vmul.f32 %v2793, %v2834
        %v2843 = vadd.f32 %v2728, %v2835
        %v2844 = vadd.f32 %v2729, %v2836
        %v2845 = vadd.f32 %v2730, %v2837
        %v2846 = vadd.f32 %v2731, %v2838
        %v2847 = vadd.f32 %v2732, %v2839
        %v2848 = vadd.f32 %v2733, %v2840
        %v2849 = vadd.f32 %v2734, %v2841
        %v2850 = vadd.f32 %v2735, %v2842
        %v2851 = vld [vmem:[%s2284 + $0x5] sm:$0x1]
        %v2852 = vld [vmem:[%s2284 + $0xd] sm:$0x1]
        %v2853 = vld [vmem:[%s2284 + $0x15] sm:$0x1]
        %v2854 = vld [vmem:[%s2284 + $0x1d] sm:$0x1]
        %v2855 = vld [vmem:[%s2284 + $0x25] sm:$0x1]
        %v2856 = vld [vmem:[%s2284 + $0x2d] sm:$0x1]
        %v2857 = vld [vmem:[%s2284 + $0x35] sm:$0x1]
        %v2858 = vld [vmem:[%s2284 + $0x3d] sm:$0x1]
        %v2859 = vlaneseq
        %v2860 = vshrl.u32 %v2859, 7
        %v2861 = vsub.s32 0, %v2860
        %v2862 = vrot.slane %v2851, %v2861
        %v2863 = vlaneseq
        %v2864 = vshrl.u32 %v2863, 7
        %v2865 = vsub.s32 0, %v2864
        %v2866 = vrot.slane %v2852, %v2865
        %v2867 = vlaneseq
        %v2868 = vshrl.u32 %v2867, 7
        %v2869 = vsub.s32 0, %v2868
        %v2870 = vrot.slane %v2853, %v2869
        %v2871 = vlaneseq
        %v2872 = vshrl.u32 %v2871, 7
        %v2873 = vsub.s32 0, %v2872
        %v2874 = vrot.slane %v2854, %v2873
        %v2875 = vlaneseq
        %v2876 = vshrl.u32 %v2875, 7
        %v2877 = vsub.s32 0, %v2876
        %v2878 = vrot.slane %v2855, %v2877
        %v2879 = vlaneseq
        %v2880 = vshrl.u32 %v2879, 7
        %v2881 = vsub.s32 0, %v2880
        %v2882 = vrot.slane %v2856, %v2881
        %v2883 = vlaneseq
        %v2884 = vshrl.u32 %v2883, 7
        %v2885 = vsub.s32 0, %v2884
        %v2886 = vrot.slane %v2857, %v2885
        %v2887 = vlaneseq
        %v2888 = vshrl.u32 %v2887, 7
        %v2889 = vsub.s32 0, %v2888
        %v2890 = vrot.slane %v2858, %v2889
        %v2891 = vmul.f32 %v2276, %v2862
        %v2892 = vmul.f32 %v2277, %v2866
        %v2893 = vmul.f32 %v2278, %v2870
        %v2894 = vmul.f32 %v2279, %v2874
        %v2895 = vmul.f32 %v2280, %v2878
        %v2896 = vmul.f32 %v2281, %v2882
        %v2897 = vmul.f32 %v2282, %v2886
        %v2898 = vmul.f32 %v2283, %v2890
        %v2899 = vadd.f32 %v2891, %v2892
        %v2900 = vadd.f32 %v2899, %v2893
        %v2901 = vadd.f32 %v2900, %v2894
        %v2902 = vadd.f32 %v2901, %v2895
        %v2903 = vadd.f32 %v2902, %v2896
        %v2904 = vadd.f32 %v2903, %v2897
        %v2905 = vadd.f32 %v2904, %v2898
        %v2906 = vmul.f32 %v2905, 1.442695
        %v2907 = vpow.pop %v2906
        %v2908 = vsel %vm1965, %v2907, 0.0
        %v2909 = vadd.f32 %v2794, %v2908
        %v2910 = vld [vmem:[%s2342 + $0x5] sm:$0x1]
        %v2911 = vld [vmem:[%s2342 + $0xd] sm:$0x1]
        %v2912 = vld [vmem:[%s2342 + $0x15] sm:$0x1]
        %v2913 = vld [vmem:[%s2342 + $0x1d] sm:$0x1]
        %v2914 = vld [vmem:[%s2342 + $0x25] sm:$0x1]
        %v2915 = vld [vmem:[%s2342 + $0x2d] sm:$0x1]
        %v2916 = vld [vmem:[%s2342 + $0x35] sm:$0x1]
        %v2917 = vld [vmem:[%s2342 + $0x3d] sm:$0x1]
        %v2918 = vlaneseq
        %v2919 = vshrl.u32 %v2918, 7
        %v2920 = vsub.s32 0, %v2919
        %v2921 = vrot.slane %v2910, %v2920
        %v2922 = vlaneseq
        %v2923 = vshrl.u32 %v2922, 7
        %v2924 = vsub.s32 0, %v2923
        %v2925 = vrot.slane %v2911, %v2924
        %v2926 = vlaneseq
        %v2927 = vshrl.u32 %v2926, 7
        %v2928 = vsub.s32 0, %v2927
        %v2929 = vrot.slane %v2912, %v2928
        %v2930 = vlaneseq
        %v2931 = vshrl.u32 %v2930, 7
        %v2932 = vsub.s32 0, %v2931
        %v2933 = vrot.slane %v2913, %v2932
        %v2934 = vlaneseq
        %v2935 = vshrl.u32 %v2934, 7
        %v2936 = vsub.s32 0, %v2935
        %v2937 = vrot.slane %v2914, %v2936
        %v2938 = vlaneseq
        %v2939 = vshrl.u32 %v2938, 7
        %v2940 = vsub.s32 0, %v2939
        %v2941 = vrot.slane %v2915, %v2940
        %v2942 = vlaneseq
        %v2943 = vshrl.u32 %v2942, 7
        %v2944 = vsub.s32 0, %v2943
        %v2945 = vrot.slane %v2916, %v2944
        %v2946 = vlaneseq
        %v2947 = vshrl.u32 %v2946, 7
        %v2948 = vsub.s32 0, %v2947
        %v2949 = vrot.slane %v2917, %v2948
        %v2950 = vmul.f32 %v2908, %v2921
        %v2951 = vmul.f32 %v2908, %v2925
        %v2952 = vmul.f32 %v2908, %v2929
        %v2953 = vmul.f32 %v2908, %v2933
        %v2954 = vmul.f32 %v2908, %v2937
        %v2955 = vmul.f32 %v2908, %v2941
        %v2956 = vmul.f32 %v2908, %v2945
        %v2957 = vmul.f32 %v2908, %v2949
        %v2958 = vadd.f32 %v2843, %v2950
        %v2959 = vadd.f32 %v2844, %v2951
        %v2960 = vadd.f32 %v2845, %v2952
        %v2961 = vadd.f32 %v2846, %v2953
        %v2962 = vadd.f32 %v2847, %v2954
        %v2963 = vadd.f32 %v2848, %v2955
        %v2964 = vadd.f32 %v2849, %v2956
        %v2965 = vadd.f32 %v2850, %v2957
        %v2966 = vld [vmem:[%s2284 + $0x6] sm:$0x1]
        %v2967 = vld [vmem:[%s2284 + $0xe] sm:$0x1]
        %v2968 = vld [vmem:[%s2284 + $0x16] sm:$0x1]
        %v2969 = vld [vmem:[%s2284 + $0x1e] sm:$0x1]
        %v2970 = vld [vmem:[%s2284 + $0x26] sm:$0x1]
        %v2971 = vld [vmem:[%s2284 + $0x2e] sm:$0x1]
        %v2972 = vld [vmem:[%s2284 + $0x36] sm:$0x1]
        %v2973 = vld [vmem:[%s2284 + $0x3e] sm:$0x1]
        %v2974 = vlaneseq
        %v2975 = vshrl.u32 %v2974, 7
        %v2976 = vsub.s32 0, %v2975
        %v2977 = vrot.slane %v2966, %v2976
        %v2978 = vlaneseq
        %v2979 = vshrl.u32 %v2978, 7
        %v2980 = vsub.s32 0, %v2979
        %v2981 = vrot.slane %v2967, %v2980
        %v2982 = vlaneseq
        %v2983 = vshrl.u32 %v2982, 7
        %v2984 = vsub.s32 0, %v2983
        %v2985 = vrot.slane %v2968, %v2984
        %v2986 = vlaneseq
        %v2987 = vshrl.u32 %v2986, 7
        %v2988 = vsub.s32 0, %v2987
        %v2989 = vrot.slane %v2969, %v2988
        %v2990 = vlaneseq
        %v2991 = vshrl.u32 %v2990, 7
        %v2992 = vsub.s32 0, %v2991
        %v2993 = vrot.slane %v2970, %v2992
        %v2994 = vlaneseq
        %v2995 = vshrl.u32 %v2994, 7
        %v2996 = vsub.s32 0, %v2995
        %v2997 = vrot.slane %v2971, %v2996
        %v2998 = vlaneseq
        %v2999 = vshrl.u32 %v2998, 7
        %v3000 = vsub.s32 0, %v2999
        %v3001 = vrot.slane %v2972, %v3000
        %v3002 = vlaneseq
        %v3003 = vshrl.u32 %v3002, 7
        %v3004 = vsub.s32 0, %v3003
        %v3005 = vrot.slane %v2973, %v3004
        %v3006 = vmul.f32 %v2276, %v2977
        %v3007 = vmul.f32 %v2277, %v2981
        %v3008 = vmul.f32 %v2278, %v2985
        %v3009 = vmul.f32 %v2279, %v2989
        %v3010 = vmul.f32 %v2280, %v2993
        %v3011 = vmul.f32 %v2281, %v2997
        %v3012 = vmul.f32 %v2282, %v3001
        %v3013 = vmul.f32 %v2283, %v3005
        %v3014 = vadd.f32 %v3006, %v3007
        %v3015 = vadd.f32 %v3014, %v3008
        %v3016 = vadd.f32 %v3015, %v3009
        %v3017 = vadd.f32 %v3016, %v3010
        %v3018 = vadd.f32 %v3017, %v3011
        %v3019 = vadd.f32 %v3018, %v3012
        %v3020 = vadd.f32 %v3019, %v3013
        %v3021 = vmul.f32 %v3020, 1.442695
        %v3022 = vpow.pop %v3021
        %v3023 = vsel %vm2081, %v3022, 0.0
        %v3024 = vadd.f32 %v2909, %v3023
        %v3025 = vld [vmem:[%s2342 + $0x6] sm:$0x1]
        %v3026 = vld [vmem:[%s2342 + $0xe] sm:$0x1]
        %v3027 = vld [vmem:[%s2342 + $0x16] sm:$0x1]
        %v3028 = vld [vmem:[%s2342 + $0x1e] sm:$0x1]
        %v3029 = vld [vmem:[%s2342 + $0x26] sm:$0x1]
        %v3030 = vld [vmem:[%s2342 + $0x2e] sm:$0x1]
        %v3031 = vld [vmem:[%s2342 + $0x36] sm:$0x1]
        %v3032 = vld [vmem:[%s2342 + $0x3e] sm:$0x1]
        %v3033 = vlaneseq
        %v3034 = vshrl.u32 %v3033, 7
        %v3035 = vsub.s32 0, %v3034
        %v3036 = vrot.slane %v3025, %v3035
        %v3037 = vlaneseq
        %v3038 = vshrl.u32 %v3037, 7
        %v3039 = vsub.s32 0, %v3038
        %v3040 = vrot.slane %v3026, %v3039
        %v3041 = vlaneseq
        %v3042 = vshrl.u32 %v3041, 7
        %v3043 = vsub.s32 0, %v3042
        %v3044 = vrot.slane %v3027, %v3043
        %v3045 = vlaneseq
        %v3046 = vshrl.u32 %v3045, 7
        %v3047 = vsub.s32 0, %v3046
        %v3048 = vrot.slane %v3028, %v3047
        %v3049 = vlaneseq
        %v3050 = vshrl.u32 %v3049, 7
        %v3051 = vsub.s32 0, %v3050
        %v3052 = vrot.slane %v3029, %v3051
        %v3053 = vlaneseq
        %v3054 = vshrl.u32 %v3053, 7
        %v3055 = vsub.s32 0, %v3054
        %v3056 = vrot.slane %v3030, %v3055
        %v3057 = vlaneseq
        %v3058 = vshrl.u32 %v3057, 7
        %v3059 = vsub.s32 0, %v3058
        %v3060 = vrot.slane %v3031, %v3059
        %v3061 = vlaneseq
        %v3062 = vshrl.u32 %v3061, 7
        %v3063 = vsub.s32 0, %v3062
        %v3064 = vrot.slane %v3032, %v3063
        %v3065 = vmul.f32 %v3023, %v3036
        %v3066 = vmul.f32 %v3023, %v3040
        %v3067 = vmul.f32 %v3023, %v3044
        %v3068 = vmul.f32 %v3023, %v3048
        %v3069 = vmul.f32 %v3023, %v3052
        %v3070 = vmul.f32 %v3023, %v3056
        %v3071 = vmul.f32 %v3023, %v3060
        %v3072 = vmul.f32 %v3023, %v3064
        %v3073 = vadd.f32 %v2958, %v3065
        %v3074 = vadd.f32 %v2959, %v3066
        %v3075 = vadd.f32 %v2960, %v3067
        %v3076 = vadd.f32 %v2961, %v3068
        %v3077 = vadd.f32 %v2962, %v3069
        %v3078 = vadd.f32 %v2963, %v3070
        %v3079 = vadd.f32 %v2964, %v3071
        %v3080 = vadd.f32 %v2965, %v3072
        %v3081 = vld [vmem:[%s2284 + $0x7] sm:$0x1]
        %v3082 = vld [vmem:[%s2284 + $0xf] sm:$0x1]
        %v3083 = vld [vmem:[%s2284 + $0x17] sm:$0x1]
        %v3084 = vld [vmem:[%s2284 + $0x1f] sm:$0x1]
        %v3085 = vld [vmem:[%s2284 + $0x27] sm:$0x1]
        %v3086 = vld [vmem:[%s2284 + $0x2f] sm:$0x1]
        %v3087 = vld [vmem:[%s2284 + $0x37] sm:$0x1]
        %v3088 = vld [vmem:[%s2284 + $0x3f] sm:$0x1]
        %v3089 = vlaneseq
        %v3090 = vshrl.u32 %v3089, 7
        %v3091 = vsub.s32 0, %v3090
        %v3092 = vrot.slane %v3081, %v3091
        %v3093 = vlaneseq
        %v3094 = vshrl.u32 %v3093, 7
        %v3095 = vsub.s32 0, %v3094
        %v3096 = vrot.slane %v3082, %v3095
        %v3097 = vlaneseq
        %v3098 = vshrl.u32 %v3097, 7
        %v3099 = vsub.s32 0, %v3098
        %v3100 = vrot.slane %v3083, %v3099
        %v3101 = vlaneseq
        %v3102 = vshrl.u32 %v3101, 7
        %v3103 = vsub.s32 0, %v3102
        %v3104 = vrot.slane %v3084, %v3103
        %v3105 = vlaneseq
        %v3106 = vshrl.u32 %v3105, 7
        %v3107 = vsub.s32 0, %v3106
        %v3108 = vrot.slane %v3085, %v3107
        %v3109 = vlaneseq
        %v3110 = vshrl.u32 %v3109, 7
        %v3111 = vsub.s32 0, %v3110
        %v3112 = vrot.slane %v3086, %v3111
        %v3113 = vlaneseq
        %v3114 = vshrl.u32 %v3113, 7
        %v3115 = vsub.s32 0, %v3114
        %v3116 = vrot.slane %v3087, %v3115
        %v3117 = vlaneseq
        %v3118 = vshrl.u32 %v3117, 7
        %v3119 = vsub.s32 0, %v3118
        %v3120 = vrot.slane %v3088, %v3119
        %v3121 = vmul.f32 %v2276, %v3092
        %v3122 = vmul.f32 %v2277, %v3096
        %v3123 = vmul.f32 %v2278, %v3100
        %v3124 = vmul.f32 %v2279, %v3104
        %v3125 = vmul.f32 %v2280, %v3108
        %v3126 = vmul.f32 %v2281, %v3112
        %v3127 = vmul.f32 %v2282, %v3116
        %v3128 = vmul.f32 %v2283, %v3120
        %v3129 = vadd.f32 %v3121, %v3122
        %v3130 = vadd.f32 %v3129, %v3123
        %v3131 = vadd.f32 %v3130, %v3124
        %v3132 = vadd.f32 %v3131, %v3125
        %v3133 = vadd.f32 %v3132, %v3126
        %v3134 = vadd.f32 %v3133, %v3127
        %v3135 = vadd.f32 %v3134, %v3128
        %v3136 = vmul.f32 %v3135, 1.442695
        %v3137 = vpow.pop %v3136
        %v3138 = vsel %vm2197, %v3137, 0.0
        %v3139 = vadd.f32 %v3024, %v3138
        %v3140 = vld [vmem:[%s2342 + $0x7] sm:$0x1]
        %v3141 = vld [vmem:[%s2342 + $0xf] sm:$0x1]
        %v3142 = vld [vmem:[%s2342 + $0x17] sm:$0x1]
        %v3143 = vld [vmem:[%s2342 + $0x1f] sm:$0x1]
        %v3144 = vld [vmem:[%s2342 + $0x27] sm:$0x1]
        %v3145 = vld [vmem:[%s2342 + $0x2f] sm:$0x1]
        %v3146 = vld [vmem:[%s2342 + $0x37] sm:$0x1]
        %v3147 = vld [vmem:[%s2342 + $0x3f] sm:$0x1]
        %v3148 = vlaneseq
        %v3149 = vshrl.u32 %v3148, 7
        %v3150 = vsub.s32 0, %v3149
        %v3151 = vrot.slane %v3140, %v3150
        %v3152 = vlaneseq
        %v3153 = vshrl.u32 %v3152, 7
        %v3154 = vsub.s32 0, %v3153
        %v3155 = vrot.slane %v3141, %v3154
        %v3156 = vlaneseq
        %v3157 = vshrl.u32 %v3156, 7
        %v3158 = vsub.s32 0, %v3157
        %v3159 = vrot.slane %v3142, %v3158
        %v3160 = vlaneseq
        %v3161 = vshrl.u32 %v3160, 7
        %v3162 = vsub.s32 0, %v3161
        %v3163 = vrot.slane %v3143, %v3162
        %v3164 = vlaneseq
        %v3165 = vshrl.u32 %v3164, 7
        %v3166 = vsub.s32 0, %v3165
        %v3167 = vrot.slane %v3144, %v3166
        %v3168 = vlaneseq
        %v3169 = vshrl.u32 %v3168, 7
        %v3170 = vsub.s32 0, %v3169
        %v3171 = vrot.slane %v3145, %v3170
        %v3172 = vlaneseq
        %v3173 = vshrl.u32 %v3172, 7
        %v3174 = vsub.s32 0, %v3173
        %v3175 = vrot.slane %v3146, %v3174
        %v3176 = vlaneseq
        %v3177 = vshrl.u32 %v3176, 7
        %v3178 = vsub.s32 0, %v3177
        %v3179 = vrot.slane %v3147, %v3178
        %v3180 = vmul.f32 %v3138, %v3151
        %v3181 = vmul.f32 %v3138, %v3155
        %v3182 = vmul.f32 %v3138, %v3159
        %v3183 = vmul.f32 %v3138, %v3163
        %v3184 = vmul.f32 %v3138, %v3167
        %v3185 = vmul.f32 %v3138, %v3171
        %v3186 = vmul.f32 %v3138, %v3175
        %v3187 = vmul.f32 %v3138, %v3179
        %v3188 = vadd.f32 %v3073, %v3180
        %v3189 = vadd.f32 %v3074, %v3181
        %v3190 = vadd.f32 %v3075, %v3182
        %v3191 = vadd.f32 %v3076, %v3183
        %v3192 = vadd.f32 %v3077, %v3184
        %v3193 = vadd.f32 %v3078, %v3185
        %v3194 = vadd.f32 %v3079, %v3186
        %v3195 = vadd.f32 %v3080, %v3187
        %v3196 = vrcp.pop %v3139
        %v3197 = vmul.f32 %v3188, %v3196
        %v3198 = vmul.f32 %v3189, %v3196
        %v3199 = vmul.f32 %v3190, %v3196
        %v3200 = vmul.f32 %v3191, %v3196
        %v3201 = vmul.f32 %v3192, %v3196
        %v3202 = vmul.f32 %v3193, %v3196
        %v3203 = vmul.f32 %v3194, %v3196
        %v3204 = vmul.f32 %v3195, %v3196
        %s3205 = scalar_lea.vmem [#allocation5], 64
        %3206 = vst [vmem:[%s3205] sm:$0xff] %v3197
        %3207 = vst [vmem:[%s3205 + $0x8] sm:$0xff] %v3198
        %3208 = vst [vmem:[%s3205 + $0x10] sm:$0xff] %v3199
        %3209 = vst [vmem:[%s3205 + $0x18] sm:$0xff] %v3200
        %3210 = vst [vmem:[%s3205 + $0x20] sm:$0xff] %v3201
        %3211 = vst [vmem:[%s3205 + $0x28] sm:$0xff] %v3202
        %3212 = vst [vmem:[%s3205 + $0x30] sm:$0xff] %v3203
        %3213 = vst [vmem:[%s3205 + $0x38] sm:$0xff] %v3204
        %s3214 = scalar_lea.vmem [#allocation2], 128
        %v3215 = vld [vmem:[%s3214] sm:$0xff]
        %v3216 = vld [vmem:[%s3214 + $0x8] sm:$0xff]
        %v3217 = vld [vmem:[%s3214 + $0x10] sm:$0xff]
        %v3218 = vld [vmem:[%s3214 + $0x18] sm:$0xff]
        %v3219 = vld [vmem:[%s3214 + $0x20] sm:$0xff]
        %v3220 = vld [vmem:[%s3214 + $0x28] sm:$0xff]
        %v3221 = vld [vmem:[%s3214 + $0x30] sm:$0xff]
        %v3222 = vld [vmem:[%s3214 + $0x38] sm:$0xff]
        %s3223 = scalar_lea.vmem [#allocation3], 128
        %v3224 = vld [vmem:[%s3223] sm:$0x1]
        %v3225 = vld [vmem:[%s3223 + $0x8] sm:$0x1]
        %v3226 = vld [vmem:[%s3223 + $0x10] sm:$0x1]
        %v3227 = vld [vmem:[%s3223 + $0x18] sm:$0x1]
        %v3228 = vld [vmem:[%s3223 + $0x20] sm:$0x1]
        %v3229 = vld [vmem:[%s3223 + $0x28] sm:$0x1]
        %v3230 = vld [vmem:[%s3223 + $0x30] sm:$0x1]
        %v3231 = vld [vmem:[%s3223 + $0x38] sm:$0x1]
        %v3232 = vlaneseq
        %v3233 = vshrl.u32 %v3232, 7
        %v3234 = vsub.s32 0, %v3233
        %v3235 = vrot.slane %v3224, %v3234
        %v3236 = vlaneseq
        %v3237 = vshrl.u32 %v3236, 7
        %v3238 = vsub.s32 0, %v3237
        %v3239 = vrot.slane %v3225, %v3238
        %v3240 = vlaneseq
        %v3241 = vshrl.u32 %v3240, 7
        %v3242 = vsub.s32 0, %v3241
        %v3243 = vrot.slane %v3226, %v3242
        %v3244 = vlaneseq
        %v3245 = vshrl.u32 %v3244, 7
        %v3246 = vsub.s32 0, %v3245
        %v3247 = vrot.slane %v3227, %v3246
        %v3248 = vlaneseq
        %v3249 = vshrl.u32 %v3248, 7
        %v3250 = vsub.s32 0, %v3249
        %v3251 = vrot.slane %v3228, %v3250
        %v3252 = vlaneseq
        %v3253 = vshrl.u32 %v3252, 7
        %v3254 = vsub.s32 0, %v3253
        %v3255 = vrot.slane %v3229, %v3254
        %v3256 = vlaneseq
        %v3257 = vshrl.u32 %v3256, 7
        %v3258 = vsub.s32 0, %v3257
        %v3259 = vrot.slane %v3230, %v3258
        %v3260 = vlaneseq
        %v3261 = vshrl.u32 %v3260, 7
        %v3262 = vsub.s32 0, %v3261
        %v3263 = vrot.slane %v3231, %v3262
        %v3264 = vmul.f32 %v3215, %v3235
        %v3265 = vmul.f32 %v3216, %v3239
        %v3266 = vmul.f32 %v3217, %v3243
        %v3267 = vmul.f32 %v3218, %v3247
        %v3268 = vmul.f32 %v3219, %v3251
        %v3269 = vmul.f32 %v3220, %v3255
        %v3270 = vmul.f32 %v3221, %v3259
        %v3271 = vmul.f32 %v3222, %v3263
        %v3272 = vadd.f32 %v3264, %v3265
        %v3273 = vadd.f32 %v3272, %v3266
        %v3274 = vadd.f32 %v3273, %v3267
        %v3275 = vadd.f32 %v3274, %v3268
        %v3276 = vadd.f32 %v3275, %v3269
        %v3277 = vadd.f32 %v3276, %v3270
        %v3278 = vadd.f32 %v3277, %v3271
        %v3279 = vmul.f32 %v3278, 1.442695
        %v3280 = vpow.pop %v3279
        %s3281 = scalar_lea.vmem [#allocation4], 128
        %v3282 = vld [vmem:[%s3281] sm:$0x1]
        %v3283 = vld [vmem:[%s3281 + $0x8] sm:$0x1]
        %v3284 = vld [vmem:[%s3281 + $0x10] sm:$0x1]
        %v3285 = vld [vmem:[%s3281 + $0x18] sm:$0x1]
        %v3286 = vld [vmem:[%s3281 + $0x20] sm:$0x1]
        %v3287 = vld [vmem:[%s3281 + $0x28] sm:$0x1]
        %v3288 = vld [vmem:[%s3281 + $0x30] sm:$0x1]
        %v3289 = vld [vmem:[%s3281 + $0x38] sm:$0x1]
        %v3290 = vlaneseq
        %v3291 = vshrl.u32 %v3290, 7
        %v3292 = vsub.s32 0, %v3291
        %v3293 = vrot.slane %v3282, %v3292
        %v3294 = vlaneseq
        %v3295 = vshrl.u32 %v3294, 7
        %v3296 = vsub.s32 0, %v3295
        %v3297 = vrot.slane %v3283, %v3296
        %v3298 = vlaneseq
        %v3299 = vshrl.u32 %v3298, 7
        %v3300 = vsub.s32 0, %v3299
        %v3301 = vrot.slane %v3284, %v3300
        %v3302 = vlaneseq
        %v3303 = vshrl.u32 %v3302, 7
        %v3304 = vsub.s32 0, %v3303
        %v3305 = vrot.slane %v3285, %v3304
        %v3306 = vlaneseq
        %v3307 = vshrl.u32 %v3306, 7
        %v3308 = vsub.s32 0, %v3307
        %v3309 = vrot.slane %v3286, %v3308
        %v3310 = vlaneseq
        %v3311 = vshrl.u32 %v3310, 7
        %v3312 = vsub.s32 0, %v3311
        %v3313 = vrot.slane %v3287, %v3312
        %v3314 = vlaneseq
        %v3315 = vshrl.u32 %v3314, 7
        %v3316 = vsub.s32 0, %v3315
        %v3317 = vrot.slane %v3288, %v3316
        %v3318 = vlaneseq
        %v3319 = vshrl.u32 %v3318, 7
        %v3320 = vsub.s32 0, %v3319
        %v3321 = vrot.slane %v3289, %v3320
        %v3322 = vmul.f32 %v3280, %v3293
        %v3323 = vmul.f32 %v3280, %v3297
        %v3324 = vmul.f32 %v3280, %v3301
        %v3325 = vmul.f32 %v3280, %v3305
        %v3326 = vmul.f32 %v3280, %v3309
        %v3327 = vmul.f32 %v3280, %v3313
        %v3328 = vmul.f32 %v3280, %v3317
        %v3329 = vmul.f32 %v3280, %v3321
        %v3330 = vld [vmem:[%s3223 + $0x1] sm:$0x1]
        %v3331 = vld [vmem:[%s3223 + $0x9] sm:$0x1]
        %v3332 = vld [vmem:[%s3223 + $0x11] sm:$0x1]
        %v3333 = vld [vmem:[%s3223 + $0x19] sm:$0x1]
        %v3334 = vld [vmem:[%s3223 + $0x21] sm:$0x1]
        %v3335 = vld [vmem:[%s3223 + $0x29] sm:$0x1]
        %v3336 = vld [vmem:[%s3223 + $0x31] sm:$0x1]
        %v3337 = vld [vmem:[%s3223 + $0x39] sm:$0x1]
        %v3338 = vlaneseq
        %v3339 = vshrl.u32 %v3338, 7
        %v3340 = vsub.s32 0, %v3339
        %v3341 = vrot.slane %v3330, %v3340
        %v3342 = vlaneseq
        %v3343 = vshrl.u32 %v3342, 7
        %v3344 = vsub.s32 0, %v3343
        %v3345 = vrot.slane %v3331, %v3344
        %v3346 = vlaneseq
        %v3347 = vshrl.u32 %v3346, 7
        %v3348 = vsub.s32 0, %v3347
        %v3349 = vrot.slane %v3332, %v3348
        %v3350 = vlaneseq
        %v3351 = vshrl.u32 %v3350, 7
        %v3352 = vsub.s32 0, %v3351
        %v3353 = vrot.slane %v3333, %v3352
        %v3354 = vlaneseq
        %v3355 = vshrl.u32 %v3354, 7
        %v3356 = vsub.s32 0, %v3355
        %v3357 = vrot.slane %v3334, %v3356
        %v3358 = vlaneseq
        %v3359 = vshrl.u32 %v3358, 7
        %v3360 = vsub.s32 0, %v3359
        %v3361 = vrot.slane %v3335, %v3360
        %v3362 = vlaneseq
        %v3363 = vshrl.u32 %v3362, 7
        %v3364 = vsub.s32 0, %v3363
        %v3365 = vrot.slane %v3336, %v3364
        %v3366 = vlaneseq
        %v3367 = vshrl.u32 %v3366, 7
        %v3368 = vsub.s32 0, %v3367
        %v3369 = vrot.slane %v3337, %v3368
        %v3370 = vmul.f32 %v3215, %v3341
        %v3371 = vmul.f32 %v3216, %v3345
        %v3372 = vmul.f32 %v3217, %v3349
        %v3373 = vmul.f32 %v3218, %v3353
        %v3374 = vmul.f32 %v3219, %v3357
        %v3375 = vmul.f32 %v3220, %v3361
        %v3376 = vmul.f32 %v3221, %v3365
        %v3377 = vmul.f32 %v3222, %v3369
        %v3378 = vadd.f32 %v3370, %v3371
        %v3379 = vadd.f32 %v3378, %v3372
        %v3380 = vadd.f32 %v3379, %v3373
        %v3381 = vadd.f32 %v3380, %v3374
        %v3382 = vadd.f32 %v3381, %v3375
        %v3383 = vadd.f32 %v3382, %v3376
        %v3384 = vadd.f32 %v3383, %v3377
        %v3385 = vmul.f32 %v3384, 1.442695
        %v3386 = vpow.pop %v3385
        %v3387 = vsel %vm1501, %v3386, 0.0
        %v3388 = vadd.f32 %v3280, %v3387
        %v3389 = vld [vmem:[%s3281 + $0x1] sm:$0x1]
        %v3390 = vld [vmem:[%s3281 + $0x9] sm:$0x1]
        %v3391 = vld [vmem:[%s3281 + $0x11] sm:$0x1]
        %v3392 = vld [vmem:[%s3281 + $0x19] sm:$0x1]
        %v3393 = vld [vmem:[%s3281 + $0x21] sm:$0x1]
        %v3394 = vld [vmem:[%s3281 + $0x29] sm:$0x1]
        %v3395 = vld [vmem:[%s3281 + $0x31] sm:$0x1]
        %v3396 = vld [vmem:[%s3281 + $0x39] sm:$0x1]
        %v3397 = vlaneseq
        %v3398 = vshrl.u32 %v3397, 7
        %v3399 = vsub.s32 0, %v3398
        %v3400 = vrot.slane %v3389, %v3399
        %v3401 = vlaneseq
        %v3402 = vshrl.u32 %v3401, 7
        %v3403 = vsub.s32 0, %v3402
        %v3404 = vrot.slane %v3390, %v3403
        %v3405 = vlaneseq
        %v3406 = vshrl.u32 %v3405, 7
        %v3407 = vsub.s32 0, %v3406
        %v3408 = vrot.slane %v3391, %v3407
        %v3409 = vlaneseq
        %v3410 = vshrl.u32 %v3409, 7
        %v3411 = vsub.s32 0, %v3410
        %v3412 = vrot.slane %v3392, %v3411
        %v3413 = vlaneseq
        %v3414 = vshrl.u32 %v3413, 7
        %v3415 = vsub.s32 0, %v3414
        %v3416 = vrot.slane %v3393, %v3415
        %v3417 = vlaneseq
        %v3418 = vshrl.u32 %v3417, 7
        %v3419 = vsub.s32 0, %v3418
        %v3420 = vrot.slane %v3394, %v3419
        %v3421 = vlaneseq
        %v3422 = vshrl.u32 %v3421, 7
        %v3423 = vsub.s32 0, %v3422
        %v3424 = vrot.slane %v3395, %v3423
        %v3425 = vlaneseq
        %v3426 = vshrl.u32 %v3425, 7
        %v3427 = vsub.s32 0, %v3426
        %v3428 = vrot.slane %v3396, %v3427
        %v3429 = vmul.f32 %v3387, %v3400
        %v3430 = vmul.f32 %v3387, %v3404
        %v3431 = vmul.f32 %v3387, %v3408
        %v3432 = vmul.f32 %v3387, %v3412
        %v3433 = vmul.f32 %v3387, %v3416
        %v3434 = vmul.f32 %v3387, %v3420
        %v3435 = vmul.f32 %v3387, %v3424
        %v3436 = vmul.f32 %v3387, %v3428
        %v3437 = vadd.f32 %v3322, %v3429
        %v3438 = vadd.f32 %v3323, %v3430
        %v3439 = vadd.f32 %v3324, %v3431
        %v3440 = vadd.f32 %v3325, %v3432
        %v3441 = vadd.f32 %v3326, %v3433
        %v3442 = vadd.f32 %v3327, %v3434
        %v3443 = vadd.f32 %v3328, %v3435
        %v3444 = vadd.f32 %v3329, %v3436
        %v3445 = vld [vmem:[%s3223 + $0x2] sm:$0x1]
        %v3446 = vld [vmem:[%s3223 + $0xa] sm:$0x1]
        %v3447 = vld [vmem:[%s3223 + $0x12] sm:$0x1]
        %v3448 = vld [vmem:[%s3223 + $0x1a] sm:$0x1]
        %v3449 = vld [vmem:[%s3223 + $0x22] sm:$0x1]
        %v3450 = vld [vmem:[%s3223 + $0x2a] sm:$0x1]
        %v3451 = vld [vmem:[%s3223 + $0x32] sm:$0x1]
        %v3452 = vld [vmem:[%s3223 + $0x3a] sm:$0x1]
        %v3453 = vlaneseq
        %v3454 = vshrl.u32 %v3453, 7
        %v3455 = vsub.s32 0, %v3454
        %v3456 = vrot.slane %v3445, %v3455
        %v3457 = vlaneseq
        %v3458 = vshrl.u32 %v3457, 7
        %v3459 = vsub.s32 0, %v3458
        %v3460 = vrot.slane %v3446, %v3459
        %v3461 = vlaneseq
        %v3462 = vshrl.u32 %v3461, 7
        %v3463 = vsub.s32 0, %v3462
        %v3464 = vrot.slane %v3447, %v3463
        %v3465 = vlaneseq
        %v3466 = vshrl.u32 %v3465, 7
        %v3467 = vsub.s32 0, %v3466
        %v3468 = vrot.slane %v3448, %v3467
        %v3469 = vlaneseq
        %v3470 = vshrl.u32 %v3469, 7
        %v3471 = vsub.s32 0, %v3470
        %v3472 = vrot.slane %v3449, %v3471
        %v3473 = vlaneseq
        %v3474 = vshrl.u32 %v3473, 7
        %v3475 = vsub.s32 0, %v3474
        %v3476 = vrot.slane %v3450, %v3475
        %v3477 = vlaneseq
        %v3478 = vshrl.u32 %v3477, 7
        %v3479 = vsub.s32 0, %v3478
        %v3480 = vrot.slane %v3451, %v3479
        %v3481 = vlaneseq
        %v3482 = vshrl.u32 %v3481, 7
        %v3483 = vsub.s32 0, %v3482
        %v3484 = vrot.slane %v3452, %v3483
        %v3485 = vmul.f32 %v3215, %v3456
        %v3486 = vmul.f32 %v3216, %v3460
        %v3487 = vmul.f32 %v3217, %v3464
        %v3488 = vmul.f32 %v3218, %v3468
        %v3489 = vmul.f32 %v3219, %v3472
        %v3490 = vmul.f32 %v3220, %v3476
        %v3491 = vmul.f32 %v3221, %v3480
        %v3492 = vmul.f32 %v3222, %v3484
        %v3493 = vadd.f32 %v3485, %v3486
        %v3494 = vadd.f32 %v3493, %v3487
        %v3495 = vadd.f32 %v3494, %v3488
        %v3496 = vadd.f32 %v3495, %v3489
        %v3497 = vadd.f32 %v3496, %v3490
        %v3498 = vadd.f32 %v3497, %v3491
        %v3499 = vadd.f32 %v3498, %v3492
        %v3500 = vmul.f32 %v3499, 1.442695
        %v3501 = vpow.pop %v3500
        %v3502 = vsel %vm1617, %v3501, 0.0
        %v3503 = vadd.f32 %v3388, %v3502
        %v3504 = vld [vmem:[%s3281 + $0x2] sm:$0x1]
        %v3505 = vld [vmem:[%s3281 + $0xa] sm:$0x1]
        %v3506 = vld [vmem:[%s3281 + $0x12] sm:$0x1]
        %v3507 = vld [vmem:[%s3281 + $0x1a] sm:$0x1]
        %v3508 = vld [vmem:[%s3281 + $0x22] sm:$0x1]
        %v3509 = vld [vmem:[%s3281 + $0x2a] sm:$0x1]
        %v3510 = vld [vmem:[%s3281 + $0x32] sm:$0x1]
        %v3511 = vld [vmem:[%s3281 + $0x3a] sm:$0x1]
        %v3512 = vlaneseq
        %v3513 = vshrl.u32 %v3512, 7
        %v3514 = vsub.s32 0, %v3513
        %v3515 = vrot.slane %v3504, %v3514
        %v3516 = vlaneseq
        %v3517 = vshrl.u32 %v3516, 7
        %v3518 = vsub.s32 0, %v3517
        %v3519 = vrot.slane %v3505, %v3518
        %v3520 = vlaneseq
        %v3521 = vshrl.u32 %v3520, 7
        %v3522 = vsub.s32 0, %v3521
        %v3523 = vrot.slane %v3506, %v3522
        %v3524 = vlaneseq
        %v3525 = vshrl.u32 %v3524, 7
        %v3526 = vsub.s32 0, %v3525
        %v3527 = vrot.slane %v3507, %v3526
        %v3528 = vlaneseq
        %v3529 = vshrl.u32 %v3528, 7
        %v3530 = vsub.s32 0, %v3529
        %v3531 = vrot.slane %v3508, %v3530
        %v3532 = vlaneseq
        %v3533 = vshrl.u32 %v3532, 7
        %v3534 = vsub.s32 0, %v3533
        %v3535 = vrot.slane %v3509, %v3534
        %v3536 = vlaneseq
        %v3537 = vshrl.u32 %v3536, 7
        %v3538 = vsub.s32 0, %v3537
        %v3539 = vrot.slane %v3510, %v3538
        %v3540 = vlaneseq
        %v3541 = vshrl.u32 %v3540, 7
        %v3542 = vsub.s32 0, %v3541
        %v3543 = vrot.slane %v3511, %v3542
        %v3544 = vmul.f32 %v3502, %v3515
        %v3545 = vmul.f32 %v3502, %v3519
        %v3546 = vmul.f32 %v3502, %v3523
        %v3547 = vmul.f32 %v3502, %v3527
        %v3548 = vmul.f32 %v3502, %v3531
        %v3549 = vmul.f32 %v3502, %v3535
        %v3550 = vmul.f32 %v3502, %v3539
        %v3551 = vmul.f32 %v3502, %v3543
        %v3552 = vadd.f32 %v3437, %v3544
        %v3553 = vadd.f32 %v3438, %v3545
        %v3554 = vadd.f32 %v3439, %v3546
        %v3555 = vadd.f32 %v3440, %v3547
        %v3556 = vadd.f32 %v3441, %v3548
        %v3557 = vadd.f32 %v3442, %v3549
        %v3558 = vadd.f32 %v3443, %v3550
        %v3559 = vadd.f32 %v3444, %v3551
        %v3560 = vld [vmem:[%s3223 + $0x3] sm:$0x1]
        %v3561 = vld [vmem:[%s3223 + $0xb] sm:$0x1]
        %v3562 = vld [vmem:[%s3223 + $0x13] sm:$0x1]
        %v3563 = vld [vmem:[%s3223 + $0x1b] sm:$0x1]
        %v3564 = vld [vmem:[%s3223 + $0x23] sm:$0x1]
        %v3565 = vld [vmem:[%s3223 + $0x2b] sm:$0x1]
        %v3566 = vld [vmem:[%s3223 + $0x33] sm:$0x1]
        %v3567 = vld [vmem:[%s3223 + $0x3b] sm:$0x1]
        %v3568 = vlaneseq
        %v3569 = vshrl.u32 %v3568, 7
        %v3570 = vsub.s32 0, %v3569
        %v3571 = vrot.slane %v3560, %v3570
        %v3572 = vlaneseq
        %v3573 = vshrl.u32 %v3572, 7
        %v3574 = vsub.s32 0, %v3573
        %v3575 = vrot.slane %v3561, %v3574
        %v3576 = vlaneseq
        %v3577 = vshrl.u32 %v3576, 7
        %v3578 = vsub.s32 0, %v3577
        %v3579 = vrot.slane %v3562, %v3578
        %v3580 = vlaneseq
        %v3581 = vshrl.u32 %v3580, 7
        %v3582 = vsub.s32 0, %v3581
        %v3583 = vrot.slane %v3563, %v3582
        %v3584 = vlaneseq
        %v3585 = vshrl.u32 %v3584, 7
        %v3586 = vsub.s32 0, %v3585
        %v3587 = vrot.slane %v3564, %v3586
        %v3588 = vlaneseq
        %v3589 = vshrl.u32 %v3588, 7
        %v3590 = vsub.s32 0, %v3589
        %v3591 = vrot.slane %v3565, %v3590
        %v3592 = vlaneseq
        %v3593 = vshrl.u32 %v3592, 7
        %v3594 = vsub.s32 0, %v3593
        %v3595 = vrot.slane %v3566, %v3594
        %v3596 = vlaneseq
        %v3597 = vshrl.u32 %v3596, 7
        %v3598 = vsub.s32 0, %v3597
        %v3599 = vrot.slane %v3567, %v3598
        %v3600 = vmul.f32 %v3215, %v3571
        %v3601 = vmul.f32 %v3216, %v3575
        %v3602 = vmul.f32 %v3217, %v3579
        %v3603 = vmul.f32 %v3218, %v3583
        %v3604 = vmul.f32 %v3219, %v3587
        %v3605 = vmul.f32 %v3220, %v3591
        %v3606 = vmul.f32 %v3221, %v3595
        %v3607 = vmul.f32 %v3222, %v3599
        %v3608 = vadd.f32 %v3600, %v3601
        %v3609 = vadd.f32 %v3608, %v3602
        %v3610 = vadd.f32 %v3609, %v3603
        %v3611 = vadd.f32 %v3610, %v3604
        %v3612 = vadd.f32 %v3611, %v3605
        %v3613 = vadd.f32 %v3612, %v3606
        %v3614 = vadd.f32 %v3613, %v3607
        %v3615 = vmul.f32 %v3614, 1.442695
        %v3616 = vpow.pop %v3615
        %v3617 = vsel %vm1733, %v3616, 0.0
        %v3618 = vadd.f32 %v3503, %v3617
        %v3619 = vld [vmem:[%s3281 + $0x3] sm:$0x1]
        %v3620 = vld [vmem:[%s3281 + $0xb] sm:$0x1]
        %v3621 = vld [vmem:[%s3281 + $0x13] sm:$0x1]
        %v3622 = vld [vmem:[%s3281 + $0x1b] sm:$0x1]
        %v3623 = vld [vmem:[%s3281 + $0x23] sm:$0x1]
        %v3624 = vld [vmem:[%s3281 + $0x2b] sm:$0x1]
        %v3625 = vld [vmem:[%s3281 + $0x33] sm:$0x1]
        %v3626 = vld [vmem:[%s3281 + $0x3b] sm:$0x1]
        %v3627 = vlaneseq
        %v3628 = vshrl.u32 %v3627, 7
        %v3629 = vsub.s32 0, %v3628
        %v3630 = vrot.slane %v3619, %v3629
        %v3631 = vlaneseq
        %v3632 = vshrl.u32 %v3631, 7
        %v3633 = vsub.s32 0, %v3632
        %v3634 = vrot.slane %v3620, %v3633
        %v3635 = vlaneseq
        %v3636 = vshrl.u32 %v3635, 7
        %v3637 = vsub.s32 0, %v3636
        %v3638 = vrot.slane %v3621, %v3637
        %v3639 = vlaneseq
        %v3640 = vshrl.u32 %v3639, 7
        %v3641 = vsub.s32 0, %v3640
        %v3642 = vrot.slane %v3622, %v3641
        %v3643 = vlaneseq
        %v3644 = vshrl.u32 %v3643, 7
        %v3645 = vsub.s32 0, %v3644
        %v3646 = vrot.slane %v3623, %v3645
        %v3647 = vlaneseq
        %v3648 = vshrl.u32 %v3647, 7
        %v3649 = vsub.s32 0, %v3648
        %v3650 = vrot.slane %v3624, %v3649
        %v3651 = vlaneseq
        %v3652 = vshrl.u32 %v3651, 7
        %v3653 = vsub.s32 0, %v3652
        %v3654 = vrot.slane %v3625, %v3653
        %v3655 = vlaneseq
        %v3656 = vshrl.u32 %v3655, 7
        %v3657 = vsub.s32 0, %v3656
        %v3658 = vrot.slane %v3626, %v3657
        %v3659 = vmul.f32 %v3617, %v3630
        %v3660 = vmul.f32 %v3617, %v3634
        %v3661 = vmul.f32 %v3617, %v3638
        %v3662 = vmul.f32 %v3617, %v3642
        %v3663 = vmul.f32 %v3617, %v3646
        %v3664 = vmul.f32 %v3617, %v3650
        %v3665 = vmul.f32 %v3617, %v3654
        %v3666 = vmul.f32 %v3617, %v3658
        %v3667 = vadd.f32 %v3552, %v3659
        %v3668 = vadd.f32 %v3553, %v3660
        %v3669 = vadd.f32 %v3554, %v3661
        %v3670 = vadd.f32 %v3555, %v3662
        %v3671 = vadd.f32 %v3556, %v3663
        %v3672 = vadd.f32 %v3557, %v3664
        %v3673 = vadd.f32 %v3558, %v3665
        %v3674 = vadd.f32 %v3559, %v3666
        %v3675 = vld [vmem:[%s3223 + $0x4] sm:$0x1]
        %v3676 = vld [vmem:[%s3223 + $0xc] sm:$0x1]
        %v3677 = vld [vmem:[%s3223 + $0x14] sm:$0x1]
        %v3678 = vld [vmem:[%s3223 + $0x1c] sm:$0x1]
        %v3679 = vld [vmem:[%s3223 + $0x24] sm:$0x1]
        %v3680 = vld [vmem:[%s3223 + $0x2c] sm:$0x1]
        %v3681 = vld [vmem:[%s3223 + $0x34] sm:$0x1]
        %v3682 = vld [vmem:[%s3223 + $0x3c] sm:$0x1]
        %v3683 = vlaneseq
        %v3684 = vshrl.u32 %v3683, 7
        %v3685 = vsub.s32 0, %v3684
        %v3686 = vrot.slane %v3675, %v3685
        %v3687 = vlaneseq
        %v3688 = vshrl.u32 %v3687, 7
        %v3689 = vsub.s32 0, %v3688
        %v3690 = vrot.slane %v3676, %v3689
        %v3691 = vlaneseq
        %v3692 = vshrl.u32 %v3691, 7
        %v3693 = vsub.s32 0, %v3692
        %v3694 = vrot.slane %v3677, %v3693
        %v3695 = vlaneseq
        %v3696 = vshrl.u32 %v3695, 7
        %v3697 = vsub.s32 0, %v3696
        %v3698 = vrot.slane %v3678, %v3697
        %v3699 = vlaneseq
        %v3700 = vshrl.u32 %v3699, 7
        %v3701 = vsub.s32 0, %v3700
        %v3702 = vrot.slane %v3679, %v3701
        %v3703 = vlaneseq
        %v3704 = vshrl.u32 %v3703, 7
        %v3705 = vsub.s32 0, %v3704
        %v3706 = vrot.slane %v3680, %v3705
        %v3707 = vlaneseq
        %v3708 = vshrl.u32 %v3707, 7
        %v3709 = vsub.s32 0, %v3708
        %v3710 = vrot.slane %v3681, %v3709
        %v3711 = vlaneseq
        %v3712 = vshrl.u32 %v3711, 7
        %v3713 = vsub.s32 0, %v3712
        %v3714 = vrot.slane %v3682, %v3713
        %v3715 = vmul.f32 %v3215, %v3686
        %v3716 = vmul.f32 %v3216, %v3690
        %v3717 = vmul.f32 %v3217, %v3694
        %v3718 = vmul.f32 %v3218, %v3698
        %v3719 = vmul.f32 %v3219, %v3702
        %v3720 = vmul.f32 %v3220, %v3706
        %v3721 = vmul.f32 %v3221, %v3710
        %v3722 = vmul.f32 %v3222, %v3714
        %v3723 = vadd.f32 %v3715, %v3716
        %v3724 = vadd.f32 %v3723, %v3717
        %v3725 = vadd.f32 %v3724, %v3718
        %v3726 = vadd.f32 %v3725, %v3719
        %v3727 = vadd.f32 %v3726, %v3720
        %v3728 = vadd.f32 %v3727, %v3721
        %v3729 = vadd.f32 %v3728, %v3722
        %v3730 = vmul.f32 %v3729, 1.442695
        %v3731 = vpow.pop %v3730
        %v3732 = vsel %vm1849, %v3731, 0.0
        %v3733 = vadd.f32 %v3618, %v3732
        %v3734 = vld [vmem:[%s3281 + $0x4] sm:$0x1]
        %v3735 = vld [vmem:[%s3281 + $0xc] sm:$0x1]
        %v3736 = vld [vmem:[%s3281 + $0x14] sm:$0x1]
        %v3737 = vld [vmem:[%s3281 + $0x1c] sm:$0x1]
        %v3738 = vld [vmem:[%s3281 + $0x24] sm:$0x1]
        %v3739 = vld [vmem:[%s3281 + $0x2c] sm:$0x1]
        %v3740 = vld [vmem:[%s3281 + $0x34] sm:$0x1]
        %v3741 = vld [vmem:[%s3281 + $0x3c] sm:$0x1]
        %v3742 = vlaneseq
        %v3743 = vshrl.u32 %v3742, 7
        %v3744 = vsub.s32 0, %v3743
        %v3745 = vrot.slane %v3734, %v3744
        %v3746 = vlaneseq
        %v3747 = vshrl.u32 %v3746, 7
        %v3748 = vsub.s32 0, %v3747
        %v3749 = vrot.slane %v3735, %v3748
        %v3750 = vlaneseq
        %v3751 = vshrl.u32 %v3750, 7
        %v3752 = vsub.s32 0, %v3751
        %v3753 = vrot.slane %v3736, %v3752
        %v3754 = vlaneseq
        %v3755 = vshrl.u32 %v3754, 7
        %v3756 = vsub.s32 0, %v3755
        %v3757 = vrot.slane %v3737, %v3756
        %v3758 = vlaneseq
        %v3759 = vshrl.u32 %v3758, 7
        %v3760 = vsub.s32 0, %v3759
        %v3761 = vrot.slane %v3738, %v3760
        %v3762 = vlaneseq
        %v3763 = vshrl.u32 %v3762, 7
        %v3764 = vsub.s32 0, %v3763
        %v3765 = vrot.slane %v3739, %v3764
        %v3766 = vlaneseq
        %v3767 = vshrl.u32 %v3766, 7
        %v3768 = vsub.s32 0, %v3767
        %v3769 = vrot.slane %v3740, %v3768
        %v3770 = vlaneseq
        %v3771 = vshrl.u32 %v3770, 7
        %v3772 = vsub.s32 0, %v3771
        %v3773 = vrot.slane %v3741, %v3772
        %v3774 = vmul.f32 %v3732, %v3745
        %v3775 = vmul.f32 %v3732, %v3749
        %v3776 = vmul.f32 %v3732, %v3753
        %v3777 = vmul.f32 %v3732, %v3757
        %v3778 = vmul.f32 %v3732, %v3761
        %v3779 = vmul.f32 %v3732, %v3765
        %v3780 = vmul.f32 %v3732, %v3769
        %v3781 = vmul.f32 %v3732, %v3773
        %v3782 = vadd.f32 %v3667, %v3774
        %v3783 = vadd.f32 %v3668, %v3775
        %v3784 = vadd.f32 %v3669, %v3776
        %v3785 = vadd.f32 %v3670, %v3777
        %v3786 = vadd.f32 %v3671, %v3778
        %v3787 = vadd.f32 %v3672, %v3779
        %v3788 = vadd.f32 %v3673, %v3780
        %v3789 = vadd.f32 %v3674, %v3781
        %v3790 = vld [vmem:[%s3223 + $0x5] sm:$0x1]
        %v3791 = vld [vmem:[%s3223 + $0xd] sm:$0x1]
        %v3792 = vld [vmem:[%s3223 + $0x15] sm:$0x1]
        %v3793 = vld [vmem:[%s3223 + $0x1d] sm:$0x1]
        %v3794 = vld [vmem:[%s3223 + $0x25] sm:$0x1]
        %v3795 = vld [vmem:[%s3223 + $0x2d] sm:$0x1]
        %v3796 = vld [vmem:[%s3223 + $0x35] sm:$0x1]
        %v3797 = vld [vmem:[%s3223 + $0x3d] sm:$0x1]
        %v3798 = vlaneseq
        %v3799 = vshrl.u32 %v3798, 7
        %v3800 = vsub.s32 0, %v3799
        %v3801 = vrot.slane %v3790, %v3800
        %v3802 = vlaneseq
        %v3803 = vshrl.u32 %v3802, 7
        %v3804 = vsub.s32 0, %v3803
        %v3805 = vrot.slane %v3791, %v3804
        %v3806 = vlaneseq
        %v3807 = vshrl.u32 %v3806, 7
        %v3808 = vsub.s32 0, %v3807
        %v3809 = vrot.slane %v3792, %v3808
        %v3810 = vlaneseq
        %v3811 = vshrl.u32 %v3810, 7
        %v3812 = vsub.s32 0, %v3811
        %v3813 = vrot.slane %v3793, %v3812
        %v3814 = vlaneseq
        %v3815 = vshrl.u32 %v3814, 7
        %v3816 = vsub.s32 0, %v3815
        %v3817 = vrot.slane %v3794, %v3816
        %v3818 = vlaneseq
        %v3819 = vshrl.u32 %v3818, 7
        %v3820 = vsub.s32 0, %v3819
        %v3821 = vrot.slane %v3795, %v3820
        %v3822 = vlaneseq
        %v3823 = vshrl.u32 %v3822, 7
        %v3824 = vsub.s32 0, %v3823
        %v3825 = vrot.slane %v3796, %v3824
        %v3826 = vlaneseq
        %v3827 = vshrl.u32 %v3826, 7
        %v3828 = vsub.s32 0, %v3827
        %v3829 = vrot.slane %v3797, %v3828
        %v3830 = vmul.f32 %v3215, %v3801
        %v3831 = vmul.f32 %v3216, %v3805
        %v3832 = vmul.f32 %v3217, %v3809
        %v3833 = vmul.f32 %v3218, %v3813
        %v3834 = vmul.f32 %v3219, %v3817
        %v3835 = vmul.f32 %v3220, %v3821
        %v3836 = vmul.f32 %v3221, %v3825
        %v3837 = vmul.f32 %v3222, %v3829
        %v3838 = vadd.f32 %v3830, %v3831
        %v3839 = vadd.f32 %v3838, %v3832
        %v3840 = vadd.f32 %v3839, %v3833
        %v3841 = vadd.f32 %v3840, %v3834
        %v3842 = vadd.f32 %v3841, %v3835
        %v3843 = vadd.f32 %v3842, %v3836
        %v3844 = vadd.f32 %v3843, %v3837
        %v3845 = vmul.f32 %v3844, 1.442695
        %v3846 = vpow.pop %v3845
        %v3847 = vsel %vm1965, %v3846, 0.0
        %v3848 = vadd.f32 %v3733, %v3847
        %v3849 = vld [vmem:[%s3281 + $0x5] sm:$0x1]
        %v3850 = vld [vmem:[%s3281 + $0xd] sm:$0x1]
        %v3851 = vld [vmem:[%s3281 + $0x15] sm:$0x1]
        %v3852 = vld [vmem:[%s3281 + $0x1d] sm:$0x1]
        %v3853 = vld [vmem:[%s3281 + $0x25] sm:$0x1]
        %v3854 = vld [vmem:[%s3281 + $0x2d] sm:$0x1]
        %v3855 = vld [vmem:[%s3281 + $0x35] sm:$0x1]
        %v3856 = vld [vmem:[%s3281 + $0x3d] sm:$0x1]
        %v3857 = vlaneseq
        %v3858 = vshrl.u32 %v3857, 7
        %v3859 = vsub.s32 0, %v3858
        %v3860 = vrot.slane %v3849, %v3859
        %v3861 = vlaneseq
        %v3862 = vshrl.u32 %v3861, 7
        %v3863 = vsub.s32 0, %v3862
        %v3864 = vrot.slane %v3850, %v3863
        %v3865 = vlaneseq
        %v3866 = vshrl.u32 %v3865, 7
        %v3867 = vsub.s32 0, %v3866
        %v3868 = vrot.slane %v3851, %v3867
        %v3869 = vlaneseq
        %v3870 = vshrl.u32 %v3869, 7
        %v3871 = vsub.s32 0, %v3870
        %v3872 = vrot.slane %v3852, %v3871
        %v3873 = vlaneseq
        %v3874 = vshrl.u32 %v3873, 7
        %v3875 = vsub.s32 0, %v3874
        %v3876 = vrot.slane %v3853, %v3875
        %v3877 = vlaneseq
        %v3878 = vshrl.u32 %v3877, 7
        %v3879 = vsub.s32 0, %v3878
        %v3880 = vrot.slane %v3854, %v3879
        %v3881 = vlaneseq
        %v3882 = vshrl.u32 %v3881, 7
        %v3883 = vsub.s32 0, %v3882
        %v3884 = vrot.slane %v3855, %v3883
        %v3885 = vlaneseq
        %v3886 = vshrl.u32 %v3885, 7
        %v3887 = vsub.s32 0, %v3886
        %v3888 = vrot.slane %v3856, %v3887
        %v3889 = vmul.f32 %v3847, %v3860
        %v3890 = vmul.f32 %v3847, %v3864
        %v3891 = vmul.f32 %v3847, %v3868
        %v3892 = vmul.f32 %v3847, %v3872
        %v3893 = vmul.f32 %v3847, %v3876
        %v3894 = vmul.f32 %v3847, %v3880
        %v3895 = vmul.f32 %v3847, %v3884
        %v3896 = vmul.f32 %v3847, %v3888
        %v3897 = vadd.f32 %v3782, %v3889
        %v3898 = vadd.f32 %v3783, %v3890
        %v3899 = vadd.f32 %v3784, %v3891
        %v3900 = vadd.f32 %v3785, %v3892
        %v3901 = vadd.f32 %v3786, %v3893
        %v3902 = vadd.f32 %v3787, %v3894
        %v3903 = vadd.f32 %v3788, %v3895
        %v3904 = vadd.f32 %v3789, %v3896
        %v3905 = vld [vmem:[%s3223 + $0x6] sm:$0x1]
        %v3906 = vld [vmem:[%s3223 + $0xe] sm:$0x1]
        %v3907 = vld [vmem:[%s3223 + $0x16] sm:$0x1]
        %v3908 = vld [vmem:[%s3223 + $0x1e] sm:$0x1]
        %v3909 = vld [vmem:[%s3223 + $0x26] sm:$0x1]
        %v3910 = vld [vmem:[%s3223 + $0x2e] sm:$0x1]
        %v3911 = vld [vmem:[%s3223 + $0x36] sm:$0x1]
        %v3912 = vld [vmem:[%s3223 + $0x3e] sm:$0x1]
        %v3913 = vlaneseq
        %v3914 = vshrl.u32 %v3913, 7
        %v3915 = vsub.s32 0, %v3914
        %v3916 = vrot.slane %v3905, %v3915
        %v3917 = vlaneseq
        %v3918 = vshrl.u32 %v3917, 7
        %v3919 = vsub.s32 0, %v3918
        %v3920 = vrot.slane %v3906, %v3919
        %v3921 = vlaneseq
        %v3922 = vshrl.u32 %v3921, 7
        %v3923 = vsub.s32 0, %v3922
        %v3924 = vrot.slane %v3907, %v3923
        %v3925 = vlaneseq
        %v3926 = vshrl.u32 %v3925, 7
        %v3927 = vsub.s32 0, %v3926
        %v3928 = vrot.slane %v3908, %v3927
        %v3929 = vlaneseq
        %v3930 = vshrl.u32 %v3929, 7
        %v3931 = vsub.s32 0, %v3930
        %v3932 = vrot.slane %v3909, %v3931
        %v3933 = vlaneseq
        %v3934 = vshrl.u32 %v3933, 7
        %v3935 = vsub.s32 0, %v3934
        %v3936 = vrot.slane %v3910, %v3935
        %v3937 = vlaneseq
        %v3938 = vshrl.u32 %v3937, 7
        %v3939 = vsub.s32 0, %v3938
        %v3940 = vrot.slane %v3911, %v3939
        %v3941 = vlaneseq
        %v3942 = vshrl.u32 %v3941, 7
        %v3943 = vsub.s32 0, %v3942
        %v3944 = vrot.slane %v3912, %v3943
        %v3945 = vmul.f32 %v3215, %v3916
        %v3946 = vmul.f32 %v3216, %v3920
        %v3947 = vmul.f32 %v3217, %v3924
        %v3948 = vmul.f32 %v3218, %v3928
        %v3949 = vmul.f32 %v3219, %v3932
        %v3950 = vmul.f32 %v3220, %v3936
        %v3951 = vmul.f32 %v3221, %v3940
        %v3952 = vmul.f32 %v3222, %v3944
        %v3953 = vadd.f32 %v3945, %v3946
        %v3954 = vadd.f32 %v3953, %v3947
        %v3955 = vadd.f32 %v3954, %v3948
        %v3956 = vadd.f32 %v3955, %v3949
        %v3957 = vadd.f32 %v3956, %v3950
        %v3958 = vadd.f32 %v3957, %v3951
        %v3959 = vadd.f32 %v3958, %v3952
        %v3960 = vmul.f32 %v3959, 1.442695
        %v3961 = vpow.pop %v3960
        %v3962 = vsel %vm2081, %v3961, 0.0
        %v3963 = vadd.f32 %v3848, %v3962
        %v3964 = vld [vmem:[%s3281 + $0x6] sm:$0x1]
        %v3965 = vld [vmem:[%s3281 + $0xe] sm:$0x1]
        %v3966 = vld [vmem:[%s3281 + $0x16] sm:$0x1]
        %v3967 = vld [vmem:[%s3281 + $0x1e] sm:$0x1]
        %v3968 = vld [vmem:[%s3281 + $0x26] sm:$0x1]
        %v3969 = vld [vmem:[%s3281 + $0x2e] sm:$0x1]
        %v3970 = vld [vmem:[%s3281 + $0x36] sm:$0x1]
        %v3971 = vld [vmem:[%s3281 + $0x3e] sm:$0x1]
        %v3972 = vlaneseq
        %v3973 = vshrl.u32 %v3972, 7
        %v3974 = vsub.s32 0, %v3973
        %v3975 = vrot.slane %v3964, %v3974
        %v3976 = vlaneseq
        %v3977 = vshrl.u32 %v3976, 7
        %v3978 = vsub.s32 0, %v3977
        %v3979 = vrot.slane %v3965, %v3978
        %v3980 = vlaneseq
        %v3981 = vshrl.u32 %v3980, 7
        %v3982 = vsub.s32 0, %v3981
        %v3983 = vrot.slane %v3966, %v3982
        %v3984 = vlaneseq
        %v3985 = vshrl.u32 %v3984, 7
        %v3986 = vsub.s32 0, %v3985
        %v3987 = vrot.slane %v3967, %v3986
        %v3988 = vlaneseq
        %v3989 = vshrl.u32 %v3988, 7
        %v3990 = vsub.s32 0, %v3989
        %v3991 = vrot.slane %v3968, %v3990
        %v3992 = vlaneseq
        %v3993 = vshrl.u32 %v3992, 7
        %v3994 = vsub.s32 0, %v3993
        %v3995 = vrot.slane %v3969, %v3994
        %v3996 = vlaneseq
        %v3997 = vshrl.u32 %v3996, 7
        %v3998 = vsub.s32 0, %v3997
        %v3999 = vrot.slane %v3970, %v3998
        %v4000 = vlaneseq
        %v4001 = vshrl.u32 %v4000, 7
        %v4002 = vsub.s32 0, %v4001
        %v4003 = vrot.slane %v3971, %v4002
        %v4004 = vmul.f32 %v3962, %v3975
        %v4005 = vmul.f32 %v3962, %v3979
        %v4006 = vmul.f32 %v3962, %v3983
        %v4007 = vmul.f32 %v3962, %v3987
        %v4008 = vmul.f32 %v3962, %v3991
        %v4009 = vmul.f32 %v3962, %v3995
        %v4010 = vmul.f32 %v3962, %v3999
        %v4011 = vmul.f32 %v3962, %v4003
        %v4012 = vadd.f32 %v3897, %v4004
        %v4013 = vadd.f32 %v3898, %v4005
        %v4014 = vadd.f32 %v3899, %v4006
        %v4015 = vadd.f32 %v3900, %v4007
        %v4016 = vadd.f32 %v3901, %v4008
        %v4017 = vadd.f32 %v3902, %v4009
        %v4018 = vadd.f32 %v3903, %v4010
        %v4019 = vadd.f32 %v3904, %v4011
        %v4020 = vld [vmem:[%s3223 + $0x7] sm:$0x1]
        %v4021 = vld [vmem:[%s3223 + $0xf] sm:$0x1]
        %v4022 = vld [vmem:[%s3223 + $0x17] sm:$0x1]
        %v4023 = vld [vmem:[%s3223 + $0x1f] sm:$0x1]
        %v4024 = vld [vmem:[%s3223 + $0x27] sm:$0x1]
        %v4025 = vld [vmem:[%s3223 + $0x2f] sm:$0x1]
        %v4026 = vld [vmem:[%s3223 + $0x37] sm:$0x1]
        %v4027 = vld [vmem:[%s3223 + $0x3f] sm:$0x1]
        %v4028 = vlaneseq
        %v4029 = vshrl.u32 %v4028, 7
        %v4030 = vsub.s32 0, %v4029
        %v4031 = vrot.slane %v4020, %v4030
        %v4032 = vlaneseq
        %v4033 = vshrl.u32 %v4032, 7
        %v4034 = vsub.s32 0, %v4033
        %v4035 = vrot.slane %v4021, %v4034
        %v4036 = vlaneseq
        %v4037 = vshrl.u32 %v4036, 7
        %v4038 = vsub.s32 0, %v4037
        %v4039 = vrot.slane %v4022, %v4038
        %v4040 = vlaneseq
        %v4041 = vshrl.u32 %v4040, 7
        %v4042 = vsub.s32 0, %v4041
        %v4043 = vrot.slane %v4023, %v4042
        %v4044 = vlaneseq
        %v4045 = vshrl.u32 %v4044, 7
        %v4046 = vsub.s32 0, %v4045
        %v4047 = vrot.slane %v4024, %v4046
        %v4048 = vlaneseq
        %v4049 = vshrl.u32 %v4048, 7
        %v4050 = vsub.s32 0, %v4049
        %v4051 = vrot.slane %v4025, %v4050
        %v4052 = vlaneseq
        %v4053 = vshrl.u32 %v4052, 7
        %v4054 = vsub.s32 0, %v4053
        %v4055 = vrot.slane %v4026, %v4054
        %v4056 = vlaneseq
        %v4057 = vshrl.u32 %v4056, 7
        %v4058 = vsub.s32 0, %v4057
        %v4059 = vrot.slane %v4027, %v4058
        %v4060 = vmul.f32 %v3215, %v4031
        %v4061 = vmul.f32 %v3216, %v4035
        %v4062 = vmul.f32 %v3217, %v4039
        %v4063 = vmul.f32 %v3218, %v4043
        %v4064 = vmul.f32 %v3219, %v4047
        %v4065 = vmul.f32 %v3220, %v4051
        %v4066 = vmul.f32 %v3221, %v4055
        %v4067 = vmul.f32 %v3222, %v4059
        %v4068 = vadd.f32 %v4060, %v4061
        %v4069 = vadd.f32 %v4068, %v4062
        %v4070 = vadd.f32 %v4069, %v4063
        %v4071 = vadd.f32 %v4070, %v4064
        %v4072 = vadd.f32 %v4071, %v4065
        %v4073 = vadd.f32 %v4072, %v4066
        %v4074 = vadd.f32 %v4073, %v4067
        %v4075 = vmul.f32 %v4074, 1.442695
        %v4076 = vpow.pop %v4075
        %v4077 = vsel %vm2197, %v4076, 0.0
        %v4078 = vadd.f32 %v3963, %v4077
        %v4079 = vld [vmem:[%s3281 + $0x7] sm:$0x1]
        %v4080 = vld [vmem:[%s3281 + $0xf] sm:$0x1]
        %v4081 = vld [vmem:[%s3281 + $0x17] sm:$0x1]
        %v4082 = vld [vmem:[%s3281 + $0x1f] sm:$0x1]
        %v4083 = vld [vmem:[%s3281 + $0x27] sm:$0x1]
        %v4084 = vld [vmem:[%s3281 + $0x2f] sm:$0x1]
        %v4085 = vld [vmem:[%s3281 + $0x37] sm:$0x1]
        %v4086 = vld [vmem:[%s3281 + $0x3f] sm:$0x1]
        %v4087 = vlaneseq
        %v4088 = vshrl.u32 %v4087, 7
        %v4089 = vsub.s32 0, %v4088
        %v4090 = vrot.slane %v4079, %v4089
        %v4091 = vlaneseq
        %v4092 = vshrl.u32 %v4091, 7
        %v4093 = vsub.s32 0, %v4092
        %v4094 = vrot.slane %v4080, %v4093
        %v4095 = vlaneseq
        %v4096 = vshrl.u32 %v4095, 7
        %v4097 = vsub.s32 0, %v4096
        %v4098 = vrot.slane %v4081, %v4097
        %v4099 = vlaneseq
        %v4100 = vshrl.u32 %v4099, 7
        %v4101 = vsub.s32 0, %v4100
        %v4102 = vrot.slane %v4082, %v4101
        %v4103 = vlaneseq
        %v4104 = vshrl.u32 %v4103, 7
        %v4105 = vsub.s32 0, %v4104
        %v4106 = vrot.slane %v4083, %v4105
        %v4107 = vlaneseq
        %v4108 = vshrl.u32 %v4107, 7
        %v4109 = vsub.s32 0, %v4108
        %v4110 = vrot.slane %v4084, %v4109
        %v4111 = vlaneseq
        %v4112 = vshrl.u32 %v4111, 7
        %v4113 = vsub.s32 0, %v4112
        %v4114 = vrot.slane %v4085, %v4113
        %v4115 = vlaneseq
        %v4116 = vshrl.u32 %v4115, 7
        %v4117 = vsub.s32 0, %v4116
        %v4118 = vrot.slane %v4086, %v4117
        %v4119 = vmul.f32 %v4077, %v4090
        %v4120 = vmul.f32 %v4077, %v4094
        %v4121 = vmul.f32 %v4077, %v4098
        %v4122 = vmul.f32 %v4077, %v4102
        %v4123 = vmul.f32 %v4077, %v4106
        %v4124 = vmul.f32 %v4077, %v4110
        %v4125 = vmul.f32 %v4077, %v4114
        %v4126 = vmul.f32 %v4077, %v4118
        %v4127 = vadd.f32 %v4012, %v4119
        %v4128 = vadd.f32 %v4013, %v4120
        %v4129 = vadd.f32 %v4014, %v4121
        %v4130 = vadd.f32 %v4015, %v4122
        %v4131 = vadd.f32 %v4016, %v4123
        %v4132 = vadd.f32 %v4017, %v4124
        %v4133 = vadd.f32 %v4018, %v4125
        %v4134 = vadd.f32 %v4019, %v4126
        %v4135 = vrcp.pop %v4078
        %v4136 = vmul.f32 %v4127, %v4135
        %v4137 = vmul.f32 %v4128, %v4135
        %v4138 = vmul.f32 %v4129, %v4135
        %v4139 = vmul.f32 %v4130, %v4135
        %v4140 = vmul.f32 %v4131, %v4135
        %v4141 = vmul.f32 %v4132, %v4135
        %v4142 = vmul.f32 %v4133, %v4135
        %v4143 = vmul.f32 %v4134, %v4135
        %s4144 = scalar_lea.vmem [#allocation5], 128
        %4145 = vst [vmem:[%s4144] sm:$0xff] %v4136
        %4146 = vst [vmem:[%s4144 + $0x8] sm:$0xff] %v4137
        %4147 = vst [vmem:[%s4144 + $0x10] sm:$0xff] %v4138
        %4148 = vst [vmem:[%s4144 + $0x18] sm:$0xff] %v4139
        %4149 = vst [vmem:[%s4144 + $0x20] sm:$0xff] %v4140
        %4150 = vst [vmem:[%s4144 + $0x28] sm:$0xff] %v4141
        %4151 = vst [vmem:[%s4144 + $0x30] sm:$0xff] %v4142
        %4152 = vst [vmem:[%s4144 + $0x38] sm:$0xff] %v4143
        %s4153 = scalar_lea.vmem [#allocation2], 192
        %v4154 = vld [vmem:[%s4153] sm:$0xff]
        %v4155 = vld [vmem:[%s4153 + $0x8] sm:$0xff]
        %v4156 = vld [vmem:[%s4153 + $0x10] sm:$0xff]
        %v4157 = vld [vmem:[%s4153 + $0x18] sm:$0xff]
        %v4158 = vld [vmem:[%s4153 + $0x20] sm:$0xff]
        %v4159 = vld [vmem:[%s4153 + $0x28] sm:$0xff]
        %v4160 = vld [vmem:[%s4153 + $0x30] sm:$0xff]
        %v4161 = vld [vmem:[%s4153 + $0x38] sm:$0xff]
        %s4162 = scalar_lea.vmem [#allocation3], 192
        %v4163 = vld [vmem:[%s4162] sm:$0x1]
        %v4164 = vld [vmem:[%s4162 + $0x8] sm:$0x1]
        %v4165 = vld [vmem:[%s4162 + $0x10] sm:$0x1]
        %v4166 = vld [vmem:[%s4162 + $0x18] sm:$0x1]
        %v4167 = vld [vmem:[%s4162 + $0x20] sm:$0x1]
        %v4168 = vld [vmem:[%s4162 + $0x28] sm:$0x1]
        %v4169 = vld [vmem:[%s4162 + $0x30] sm:$0x1]
        %v4170 = vld [vmem:[%s4162 + $0x38] sm:$0x1]
        %v4171 = vlaneseq
        %v4172 = vshrl.u32 %v4171, 7
        %v4173 = vsub.s32 0, %v4172
        %v4174 = vrot.slane %v4163, %v4173
        %v4175 = vlaneseq
        %v4176 = vshrl.u32 %v4175, 7
        %v4177 = vsub.s32 0, %v4176
        %v4178 = vrot.slane %v4164, %v4177
        %v4179 = vlaneseq
        %v4180 = vshrl.u32 %v4179, 7
        %v4181 = vsub.s32 0, %v4180
        %v4182 = vrot.slane %v4165, %v4181
        %v4183 = vlaneseq
        %v4184 = vshrl.u32 %v4183, 7
        %v4185 = vsub.s32 0, %v4184
        %v4186 = vrot.slane %v4166, %v4185
        %v4187 = vlaneseq
        %v4188 = vshrl.u32 %v4187, 7
        %v4189 = vsub.s32 0, %v4188
        %v4190 = vrot.slane %v4167, %v4189
        %v4191 = vlaneseq
        %v4192 = vshrl.u32 %v4191, 7
        %v4193 = vsub.s32 0, %v4192
        %v4194 = vrot.slane %v4168, %v4193
        %v4195 = vlaneseq
        %v4196 = vshrl.u32 %v4195, 7
        %v4197 = vsub.s32 0, %v4196
        %v4198 = vrot.slane %v4169, %v4197
        %v4199 = vlaneseq
        %v4200 = vshrl.u32 %v4199, 7
        %v4201 = vsub.s32 0, %v4200
        %v4202 = vrot.slane %v4170, %v4201
        %v4203 = vmul.f32 %v4154, %v4174
        %v4204 = vmul.f32 %v4155, %v4178
        %v4205 = vmul.f32 %v4156, %v4182
        %v4206 = vmul.f32 %v4157, %v4186
        %v4207 = vmul.f32 %v4158, %v4190
        %v4208 = vmul.f32 %v4159, %v4194
        %v4209 = vmul.f32 %v4160, %v4198
        %v4210 = vmul.f32 %v4161, %v4202
        %v4211 = vadd.f32 %v4203, %v4204
        %v4212 = vadd.f32 %v4211, %v4205
        %v4213 = vadd.f32 %v4212, %v4206
        %v4214 = vadd.f32 %v4213, %v4207
        %v4215 = vadd.f32 %v4214, %v4208
        %v4216 = vadd.f32 %v4215, %v4209
        %v4217 = vadd.f32 %v4216, %v4210
        %v4218 = vmul.f32 %v4217, 1.442695
        %v4219 = vpow.pop %v4218
        %s4220 = scalar_lea.vmem [#allocation4], 192
        %v4221 = vld [vmem:[%s4220] sm:$0x1]
        %v4222 = vld [vmem:[%s4220 + $0x8] sm:$0x1]
        %v4223 = vld [vmem:[%s4220 + $0x10] sm:$0x1]
        %v4224 = vld [vmem:[%s4220 + $0x18] sm:$0x1]
        %v4225 = vld [vmem:[%s4220 + $0x20] sm:$0x1]
        %v4226 = vld [vmem:[%s4220 + $0x28] sm:$0x1]
        %v4227 = vld [vmem:[%s4220 + $0x30] sm:$0x1]
        %v4228 = vld [vmem:[%s4220 + $0x38] sm:$0x1]
        %v4229 = vlaneseq
        %v4230 = vshrl.u32 %v4229, 7
        %v4231 = vsub.s32 0, %v4230
        %v4232 = vrot.slane %v4221, %v4231
        %v4233 = vlaneseq
        %v4234 = vshrl.u32 %v4233, 7
        %v4235 = vsub.s32 0, %v4234
        %v4236 = vrot.slane %v4222, %v4235
        %v4237 = vlaneseq
        %v4238 = vshrl.u32 %v4237, 7
        %v4239 = vsub.s32 0, %v4238
        %v4240 = vrot.slane %v4223, %v4239
        %v4241 = vlaneseq
        %v4242 = vshrl.u32 %v4241, 7
        %v4243 = vsub.s32 0, %v4242
        %v4244 = vrot.slane %v4224, %v4243
        %v4245 = vlaneseq
        %v4246 = vshrl.u32 %v4245, 7
        %v4247 = vsub.s32 0, %v4246
        %v4248 = vrot.slane %v4225, %v4247
        %v4249 = vlaneseq
        %v4250 = vshrl.u32 %v4249, 7
        %v4251 = vsub.s32 0, %v4250
        %v4252 = vrot.slane %v4226, %v4251
        %v4253 = vlaneseq
        %v4254 = vshrl.u32 %v4253, 7
        %v4255 = vsub.s32 0, %v4254
        %v4256 = vrot.slane %v4227, %v4255
        %v4257 = vlaneseq
        %v4258 = vshrl.u32 %v4257, 7
        %v4259 = vsub.s32 0, %v4258
        %v4260 = vrot.slane %v4228, %v4259
        %v4261 = vmul.f32 %v4219, %v4232
        %v4262 = vmul.f32 %v4219, %v4236
        %v4263 = vmul.f32 %v4219, %v4240
        %v4264 = vmul.f32 %v4219, %v4244
        %v4265 = vmul.f32 %v4219, %v4248
        %v4266 = vmul.f32 %v4219, %v4252
        %v4267 = vmul.f32 %v4219, %v4256
        %v4268 = vmul.f32 %v4219, %v4260
        %v4269 = vld [vmem:[%s4162 + $0x1] sm:$0x1]
        %v4270 = vld [vmem:[%s4162 + $0x9] sm:$0x1]
        %v4271 = vld [vmem:[%s4162 + $0x11] sm:$0x1]
        %v4272 = vld [vmem:[%s4162 + $0x19] sm:$0x1]
        %v4273 = vld [vmem:[%s4162 + $0x21] sm:$0x1]
        %v4274 = vld [vmem:[%s4162 + $0x29] sm:$0x1]
        %v4275 = vld [vmem:[%s4162 + $0x31] sm:$0x1]
        %v4276 = vld [vmem:[%s4162 + $0x39] sm:$0x1]
        %v4277 = vlaneseq
        %v4278 = vshrl.u32 %v4277, 7
        %v4279 = vsub.s32 0, %v4278
        %v4280 = vrot.slane %v4269, %v4279
        %v4281 = vlaneseq
        %v4282 = vshrl.u32 %v4281, 7
        %v4283 = vsub.s32 0, %v4282
        %v4284 = vrot.slane %v4270, %v4283
        %v4285 = vlaneseq
        %v4286 = vshrl.u32 %v4285, 7
        %v4287 = vsub.s32 0, %v4286
        %v4288 = vrot.slane %v4271, %v4287
        %v4289 = vlaneseq
        %v4290 = vshrl.u32 %v4289, 7
        %v4291 = vsub.s32 0, %v4290
        %v4292 = vrot.slane %v4272, %v4291
        %v4293 = vlaneseq
        %v4294 = vshrl.u32 %v4293, 7
        %v4295 = vsub.s32 0, %v4294
        %v4296 = vrot.slane %v4273, %v4295
        %v4297 = vlaneseq
        %v4298 = vshrl.u32 %v4297, 7
        %v4299 = vsub.s32 0, %v4298
        %v4300 = vrot.slane %v4274, %v4299
        %v4301 = vlaneseq
        %v4302 = vshrl.u32 %v4301, 7
        %v4303 = vsub.s32 0, %v4302
        %v4304 = vrot.slane %v4275, %v4303
        %v4305 = vlaneseq
        %v4306 = vshrl.u32 %v4305, 7
        %v4307 = vsub.s32 0, %v4306
        %v4308 = vrot.slane %v4276, %v4307
        %v4309 = vmul.f32 %v4154, %v4280
        %v4310 = vmul.f32 %v4155, %v4284
        %v4311 = vmul.f32 %v4156, %v4288
        %v4312 = vmul.f32 %v4157, %v4292
        %v4313 = vmul.f32 %v4158, %v4296
        %v4314 = vmul.f32 %v4159, %v4300
        %v4315 = vmul.f32 %v4160, %v4304
        %v4316 = vmul.f32 %v4161, %v4308
        %v4317 = vadd.f32 %v4309, %v4310
        %v4318 = vadd.f32 %v4317, %v4311
        %v4319 = vadd.f32 %v4318, %v4312
        %v4320 = vadd.f32 %v4319, %v4313
        %v4321 = vadd.f32 %v4320, %v4314
        %v4322 = vadd.f32 %v4321, %v4315
        %v4323 = vadd.f32 %v4322, %v4316
        %v4324 = vmul.f32 %v4323, 1.442695
        %v4325 = vpow.pop %v4324
        %v4326 = vsel %vm1501, %v4325, 0.0
        %v4327 = vadd.f32 %v4219, %v4326
        %v4328 = vld [vmem:[%s4220 + $0x1] sm:$0x1]
        %v4329 = vld [vmem:[%s4220 + $0x9] sm:$0x1]
        %v4330 = vld [vmem:[%s4220 + $0x11] sm:$0x1]
        %v4331 = vld [vmem:[%s4220 + $0x19] sm:$0x1]
        %v4332 = vld [vmem:[%s4220 + $0x21] sm:$0x1]
        %v4333 = vld [vmem:[%s4220 + $0x29] sm:$0x1]
        %v4334 = vld [vmem:[%s4220 + $0x31] sm:$0x1]
        %v4335 = vld [vmem:[%s4220 + $0x39] sm:$0x1]
        %v4336 = vlaneseq
        %v4337 = vshrl.u32 %v4336, 7
        %v4338 = vsub.s32 0, %v4337
        %v4339 = vrot.slane %v4328, %v4338
        %v4340 = vlaneseq
        %v4341 = vshrl.u32 %v4340, 7
        %v4342 = vsub.s32 0, %v4341
        %v4343 = vrot.slane %v4329, %v4342
        %v4344 = vlaneseq
        %v4345 = vshrl.u32 %v4344, 7
        %v4346 = vsub.s32 0, %v4345
        %v4347 = vrot.slane %v4330, %v4346
        %v4348 = vlaneseq
        %v4349 = vshrl.u32 %v4348, 7
        %v4350 = vsub.s32 0, %v4349
        %v4351 = vrot.slane %v4331, %v4350
        %v4352 = vlaneseq
        %v4353 = vshrl.u32 %v4352, 7
        %v4354 = vsub.s32 0, %v4353
        %v4355 = vrot.slane %v4332, %v4354
        %v4356 = vlaneseq
        %v4357 = vshrl.u32 %v4356, 7
        %v4358 = vsub.s32 0, %v4357
        %v4359 = vrot.slane %v4333, %v4358
        %v4360 = vlaneseq
        %v4361 = vshrl.u32 %v4360, 7
        %v4362 = vsub.s32 0, %v4361
        %v4363 = vrot.slane %v4334, %v4362
        %v4364 = vlaneseq
        %v4365 = vshrl.u32 %v4364, 7
        %v4366 = vsub.s32 0, %v4365
        %v4367 = vrot.slane %v4335, %v4366
        %v4368 = vmul.f32 %v4326, %v4339
        %v4369 = vmul.f32 %v4326, %v4343
        %v4370 = vmul.f32 %v4326, %v4347
        %v4371 = vmul.f32 %v4326, %v4351
        %v4372 = vmul.f32 %v4326, %v4355
        %v4373 = vmul.f32 %v4326, %v4359
        %v4374 = vmul.f32 %v4326, %v4363
        %v4375 = vmul.f32 %v4326, %v4367
        %v4376 = vadd.f32 %v4261, %v4368
        %v4377 = vadd.f32 %v4262, %v4369
        %v4378 = vadd.f32 %v4263, %v4370
        %v4379 = vadd.f32 %v4264, %v4371
        %v4380 = vadd.f32 %v4265, %v4372
        %v4381 = vadd.f32 %v4266, %v4373
        %v4382 = vadd.f32 %v4267, %v4374
        %v4383 = vadd.f32 %v4268, %v4375
        %v4384 = vld [vmem:[%s4162 + $0x2] sm:$0x1]
        %v4385 = vld [vmem:[%s4162 + $0xa] sm:$0x1]
        %v4386 = vld [vmem:[%s4162 + $0x12] sm:$0x1]
        %v4387 = vld [vmem:[%s4162 + $0x1a] sm:$0x1]
        %v4388 = vld [vmem:[%s4162 + $0x22] sm:$0x1]
        %v4389 = vld [vmem:[%s4162 + $0x2a] sm:$0x1]
        %v4390 = vld [vmem:[%s4162 + $0x32] sm:$0x1]
        %v4391 = vld [vmem:[%s4162 + $0x3a] sm:$0x1]
        %v4392 = vlaneseq
        %v4393 = vshrl.u32 %v4392, 7
        %v4394 = vsub.s32 0, %v4393
        %v4395 = vrot.slane %v4384, %v4394
        %v4396 = vlaneseq
        %v4397 = vshrl.u32 %v4396, 7
        %v4398 = vsub.s32 0, %v4397
        %v4399 = vrot.slane %v4385, %v4398
        %v4400 = vlaneseq
        %v4401 = vshrl.u32 %v4400, 7
        %v4402 = vsub.s32 0, %v4401
        %v4403 = vrot.slane %v4386, %v4402
        %v4404 = vlaneseq
        %v4405 = vshrl.u32 %v4404, 7
        %v4406 = vsub.s32 0, %v4405
        %v4407 = vrot.slane %v4387, %v4406
        %v4408 = vlaneseq
        %v4409 = vshrl.u32 %v4408, 7
        %v4410 = vsub.s32 0, %v4409
        %v4411 = vrot.slane %v4388, %v4410
        %v4412 = vlaneseq
        %v4413 = vshrl.u32 %v4412, 7
        %v4414 = vsub.s32 0, %v4413
        %v4415 = vrot.slane %v4389, %v4414
        %v4416 = vlaneseq
        %v4417 = vshrl.u32 %v4416, 7
        %v4418 = vsub.s32 0, %v4417
        %v4419 = vrot.slane %v4390, %v4418
        %v4420 = vlaneseq
        %v4421 = vshrl.u32 %v4420, 7
        %v4422 = vsub.s32 0, %v4421
        %v4423 = vrot.slane %v4391, %v4422
        %v4424 = vmul.f32 %v4154, %v4395
        %v4425 = vmul.f32 %v4155, %v4399
        %v4426 = vmul.f32 %v4156, %v4403
        %v4427 = vmul.f32 %v4157, %v4407
        %v4428 = vmul.f32 %v4158, %v4411
        %v4429 = vmul.f32 %v4159, %v4415
        %v4430 = vmul.f32 %v4160, %v4419
        %v4431 = vmul.f32 %v4161, %v4423
        %v4432 = vadd.f32 %v4424, %v4425
        %v4433 = vadd.f32 %v4432, %v4426
        %v4434 = vadd.f32 %v4433, %v4427
        %v4435 = vadd.f32 %v4434, %v4428
        %v4436 = vadd.f32 %v4435, %v4429
        %v4437 = vadd.f32 %v4436, %v4430
        %v4438 = vadd.f32 %v4437, %v4431
        %v4439 = vmul.f32 %v4438, 1.442695
        %v4440 = vpow.pop %v4439
        %v4441 = vsel %vm1617, %v4440, 0.0
        %v4442 = vadd.f32 %v4327, %v4441
        %v4443 = vld [vmem:[%s4220 + $0x2] sm:$0x1]
        %v4444 = vld [vmem:[%s4220 + $0xa] sm:$0x1]
        %v4445 = vld [vmem:[%s4220 + $0x12] sm:$0x1]
        %v4446 = vld [vmem:[%s4220 + $0x1a] sm:$0x1]
        %v4447 = vld [vmem:[%s4220 + $0x22] sm:$0x1]
        %v4448 = vld [vmem:[%s4220 + $0x2a] sm:$0x1]
        %v4449 = vld [vmem:[%s4220 + $0x32] sm:$0x1]
        %v4450 = vld [vmem:[%s4220 + $0x3a] sm:$0x1]
        %v4451 = vlaneseq
        %v4452 = vshrl.u32 %v4451, 7
        %v4453 = vsub.s32 0, %v4452
        %v4454 = vrot.slane %v4443, %v4453
        %v4455 = vlaneseq
        %v4456 = vshrl.u32 %v4455, 7
        %v4457 = vsub.s32 0, %v4456
        %v4458 = vrot.slane %v4444, %v4457
        %v4459 = vlaneseq
        %v4460 = vshrl.u32 %v4459, 7
        %v4461 = vsub.s32 0, %v4460
        %v4462 = vrot.slane %v4445, %v4461
        %v4463 = vlaneseq
        %v4464 = vshrl.u32 %v4463, 7
        %v4465 = vsub.s32 0, %v4464
        %v4466 = vrot.slane %v4446, %v4465
        %v4467 = vlaneseq
        %v4468 = vshrl.u32 %v4467, 7
        %v4469 = vsub.s32 0, %v4468
        %v4470 = vrot.slane %v4447, %v4469
        %v4471 = vlaneseq
        %v4472 = vshrl.u32 %v4471, 7
        %v4473 = vsub.s32 0, %v4472
        %v4474 = vrot.slane %v4448, %v4473
        %v4475 = vlaneseq
        %v4476 = vshrl.u32 %v4475, 7
        %v4477 = vsub.s32 0, %v4476
        %v4478 = vrot.slane %v4449, %v4477
        %v4479 = vlaneseq
        %v4480 = vshrl.u32 %v4479, 7
        %v4481 = vsub.s32 0, %v4480
        %v4482 = vrot.slane %v4450, %v4481
        %v4483 = vmul.f32 %v4441, %v4454
        %v4484 = vmul.f32 %v4441, %v4458
        %v4485 = vmul.f32 %v4441, %v4462
        %v4486 = vmul.f32 %v4441, %v4466
        %v4487 = vmul.f32 %v4441, %v4470
        %v4488 = vmul.f32 %v4441, %v4474
        %v4489 = vmul.f32 %v4441, %v4478
        %v4490 = vmul.f32 %v4441, %v4482
        %v4491 = vadd.f32 %v4376, %v4483
        %v4492 = vadd.f32 %v4377, %v4484
        %v4493 = vadd.f32 %v4378, %v4485
        %v4494 = vadd.f32 %v4379, %v4486
        %v4495 = vadd.f32 %v4380, %v4487
        %v4496 = vadd.f32 %v4381, %v4488
        %v4497 = vadd.f32 %v4382, %v4489
        %v4498 = vadd.f32 %v4383, %v4490
        %v4499 = vld [vmem:[%s4162 + $0x3] sm:$0x1]
        %v4500 = vld [vmem:[%s4162 + $0xb] sm:$0x1]
        %v4501 = vld [vmem:[%s4162 + $0x13] sm:$0x1]
        %v4502 = vld [vmem:[%s4162 + $0x1b] sm:$0x1]
        %v4503 = vld [vmem:[%s4162 + $0x23] sm:$0x1]
        %v4504 = vld [vmem:[%s4162 + $0x2b] sm:$0x1]
        %v4505 = vld [vmem:[%s4162 + $0x33] sm:$0x1]
        %v4506 = vld [vmem:[%s4162 + $0x3b] sm:$0x1]
        %v4507 = vlaneseq
        %v4508 = vshrl.u32 %v4507, 7
        %v4509 = vsub.s32 0, %v4508
        %v4510 = vrot.slane %v4499, %v4509
        %v4511 = vlaneseq
        %v4512 = vshrl.u32 %v4511, 7
        %v4513 = vsub.s32 0, %v4512
        %v4514 = vrot.slane %v4500, %v4513
        %v4515 = vlaneseq
        %v4516 = vshrl.u32 %v4515, 7
        %v4517 = vsub.s32 0, %v4516
        %v4518 = vrot.slane %v4501, %v4517
        %v4519 = vlaneseq
        %v4520 = vshrl.u32 %v4519, 7
        %v4521 = vsub.s32 0, %v4520
        %v4522 = vrot.slane %v4502, %v4521
        %v4523 = vlaneseq
        %v4524 = vshrl.u32 %v4523, 7
        %v4525 = vsub.s32 0, %v4524
        %v4526 = vrot.slane %v4503, %v4525
        %v4527 = vlaneseq
        %v4528 = vshrl.u32 %v4527, 7
        %v4529 = vsub.s32 0, %v4528
        %v4530 = vrot.slane %v4504, %v4529
        %v4531 = vlaneseq
        %v4532 = vshrl.u32 %v4531, 7
        %v4533 = vsub.s32 0, %v4532
        %v4534 = vrot.slane %v4505, %v4533
        %v4535 = vlaneseq
        %v4536 = vshrl.u32 %v4535, 7
        %v4537 = vsub.s32 0, %v4536
        %v4538 = vrot.slane %v4506, %v4537
        %v4539 = vmul.f32 %v4154, %v4510
        %v4540 = vmul.f32 %v4155, %v4514
        %v4541 = vmul.f32 %v4156, %v4518
        %v4542 = vmul.f32 %v4157, %v4522
        %v4543 = vmul.f32 %v4158, %v4526
        %v4544 = vmul.f32 %v4159, %v4530
        %v4545 = vmul.f32 %v4160, %v4534
        %v4546 = vmul.f32 %v4161, %v4538
        %v4547 = vadd.f32 %v4539, %v4540
        %v4548 = vadd.f32 %v4547, %v4541
        %v4549 = vadd.f32 %v4548, %v4542
        %v4550 = vadd.f32 %v4549, %v4543
        %v4551 = vadd.f32 %v4550, %v4544
        %v4552 = vadd.f32 %v4551, %v4545
        %v4553 = vadd.f32 %v4552, %v4546
        %v4554 = vmul.f32 %v4553, 1.442695
        %v4555 = vpow.pop %v4554
        %v4556 = vsel %vm1733, %v4555, 0.0
        %v4557 = vadd.f32 %v4442, %v4556
        %v4558 = vld [vmem:[%s4220 + $0x3] sm:$0x1]
        %v4559 = vld [vmem:[%s4220 + $0xb] sm:$0x1]
        %v4560 = vld [vmem:[%s4220 + $0x13] sm:$0x1]
        %v4561 = vld [vmem:[%s4220 + $0x1b] sm:$0x1]
        %v4562 = vld [vmem:[%s4220 + $0x23] sm:$0x1]
        %v4563 = vld [vmem:[%s4220 + $0x2b] sm:$0x1]
        %v4564 = vld [vmem:[%s4220 + $0x33] sm:$0x1]
        %v4565 = vld [vmem:[%s4220 + $0x3b] sm:$0x1]
        %v4566 = vlaneseq
        %v4567 = vshrl.u32 %v4566, 7
        %v4568 = vsub.s32 0, %v4567
        %v4569 = vrot.slane %v4558, %v4568
        %v4570 = vlaneseq
        %v4571 = vshrl.u32 %v4570, 7
        %v4572 = vsub.s32 0, %v4571
        %v4573 = vrot.slane %v4559, %v4572
        %v4574 = vlaneseq
        %v4575 = vshrl.u32 %v4574, 7
        %v4576 = vsub.s32 0, %v4575
        %v4577 = vrot.slane %v4560, %v4576
        %v4578 = vlaneseq
        %v4579 = vshrl.u32 %v4578, 7
        %v4580 = vsub.s32 0, %v4579
        %v4581 = vrot.slane %v4561, %v4580
        %v4582 = vlaneseq
        %v4583 = vshrl.u32 %v4582, 7
        %v4584 = vsub.s32 0, %v4583
        %v4585 = vrot.slane %v4562, %v4584
        %v4586 = vlaneseq
        %v4587 = vshrl.u32 %v4586, 7
        %v4588 = vsub.s32 0, %v4587
        %v4589 = vrot.slane %v4563, %v4588
        %v4590 = vlaneseq
        %v4591 = vshrl.u32 %v4590, 7
        %v4592 = vsub.s32 0, %v4591
        %v4593 = vrot.slane %v4564, %v4592
        %v4594 = vlaneseq
        %v4595 = vshrl.u32 %v4594, 7
        %v4596 = vsub.s32 0, %v4595
        %v4597 = vrot.slane %v4565, %v4596
        %v4598 = vmul.f32 %v4556, %v4569
        %v4599 = vmul.f32 %v4556, %v4573
        %v4600 = vmul.f32 %v4556, %v4577
        %v4601 = vmul.f32 %v4556, %v4581
        %v4602 = vmul.f32 %v4556, %v4585
        %v4603 = vmul.f32 %v4556, %v4589
        %v4604 = vmul.f32 %v4556, %v4593
        %v4605 = vmul.f32 %v4556, %v4597
        %v4606 = vadd.f32 %v4491, %v4598
        %v4607 = vadd.f32 %v4492, %v4599
        %v4608 = vadd.f32 %v4493, %v4600
        %v4609 = vadd.f32 %v4494, %v4601
        %v4610 = vadd.f32 %v4495, %v4602
        %v4611 = vadd.f32 %v4496, %v4603
        %v4612 = vadd.f32 %v4497, %v4604
        %v4613 = vadd.f32 %v4498, %v4605
        %v4614 = vld [vmem:[%s4162 + $0x4] sm:$0x1]
        %v4615 = vld [vmem:[%s4162 + $0xc] sm:$0x1]
        %v4616 = vld [vmem:[%s4162 + $0x14] sm:$0x1]
        %v4617 = vld [vmem:[%s4162 + $0x1c] sm:$0x1]
        %v4618 = vld [vmem:[%s4162 + $0x24] sm:$0x1]
        %v4619 = vld [vmem:[%s4162 + $0x2c] sm:$0x1]
        %v4620 = vld [vmem:[%s4162 + $0x34] sm:$0x1]
        %v4621 = vld [vmem:[%s4162 + $0x3c] sm:$0x1]
        %v4622 = vlaneseq
        %v4623 = vshrl.u32 %v4622, 7
        %v4624 = vsub.s32 0, %v4623
        %v4625 = vrot.slane %v4614, %v4624
        %v4626 = vlaneseq
        %v4627 = vshrl.u32 %v4626, 7
        %v4628 = vsub.s32 0, %v4627
        %v4629 = vrot.slane %v4615, %v4628
        %v4630 = vlaneseq
        %v4631 = vshrl.u32 %v4630, 7
        %v4632 = vsub.s32 0, %v4631
        %v4633 = vrot.slane %v4616, %v4632
        %v4634 = vlaneseq
        %v4635 = vshrl.u32 %v4634, 7
        %v4636 = vsub.s32 0, %v4635
        %v4637 = vrot.slane %v4617, %v4636
        %v4638 = vlaneseq
        %v4639 = vshrl.u32 %v4638, 7
        %v4640 = vsub.s32 0, %v4639
        %v4641 = vrot.slane %v4618, %v4640
        %v4642 = vlaneseq
        %v4643 = vshrl.u32 %v4642, 7
        %v4644 = vsub.s32 0, %v4643
        %v4645 = vrot.slane %v4619, %v4644
        %v4646 = vlaneseq
        %v4647 = vshrl.u32 %v4646, 7
        %v4648 = vsub.s32 0, %v4647
        %v4649 = vrot.slane %v4620, %v4648
        %v4650 = vlaneseq
        %v4651 = vshrl.u32 %v4650, 7
        %v4652 = vsub.s32 0, %v4651
        %v4653 = vrot.slane %v4621, %v4652
        %v4654 = vmul.f32 %v4154, %v4625
        %v4655 = vmul.f32 %v4155, %v4629
        %v4656 = vmul.f32 %v4156, %v4633
        %v4657 = vmul.f32 %v4157, %v4637
        %v4658 = vmul.f32 %v4158, %v4641
        %v4659 = vmul.f32 %v4159, %v4645
        %v4660 = vmul.f32 %v4160, %v4649
        %v4661 = vmul.f32 %v4161, %v4653
        %v4662 = vadd.f32 %v4654, %v4655
        %v4663 = vadd.f32 %v4662, %v4656
        %v4664 = vadd.f32 %v4663, %v4657
        %v4665 = vadd.f32 %v4664, %v4658
        %v4666 = vadd.f32 %v4665, %v4659
        %v4667 = vadd.f32 %v4666, %v4660
        %v4668 = vadd.f32 %v4667, %v4661
        %v4669 = vmul.f32 %v4668, 1.442695
        %v4670 = vpow.pop %v4669
        %v4671 = vsel %vm1849, %v4670, 0.0
        %v4672 = vadd.f32 %v4557, %v4671
        %v4673 = vld [vmem:[%s4220 + $0x4] sm:$0x1]
        %v4674 = vld [vmem:[%s4220 + $0xc] sm:$0x1]
        %v4675 = vld [vmem:[%s4220 + $0x14] sm:$0x1]
        %v4676 = vld [vmem:[%s4220 + $0x1c] sm:$0x1]
        %v4677 = vld [vmem:[%s4220 + $0x24] sm:$0x1]
        %v4678 = vld [vmem:[%s4220 + $0x2c] sm:$0x1]
        %v4679 = vld [vmem:[%s4220 + $0x34] sm:$0x1]
        %v4680 = vld [vmem:[%s4220 + $0x3c] sm:$0x1]
        %v4681 = vlaneseq
        %v4682 = vshrl.u32 %v4681, 7
        %v4683 = vsub.s32 0, %v4682
        %v4684 = vrot.slane %v4673, %v4683
        %v4685 = vlaneseq
        %v4686 = vshrl.u32 %v4685, 7
        %v4687 = vsub.s32 0, %v4686
        %v4688 = vrot.slane %v4674, %v4687
        %v4689 = vlaneseq
        %v4690 = vshrl.u32 %v4689, 7
        %v4691 = vsub.s32 0, %v4690
        %v4692 = vrot.slane %v4675, %v4691
        %v4693 = vlaneseq
        %v4694 = vshrl.u32 %v4693, 7
        %v4695 = vsub.s32 0, %v4694
        %v4696 = vrot.slane %v4676, %v4695
        %v4697 = vlaneseq
        %v4698 = vshrl.u32 %v4697, 7
        %v4699 = vsub.s32 0, %v4698
        %v4700 = vrot.slane %v4677, %v4699
        %v4701 = vlaneseq
        %v4702 = vshrl.u32 %v4701, 7
        %v4703 = vsub.s32 0, %v4702
        %v4704 = vrot.slane %v4678, %v4703
        %v4705 = vlaneseq
        %v4706 = vshrl.u32 %v4705, 7
        %v4707 = vsub.s32 0, %v4706
        %v4708 = vrot.slane %v4679, %v4707
        %v4709 = vlaneseq
        %v4710 = vshrl.u32 %v4709, 7
        %v4711 = vsub.s32 0, %v4710
        %v4712 = vrot.slane %v4680, %v4711
        %v4713 = vmul.f32 %v4671, %v4684
        %v4714 = vmul.f32 %v4671, %v4688
        %v4715 = vmul.f32 %v4671, %v4692
        %v4716 = vmul.f32 %v4671, %v4696
        %v4717 = vmul.f32 %v4671, %v4700
        %v4718 = vmul.f32 %v4671, %v4704
        %v4719 = vmul.f32 %v4671, %v4708
        %v4720 = vmul.f32 %v4671, %v4712
        %v4721 = vadd.f32 %v4606, %v4713
        %v4722 = vadd.f32 %v4607, %v4714
        %v4723 = vadd.f32 %v4608, %v4715
        %v4724 = vadd.f32 %v4609, %v4716
        %v4725 = vadd.f32 %v4610, %v4717
        %v4726 = vadd.f32 %v4611, %v4718
        %v4727 = vadd.f32 %v4612, %v4719
        %v4728 = vadd.f32 %v4613, %v4720
        %v4729 = vld [vmem:[%s4162 + $0x5] sm:$0x1]
        %v4730 = vld [vmem:[%s4162 + $0xd] sm:$0x1]
        %v4731 = vld [vmem:[%s4162 + $0x15] sm:$0x1]
        %v4732 = vld [vmem:[%s4162 + $0x1d] sm:$0x1]
        %v4733 = vld [vmem:[%s4162 + $0x25] sm:$0x1]
        %v4734 = vld [vmem:[%s4162 + $0x2d] sm:$0x1]
        %v4735 = vld [vmem:[%s4162 + $0x35] sm:$0x1]
        %v4736 = vld [vmem:[%s4162 + $0x3d] sm:$0x1]
        %v4737 = vlaneseq
        %v4738 = vshrl.u32 %v4737, 7
        %v4739 = vsub.s32 0, %v4738
        %v4740 = vrot.slane %v4729, %v4739
        %v4741 = vlaneseq
        %v4742 = vshrl.u32 %v4741, 7
        %v4743 = vsub.s32 0, %v4742
        %v4744 = vrot.slane %v4730, %v4743
        %v4745 = vlaneseq
        %v4746 = vshrl.u32 %v4745, 7
        %v4747 = vsub.s32 0, %v4746
        %v4748 = vrot.slane %v4731, %v4747
        %v4749 = vlaneseq
        %v4750 = vshrl.u32 %v4749, 7
        %v4751 = vsub.s32 0, %v4750
        %v4752 = vrot.slane %v4732, %v4751
        %v4753 = vlaneseq
        %v4754 = vshrl.u32 %v4753, 7
        %v4755 = vsub.s32 0, %v4754
        %v4756 = vrot.slane %v4733, %v4755
        %v4757 = vlaneseq
        %v4758 = vshrl.u32 %v4757, 7
        %v4759 = vsub.s32 0, %v4758
        %v4760 = vrot.slane %v4734, %v4759
        %v4761 = vlaneseq
        %v4762 = vshrl.u32 %v4761, 7
        %v4763 = vsub.s32 0, %v4762
        %v4764 = vrot.slane %v4735, %v4763
        %v4765 = vlaneseq
        %v4766 = vshrl.u32 %v4765, 7
        %v4767 = vsub.s32 0, %v4766
        %v4768 = vrot.slane %v4736, %v4767
        %v4769 = vmul.f32 %v4154, %v4740
        %v4770 = vmul.f32 %v4155, %v4744
        %v4771 = vmul.f32 %v4156, %v4748
        %v4772 = vmul.f32 %v4157, %v4752
        %v4773 = vmul.f32 %v4158, %v4756
        %v4774 = vmul.f32 %v4159, %v4760
        %v4775 = vmul.f32 %v4160, %v4764
        %v4776 = vmul.f32 %v4161, %v4768
        %v4777 = vadd.f32 %v4769, %v4770
        %v4778 = vadd.f32 %v4777, %v4771
        %v4779 = vadd.f32 %v4778, %v4772
        %v4780 = vadd.f32 %v4779, %v4773
        %v4781 = vadd.f32 %v4780, %v4774
        %v4782 = vadd.f32 %v4781, %v4775
        %v4783 = vadd.f32 %v4782, %v4776
        %v4784 = vmul.f32 %v4783, 1.442695
        %v4785 = vpow.pop %v4784
        %v4786 = vsel %vm1965, %v4785, 0.0
        %v4787 = vadd.f32 %v4672, %v4786
        %v4788 = vld [vmem:[%s4220 + $0x5] sm:$0x1]
        %v4789 = vld [vmem:[%s4220 + $0xd] sm:$0x1]
        %v4790 = vld [vmem:[%s4220 + $0x15] sm:$0x1]
        %v4791 = vld [vmem:[%s4220 + $0x1d] sm:$0x1]
        %v4792 = vld [vmem:[%s4220 + $0x25] sm:$0x1]
        %v4793 = vld [vmem:[%s4220 + $0x2d] sm:$0x1]
        %v4794 = vld [vmem:[%s4220 + $0x35] sm:$0x1]
        %v4795 = vld [vmem:[%s4220 + $0x3d] sm:$0x1]
        %v4796 = vlaneseq
        %v4797 = vshrl.u32 %v4796, 7
        %v4798 = vsub.s32 0, %v4797
        %v4799 = vrot.slane %v4788, %v4798
        %v4800 = vlaneseq
        %v4801 = vshrl.u32 %v4800, 7
        %v4802 = vsub.s32 0, %v4801
        %v4803 = vrot.slane %v4789, %v4802
        %v4804 = vlaneseq
        %v4805 = vshrl.u32 %v4804, 7
        %v4806 = vsub.s32 0, %v4805
        %v4807 = vrot.slane %v4790, %v4806
        %v4808 = vlaneseq
        %v4809 = vshrl.u32 %v4808, 7
        %v4810 = vsub.s32 0, %v4809
        %v4811 = vrot.slane %v4791, %v4810
        %v4812 = vlaneseq
        %v4813 = vshrl.u32 %v4812, 7
        %v4814 = vsub.s32 0, %v4813
        %v4815 = vrot.slane %v4792, %v4814
        %v4816 = vlaneseq
        %v4817 = vshrl.u32 %v4816, 7
        %v4818 = vsub.s32 0, %v4817
        %v4819 = vrot.slane %v4793, %v4818
        %v4820 = vlaneseq
        %v4821 = vshrl.u32 %v4820, 7
        %v4822 = vsub.s32 0, %v4821
        %v4823 = vrot.slane %v4794, %v4822
        %v4824 = vlaneseq
        %v4825 = vshrl.u32 %v4824, 7
        %v4826 = vsub.s32 0, %v4825
        %v4827 = vrot.slane %v4795, %v4826
        %v4828 = vmul.f32 %v4786, %v4799
        %v4829 = vmul.f32 %v4786, %v4803
        %v4830 = vmul.f32 %v4786, %v4807
        %v4831 = vmul.f32 %v4786, %v4811
        %v4832 = vmul.f32 %v4786, %v4815
        %v4833 = vmul.f32 %v4786, %v4819
        %v4834 = vmul.f32 %v4786, %v4823
        %v4835 = vmul.f32 %v4786, %v4827
        %v4836 = vadd.f32 %v4721, %v4828
        %v4837 = vadd.f32 %v4722, %v4829
        %v4838 = vadd.f32 %v4723, %v4830
        %v4839 = vadd.f32 %v4724, %v4831
        %v4840 = vadd.f32 %v4725, %v4832
        %v4841 = vadd.f32 %v4726, %v4833
        %v4842 = vadd.f32 %v4727, %v4834
        %v4843 = vadd.f32 %v4728, %v4835
        %v4844 = vld [vmem:[%s4162 + $0x6] sm:$0x1]
        %v4845 = vld [vmem:[%s4162 + $0xe] sm:$0x1]
        %v4846 = vld [vmem:[%s4162 + $0x16] sm:$0x1]
        %v4847 = vld [vmem:[%s4162 + $0x1e] sm:$0x1]
        %v4848 = vld [vmem:[%s4162 + $0x26] sm:$0x1]
        %v4849 = vld [vmem:[%s4162 + $0x2e] sm:$0x1]
        %v4850 = vld [vmem:[%s4162 + $0x36] sm:$0x1]
        %v4851 = vld [vmem:[%s4162 + $0x3e] sm:$0x1]
        %v4852 = vlaneseq
        %v4853 = vshrl.u32 %v4852, 7
        %v4854 = vsub.s32 0, %v4853
        %v4855 = vrot.slane %v4844, %v4854
        %v4856 = vlaneseq
        %v4857 = vshrl.u32 %v4856, 7
        %v4858 = vsub.s32 0, %v4857
        %v4859 = vrot.slane %v4845, %v4858
        %v4860 = vlaneseq
        %v4861 = vshrl.u32 %v4860, 7
        %v4862 = vsub.s32 0, %v4861
        %v4863 = vrot.slane %v4846, %v4862
        %v4864 = vlaneseq
        %v4865 = vshrl.u32 %v4864, 7
        %v4866 = vsub.s32 0, %v4865
        %v4867 = vrot.slane %v4847, %v4866
        %v4868 = vlaneseq
        %v4869 = vshrl.u32 %v4868, 7
        %v4870 = vsub.s32 0, %v4869
        %v4871 = vrot.slane %v4848, %v4870
        %v4872 = vlaneseq
        %v4873 = vshrl.u32 %v4872, 7
        %v4874 = vsub.s32 0, %v4873
        %v4875 = vrot.slane %v4849, %v4874
        %v4876 = vlaneseq
        %v4877 = vshrl.u32 %v4876, 7
        %v4878 = vsub.s32 0, %v4877
        %v4879 = vrot.slane %v4850, %v4878
        %v4880 = vlaneseq
        %v4881 = vshrl.u32 %v4880, 7
        %v4882 = vsub.s32 0, %v4881
        %v4883 = vrot.slane %v4851, %v4882
        %v4884 = vmul.f32 %v4154, %v4855
        %v4885 = vmul.f32 %v4155, %v4859
        %v4886 = vmul.f32 %v4156, %v4863
        %v4887 = vmul.f32 %v4157, %v4867
        %v4888 = vmul.f32 %v4158, %v4871
        %v4889 = vmul.f32 %v4159, %v4875
        %v4890 = vmul.f32 %v4160, %v4879
        %v4891 = vmul.f32 %v4161, %v4883
        %v4892 = vadd.f32 %v4884, %v4885
        %v4893 = vadd.f32 %v4892, %v4886
        %v4894 = vadd.f32 %v4893, %v4887
        %v4895 = vadd.f32 %v4894, %v4888
        %v4896 = vadd.f32 %v4895, %v4889
        %v4897 = vadd.f32 %v4896, %v4890
        %v4898 = vadd.f32 %v4897, %v4891
        %v4899 = vmul.f32 %v4898, 1.442695
        %v4900 = vpow.pop %v4899
        %v4901 = vsel %vm2081, %v4900, 0.0
        %v4902 = vadd.f32 %v4787, %v4901
        %v4903 = vld [vmem:[%s4220 + $0x6] sm:$0x1]
        %v4904 = vld [vmem:[%s4220 + $0xe] sm:$0x1]
        %v4905 = vld [vmem:[%s4220 + $0x16] sm:$0x1]
        %v4906 = vld [vmem:[%s4220 + $0x1e] sm:$0x1]
        %v4907 = vld [vmem:[%s4220 + $0x26] sm:$0x1]
        %v4908 = vld [vmem:[%s4220 + $0x2e] sm:$0x1]
        %v4909 = vld [vmem:[%s4220 + $0x36] sm:$0x1]
        %v4910 = vld [vmem:[%s4220 + $0x3e] sm:$0x1]
        %v4911 = vlaneseq
        %v4912 = vshrl.u32 %v4911, 7
        %v4913 = vsub.s32 0, %v4912
        %v4914 = vrot.slane %v4903, %v4913
        %v4915 = vlaneseq
        %v4916 = vshrl.u32 %v4915, 7
        %v4917 = vsub.s32 0, %v4916
        %v4918 = vrot.slane %v4904, %v4917
        %v4919 = vlaneseq
        %v4920 = vshrl.u32 %v4919, 7
        %v4921 = vsub.s32 0, %v4920
        %v4922 = vrot.slane %v4905, %v4921
        %v4923 = vlaneseq
        %v4924 = vshrl.u32 %v4923, 7
        %v4925 = vsub.s32 0, %v4924
        %v4926 = vrot.slane %v4906, %v4925
        %v4927 = vlaneseq
        %v4928 = vshrl.u32 %v4927, 7
        %v4929 = vsub.s32 0, %v4928
        %v4930 = vrot.slane %v4907, %v4929
        %v4931 = vlaneseq
        %v4932 = vshrl.u32 %v4931, 7
        %v4933 = vsub.s32 0, %v4932
        %v4934 = vrot.slane %v4908, %v4933
        %v4935 = vlaneseq
        %v4936 = vshrl.u32 %v4935, 7
        %v4937 = vsub.s32 0, %v4936
        %v4938 = vrot.slane %v4909, %v4937
        %v4939 = vlaneseq
        %v4940 = vshrl.u32 %v4939, 7
        %v4941 = vsub.s32 0, %v4940
        %v4942 = vrot.slane %v4910, %v4941
        %v4943 = vmul.f32 %v4901, %v4914
        %v4944 = vmul.f32 %v4901, %v4918
        %v4945 = vmul.f32 %v4901, %v4922
        %v4946 = vmul.f32 %v4901, %v4926
        %v4947 = vmul.f32 %v4901, %v4930
        %v4948 = vmul.f32 %v4901, %v4934
        %v4949 = vmul.f32 %v4901, %v4938
        %v4950 = vmul.f32 %v4901, %v4942
        %v4951 = vadd.f32 %v4836, %v4943
        %v4952 = vadd.f32 %v4837, %v4944
        %v4953 = vadd.f32 %v4838, %v4945
        %v4954 = vadd.f32 %v4839, %v4946
        %v4955 = vadd.f32 %v4840, %v4947
        %v4956 = vadd.f32 %v4841, %v4948
        %v4957 = vadd.f32 %v4842, %v4949
        %v4958 = vadd.f32 %v4843, %v4950
        %v4959 = vld [vmem:[%s4162 + $0x7] sm:$0x1]
        %v4960 = vld [vmem:[%s4162 + $0xf] sm:$0x1]
        %v4961 = vld [vmem:[%s4162 + $0x17] sm:$0x1]
        %v4962 = vld [vmem:[%s4162 + $0x1f] sm:$0x1]
        %v4963 = vld [vmem:[%s4162 + $0x27] sm:$0x1]
        %v4964 = vld [vmem:[%s4162 + $0x2f] sm:$0x1]
        %v4965 = vld [vmem:[%s4162 + $0x37] sm:$0x1]
        %v4966 = vld [vmem:[%s4162 + $0x3f] sm:$0x1]
        %v4967 = vlaneseq
        %v4968 = vshrl.u32 %v4967, 7
        %v4969 = vsub.s32 0, %v4968
        %v4970 = vrot.slane %v4959, %v4969
        %v4971 = vlaneseq
        %v4972 = vshrl.u32 %v4971, 7
        %v4973 = vsub.s32 0, %v4972
        %v4974 = vrot.slane %v4960, %v4973
        %v4975 = vlaneseq
        %v4976 = vshrl.u32 %v4975, 7
        %v4977 = vsub.s32 0, %v4976
        %v4978 = vrot.slane %v4961, %v4977
        %v4979 = vlaneseq
        %v4980 = vshrl.u32 %v4979, 7
        %v4981 = vsub.s32 0, %v4980
        %v4982 = vrot.slane %v4962, %v4981
        %v4983 = vlaneseq
        %v4984 = vshrl.u32 %v4983, 7
        %v4985 = vsub.s32 0, %v4984
        %v4986 = vrot.slane %v4963, %v4985
        %v4987 = vlaneseq
        %v4988 = vshrl.u32 %v4987, 7
        %v4989 = vsub.s32 0, %v4988
        %v4990 = vrot.slane %v4964, %v4989
        %v4991 = vlaneseq
        %v4992 = vshrl.u32 %v4991, 7
        %v4993 = vsub.s32 0, %v4992
        %v4994 = vrot.slane %v4965, %v4993
        %v4995 = vlaneseq
        %v4996 = vshrl.u32 %v4995, 7
        %v4997 = vsub.s32 0, %v4996
        %v4998 = vrot.slane %v4966, %v4997
        %v4999 = vmul.f32 %v4154, %v4970
        %v5000 = vmul.f32 %v4155, %v4974
        %v5001 = vmul.f32 %v4156, %v4978
        %v5002 = vmul.f32 %v4157, %v4982
        %v5003 = vmul.f32 %v4158, %v4986
        %v5004 = vmul.f32 %v4159, %v4990
        %v5005 = vmul.f32 %v4160, %v4994
        %v5006 = vmul.f32 %v4161, %v4998
        %v5007 = vadd.f32 %v4999, %v5000
        %v5008 = vadd.f32 %v5007, %v5001
        %v5009 = vadd.f32 %v5008, %v5002
        %v5010 = vadd.f32 %v5009, %v5003
        %v5011 = vadd.f32 %v5010, %v5004
        %v5012 = vadd.f32 %v5011, %v5005
        %v5013 = vadd.f32 %v5012, %v5006
        %v5014 = vmul.f32 %v5013, 1.442695
        %v5015 = vpow.pop %v5014
        %v5016 = vsel %vm2197, %v5015, 0.0
        %v5017 = vadd.f32 %v4902, %v5016
        %v5018 = vld [vmem:[%s4220 + $0x7] sm:$0x1]
        %v5019 = vld [vmem:[%s4220 + $0xf] sm:$0x1]
        %v5020 = vld [vmem:[%s4220 + $0x17] sm:$0x1]
        %v5021 = vld [vmem:[%s4220 + $0x1f] sm:$0x1]
        %v5022 = vld [vmem:[%s4220 + $0x27] sm:$0x1]
        %v5023 = vld [vmem:[%s4220 + $0x2f] sm:$0x1]
        %v5024 = vld [vmem:[%s4220 + $0x37] sm:$0x1]
        %v5025 = vld [vmem:[%s4220 + $0x3f] sm:$0x1]
        %v5026 = vlaneseq
        %v5027 = vshrl.u32 %v5026, 7
        %v5028 = vsub.s32 0, %v5027
        %v5029 = vrot.slane %v5018, %v5028
        %v5030 = vlaneseq
        %v5031 = vshrl.u32 %v5030, 7
        %v5032 = vsub.s32 0, %v5031
        %v5033 = vrot.slane %v5019, %v5032
        %v5034 = vlaneseq
        %v5035 = vshrl.u32 %v5034, 7
        %v5036 = vsub.s32 0, %v5035
        %v5037 = vrot.slane %v5020, %v5036
        %v5038 = vlaneseq
        %v5039 = vshrl.u32 %v5038, 7
        %v5040 = vsub.s32 0, %v5039
        %v5041 = vrot.slane %v5021, %v5040
        %v5042 = vlaneseq
        %v5043 = vshrl.u32 %v5042, 7
        %v5044 = vsub.s32 0, %v5043
        %v5045 = vrot.slane %v5022, %v5044
        %v5046 = vlaneseq
        %v5047 = vshrl.u32 %v5046, 7
        %v5048 = vsub.s32 0, %v5047
        %v5049 = vrot.slane %v5023, %v5048
        %v5050 = vlaneseq
        %v5051 = vshrl.u32 %v5050, 7
        %v5052 = vsub.s32 0, %v5051
        %v5053 = vrot.slane %v5024, %v5052
        %v5054 = vlaneseq
        %v5055 = vshrl.u32 %v5054, 7
        %v5056 = vsub.s32 0, %v5055
        %v5057 = vrot.slane %v5025, %v5056
        %v5058 = vmul.f32 %v5016, %v5029
        %v5059 = vmul.f32 %v5016, %v5033
        %v5060 = vmul.f32 %v5016, %v5037
        %v5061 = vmul.f32 %v5016, %v5041
        %v5062 = vmul.f32 %v5016, %v5045
        %v5063 = vmul.f32 %v5016, %v5049
        %v5064 = vmul.f32 %v5016, %v5053
        %v5065 = vmul.f32 %v5016, %v5057
        %v5066 = vadd.f32 %v4951, %v5058
        %v5067 = vadd.f32 %v4952, %v5059
        %v5068 = vadd.f32 %v4953, %v5060
        %v5069 = vadd.f32 %v4954, %v5061
        %v5070 = vadd.f32 %v4955, %v5062
        %v5071 = vadd.f32 %v4956, %v5063
        %v5072 = vadd.f32 %v4957, %v5064
        %v5073 = vadd.f32 %v4958, %v5065
        %v5074 = vrcp.pop %v5017
        %v5075 = vmul.f32 %v5066, %v5074
        %v5076 = vmul.f32 %v5067, %v5074
        %v5077 = vmul.f32 %v5068, %v5074
        %v5078 = vmul.f32 %v5069, %v5074
        %v5079 = vmul.f32 %v5070, %v5074
        %v5080 = vmul.f32 %v5071, %v5074
        %v5081 = vmul.f32 %v5072, %v5074
        %v5082 = vmul.f32 %v5073, %v5074
        %s5083 = scalar_lea.vmem [#allocation5], 192
        %5084 = vst [vmem:[%s5083] sm:$0xff] %v5075
        %5085 = vst [vmem:[%s5083 + $0x8] sm:$0xff] %v5076
        %5086 = vst [vmem:[%s5083 + $0x10] sm:$0xff] %v5077
        %5087 = vst [vmem:[%s5083 + $0x18] sm:$0xff] %v5078
        %5088 = vst [vmem:[%s5083 + $0x20] sm:$0xff] %v5079
        %5089 = vst [vmem:[%s5083 + $0x28] sm:$0xff] %v5080
        %5090 = vst [vmem:[%s5083 + $0x30] sm:$0xff] %v5081
        %5091 = vst [vmem:[%s5083 + $0x38] sm:$0xff] %v5082
        %v5092 = vld [vmem:[#allocation5] sm:$0xff]
        %v5093 = vld [vmem:[#allocation5 + $0x8] sm:$0xff]
        %v5094 = vld [vmem:[#allocation5 + $0x10] sm:$0xff]
        %v5095 = vld [vmem:[#allocation5 + $0x18] sm:$0xff]
        %v5096 = vld [vmem:[#allocation5 + $0x20] sm:$0xff]
        %v5097 = vld [vmem:[#allocation5 + $0x28] sm:$0xff]
        %v5098 = vld [vmem:[#allocation5 + $0x30] sm:$0xff]
        %v5099 = vld [vmem:[#allocation5 + $0x38] sm:$0xff]
        %v5100 = vld [vmem:[#allocation5 + $0x40] sm:$0xff]
        %v5101 = vld [vmem:[#allocation5 + $0x48] sm:$0xff]
        %v5102 = vld [vmem:[#allocation5 + $0x50] sm:$0xff]
        %v5103 = vld [vmem:[#allocation5 + $0x58] sm:$0xff]
        %v5104 = vld [vmem:[#allocation5 + $0x60] sm:$0xff]
        %v5105 = vld [vmem:[#allocation5 + $0x68] sm:$0xff]
        %v5106 = vld [vmem:[#allocation5 + $0x70] sm:$0xff]
        %v5107 = vld [vmem:[#allocation5 + $0x78] sm:$0xff]
        %v5108 = vld [vmem:[#allocation5 + $0x80] sm:$0xff]
        %v5109 = vld [vmem:[#allocation5 + $0x88] sm:$0xff]
        %v5110 = vld [vmem:[#allocation5 + $0x90] sm:$0xff]
        %v5111 = vld [vmem:[#allocation5 + $0x98] sm:$0xff]
        %v5112 = vld [vmem:[#allocation5 + $0xa0] sm:$0xff]
        %v5113 = vld [vmem:[#allocation5 + $0xa8] sm:$0xff]
        %v5114 = vld [vmem:[#allocation5 + $0xb0] sm:$0xff]
        %v5115 = vld [vmem:[#allocation5 + $0xb8] sm:$0xff]
        %v5116 = vld [vmem:[#allocation5 + $0xc0] sm:$0xff]
        %v5117 = vld [vmem:[#allocation5 + $0xc8] sm:$0xff]
        %v5118 = vld [vmem:[#allocation5 + $0xd0] sm:$0xff]
        %v5119 = vld [vmem:[#allocation5 + $0xd8] sm:$0xff]
        %v5120 = vld [vmem:[#allocation5 + $0xe0] sm:$0xff]
        %v5121 = vld [vmem:[#allocation5 + $0xe8] sm:$0xff]
        %v5122 = vld [vmem:[#allocation5 + $0xf0] sm:$0xff]
        %v5123 = vld [vmem:[#allocation5 + $0xf8] sm:$0xff]
        %v5124 = vld [vmem:[#allocation11] sm:$0xff]
        %v5125 = vld [vmem:[#allocation11 + $0x8] sm:$0xff]
        %v5126 = vld [vmem:[#allocation11 + $0x10] sm:$0xff]
        %v5127 = vld [vmem:[#allocation11 + $0x18] sm:$0xff]
        %v5128 = vld [vmem:[#allocation11 + $0x20] sm:$0xff]
        %v5129 = vld [vmem:[#allocation11 + $0x28] sm:$0xff]
        %v5130 = vld [vmem:[#allocation11 + $0x30] sm:$0xff]
        %v5131 = vld [vmem:[#allocation11 + $0x38] sm:$0xff]
        %v5132 = vld [vmem:[#allocation11 + $0x40] sm:$0xff]
        %v5133 = vld [vmem:[#allocation11 + $0x48] sm:$0xff]
        %v5134 = vld [vmem:[#allocation11 + $0x50] sm:$0xff]
        %v5135 = vld [vmem:[#allocation11 + $0x58] sm:$0xff]
        %v5136 = vld [vmem:[#allocation11 + $0x60] sm:$0xff]
        %v5137 = vld [vmem:[#allocation11 + $0x68] sm:$0xff]
        %v5138 = vld [vmem:[#allocation11 + $0x70] sm:$0xff]
        %v5139 = vld [vmem:[#allocation11 + $0x78] sm:$0xff]
        %v5140 = vld [vmem:[#allocation11 + $0x80] sm:$0xff]
        %v5141 = vld [vmem:[#allocation11 + $0x88] sm:$0xff]
        %v5142 = vld [vmem:[#allocation11 + $0x90] sm:$0xff]
        %v5143 = vld [vmem:[#allocation11 + $0x98] sm:$0xff]
        %v5144 = vld [vmem:[#allocation11 + $0xa0] sm:$0xff]
        %v5145 = vld [vmem:[#allocation11 + $0xa8] sm:$0xff]
        %v5146 = vld [vmem:[#allocation11 + $0xb0] sm:$0xff]
        %v5147 = vld [vmem:[#allocation11 + $0xb8] sm:$0xff]
        %v5148 = vld [vmem:[#allocation11 + $0xc0] sm:$0xff]
        %v5149 = vld [vmem:[#allocation11 + $0xc8] sm:$0xff]
        %v5150 = vld [vmem:[#allocation11 + $0xd0] sm:$0xff]
        %v5151 = vld [vmem:[#allocation11 + $0xd8] sm:$0xff]
        %v5152 = vld [vmem:[#allocation11 + $0xe0] sm:$0xff]
        %v5153 = vld [vmem:[#allocation11 + $0xe8] sm:$0xff]
        %v5154 = vld [vmem:[#allocation11 + $0xf0] sm:$0xff]
        %v5155 = vld [vmem:[#allocation11 + $0xf8] sm:$0xff]
        %v5156 = vld [vmem:[#allocation11 + $0x100] sm:$0xff]
        %v5157 = vld [vmem:[#allocation11 + $0x108] sm:$0xff]
        %v5158 = vld [vmem:[#allocation11 + $0x110] sm:$0xff]
        %v5159 = vld [vmem:[#allocation11 + $0x118] sm:$0xff]
        %v5160 = vld [vmem:[#allocation11 + $0x120] sm:$0xff]
        %v5161 = vld [vmem:[#allocation11 + $0x128] sm:$0xff]
        %v5162 = vld [vmem:[#allocation11 + $0x130] sm:$0xff]
        %v5163 = vld [vmem:[#allocation11 + $0x138] sm:$0xff]
        %v5164 = vld [vmem:[#allocation11 + $0x140] sm:$0xff]
        %v5165 = vld [vmem:[#allocation11 + $0x148] sm:$0xff]
        %v5166 = vld [vmem:[#allocation11 + $0x150] sm:$0xff]
        %v5167 = vld [vmem:[#allocation11 + $0x158] sm:$0xff]
        %v5168 = vld [vmem:[#allocation11 + $0x160] sm:$0xff]
        %v5169 = vld [vmem:[#allocation11 + $0x168] sm:$0xff]
        %v5170 = vld [vmem:[#allocation11 + $0x170] sm:$0xff]
        %v5171 = vld [vmem:[#allocation11 + $0x178] sm:$0xff]
        %v5172 = vld [vmem:[#allocation11 + $0x180] sm:$0xff]
        %v5173 = vld [vmem:[#allocation11 + $0x188] sm:$0xff]
        %v5174 = vld [vmem:[#allocation11 + $0x190] sm:$0xff]
        %v5175 = vld [vmem:[#allocation11 + $0x198] sm:$0xff]
        %v5176 = vld [vmem:[#allocation11 + $0x1a0] sm:$0xff]
        %v5177 = vld [vmem:[#allocation11 + $0x1a8] sm:$0xff]
        %v5178 = vld [vmem:[#allocation11 + $0x1b0] sm:$0xff]
        %v5179 = vld [vmem:[#allocation11 + $0x1b8] sm:$0xff]
        %v5180 = vld [vmem:[#allocation11 + $0x1c0] sm:$0xff]
        %v5181 = vld [vmem:[#allocation11 + $0x1c8] sm:$0xff]
        %v5182 = vld [vmem:[#allocation11 + $0x1d0] sm:$0xff]
        %v5183 = vld [vmem:[#allocation11 + $0x1d8] sm:$0xff]
        %v5184 = vld [vmem:[#allocation11 + $0x1e0] sm:$0xff]
        %v5185 = vld [vmem:[#allocation11 + $0x1e8] sm:$0xff]
        %v5186 = vld [vmem:[#allocation11 + $0x1f0] sm:$0xff]
        %v5187 = vld [vmem:[#allocation11 + $0x1f8] sm:$0xff]
        %v5188 = vld [vmem:[%s3] sm:$0xff]
        %v5189 = vld [vmem:[%s3 + $0x8] sm:$0xff]
        %v5190 = vld [vmem:[%s3 + $0x10] sm:$0xff]
        %v5191 = vld [vmem:[%s3 + $0x18] sm:$0xff]
        %v5192 = vld [vmem:[%s3 + $0x20] sm:$0xff]
        %v5193 = vld [vmem:[%s3 + $0x28] sm:$0xff]
        %v5194 = vld [vmem:[%s3 + $0x30] sm:$0xff]
        %v5195 = vld [vmem:[%s3 + $0x38] sm:$0xff]
        %v5196 = vld [vmem:[%s3 + $0x40] sm:$0xff]
        %v5197 = vld [vmem:[%s3 + $0x48] sm:$0xff]
        %v5198 = vld [vmem:[%s3 + $0x50] sm:$0xff]
        %v5199 = vld [vmem:[%s3 + $0x58] sm:$0xff]
        %v5200 = vld [vmem:[%s3 + $0x60] sm:$0xff]
        %v5201 = vld [vmem:[%s3 + $0x68] sm:$0xff]
        %v5202 = vld [vmem:[%s3 + $0x70] sm:$0xff]
        %v5203 = vld [vmem:[%s3 + $0x78] sm:$0xff]
        %v5204 = vld [vmem:[%s3 + $0x80] sm:$0xff]
        %v5205 = vld [vmem:[%s3 + $0x88] sm:$0xff]
        %v5206 = vld [vmem:[%s3 + $0x90] sm:$0xff]
        %v5207 = vld [vmem:[%s3 + $0x98] sm:$0xff]
        %v5208 = vld [vmem:[%s3 + $0xa0] sm:$0xff]
        %v5209 = vld [vmem:[%s3 + $0xa8] sm:$0xff]
        %v5210 = vld [vmem:[%s3 + $0xb0] sm:$0xff]
        %v5211 = vld [vmem:[%s3 + $0xb8] sm:$0xff]
        %v5212 = vld [vmem:[%s3 + $0xc0] sm:$0xff]
        %v5213 = vld [vmem:[%s3 + $0xc8] sm:$0xff]
        %v5214 = vld [vmem:[%s3 + $0xd0] sm:$0xff]
        %v5215 = vld [vmem:[%s3 + $0xd8] sm:$0xff]
        %v5216 = vld [vmem:[%s3 + $0xe0] sm:$0xff]
        %v5217 = vld [vmem:[%s3 + $0xe8] sm:$0xff]
        %v5218 = vld [vmem:[%s3 + $0xf0] sm:$0xff]
        %v5219 = vld [vmem:[%s3 + $0xf8] sm:$0xff]
        %5221 = vset.pattern.permute.xlu0 0
        %5222 = vperm.xlu0 %5221, %v5188
        %v5223 = vpop.permute.xlu0 %5222
        %5226 = vset.pattern.permute.xlu0 0
        %5227 = vperm.xlu0 %5226, %v5189
        %v5228 = vpop.permute.xlu0 %5227
        %5231 = vset.pattern.permute.xlu0 0
        %5232 = vperm.xlu0 %5231, %v5190
        %v5233 = vpop.permute.xlu0 %5232
        %5236 = vset.pattern.permute.xlu0 0
        %5237 = vperm.xlu0 %5236, %v5191
        %v5238 = vpop.permute.xlu0 %5237
        %5241 = vset.pattern.permute.xlu0 0
        %5242 = vperm.xlu0 %5241, %v5192
        %v5243 = vpop.permute.xlu0 %5242
        %5246 = vset.pattern.permute.xlu0 0
        %5247 = vperm.xlu0 %5246, %v5193
        %v5248 = vpop.permute.xlu0 %5247
        %5251 = vset.pattern.permute.xlu0 0
        %5252 = vperm.xlu0 %5251, %v5194
        %v5253 = vpop.permute.xlu0 %5252
        %5256 = vset.pattern.permute.xlu0 0
        %5257 = vperm.xlu0 %5256, %v5195
        %v5258 = vpop.permute.xlu0 %5257
        %5261 = vset.pattern.permute.xlu0 0
        %5262 = vperm.xlu0 %5261, %v5196
        %v5263 = vpop.permute.xlu0 %5262
        %5266 = vset.pattern.permute.xlu0 0
        %5267 = vperm.xlu0 %5266, %v5197
        %v5268 = vpop.permute.xlu0 %5267
        %5271 = vset.pattern.permute.xlu0 0
        %5272 = vperm.xlu0 %5271, %v5198
        %v5273 = vpop.permute.xlu0 %5272
        %5276 = vset.pattern.permute.xlu0 0
        %5277 = vperm.xlu0 %5276, %v5199
        %v5278 = vpop.permute.xlu0 %5277
        %5281 = vset.pattern.permute.xlu0 0
        %5282 = vperm.xlu0 %5281, %v5200
        %v5283 = vpop.permute.xlu0 %5282
        %5286 = vset.pattern.permute.xlu0 0
        %5287 = vperm.xlu0 %5286, %v5201
        %v5288 = vpop.permute.xlu0 %5287
        %5291 = vset.pattern.permute.xlu0 0
        %5292 = vperm.xlu0 %5291, %v5202
        %v5293 = vpop.permute.xlu0 %5292
        %5296 = vset.pattern.permute.xlu0 0
        %5297 = vperm.xlu0 %5296, %v5203
        %v5298 = vpop.permute.xlu0 %5297
        %5301 = vset.pattern.permute.xlu0 0
        %5302 = vperm.xlu0 %5301, %v5204
        %v5303 = vpop.permute.xlu0 %5302
        %5306 = vset.pattern.permute.xlu0 0
        %5307 = vperm.xlu0 %5306, %v5205
        %v5308 = vpop.permute.xlu0 %5307
        %5311 = vset.pattern.permute.xlu0 0
        %5312 = vperm.xlu0 %5311, %v5206
        %v5313 = vpop.permute.xlu0 %5312
        %5316 = vset.pattern.permute.xlu0 0
        %5317 = vperm.xlu0 %5316, %v5207
        %v5318 = vpop.permute.xlu0 %5317
        %5321 = vset.pattern.permute.xlu0 0
        %5322 = vperm.xlu0 %5321, %v5208
        %v5323 = vpop.permute.xlu0 %5322
        %5326 = vset.pattern.permute.xlu0 0
        %5327 = vperm.xlu0 %5326, %v5209
        %v5328 = vpop.permute.xlu0 %5327
        %5331 = vset.pattern.permute.xlu0 0
        %5332 = vperm.xlu0 %5331, %v5210
        %v5333 = vpop.permute.xlu0 %5332
        %5336 = vset.pattern.permute.xlu0 0
        %5337 = vperm.xlu0 %5336, %v5211
        %v5338 = vpop.permute.xlu0 %5337
        %5341 = vset.pattern.permute.xlu0 0
        %5342 = vperm.xlu0 %5341, %v5212
        %v5343 = vpop.permute.xlu0 %5342
        %5346 = vset.pattern.permute.xlu0 0
        %5347 = vperm.xlu0 %5346, %v5213
        %v5348 = vpop.permute.xlu0 %5347
        %5351 = vset.pattern.permute.xlu0 0
        %5352 = vperm.xlu0 %5351, %v5214
        %v5353 = vpop.permute.xlu0 %5352
        %5356 = vset.pattern.permute.xlu0 0
        %5357 = vperm.xlu0 %5356, %v5215
        %v5358 = vpop.permute.xlu0 %5357
        %5361 = vset.pattern.permute.xlu0 0
        %5362 = vperm.xlu0 %5361, %v5216
        %v5363 = vpop.permute.xlu0 %5362
        %5366 = vset.pattern.permute.xlu0 0
        %5367 = vperm.xlu0 %5366, %v5217
        %v5368 = vpop.permute.xlu0 %5367
        %5371 = vset.pattern.permute.xlu0 0
        %5372 = vperm.xlu0 %5371, %v5218
        %v5373 = vpop.permute.xlu0 %5372
        %5376 = vset.pattern.permute.xlu0 0
        %5377 = vperm.xlu0 %5376, %v5219
        %v5378 = vpop.permute.xlu0 %5377
        %5380 = vmatprep.subr.mxu0 0.0
        %5381 = vmatpush1.msra.mxu0 %v5092
        %5382 = vmatprep.subr.mxu0 0.0
        %5383 = vmatpush1.msra.mxu0 %v5093
        %5384 = vmatprep.subr.mxu0 0.0
        %5385 = vmatpush1.msra.mxu0 %v5094
        %5386 = vmatprep.subr.mxu0 0.0
        %5387 = vmatpush1.msra.mxu0 %v5095
        %5388 = vmatprep.subr.mxu0 0.0
        %5389 = vmatpush1.msra.mxu0 %v5096
        %5390 = vmatprep.subr.mxu0 0.0
        %5391 = vmatpush1.msra.mxu0 %v5097
        %5392 = vmatprep.subr.mxu0 0.0
        %5393 = vmatpush1.msra.mxu0 %v5098
        %5394 = vmatprep.subr.mxu0 0.0
        %5395 = vmatpush1.msra.mxu0 %v5099
        %5396 = vmatprep.subr.mxu0 0.0
        %5397 = vmatpush1.msra.mxu0 %v5100
        %5398 = vmatprep.subr.mxu0 0.0
        %5399 = vmatpush1.msra.mxu0 %v5101
        %5400 = vmatprep.subr.mxu0 0.0
        %5401 = vmatpush1.msra.mxu0 %v5102
        %5402 = vmatprep.subr.mxu0 0.0
        %5403 = vmatpush1.msra.mxu0 %v5103
        %5404 = vmatprep.subr.mxu0 0.0
        %5405 = vmatpush1.msra.mxu0 %v5104
        %5406 = vmatprep.subr.mxu0 0.0
        %5407 = vmatpush1.msra.mxu0 %v5105
        %5408 = vmatprep.subr.mxu0 0.0
        %5409 = vmatpush1.msra.mxu0 %v5106
        %5410 = vmatprep.subr.mxu0 0.0
        %5411 = vmatpush1.msra.mxu0 %v5107
        %5412 = vmatprep.subr.mxu0 0.0
        %5413 = vmatpush1.msra.mxu0 %v5108
        %5414 = vmatprep.subr.mxu0 0.0
        %5415 = vmatpush1.msra.mxu0 %v5109
        %5416 = vmatprep.subr.mxu0 0.0
        %5417 = vmatpush1.msra.mxu0 %v5110
        %5418 = vmatprep.subr.mxu0 0.0
        %5419 = vmatpush1.msra.mxu0 %v5111
        %5420 = vmatprep.subr.mxu0 0.0
        %5421 = vmatpush1.msra.mxu0 %v5112
        %5422 = vmatprep.subr.mxu0 0.0
        %5423 = vmatpush1.msra.mxu0 %v5113
        %5424 = vmatprep.subr.mxu0 0.0
        %5425 = vmatpush1.msra.mxu0 %v5114
        %5426 = vmatprep.subr.mxu0 0.0
        %5427 = vmatpush1.msra.mxu0 %v5115
        %5428 = vmatprep.subr.mxu0 0.0
        %5429 = vmatpush1.msra.mxu0 %v5116
        %5430 = vmatprep.subr.mxu0 0.0
        %5431 = vmatpush1.msra.mxu0 %v5117
        %5432 = vmatprep.subr.mxu0 0.0
        %5433 = vmatpush1.msra.mxu0 %v5118
        %5434 = vmatprep.subr.mxu0 0.0
        %5435 = vmatpush1.msra.mxu0 %v5119
        %5436 = vmatprep.subr.mxu0 0.0
        %5437 = vmatpush1.msra.mxu0 %v5120
        %5438 = vmatprep.subr.mxu0 0.0
        %5439 = vmatpush1.msra.mxu0 %v5121
        %5440 = vmatprep.subr.mxu0 0.0
        %5441 = vmatpush1.msra.mxu0 %v5122
        %5442 = vmatprep.subr.mxu0 0.0
        %5443 = vmatpush1.msra.mxu0 %v5123
        %5444 = vmatprep.mubr.f32.mxu0 %v5125
        %5445 = vmatmul.mubr.f32.gmra.mrb[0].mxu0 %v5124
        %v5446 = vpop.f32.mrb[0].mxu0
        %v5447 = vadd.f32 %v5223, %v5446
        %v5448 = vpop.f32.mrb[0].mxu0
        %5449 = vmatprep.mubr.f32.mxu0 %v5127
        %5450 = vmatmul.mubr.f32.gmra.mrb[0].mxu0 %v5126
        %v5451 = vpop.f32.mrb[0].mxu0
        %v5452 = vadd.f32 %v5228, %v5451
        %v5453 = vpop.f32.mrb[0].mxu0
        %5454 = vmatprep.mubr.f32.mxu0 %v5129
        %5455 = vmatmul.mubr.f32.gmra.mrb[0].mxu0 %v5128
        %v5456 = vpop.f32.mrb[0].mxu0
        %v5457 = vadd.f32 %v5233, %v5456
        %v5458 = vpop.f32.mrb[0].mxu0
        %5459 = vmatprep.mubr.f32.mxu0 %v5131
        %5460 = vmatmul.mubr.f32.gmra.mrb[0].mxu0 %v5130
        %v5461 = vpop.f32.mrb[0].mxu0
        %v5462 = vadd.f32 %v5238, %v5461
        %v5463 = vpop.f32.mrb[0].mxu0
        %5464 = vmatprep.mubr.f32.mxu0 %v5133
        %5465 = vmatmul.mubr.f32.gmra.mrb[0].mxu0 %v5132
        %v5466 = vpop.f32.mrb[0].mxu0
        %v5467 = vadd.f32 %v5243, %v5466
        %v5468 = vpop.f32.mrb[0].mxu0
        %5469 = vmatprep.mubr.f32.mxu0 %v5135
        %5470 = vmatmul.mubr.f32.gmra.mrb[0].mxu0 %v5134
        %v5471 = vpop.f32.mrb[0].mxu0
        %v5472 = vadd.f32 %v5248, %v5471
        %v5473 = vpop.f32.mrb[0].mxu0
        %5474 = vmatprep.mubr.f32.mxu0 %v5137
        %5475 = vmatmul.mubr.f32.gmra.mrb[0].mxu0 %v5136
        %v5476 = vpop.f32.mrb[0].mxu0
        %v5477 = vadd.f32 %v5253, %v5476
        %v5478 = vpop.f32.mrb[0].mxu0
        %5479 = vmatprep.mubr.f32.mxu0 %v5139
        %5480 = vmatmul.mubr.f32.gmra.mrb[0].mxu0 %v5138
        %v5481 = vpop.f32.mrb[0].mxu0
        %v5482 = vadd.f32 %v5258, %v5481
        %v5483 = vpop.f32.mrb[0].mxu0
        %5484 = vmatprep.mubr.f32.mxu0 %v5141
        %5485 = vmatmul.mubr.f32.gmra.mrb[0].mxu0 %v5140
        %v5486 = vpop.f32.mrb[0].mxu0
        %v5487 = vadd.f32 %v5263, %v5486
        %v5488 = vpop.f32.mrb[0].mxu0
        %5489 = vmatprep.mubr.f32.mxu0 %v5143
        %5490 = vmatmul.mubr.f32.gmra.mrb[0].mxu0 %v5142
        %v5491 = vpop.f32.mrb[0].mxu0
        %v5492 = vadd.f32 %v5268, %v5491
        %v5493 = vpop.f32.mrb[0].mxu0
        %5494 = vmatprep.mubr.f32.mxu0 %v5145
        %5495 = vmatmul.mubr.f32.gmra.mrb[0].mxu0 %v5144
        %v5496 = vpop.f32.mrb[0].mxu0
        %v5497 = vadd.f32 %v5273, %v5496
        %v5498 = vpop.f32.mrb[0].mxu0
        %5499 = vmatprep.mubr.f32.mxu0 %v5147
        %5500 = vmatmul.mubr.f32.gmra.mrb[0].mxu0 %v5146
        %v5501 = vpop.f32.mrb[0].mxu0
        %v5502 = vadd.f32 %v5278, %v5501
        %v5503 = vpop.f32.mrb[0].mxu0
        %5504 = vmatprep.mubr.f32.mxu0 %v5149
        %5505 = vmatmul.mubr.f32.gmra.mrb[0].mxu0 %v5148
        %v5506 = vpop.f32.mrb[0].mxu0
        %v5507 = vadd.f32 %v5283, %v5506
        %v5508 = vpop.f32.mrb[0].mxu0
        %5509 = vmatprep.mubr.f32.mxu0 %v5151
        %5510 = vmatmul.mubr.f32.gmra.mrb[0].mxu0 %v5150
        %v5511 = vpop.f32.mrb[0].mxu0
        %v5512 = vadd.f32 %v5288, %v5511
        %v5513 = vpop.f32.mrb[0].mxu0
        %5514 = vmatprep.mubr.f32.mxu0 %v5153
        %5515 = vmatmul.mubr.f32.gmra.mrb[0].mxu0 %v5152
        %v5516 = vpop.f32.mrb[0].mxu0
        %v5517 = vadd.f32 %v5293, %v5516
        %v5518 = vpop.f32.mrb[0].mxu0
        %5519 = vmatprep.mubr.f32.mxu0 %v5155
        %5520 = vmatmul.mubr.f32.gmra.mrb[0].mxu0 %v5154
        %v5521 = vpop.f32.mrb[0].mxu0
        %v5522 = vadd.f32 %v5298, %v5521
        %v5523 = vpop.f32.mrb[0].mxu0
        %5524 = vmatprep.mubr.f32.mxu0 %v5157
        %5525 = vmatmul.mubr.f32.gmra.mrb[0].mxu0 %v5156
        %v5526 = vpop.f32.mrb[0].mxu0
        %v5527 = vadd.f32 %v5303, %v5526
        %v5528 = vpop.f32.mrb[0].mxu0
        %5529 = vmatprep.mubr.f32.mxu0 %v5159
        %5530 = vmatmul.mubr.f32.gmra.mrb[0].mxu0 %v5158
        %v5531 = vpop.f32.mrb[0].mxu0
        %v5532 = vadd.f32 %v5308, %v5531
        %v5533 = vpop.f32.mrb[0].mxu0
        %5534 = vmatprep.mubr.f32.mxu0 %v5161
        %5535 = vmatmul.mubr.f32.gmra.mrb[0].mxu0 %v5160
        %v5536 = vpop.f32.mrb[0].mxu0
        %v5537 = vadd.f32 %v5313, %v5536
        %v5538 = vpop.f32.mrb[0].mxu0
        %5539 = vmatprep.mubr.f32.mxu0 %v5163
        %5540 = vmatmul.mubr.f32.gmra.mrb[0].mxu0 %v5162
        %v5541 = vpop.f32.mrb[0].mxu0
        %v5542 = vadd.f32 %v5318, %v5541
        %v5543 = vpop.f32.mrb[0].mxu0
        %5544 = vmatprep.mubr.f32.mxu0 %v5165
        %5545 = vmatmul.mubr.f32.gmra.mrb[0].mxu0 %v5164
        %v5546 = vpop.f32.mrb[0].mxu0
        %v5547 = vadd.f32 %v5323, %v5546
        %v5548 = vpop.f32.mrb[0].mxu0
        %5549 = vmatprep.mubr.f32.mxu0 %v5167
        %5550 = vmatmul.mubr.f32.gmra.mrb[0].mxu0 %v5166
        %v5551 = vpop.f32.mrb[0].mxu0
        %v5552 = vadd.f32 %v5328, %v5551
        %v5553 = vpop.f32.mrb[0].mxu0
        %5554 = vmatprep.mubr.f32.mxu0 %v5169
        %5555 = vmatmul.mubr.f32.gmra.mrb[0].mxu0 %v5168
        %v5556 = vpop.f32.mrb[0].mxu0
        %v5557 = vadd.f32 %v5333, %v5556
        %v5558 = vpop.f32.mrb[0].mxu0
        %5559 = vmatprep.mubr.f32.mxu0 %v5171
        %5560 = vmatmul.mubr.f32.gmra.mrb[0].mxu0 %v5170
        %v5561 = vpop.f32.mrb[0].mxu0
        %v5562 = vadd.f32 %v5338, %v5561
        %v5563 = vpop.f32.mrb[0].mxu0
        %5564 = vmatprep.mubr.f32.mxu0 %v5173
        %5565 = vmatmul.mubr.f32.gmra.mrb[0].mxu0 %v5172
        %v5566 = vpop.f32.mrb[0].mxu0
        %v5567 = vadd.f32 %v5343, %v5566
        %v5568 = vpop.f32.mrb[0].mxu0
        %5569 = vmatprep.mubr.f32.mxu0 %v5175
        %5570 = vmatmul.mubr.f32.gmra.mrb[0].mxu0 %v5174
        %v5571 = vpop.f32.mrb[0].mxu0
        %v5572 = vadd.f32 %v5348, %v5571
        %v5573 = vpop.f32.mrb[0].mxu0
        %5574 = vmatprep.mubr.f32.mxu0 %v5177
        %5575 = vmatmul.mubr.f32.gmra.mrb[0].mxu0 %v5176
        %v5576 = vpop.f32.mrb[0].mxu0
        %v5577 = vadd.f32 %v5353, %v5576
        %v5578 = vpop.f32.mrb[0].mxu0
        %5579 = vmatprep.mubr.f32.mxu0 %v5179
        %5580 = vmatmul.mubr.f32.gmra.mrb[0].mxu0 %v5178
        %v5581 = vpop.f32.mrb[0].mxu0
        %v5582 = vadd.f32 %v5358, %v5581
        %v5583 = vpop.f32.mrb[0].mxu0
        %5584 = vmatprep.mubr.f32.mxu0 %v5181
        %5585 = vmatmul.mubr.f32.gmra.mrb[0].mxu0 %v5180
        %v5586 = vpop.f32.mrb[0].mxu0
        %v5587 = vadd.f32 %v5363, %v5586
        %v5588 = vpop.f32.mrb[0].mxu0
        %5589 = vmatprep.mubr.f32.mxu0 %v5183
        %5590 = vmatmul.mubr.f32.gmra.mrb[0].mxu0 %v5182
        %v5591 = vpop.f32.mrb[0].mxu0
        %v5592 = vadd.f32 %v5368, %v5591
        %v5593 = vpop.f32.mrb[0].mxu0
        %5594 = vmatprep.mubr.f32.mxu0 %v5185
        %5595 = vmatmul.mubr.f32.gmra.mrb[0].mxu0 %v5184
        %v5596 = vpop.f32.mrb[0].mxu0
        %v5597 = vadd.f32 %v5373, %v5596
        %v5598 = vpop.f32.mrb[0].mxu0
        %5599 = vmatprep.mubr.f32.mxu0 %v5187
        %5600 = vmatmul.mubr.f32.gmra.mrb[0].mxu0 %v5186
        %v5601 = vpop.f32.mrb[0].mxu0
        %v5602 = vadd.f32 %v5378, %v5601
        %v5603 = vpop.f32.mrb[0].mxu0
        %5604 = vdwg.mxu0
        %5605 = vst [vmem:[%s261] sm:$0xff] %v5447
        %5606 = vst [vmem:[%s261 + $0x8] sm:$0xff] %v5452
        %5607 = vst [vmem:[%s261 + $0x10] sm:$0xff] %v5457
        %5608 = vst [vmem:[%s261 + $0x18] sm:$0xff] %v5462
        %5609 = vst [vmem:[%s261 + $0x20] sm:$0xff] %v5467
        %5610 = vst [vmem:[%s261 + $0x28] sm:$0xff] %v5472
        %5611 = vst [vmem:[%s261 + $0x30] sm:$0xff] %v5477
        %5612 = vst [vmem:[%s261 + $0x38] sm:$0xff] %v5482
        %5613 = vst [vmem:[%s261 + $0x40] sm:$0xff] %v5487
        %5614 = vst [vmem:[%s261 + $0x48] sm:$0xff] %v5492
        %5615 = vst [vmem:[%s261 + $0x50] sm:$0xff] %v5497
        %5616 = vst [vmem:[%s261 + $0x58] sm:$0xff] %v5502
        %5617 = vst [vmem:[%s261 + $0x60] sm:$0xff] %v5507
        %5618 = vst [vmem:[%s261 + $0x68] sm:$0xff] %v5512
        %5619 = vst [vmem:[%s261 + $0x70] sm:$0xff] %v5517
        %5620 = vst [vmem:[%s261 + $0x78] sm:$0xff] %v5522
        %5621 = vst [vmem:[%s261 + $0x80] sm:$0xff] %v5527
        %5622 = vst [vmem:[%s261 + $0x88] sm:$0xff] %v5532
        %5623 = vst [vmem:[%s261 + $0x90] sm:$0xff] %v5537
        %5624 = vst [vmem:[%s261 + $0x98] sm:$0xff] %v5542
        %5625 = vst [vmem:[%s261 + $0xa0] sm:$0xff] %v5547
        %5626 = vst [vmem:[%s261 + $0xa8] sm:$0xff] %v5552
        %5627 = vst [vmem:[%s261 + $0xb0] sm:$0xff] %v5557
        %5628 = vst [vmem:[%s261 + $0xb8] sm:$0xff] %v5562
        %5629 = vst [vmem:[%s261 + $0xc0] sm:$0xff] %v5567
        %5630 = vst [vmem:[%s261 + $0xc8] sm:$0xff] %v5572
        %5631 = vst [vmem:[%s261 + $0xd0] sm:$0xff] %v5577
        %5632 = vst [vmem:[%s261 + $0xd8] sm:$0xff] %v5582
        %5633 = vst [vmem:[%s261 + $0xe0] sm:$0xff] %v5587
        %5634 = vst [vmem:[%s261 + $0xe8] sm:$0xff] %v5592
        %5635 = vst [vmem:[%s261 + $0xf0] sm:$0xff] %v5597
        %5636 = vst [vmem:[%s261 + $0xf8] sm:$0xff] %v5602
        %s5637 = sand.u32 %s135, 1
        %s5638 = scalar_lea.sflag [#allocation8], %s5637
        %s5639 = sand.u32 %s135, 1
        %s5640 = smul.addr %s5639, 256
        %s5641 = scalar_lea.vmem [#allocation12], %s5640
        // Predicated region
        $region49: #{tpu_custom_call.1} parent=35 // pred_check
          %p5642 = pneg %p145
        $region50: #{tpu_custom_call.1} parent=35 // pred_check_branch
          %5644 = sbr.rel (%p5642) target = $region52
        $region51: #{tpu_custom_call.1} parent=35 // pred_region
          %s5646 = ssub.s32 4096, 4096
          %5647 = vsyncadd %s5638, %s5646
          %s5648 = smul.addr %s26, 32
          %s5649 = sadd.s32 %s27, %s5648
          %s5650 = smul.addr %s5649, 128
          %s5651 = scalar_lea.hbm %s4, %s5650
          %s5652 = sshll.u32 %s5641, 4
          %s5653 = int_to_ptr.vmem [resolvable:$true] %s5652
          %5658 = dma.vmem_to_hbm [thread:$0]  %s5653, 4096, %s5651, %s5638, 128, 128, 8
        $region52: #{tpu_custom_call.1} parent=35 // pred_fallthru
          _
      $region36: #{tpu_custom_call.1} parent=5 // pred_fallthru
        _
      %p5659 = scmp.le.s32.totalorder 2, %s17
      // Predicated region
      $region53: #{tpu_custom_call.1} parent=5 // pred_check
        %p5660 = pneg %p5659
      $region54: #{tpu_custom_call.1} parent=5 // pred_check_branch
        %5662 = sbr.rel (%p5660) target = $region56
      $region55: #{tpu_custom_call.1} parent=5 // pred_region
        %s5663 = ssub.s32 %s17, 2
        // Predicated region
        $region57: #{tpu_custom_call.1} parent=55 // pred_check
          %p5664 = pneg %p151
        $region58: #{tpu_custom_call.1} parent=55 // pred_check_branch
          %5666 = sbr.rel (%p5664) target = $region60
        $region59: #{tpu_custom_call.1} parent=55 // pred_region
          %s5667 = sand.u32 %s136, 1
          %s5668 = scalar_lea.sflag [#allocation8], %s5667
          %s5669 = sand.u32 %s136, 1
          %s5670 = smul.addr %s5669, 256
          %s5671 = scalar_lea.vmem [#allocation12], %s5670
          %5672 = dma.done %s5668, 4096
        $region60: #{tpu_custom_call.1} parent=55 // pred_fallthru
          _
      $region56: #{tpu_custom_call.1} parent=5 // pred_fallthru
        _
    $region6: #{tpu_custom_call.1} parent=1 // loop_footer
      %s21 = sadd.s32 1, %s17
    $region7: #{tpu_custom_call.1} parent=1 // loop_footer_branch
      %16 = sbr.rel target = $region3
    $region8: #{tpu_custom_call.1} parent=1 // loop_exit
      _
    %5673 = vsyncpa [#allocation7], 1
    %s5674 = scalar_lea.sflag [#allocation7], 1
    %5675 = vsyncpa %s5674, 1
    %5676 = vsyncpa [#allocation10], 1
    %5677 = vsyncpa [#allocation8], 1
    %s5678 = scalar_lea.sflag [#allocation8], 1
    %5679 = vsyncpa %s5678, 1

</llo_original>
